<compile_context>
chip_gen: v6e
topology: v6e:2x2x1
jax: 0.10.0
libtpu: 0.0.40
codegen_flags: <defaults>
</compile_context>

<pallas_src>
import functools

import jax
import jax.numpy as jnp
import numpy as np
from jax import lax
from jax.experimental import pallas as pl
from jax.experimental.pallas import tpu as pltpu


# --------------------- static layout (specialized: 3x32x32) ------------------ #
GH = GW = 20        # per-image storage grid (rows x cols), 400 valid lanes
LM = 128            # left-margin lanes (>= 84 = largest |tap offset|)
NCI = 512           # per-image core lane width (400 valid + 112 dead), 4*128
NLI = LM + NCI + 128  # per-image slab width = 768 lanes (6*128)
C1 = 8              # conv1 input channels zero-padded 3 -> 8
CP = 16             # packed K per tap (2*C1 for conv1, 12->16 for conv2/3)
COUT = 12
K = 5
FCW = 128           # fc weight-grid column width (COUT*NCLS=120 padded to 128)


# ------------------------------- Pallas kernel ------------------------------- #
def _lenet_kernel(xp_ref, w1_ref, b1_ref, m1_ref,
                  w2_ref, b2_ref, m2_ref,
                  w3_ref, b3_ref, wfc_ref,
                  o_ref, a1_ref, a2_ref, *, nc):
    f32 = jnp.float32

    # Full zero-init of the activation scratch is load-bearing: margins act as
    # the conv zero-padding and padded channel sublanes 12..15 must not be NaN.
    a1_ref[...] = jnp.zeros(a1_ref.shape, a1_ref.dtype)
    a2_ref[...] = jnp.zeros(a2_ref.shape, a2_ref.dtype)

    def act(z):  # sigmoid via a single EUP transcendental
        return 0.5 * jnp.tanh(0.5 * z) + 0.5

    # ----- conv1: 3->12, k5, s2, p2 (row parities folded into channels) ------
    w1 = w1_ref[...]                                        # (12, 15*CP) bf16
    acc = jnp.zeros((COUT, nc), f32)
    t = 0
    for a in range(3):                                      # a = di // 2
        for dj in range(K):
            off = LM + a * GW + dj // 2
            win = xp_ref[dj % 2, :, off:off + nc]           # (CP, nc) bf16
            acc += jnp.dot(w1[:, t * CP:(t + 1) * CP], win,
                           preferred_element_type=f32)
            t += 1
    h = act(acc + b1_ref[...]) * m1_ref[...]
    a1_ref[0:COUT, LM:LM + nc] = h.astype(a1_ref.dtype)

    # ----- conv2: 12->12, k5, s2, p2 (output lands 2x-dilated on the grid) ----
    w2 = w2_ref[...]                                        # (12, 25*CP) bf16
    acc = jnp.zeros((COUT, nc), f32)
    for di in range(K):
        for dj in range(K):
            t = di * K + dj
            off = LM + (di - 2) * GW + (dj - 2)
            win = a1_ref[:, off:off + nc]                   # (CP, nc) bf16
            acc += jnp.dot(w2[:, t * CP:(t + 1) * CP], win,
                           preferred_element_type=f32)
    h = act(acc + b2_ref[...]) * m2_ref[...]
    a2_ref[0:COUT, LM:LM + nc] = h.astype(a2_ref.dtype)

    # ----- conv3: 12->12, k5, s1 (on the 2x-dilated grid) ---------------------
    w3 = w3_ref[...]
    acc = jnp.zeros((COUT, nc), f32)
    for di in range(K):
        for dj in range(K):
            t = di * K + dj
            off = LM + (2 * di - 4) * GW + (2 * dj - 4)
            win = a2_ref[:, off:off + nc]
            acc += jnp.dot(w3[:, t * CP:(t + 1) * CP], win,
                           preferred_element_type=f32)
    h3 = act(acc + b3_ref[...]).astype(jnp.bfloat16)        # (12, nc)

    # ----- fc partials: one lane-dense GEMM (12, nc) @ (nc, 128) --------------
    # Column block c holds the fc weights of channel c; the XLA epilogue sums
    # the 12 diagonal (c, c*NCLS:(c+1)*NCLS) blocks and adds the bias.
    o_ref[0, :, :] = jnp.dot(h3, wfc_ref[...], preferred_element_type=f32)


# ----------------------- one-time parameter preparation ---------------------- #
def prepare_lenet_params(params):
    """Pack weights/masks ONCE (outside the per-call jit) for the fused kernel."""
    bf16, f32 = jnp.bfloat16, jnp.float32
    cin = params["w1"].shape[1]
    assert cin <= C1
    ncls = params["bfc"].shape[0]
    assert COUT * ncls <= FCW

    # conv1: (a, dj) tap groups with the two row parities concatenated on K.
    w1 = params["w1"]                                       # (12, cin, 5, 5)
    zeros8 = jnp.zeros((COUT, C1), f32)
    blocks = []
    for a in range(3):
        for dj in range(K):
            lo = jnp.pad(w1[:, :, 2 * a, dj], ((0, 0), (0, C1 - cin)))
            hi = (jnp.pad(w1[:, :, 2 * a + 1, dj], ((0, 0), (0, C1 - cin)))
                  if 2 * a + 1 < K else zeros8)
            blocks.append(jnp.concatenate([lo, hi], axis=1))
    w1p = jnp.concatenate(blocks, axis=1).astype(bf16)      # (12, 15*CP)

    # conv2/conv3: one (Cout, CP) block per tap, taps in (di, dj) order.
    def pack_w(w):
        cout, ci, kh, kw = w.shape
        w = jnp.pad(w.transpose(0, 2, 3, 1), ((0, 0), (0, 0), (0, 0), (0, CP - ci)))
        return w.reshape(cout, kh * kw * CP).astype(bf16)

    w2p, w3p = pack_w(params["w2"]), pack_w(params["w3"])

    b1 = params["b1"].reshape(COUT, 1).astype(f32)
    b2 = params["b2"].reshape(COUT, 1).astype(f32)
    b3 = params["b3"].reshape(COUT, 1).astype(f32)

    # lane masks selecting the meaningful conv1 / conv2 outputs (per image).
    rr, qq = np.arange(GH)[:, None], np.arange(GW)[None, :]
    m1g = ((rr < 16) & (qq < 16)).astype(np.float32)                 # 16x16
    m2g = m1g * ((rr % 2 == 0) & (qq % 2 == 0))                      # 8x8 dilated
    m1 = np.zeros((1, NCI), np.float32); m1[0, :GH * GW] = m1g.reshape(-1)
    m2 = np.zeros((1, NCI), np.float32); m2[0, :GH * GW] = m2g.reshape(-1)

    # fc weights scattered onto the 2x-dilated per-image grid (shared by batch).
    wr = params["wfc"].reshape(ncls, COUT, 8, 8).transpose(2, 3, 1, 0)  # (8,8,12,10)
    g = jnp.zeros((GH, GW, COUT, ncls), f32).at[0:16:2, 0:16:2].set(wr)
    wgrid = g.reshape(GH * GW, COUT * ncls)
    wgrid = jnp.pad(wgrid, ((0, NCI - GH * GW), (0, FCW - COUT * ncls))).astype(bf16)

    return {"w1p": w1p, "b1": b1, "m1": jnp.asarray(m1),
            "w2p": w2p, "b2": b2, "m2": jnp.asarray(m2),
            "w3p": w3p, "b3": b3, "wgrid": wgrid,
            "bfc": params["bfc"].astype(f32)}


# --------------------------------- forward ------------------------------------ #
@jax.jit
def lenet_forward(prep, x):
    bf16, f32 = jnp.bfloat16, jnp.float32
    B, C, H, W = x.shape
    assert (C, H, W) == (3, 32, 32), "layout specialized for 3x32x32 inputs"
    ncls = prep["bfc"].shape[0]

    # Only x-dependent work lives here: pad by 2, split into the 2 column-parity
    # planes with the 2 row parities folded into channels, lay out per-image
    # 512-lane slabs with 128-lane margins.
    xpad = jnp.pad(x, ((0, 0), (0, 0), (2, 2), (2, 2)))              # (B,3,36,36)
    planes = []
    for pw in range(2):
        chans = []
        for rp in range(2):
            sub = xpad[:, :, rp::2, pw::2]                           # (B,3,18,18)
            sub = jnp.pad(sub, ((0, 0), (0, C1 - 3), (0, GH - 18), (0, GW - 18)))
            chans.append(sub)
        planes.append(jnp.concatenate(chans, axis=1))                # (B,16,20,20)
    xg = jnp.stack(planes, axis=1).reshape(B * 2, 2 * C1, GH * GW)
    xp = jnp.pad(xg, ((0, 0), (0, 0), (LM, NLI - LM - GH * GW))).astype(bf16)

    operands = (xp, prep["w1p"], prep["b1"], prep["m1"],
                prep["w2p"], prep["b2"], prep["m2"],
                prep["w3p"], prep["b3"], prep["wgrid"])

    cost = pl.CostEstimate(
        flops=B * (2 * COUT * NCI * CP * (15 + 25 + 25) + 2 * COUT * NCI * FCW),
        transcendentals=B * 3 * COUT * NCI,
        bytes_accessed=int(sum(op.size * op.dtype.itemsize for op in operands)
                           + B * COUT * FCW * 4))

    const2 = lambda b: (0, 0)
    part = pl.pallas_call(
        functools.partial(_lenet_kernel, nc=NCI),
        out_shape=jax.ShapeDtypeStruct((B, COUT, FCW), f32),
        grid=(B,),
        in_specs=[
            pl.BlockSpec((2, 2 * C1, NLI), lambda b: (b, 0, 0)),     # xp (per image)
            pl.BlockSpec((COUT, 15 * CP), const2),                   # w1p
            pl.BlockSpec((COUT, 1), const2),                         # b1
            pl.BlockSpec((1, NCI), const2),                          # m1
            pl.BlockSpec((COUT, 25 * CP), const2),                   # w2p
            pl.BlockSpec((COUT, 1), const2),                         # b2
            pl.BlockSpec((1, NCI), const2),                          # m2
            pl.BlockSpec((COUT, 25 * CP), const2),                   # w3p
            pl.BlockSpec((COUT, 1), const2),                         # b3
            pl.BlockSpec((NCI, FCW), const2),                        # wgrid
        ],
        out_specs=pl.BlockSpec((1, COUT, FCW), lambda b: (b, 0, 0)),
        scratch_shapes=[pltpu.VMEM((CP, NLI), bf16),
                        pltpu.VMEM((CP, NLI), bf16)],
        compiler_params=pltpu.CompilerParams(
            dimension_semantics=("parallel",)),
        cost_estimate=cost,
    )(*operands)

    # Epilogue: sum the 12 diagonal channel blocks and add the bias.
    diag = part[:, :, :COUT * ncls].reshape(B, COUT, COUT, ncls)
    return jnp.trace(diag, axis1=1, axis2=2) + prep["bfc"]


# ------------------------------ params / reference --------------------------- #
def init_lenet_params(key, channel=3, hidden=768, num_classes=10):
    ks = jax.random.split(key, 8)

    def u(k, shape, fan_in):
        bound = 1.0 / jnp.sqrt(fan_in)
        return jax.random.uniform(k, shape, jnp.float32, -bound, bound)

    p = {}
    p["w1"] = u(ks[0], (12, channel, 5, 5), channel * 25)
    p["b1"] = u(ks[1], (12,), channel * 25)
    p["w2"] = u(ks[2], (12, 12, 5, 5), 12 * 25)
    p["b2"] = u(ks[3], (12,), 12 * 25)
    p["w3"] = u(ks[4], (12, 12, 5, 5), 12 * 25)
    p["b3"] = u(ks[5], (12,), 12 * 25)
    p["wfc"] = u(ks[6], (num_classes, hidden), hidden)
    p["bfc"] = u(ks[7], (num_classes,), hidden)
    return p


def lenet_reference(params, x):
    """Pure-JAX (XLA) reference with PyTorch semantics, for a sanity check."""
    def conv_sig(z, w, b, stride):
        z = lax.conv_general_dilated(
            z, w, window_strides=(stride, stride), padding=((2, 2), (2, 2)),
            dimension_numbers=("NCHW", "OIHW", "NCHW"))
        return jax.nn.sigmoid(z + b.reshape(1, -1, 1, 1))

    out = conv_sig(x, params["w1"], params["b1"], 2)
    out = conv_sig(out, params["w2"], params["b2"], 2)
    out = conv_sig(out, params["w3"], params["b3"], 1)
    flat = out.reshape(x.shape[0], -1)
    return flat @ params["wfc"].T + params["bfc"]


if __name__ == "__main__":
    key = jax.random.PRNGKey(0)
    pkey, xkey = jax.random.split(key)
    params = init_lenet_params(pkey, channel=3, hidden=768, num_classes=10)
    # hidden=768 implies 32x32 inputs: 32 -> 16 -> 8 -> 8, 12*8*8 = 768.
    x = jax.random.normal(xkey, (2, 3, 32, 32), jnp.float32)

    prep = prepare_lenet_params(params)       # one-time packing, outside the jit
    logits = lenet_forward(prep, x)
    jax.block_until_ready(logits)
    assert logits.shape == (2, 10)

    ref = lenet_reference(params, x)
    err = float(jnp.max(jnp.abs(logits - ref)))
    assert err < 5e-2, f"mismatch vs reference: max abs err {err}"
    print("KERNEL_OK")
</pallas_src>

<mosaic_0001>
module attributes {stable_mosaic.version = 11 : i64} {
  func.func @_lenet_kernel(%arg0: i32, %arg1: memref<2x16x768xbf16, #tpu.memory_space<vmem>>, %arg2: memref<12x240xbf16, #tpu.memory_space<vmem>>, %arg3: memref<12x1xf32, #tpu.memory_space<vmem>>, %arg4: memref<1x512xf32, #tpu.memory_space<vmem>>, %arg5: memref<12x400xbf16, #tpu.memory_space<vmem>>, %arg6: memref<12x1xf32, #tpu.memory_space<vmem>>, %arg7: memref<1x512xf32, #tpu.memory_space<vmem>>, %arg8: memref<12x400xbf16, #tpu.memory_space<vmem>>, %arg9: memref<12x1xf32, #tpu.memory_space<vmem>>, %arg10: memref<512x128xbf16, #tpu.memory_space<vmem>>, %arg11: memref<1x12x128xf32, #tpu.memory_space<vmem>>, %arg12: memref<16x768xbf16, #tpu.memory_space<vmem>>, %arg13: memref<16x768xbf16, #tpu.memory_space<vmem>>) attributes {dimension_semantics = [#tpu.dimension_semantics<parallel>], iteration_bounds = array<i64: 2>, scalar_prefetch = 0 : i64, scratch_operands = 2 : i64, tpu.core_type = #tpu.core_type<tc>, window_params = [{transform_indices = @transform_0, window_bounds = array<i64: 2, 16, 768>}, {pipeline_mode = #tpu.pipeline_mode<synchronous>, transform_indices = @transform_1, window_bounds = array<i64: 12, 240>}, {pipeline_mode = #tpu.pipeline_mode<synchronous>, transform_indices = @transform_2, window_bounds = array<i64: 12, 1>}, {pipeline_mode = #tpu.pipeline_mode<synchronous>, transform_indices = @transform_3, window_bounds = array<i64: 1, 512>}, {pipeline_mode = #tpu.pipeline_mode<synchronous>, transform_indices = @transform_4, window_bounds = array<i64: 12, 400>}, {pipeline_mode = #tpu.pipeline_mode<synchronous>, transform_indices = @transform_5, window_bounds = array<i64: 12, 1>}, {pipeline_mode = #tpu.pipeline_mode<synchronous>, transform_indices = @transform_6, window_bounds = array<i64: 1, 512>}, {pipeline_mode = #tpu.pipeline_mode<synchronous>, transform_indices = @transform_7, window_bounds = array<i64: 12, 400>}, {pipeline_mode = #tpu.pipeline_mode<synchronous>, transform_indices = @transform_8, window_bounds = array<i64: 12, 1>}, {pipeline_mode = #tpu.pipeline_mode<synchronous>, transform_indices = @transform_9, window_bounds = array<i64: 512, 128>}, {transform_indices = @transform_10, window_bounds = array<i64: 1, 12, 128>}]} {
    %cst = arith.constant 0.000000e+00 : bf16
    %0 = vector.broadcast %cst : bf16 to vector<16x768xbf16>
    %c0 = arith.constant 0 : index
    %c0_0 = arith.constant 0 : index
    %1 = vector.load %arg12[%c0, %c0_0] : memref<16x768xbf16, #tpu.memory_space<vmem>>, vector<16x768xbf16>
    tpu.vector_store %arg12[%c0, %c0_0], %0 {strides = array<i32>} : memref<16x768xbf16, #tpu.memory_space<vmem>>, vector<16x768xbf16>,
    %cst_1 = arith.constant 0.000000e+00 : bf16
    %2 = vector.broadcast %cst_1 : bf16 to vector<16x768xbf16>
    %c0_2 = arith.constant 0 : index
    %c0_3 = arith.constant 0 : index
    %3 = vector.load %arg13[%c0_2, %c0_3] : memref<16x768xbf16, #tpu.memory_space<vmem>>, vector<16x768xbf16>
    tpu.vector_store %arg13[%c0_2, %c0_3], %2 {strides = array<i32>} : memref<16x768xbf16, #tpu.memory_space<vmem>>, vector<16x768xbf16>,
    %c0_4 = arith.constant 0 : index
    %c0_5 = arith.constant 0 : index
    %4 = vector.load %arg2[%c0_4, %c0_5] : memref<12x240xbf16, #tpu.memory_space<vmem>>, vector<12x240xbf16>
    %cst_6 = arith.constant 0.000000e+00 : f32
    %5 = vector.broadcast %cst_6 : f32 to vector<12x512xf32>
    %c0_7 = arith.constant 0 : index
    %c0_8 = arith.constant 0 : index
    %c128 = arith.constant 128 : index
    %6 = vector.load %arg1[%c0_7, %c0_8, %c128] : memref<2x16x768xbf16, #tpu.memory_space<vmem>>, vector<1x16x512xbf16>
    %7 = vector.shape_cast %6 : vector<1x16x512xbf16> to vector<16x512xbf16>
    %8 = vector.extract_strided_slice %4 {offsets = [0, 0], sizes = [12, 16], strides = [1, 1]} : vector<12x240xbf16> to vector<12x16xbf16>
    %cst_9 = arith.constant dense<0.000000e+00> : vector<12x512xf32>
    %9 = tpu.matmul %8, %7, %cst_9 {dimension_numbers = #tpu.dot_dimension_numbers<[1], [0], [0], [1], [0, 0, 1, 1], [], []>} : vector<12x16xbf16>, vector<16x512xbf16>, vector<12x512xf32> -> vector<12x512xf32>
    %10 = arith.addf %5, %9 : vector<12x512xf32>
    %c1 = arith.constant 1 : index
    %c0_10 = arith.constant 0 : index
    %c128_11 = arith.constant 128 : index
    %11 = vector.load %arg1[%c1, %c0_10, %c128_11] : memref<2x16x768xbf16, #tpu.memory_space<vmem>>, vector<1x16x512xbf16>
    %12 = vector.shape_cast %11 : vector<1x16x512xbf16> to vector<16x512xbf16>
    %13 = vector.extract_strided_slice %4 {offsets = [0, 16], sizes = [12, 16], strides = [1, 1]} : vector<12x240xbf16> to vector<12x16xbf16>
    %cst_12 = arith.constant dense<0.000000e+00> : vector<12x512xf32>
    %14 = tpu.matmul %13, %12, %cst_12 {dimension_numbers = #tpu.dot_dimension_numbers<[1], [0], [0], [1], [0, 0, 1, 1], [], []>} : vector<12x16xbf16>, vector<16x512xbf16>, vector<12x512xf32> -> vector<12x512xf32>
    %15 = arith.addf %10, %14 : vector<12x512xf32>
    %c0_13 = arith.constant 0 : index
    %c0_14 = arith.constant 0 : index
    %c129 = arith.constant 129 : index
    %16 = vector.load %arg1[%c0_13, %c0_14, %c129] : memref<2x16x768xbf16, #tpu.memory_space<vmem>>, vector<1x16x512xbf16>
    %17 = vector.shape_cast %16 : vector<1x16x512xbf16> to vector<16x512xbf16>
    %18 = vector.extract_strided_slice %4 {offsets = [0, 32], sizes = [12, 16], strides = [1, 1]} : vector<12x240xbf16> to vector<12x16xbf16>
    %cst_15 = arith.constant dense<0.000000e+00> : vector<12x512xf32>
    %19 = tpu.matmul %18, %17, %cst_15 {dimension_numbers = #tpu.dot_dimension_numbers<[1], [0], [0], [1], [0, 0, 1, 1], [], []>} : vector<12x16xbf16>, vector<16x512xbf16>, vector<12x512xf32> -> vector<12x512xf32>
    %20 = arith.addf %15, %19 : vector<12x512xf32>
    %c1_16 = arith.constant 1 : index
    %c0_17 = arith.constant 0 : index
    %c129_18 = arith.constant 129 : index
    %21 = vector.load %arg1[%c1_16, %c0_17, %c129_18] : memref<2x16x768xbf16, #tpu.memory_space<vmem>>, vector<1x16x512xbf16>
    %22 = vector.shape_cast %21 : vector<1x16x512xbf16> to vector<16x512xbf16>
    %23 = vector.extract_strided_slice %4 {offsets = [0, 48], sizes = [12, 16], strides = [1, 1]} : vector<12x240xbf16> to vector<12x16xbf16>
    %cst_19 = arith.constant dense<0.000000e+00> : vector<12x512xf32>
    %24 = tpu.matmul %23, %22, %cst_19 {dimension_numbers = #tpu.dot_dimension_numbers<[1], [0], [0], [1], [0, 0, 1, 1], [], []>} : vector<12x16xbf16>, vector<16x512xbf16>, vector<12x512xf32> -> vector<12x512xf32>
    %25 = arith.addf %20, %24 : vector<12x512xf32>
    %c0_20 = arith.constant 0 : index
    %c0_21 = arith.constant 0 : index
    %c130 = arith.constant 130 : index
    %26 = vector.load %arg1[%c0_20, %c0_21, %c130] : memref<2x16x768xbf16, #tpu.memory_space<vmem>>, vector<1x16x512xbf16>
    %27 = vector.shape_cast %26 : vector<1x16x512xbf16> to vector<16x512xbf16>
    %28 = vector.extract_strided_slice %4 {offsets = [0, 64], sizes = [12, 16], strides = [1, 1]} : vector<12x240xbf16> to vector<12x16xbf16>
    %cst_22 = arith.constant dense<0.000000e+00> : vector<12x512xf32>
    %29 = tpu.matmul %28, %27, %cst_22 {dimension_numbers = #tpu.dot_dimension_numbers<[1], [0], [0], [1], [0, 0, 1, 1], [], []>} : vector<12x16xbf16>, vector<16x512xbf16>, vector<12x512xf32> -> vector<12x512xf32>
    %30 = arith.addf %25, %29 : vector<12x512xf32>
    %c0_23 = arith.constant 0 : index
    %c0_24 = arith.constant 0 : index
    %c148 = arith.constant 148 : index
    %31 = vector.load %arg1[%c0_23, %c0_24, %c148] : memref<2x16x768xbf16, #tpu.memory_space<vmem>>, vector<1x16x512xbf16>
    %32 = vector.shape_cast %31 : vector<1x16x512xbf16> to vector<16x512xbf16>
    %33 = vector.extract_strided_slice %4 {offsets = [0, 80], sizes = [12, 16], strides = [1, 1]} : vector<12x240xbf16> to vector<12x16xbf16>
    %cst_25 = arith.constant dense<0.000000e+00> : vector<12x512xf32>
    %34 = tpu.matmul %33, %32, %cst_25 {dimension_numbers = #tpu.dot_dimension_numbers<[1], [0], [0], [1], [0, 0, 1, 1], [], []>} : vector<12x16xbf16>, vector<16x512xbf16>, vector<12x512xf32> -> vector<12x512xf32>
    %35 = arith.addf %30, %34 : vector<12x512xf32>
    %c1_26 = arith.constant 1 : index
    %c0_27 = arith.constant 0 : index
    %c148_28 = arith.constant 148 : index
    %36 = vector.load %arg1[%c1_26, %c0_27, %c148_28] : memref<2x16x768xbf16, #tpu.memory_space<vmem>>, vector<1x16x512xbf16>
    %37 = vector.shape_cast %36 : vector<1x16x512xbf16> to vector<16x512xbf16>
    %38 = vector.extract_strided_slice %4 {offsets = [0, 96], sizes = [12, 16], strides = [1, 1]} : vector<12x240xbf16> to vector<12x16xbf16>
    %cst_29 = arith.constant dense<0.000000e+00> : vector<12x512xf32>
    %39 = tpu.matmul %38, %37, %cst_29 {dimension_numbers = #tpu.dot_dimension_numbers<[1], [0], [0], [1], [0, 0, 1, 1], [], []>} : vector<12x16xbf16>, vector<16x512xbf16>, vector<12x512xf32> -> vector<12x512xf32>
    %40 = arith.addf %35, %39 : vector<12x512xf32>
    %c0_30 = arith.constant 0 : index
    %c0_31 = arith.constant 0 : index
    %c149 = arith.constant 149 : index
    %41 = vector.load %arg1[%c0_30, %c0_31, %c149] : memref<2x16x768xbf16, #tpu.memory_space<vmem>>, vector<1x16x512xbf16>
    %42 = vector.shape_cast %41 : vector<1x16x512xbf16> to vector<16x512xbf16>
    %43 = vector.extract_strided_slice %4 {offsets = [0, 112], sizes = [12, 16], strides = [1, 1]} : vector<12x240xbf16> to vector<12x16xbf16>
    %cst_32 = arith.constant dense<0.000000e+00> : vector<12x512xf32>
    %44 = tpu.matmul %43, %42, %cst_32 {dimension_numbers = #tpu.dot_dimension_numbers<[1], [0], [0], [1], [0, 0, 1, 1], [], []>} : vector<12x16xbf16>, vector<16x512xbf16>, vector<12x512xf32> -> vector<12x512xf32>
    %45 = arith.addf %40, %44 : vector<12x512xf32>
    %c1_33 = arith.constant 1 : index
    %c0_34 = arith.constant 0 : index
    %c149_35 = arith.constant 149 : index
    %46 = vector.load %arg1[%c1_33, %c0_34, %c149_35] : memref<2x16x768xbf16, #tpu.memory_space<vmem>>, vector<1x16x512xbf16>
    %47 = vector.shape_cast %46 : vector<1x16x512xbf16> to vector<16x512xbf16>
    %48 = vector.extract_strided_slice %4 {offsets = [0, 128], sizes = [12, 16], strides = [1, 1]} : vector<12x240xbf16> to vector<12x16xbf16>
    %cst_36 = arith.constant dense<0.000000e+00> : vector<12x512xf32>
    %49 = tpu.matmul %48, %47, %cst_36 {dimension_numbers = #tpu.dot_dimension_numbers<[1], [0], [0], [1], [0, 0, 1, 1], [], []>} : vector<12x16xbf16>, vector<16x512xbf16>, vector<12x512xf32> -> vector<12x512xf32>
    %50 = arith.addf %45, %49 : vector<12x512xf32>
    %c0_37 = arith.constant 0 : index
    %c0_38 = arith.constant 0 : index
    %c150 = arith.constant 150 : index
    %51 = vector.load %arg1[%c0_37, %c0_38, %c150] : memref<2x16x768xbf16, #tpu.memory_space<vmem>>, vector<1x16x512xbf16>
    %52 = vector.shape_cast %51 : vector<1x16x512xbf16> to vector<16x512xbf16>
    %53 = vector.extract_strided_slice %4 {offsets = [0, 144], sizes = [12, 16], strides = [1, 1]} : vector<12x240xbf16> to vector<12x16xbf16>
    %cst_39 = arith.constant dense<0.000000e+00> : vector<12x512xf32>
    %54 = tpu.matmul %53, %52, %cst_39 {dimension_numbers = #tpu.dot_dimension_numbers<[1], [0], [0], [1], [0, 0, 1, 1], [], []>} : vector<12x16xbf16>, vector<16x512xbf16>, vector<12x512xf32> -> vector<12x512xf32>
    %55 = arith.addf %50, %54 : vector<12x512xf32>
    %c0_40 = arith.constant 0 : index
    %c0_41 = arith.constant 0 : index
    %c168 = arith.constant 168 : index
    %56 = vector.load %arg1[%c0_40, %c0_41, %c168] : memref<2x16x768xbf16, #tpu.memory_space<vmem>>, vector<1x16x512xbf16>
    %57 = vector.shape_cast %56 : vector<1x16x512xbf16> to vector<16x512xbf16>
    %58 = vector.extract_strided_slice %4 {offsets = [0, 160], sizes = [12, 16], strides = [1, 1]} : vector<12x240xbf16> to vector<12x16xbf16>
    %cst_42 = arith.constant dense<0.000000e+00> : vector<12x512xf32>
    %59 = tpu.matmul %58, %57, %cst_42 {dimension_numbers = #tpu.dot_dimension_numbers<[1], [0], [0], [1], [0, 0, 1, 1], [], []>} : vector<12x16xbf16>, vector<16x512xbf16>, vector<12x512xf32> -> vector<12x512xf32>
    %60 = arith.addf %55, %59 : vector<12x512xf32>
    %c1_43 = arith.constant 1 : index
    %c0_44 = arith.constant 0 : index
    %c168_45 = arith.constant 168 : index
    %61 = vector.load %arg1[%c1_43, %c0_44, %c168_45] : memref<2x16x768xbf16, #tpu.memory_space<vmem>>, vector<1x16x512xbf16>
    %62 = vector.shape_cast %61 : vector<1x16x512xbf16> to vector<16x512xbf16>
    %63 = vector.extract_strided_slice %4 {offsets = [0, 176], sizes = [12, 16], strides = [1, 1]} : vector<12x240xbf16> to vector<12x16xbf16>
    %cst_46 = arith.constant dense<0.000000e+00> : vector<12x512xf32>
    %64 = tpu.matmul %63, %62, %cst_46 {dimension_numbers = #tpu.dot_dimension_numbers<[1], [0], [0], [1], [0, 0, 1, 1], [], []>} : vector<12x16xbf16>, vector<16x512xbf16>, vector<12x512xf32> -> vector<12x512xf32>
    %65 = arith.addf %60, %64 : vector<12x512xf32>
    %c0_47 = arith.constant 0 : index
    %c0_48 = arith.constant 0 : index
    %c169 = arith.constant 169 : index
    %66 = vector.load %arg1[%c0_47, %c0_48, %c169] : memref<2x16x768xbf16, #tpu.memory_space<vmem>>, vector<1x16x512xbf16>
    %67 = vector.shape_cast %66 : vector<1x16x512xbf16> to vector<16x512xbf16>
    %68 = vector.extract_strided_slice %4 {offsets = [0, 192], sizes = [12, 16], strides = [1, 1]} : vector<12x240xbf16> to vector<12x16xbf16>
    %cst_49 = arith.constant dense<0.000000e+00> : vector<12x512xf32>
    %69 = tpu.matmul %68, %67, %cst_49 {dimension_numbers = #tpu.dot_dimension_numbers<[1], [0], [0], [1], [0, 0, 1, 1], [], []>} : vector<12x16xbf16>, vector<16x512xbf16>, vector<12x512xf32> -> vector<12x512xf32>
    %70 = arith.addf %65, %69 : vector<12x512xf32>
    %c1_50 = arith.constant 1 : index
    %c0_51 = arith.constant 0 : index
    %c169_52 = arith.constant 169 : index
    %71 = vector.load %arg1[%c1_50, %c0_51, %c169_52] : memref<2x16x768xbf16, #tpu.memory_space<vmem>>, vector<1x16x512xbf16>
    %72 = vector.shape_cast %71 : vector<1x16x512xbf16> to vector<16x512xbf16>
    %73 = vector.extract_strided_slice %4 {offsets = [0, 208], sizes = [12, 16], strides = [1, 1]} : vector<12x240xbf16> to vector<12x16xbf16>
    %cst_53 = arith.constant dense<0.000000e+00> : vector<12x512xf32>
    %74 = tpu.matmul %73, %72, %cst_53 {dimension_numbers = #tpu.dot_dimension_numbers<[1], [0], [0], [1], [0, 0, 1, 1], [], []>} : vector<12x16xbf16>, vector<16x512xbf16>, vector<12x512xf32> -> vector<12x512xf32>
    %75 = arith.addf %70, %74 : vector<12x512xf32>
    %c0_54 = arith.constant 0 : index
    %c0_55 = arith.constant 0 : index
    %c170 = arith.constant 170 : index
    %76 = vector.load %arg1[%c0_54, %c0_55, %c170] : memref<2x16x768xbf16, #tpu.memory_space<vmem>>, vector<1x16x512xbf16>
    %77 = vector.shape_cast %76 : vector<1x16x512xbf16> to vector<16x512xbf16>
    %78 = vector.extract_strided_slice %4 {offsets = [0, 224], sizes = [12, 16], strides = [1, 1]} : vector<12x240xbf16> to vector<12x16xbf16>
    %cst_56 = arith.constant dense<0.000000e+00> : vector<12x512xf32>
    %79 = tpu.matmul %78, %77, %cst_56 {dimension_numbers = #tpu.dot_dimension_numbers<[1], [0], [0], [1], [0, 0, 1, 1], [], []>} : vector<12x16xbf16>, vector<16x512xbf16>, vector<12x512xf32> -> vector<12x512xf32>
    %80 = arith.addf %75, %79 : vector<12x512xf32>
    %c0_57 = arith.constant 0 : index
    %c0_58 = arith.constant 0 : index
    %81 = vector.load %arg3[%c0_57, %c0_58] : memref<12x1xf32, #tpu.memory_space<vmem>>, vector<12x1xf32>
    %82 = vector.broadcast %81 : vector<12x1xf32> to vector<12x512xf32>
    %83 = arith.addf %80, %82 : vector<12x512xf32>
    %cst_59 = arith.constant 5.000000e-01 : f32
    %84 = vector.broadcast %cst_59 : f32 to vector<12x512xf32>
    %85 = arith.mulf %84, %83 : vector<12x512xf32>
    %86 = math.tanh %85 : vector<12x512xf32>
    %cst_60 = arith.constant 5.000000e-01 : f32
    %87 = vector.broadcast %cst_60 : f32 to vector<12x512xf32>
    %88 = arith.mulf %87, %86 : vector<12x512xf32>
    %cst_61 = arith.constant 5.000000e-01 : f32
    %89 = vector.broadcast %cst_61 : f32 to vector<12x512xf32>
    %90 = arith.addf %88, %89 : vector<12x512xf32>
    %c0_62 = arith.constant 0 : index
    %c0_63 = arith.constant 0 : index
    %91 = vector.load %arg4[%c0_62, %c0_63] : memref<1x512xf32, #tpu.memory_space<vmem>>, vector<1x512xf32>
    %92 = vector.broadcast %91 : vector<1x512xf32> to vector<12x512xf32>
    %93 = arith.mulf %90, %92 : vector<12x512xf32>
    %94 = arith.truncf %93 : vector<12x512xf32> to vector<12x512xbf16>
    %c0_64 = arith.constant 0 : index
    %c128_65 = arith.constant 128 : index
    %95 = vector.load %arg12[%c0_64, %c128_65] : memref<16x768xbf16, #tpu.memory_space<vmem>>, vector<12x512xbf16>
    tpu.vector_store %arg12[%c0_64, %c128_65], %94 {strides = array<i32>} : memref<16x768xbf16, #tpu.memory_space<vmem>>, vector<12x512xbf16>,
    %c0_66 = arith.constant 0 : index
    %c0_67 = arith.constant 0 : index
    %96 = vector.load %arg5[%c0_66, %c0_67] : memref<12x400xbf16, #tpu.memory_space<vmem>>, vector<12x400xbf16>
    %cst_68 = arith.constant 0.000000e+00 : f32
    %97 = vector.broadcast %cst_68 : f32 to vector<12x512xf32>
    %c0_69 = arith.constant 0 : index
    %c86 = arith.constant 86 : index
    %98 = vector.load %arg12[%c0_69, %c86] : memref<16x768xbf16, #tpu.memory_space<vmem>>, vector<16x512xbf16>
    %99 = vector.extract_strided_slice %96 {offsets = [0, 0], sizes = [12, 16], strides = [1, 1]} : vector<12x400xbf16> to vector<12x16xbf16>
    %cst_70 = arith.constant dense<0.000000e+00> : vector<12x512xf32>
    %100 = tpu.matmul %99, %98, %cst_70 {dimension_numbers = #tpu.dot_dimension_numbers<[1], [0], [0], [1], [0, 0, 1, 1], [], []>} : vector<12x16xbf16>, vector<16x512xbf16>, vector<12x512xf32> -> vector<12x512xf32>
    %101 = arith.addf %97, %100 : vector<12x512xf32>
    %c0_71 = arith.constant 0 : index
    %c87 = arith.constant 87 : index
    %102 = vector.load %arg12[%c0_71, %c87] : memref<16x768xbf16, #tpu.memory_space<vmem>>, vector<16x512xbf16>
    %103 = vector.extract_strided_slice %96 {offsets = [0, 16], sizes = [12, 16], strides = [1, 1]} : vector<12x400xbf16> to vector<12x16xbf16>
    %cst_72 = arith.constant dense<0.000000e+00> : vector<12x512xf32>
    %104 = tpu.matmul %103, %102, %cst_72 {dimension_numbers = #tpu.dot_dimension_numbers<[1], [0], [0], [1], [0, 0, 1, 1], [], []>} : vector<12x16xbf16>, vector<16x512xbf16>, vector<12x512xf32> -> vector<12x512xf32>
    %105 = arith.addf %101, %104 : vector<12x512xf32>
    %c0_73 = arith.constant 0 : index
    %c88 = arith.constant 88 : index
    %106 = vector.load %arg12[%c0_73, %c88] : memref<16x768xbf16, #tpu.memory_space<vmem>>, vector<16x512xbf16>
    %107 = vector.extract_strided_slice %96 {offsets = [0, 32], sizes = [12, 16], strides = [1, 1]} : vector<12x400xbf16> to vector<12x16xbf16>
    %cst_74 = arith.constant dense<0.000000e+00> : vector<12x512xf32>
    %108 = tpu.matmul %107, %106, %cst_74 {dimension_numbers = #tpu.dot_dimension_numbers<[1], [0], [0], [1], [0, 0, 1, 1], [], []>} : vector<12x16xbf16>, vector<16x512xbf16>, vector<12x512xf32> -> vector<12x512xf32>
    %109 = arith.addf %105, %108 : vector<12x512xf32>
    %c0_75 = arith.constant 0 : index
    %c89 = arith.constant 89 : index
    %110 = vector.load %arg12[%c0_75, %c89] : memref<16x768xbf16, #tpu.memory_space<vmem>>, vector<16x512xbf16>
    %111 = vector.extract_strided_slice %96 {offsets = [0, 48], sizes = [12, 16], strides = [1, 1]} : vector<12x400xbf16> to vector<12x16xbf16>
    %cst_76 = arith.constant dense<0.000000e+00> : vector<12x512xf32>
    %112 = tpu.matmul %111, %110, %cst_76 {dimension_numbers = #tpu.dot_dimension_numbers<[1], [0], [0], [1], [0, 0, 1, 1], [], []>} : vector<12x16xbf16>, vector<16x512xbf16>, vector<12x512xf32> -> vector<12x512xf32>
    %113 = arith.addf %109, %112 : vector<12x512xf32>
    %c0_77 = arith.constant 0 : index
    %c90 = arith.constant 90 : index
    %114 = vector.load %arg12[%c0_77, %c90] : memref<16x768xbf16, #tpu.memory_space<vmem>>, vector<16x512xbf16>
    %115 = vector.extract_strided_slice %96 {offsets = [0, 64], sizes = [12, 16], strides = [1, 1]} : vector<12x400xbf16> to vector<12x16xbf16>
    %cst_78 = arith.constant dense<0.000000e+00> : vector<12x512xf32>
    %116 = tpu.matmul %115, %114, %cst_78 {dimension_numbers = #tpu.dot_dimension_numbers<[1], [0], [0], [1], [0, 0, 1, 1], [], []>} : vector<12x16xbf16>, vector<16x512xbf16>, vector<12x512xf32> -> vector<12x512xf32>
    %117 = arith.addf %113, %116 : vector<12x512xf32>
    %c0_79 = arith.constant 0 : index
    %c106 = arith.constant 106 : index
    %118 = vector.load %arg12[%c0_79, %c106] : memref<16x768xbf16, #tpu.memory_space<vmem>>, vector<16x512xbf16>
    %119 = vector.extract_strided_slice %96 {offsets = [0, 80], sizes = [12, 16], strides = [1, 1]} : vector<12x400xbf16> to vector<12x16xbf16>
    %cst_80 = arith.constant dense<0.000000e+00> : vector<12x512xf32>
    %120 = tpu.matmul %119, %118, %cst_80 {dimension_numbers = #tpu.dot_dimension_numbers<[1], [0], [0], [1], [0, 0, 1, 1], [], []>} : vector<12x16xbf16>, vector<16x512xbf16>, vector<12x512xf32> -> vector<12x512xf32>
    %121 = arith.addf %117, %120 : vector<12x512xf32>
    %c0_81 = arith.constant 0 : index
    %c107 = arith.constant 107 : index
    %122 = vector.load %arg12[%c0_81, %c107] : memref<16x768xbf16, #tpu.memory_space<vmem>>, vector<16x512xbf16>
    %123 = vector.extract_strided_slice %96 {offsets = [0, 96], sizes = [12, 16], strides = [1, 1]} : vector<12x400xbf16> to vector<12x16xbf16>
    %cst_82 = arith.constant dense<0.000000e+00> : vector<12x512xf32>
    %124 = tpu.matmul %123, %122, %cst_82 {dimension_numbers = #tpu.dot_dimension_numbers<[1], [0], [0], [1], [0, 0, 1, 1], [], []>} : vector<12x16xbf16>, vector<16x512xbf16>, vector<12x512xf32> -> vector<12x512xf32>
    %125 = arith.addf %121, %124 : vector<12x512xf32>
    %c0_83 = arith.constant 0 : index
    %c108 = arith.constant 108 : index
    %126 = vector.load %arg12[%c0_83, %c108] : memref<16x768xbf16, #tpu.memory_space<vmem>>, vector<16x512xbf16>
    %127 = vector.extract_strided_slice %96 {offsets = [0, 112], sizes = [12, 16], strides = [1, 1]} : vector<12x400xbf16> to vector<12x16xbf16>
    %cst_84 = arith.constant dense<0.000000e+00> : vector<12x512xf32>
    %128 = tpu.matmul %127, %126, %cst_84 {dimension_numbers = #tpu.dot_dimension_numbers<[1], [0], [0], [1], [0, 0, 1, 1], [], []>} : vector<12x16xbf16>, vector<16x512xbf16>, vector<12x512xf32> -> vector<12x512xf32>
    %129 = arith.addf %125, %128 : vector<12x512xf32>
    %c0_85 = arith.constant 0 : index
    %c109 = arith.constant 109 : index
    %130 = vector.load %arg12[%c0_85, %c109] : memref<16x768xbf16, #tpu.memory_space<vmem>>, vector<16x512xbf16>
    %131 = vector.extract_strided_slice %96 {offsets = [0, 128], sizes = [12, 16], strides = [1, 1]} : vector<12x400xbf16> to vector<12x16xbf16>
    %cst_86 = arith.constant dense<0.000000e+00> : vector<12x512xf32>
    %132 = tpu.matmul %131, %130, %cst_86 {dimension_numbers = #tpu.dot_dimension_numbers<[1], [0], [0], [1], [0, 0, 1, 1], [], []>} : vector<12x16xbf16>, vector<16x512xbf16>, vector<12x512xf32> -> vector<12x512xf32>
    %133 = arith.addf %129, %132 : vector<12x512xf32>
    %c0_87 = arith.constant 0 : index
    %c110 = arith.constant 110 : index
    %134 = vector.load %arg12[%c0_87, %c110] : memref<16x768xbf16, #tpu.memory_space<vmem>>, vector<16x512xbf16>
    %135 = vector.extract_strided_slice %96 {offsets = [0, 144], sizes = [12, 16], strides = [1, 1]} : vector<12x400xbf16> to vector<12x16xbf16>
    %cst_88 = arith.constant dense<0.000000e+00> : vector<12x512xf32>
    %136 = tpu.matmul %135, %134, %cst_88 {dimension_numbers = #tpu.dot_dimension_numbers<[1], [0], [0], [1], [0, 0, 1, 1], [], []>} : vector<12x16xbf16>, vector<16x512xbf16>, vector<12x512xf32> -> vector<12x512xf32>
    %137 = arith.addf %133, %136 : vector<12x512xf32>
    %c0_89 = arith.constant 0 : index
    %c126 = arith.constant 126 : index
    %138 = vector.load %arg12[%c0_89, %c126] : memref<16x768xbf16, #tpu.memory_space<vmem>>, vector<16x512xbf16>
    %139 = vector.extract_strided_slice %96 {offsets = [0, 160], sizes = [12, 16], strides = [1, 1]} : vector<12x400xbf16> to vector<12x16xbf16>
    %cst_90 = arith.constant dense<0.000000e+00> : vector<12x512xf32>
    %140 = tpu.matmul %139, %138, %cst_90 {dimension_numbers = #tpu.dot_dimension_numbers<[1], [0], [0], [1], [0, 0, 1, 1], [], []>} : vector<12x16xbf16>, vector<16x512xbf16>, vector<12x512xf32> -> vector<12x512xf32>
    %141 = arith.addf %137, %140 : vector<12x512xf32>
    %c0_91 = arith.constant 0 : index
    %c127 = arith.constant 127 : index
    %142 = vector.load %arg12[%c0_91, %c127] : memref<16x768xbf16, #tpu.memory_space<vmem>>, vector<16x512xbf16>
    %143 = vector.extract_strided_slice %96 {offsets = [0, 176], sizes = [12, 16], strides = [1, 1]} : vector<12x400xbf16> to vector<12x16xbf16>
    %cst_92 = arith.constant dense<0.000000e+00> : vector<12x512xf32>
    %144 = tpu.matmul %143, %142, %cst_92 {dimension_numbers = #tpu.dot_dimension_numbers<[1], [0], [0], [1], [0, 0, 1, 1], [], []>} : vector<12x16xbf16>, vector<16x512xbf16>, vector<12x512xf32> -> vector<12x512xf32>
    %145 = arith.addf %141, %144 : vector<12x512xf32>
    %c0_93 = arith.constant 0 : index
    %c128_94 = arith.constant 128 : index
    %146 = vector.load %arg12[%c0_93, %c128_94] : memref<16x768xbf16, #tpu.memory_space<vmem>>, vector<16x512xbf16>
    %147 = vector.extract_strided_slice %96 {offsets = [0, 192], sizes = [12, 16], strides = [1, 1]} : vector<12x400xbf16> to vector<12x16xbf16>
    %cst_95 = arith.constant dense<0.000000e+00> : vector<12x512xf32>
    %148 = tpu.matmul %147, %146, %cst_95 {dimension_numbers = #tpu.dot_dimension_numbers<[1], [0], [0], [1], [0, 0, 1, 1], [], []>} : vector<12x16xbf16>, vector<16x512xbf16>, vector<12x512xf32> -> vector<12x512xf32>
    %149 = arith.addf %145, %148 : vector<12x512xf32>
    %c0_96 = arith.constant 0 : index
    %c129_97 = arith.constant 129 : index
    %150 = vector.load %arg12[%c0_96, %c129_97] : memref<16x768xbf16, #tpu.memory_space<vmem>>, vector<16x512xbf16>
    %151 = vector.extract_strided_slice %96 {offsets = [0, 208], sizes = [12, 16], strides = [1, 1]} : vector<12x400xbf16> to vector<12x16xbf16>
    %cst_98 = arith.constant dense<0.000000e+00> : vector<12x512xf32>
    %152 = tpu.matmul %151, %150, %cst_98 {dimension_numbers = #tpu.dot_dimension_numbers<[1], [0], [0], [1], [0, 0, 1, 1], [], []>} : vector<12x16xbf16>, vector<16x512xbf16>, vector<12x512xf32> -> vector<12x512xf32>
    %153 = arith.addf %149, %152 : vector<12x512xf32>
    %c0_99 = arith.constant 0 : index
    %c130_100 = arith.constant 130 : index
    %154 = vector.load %arg12[%c0_99, %c130_100] : memref<16x768xbf16, #tpu.memory_space<vmem>>, vector<16x512xbf16>
    %155 = vector.extract_strided_slice %96 {offsets = [0, 224], sizes = [12, 16], strides = [1, 1]} : vector<12x400xbf16> to vector<12x16xbf16>
    %cst_101 = arith.constant dense<0.000000e+00> : vector<12x512xf32>
    %156 = tpu.matmul %155, %154, %cst_101 {dimension_numbers = #tpu.dot_dimension_numbers<[1], [0], [0], [1], [0, 0, 1, 1], [], []>} : vector<12x16xbf16>, vector<16x512xbf16>, vector<12x512xf32> -> vector<12x512xf32>
    %157 = arith.addf %153, %156 : vector<12x512xf32>
    %c0_102 = arith.constant 0 : index
    %c146 = arith.constant 146 : index
    %158 = vector.load %arg12[%c0_102, %c146] : memref<16x768xbf16, #tpu.memory_space<vmem>>, vector<16x512xbf16>
    %159 = vector.extract_strided_slice %96 {offsets = [0, 240], sizes = [12, 16], strides = [1, 1]} : vector<12x400xbf16> to vector<12x16xbf16>
    %cst_103 = arith.constant dense<0.000000e+00> : vector<12x512xf32>
    %160 = tpu.matmul %159, %158, %cst_103 {dimension_numbers = #tpu.dot_dimension_numbers<[1], [0], [0], [1], [0, 0, 1, 1], [], []>} : vector<12x16xbf16>, vector<16x512xbf16>, vector<12x512xf32> -> vector<12x512xf32>
    %161 = arith.addf %157, %160 : vector<12x512xf32>
    %c0_104 = arith.constant 0 : index
    %c147 = arith.constant 147 : index
    %162 = vector.load %arg12[%c0_104, %c147] : memref<16x768xbf16, #tpu.memory_space<vmem>>, vector<16x512xbf16>
    %163 = vector.extract_strided_slice %96 {offsets = [0, 256], sizes = [12, 16], strides = [1, 1]} : vector<12x400xbf16> to vector<12x16xbf16>
    %cst_105 = arith.constant dense<0.000000e+00> : vector<12x512xf32>
    %164 = tpu.matmul %163, %162, %cst_105 {dimension_numbers = #tpu.dot_dimension_numbers<[1], [0], [0], [1], [0, 0, 1, 1], [], []>} : vector<12x16xbf16>, vector<16x512xbf16>, vector<12x512xf32> -> vector<12x512xf32>
    %165 = arith.addf %161, %164 : vector<12x512xf32>
    %c0_106 = arith.constant 0 : index
    %c148_107 = arith.constant 148 : index
    %166 = vector.load %arg12[%c0_106, %c148_107] : memref<16x768xbf16, #tpu.memory_space<vmem>>, vector<16x512xbf16>
    %167 = vector.extract_strided_slice %96 {offsets = [0, 272], sizes = [12, 16], strides = [1, 1]} : vector<12x400xbf16> to vector<12x16xbf16>
    %cst_108 = arith.constant dense<0.000000e+00> : vector<12x512xf32>
    %168 = tpu.matmul %167, %166, %cst_108 {dimension_numbers = #tpu.dot_dimension_numbers<[1], [0], [0], [1], [0, 0, 1, 1], [], []>} : vector<12x16xbf16>, vector<16x512xbf16>, vector<12x512xf32> -> vector<12x512xf32>
    %169 = arith.addf %165, %168 : vector<12x512xf32>
    %c0_109 = arith.constant 0 : index
    %c149_110 = arith.constant 149 : index
    %170 = vector.load %arg12[%c0_109, %c149_110] : memref<16x768xbf16, #tpu.memory_space<vmem>>, vector<16x512xbf16>
    %171 = vector.extract_strided_slice %96 {offsets = [0, 288], sizes = [12, 16], strides = [1, 1]} : vector<12x400xbf16> to vector<12x16xbf16>
    %cst_111 = arith.constant dense<0.000000e+00> : vector<12x512xf32>
    %172 = tpu.matmul %171, %170, %cst_111 {dimension_numbers = #tpu.dot_dimension_numbers<[1], [0], [0], [1], [0, 0, 1, 1], [], []>} : vector<12x16xbf16>, vector<16x512xbf16>, vector<12x512xf32> -> vector<12x512xf32>
    %173 = arith.addf %169, %172 : vector<12x512xf32>
    %c0_112 = arith.constant 0 : index
    %c150_113 = arith.constant 150 : index
    %174 = vector.load %arg12[%c0_112, %c150_113] : memref<16x768xbf16, #tpu.memory_space<vmem>>, vector<16x512xbf16>
    %175 = vector.extract_strided_slice %96 {offsets = [0, 304], sizes = [12, 16], strides = [1, 1]} : vector<12x400xbf16> to vector<12x16xbf16>
    %cst_114 = arith.constant dense<0.000000e+00> : vector<12x512xf32>
    %176 = tpu.matmul %175, %174, %cst_114 {dimension_numbers = #tpu.dot_dimension_numbers<[1], [0], [0], [1], [0, 0, 1, 1], [], []>} : vector<12x16xbf16>, vector<16x512xbf16>, vector<12x512xf32> -> vector<12x512xf32>
    %177 = arith.addf %173, %176 : vector<12x512xf32>
    %c0_115 = arith.constant 0 : index
    %c166 = arith.constant 166 : index
    %178 = vector.load %arg12[%c0_115, %c166] : memref<16x768xbf16, #tpu.memory_space<vmem>>, vector<16x512xbf16>
    %179 = vector.extract_strided_slice %96 {offsets = [0, 320], sizes = [12, 16], strides = [1, 1]} : vector<12x400xbf16> to vector<12x16xbf16>
    %cst_116 = arith.constant dense<0.000000e+00> : vector<12x512xf32>
    %180 = tpu.matmul %179, %178, %cst_116 {dimension_numbers = #tpu.dot_dimension_numbers<[1], [0], [0], [1], [0, 0, 1, 1], [], []>} : vector<12x16xbf16>, vector<16x512xbf16>, vector<12x512xf32> -> vector<12x512xf32>
    %181 = arith.addf %177, %180 : vector<12x512xf32>
    %c0_117 = arith.constant 0 : index
    %c167 = arith.constant 167 : index
    %182 = vector.load %arg12[%c0_117, %c167] : memref<16x768xbf16, #tpu.memory_space<vmem>>, vector<16x512xbf16>
    %183 = vector.extract_strided_slice %96 {offsets = [0, 336], sizes = [12, 16], strides = [1, 1]} : vector<12x400xbf16> to vector<12x16xbf16>
    %cst_118 = arith.constant dense<0.000000e+00> : vector<12x512xf32>
    %184 = tpu.matmul %183, %182, %cst_118 {dimension_numbers = #tpu.dot_dimension_numbers<[1], [0], [0], [1], [0, 0, 1, 1], [], []>} : vector<12x16xbf16>, vector<16x512xbf16>, vector<12x512xf32> -> vector<12x512xf32>
    %185 = arith.addf %181, %184 : vector<12x512xf32>
    %c0_119 = arith.constant 0 : index
    %c168_120 = arith.constant 168 : index
    %186 = vector.load %arg12[%c0_119, %c168_120] : memref<16x768xbf16, #tpu.memory_space<vmem>>, vector<16x512xbf16>
    %187 = vector.extract_strided_slice %96 {offsets = [0, 352], sizes = [12, 16], strides = [1, 1]} : vector<12x400xbf16> to vector<12x16xbf16>
    %cst_121 = arith.constant dense<0.000000e+00> : vector<12x512xf32>
    %188 = tpu.matmul %187, %186, %cst_121 {dimension_numbers = #tpu.dot_dimension_numbers<[1], [0], [0], [1], [0, 0, 1, 1], [], []>} : vector<12x16xbf16>, vector<16x512xbf16>, vector<12x512xf32> -> vector<12x512xf32>
    %189 = arith.addf %185, %188 : vector<12x512xf32>
    %c0_122 = arith.constant 0 : index
    %c169_123 = arith.constant 169 : index
    %190 = vector.load %arg12[%c0_122, %c169_123] : memref<16x768xbf16, #tpu.memory_space<vmem>>, vector<16x512xbf16>
    %191 = vector.extract_strided_slice %96 {offsets = [0, 368], sizes = [12, 16], strides = [1, 1]} : vector<12x400xbf16> to vector<12x16xbf16>
    %cst_124 = arith.constant dense<0.000000e+00> : vector<12x512xf32>
    %192 = tpu.matmul %191, %190, %cst_124 {dimension_numbers = #tpu.dot_dimension_numbers<[1], [0], [0], [1], [0, 0, 1, 1], [], []>} : vector<12x16xbf16>, vector<16x512xbf16>, vector<12x512xf32> -> vector<12x512xf32>
    %193 = arith.addf %189, %192 : vector<12x512xf32>
    %c0_125 = arith.constant 0 : index
    %c170_126 = arith.constant 170 : index
    %194 = vector.load %arg12[%c0_125, %c170_126] : memref<16x768xbf16, #tpu.memory_space<vmem>>, vector<16x512xbf16>
    %195 = vector.extract_strided_slice %96 {offsets = [0, 384], sizes = [12, 16], strides = [1, 1]} : vector<12x400xbf16> to vector<12x16xbf16>
    %cst_127 = arith.constant dense<0.000000e+00> : vector<12x512xf32>
    %196 = tpu.matmul %195, %194, %cst_127 {dimension_numbers = #tpu.dot_dimension_numbers<[1], [0], [0], [1], [0, 0, 1, 1], [], []>} : vector<12x16xbf16>, vector<16x512xbf16>, vector<12x512xf32> -> vector<12x512xf32>
    %197 = arith.addf %193, %196 : vector<12x512xf32>
    %c0_128 = arith.constant 0 : index
    %c0_129 = arith.constant 0 : index
    %198 = vector.load %arg6[%c0_128, %c0_129] : memref<12x1xf32, #tpu.memory_space<vmem>>, vector<12x1xf32>
    %199 = vector.broadcast %198 : vector<12x1xf32> to vector<12x512xf32>
    %200 = arith.addf %197, %199 : vector<12x512xf32>
    %cst_130 = arith.constant 5.000000e-01 : f32
    %201 = vector.broadcast %cst_130 : f32 to vector<12x512xf32>
    %202 = arith.mulf %201, %200 : vector<12x512xf32>
    %203 = math.tanh %202 : vector<12x512xf32>
    %cst_131 = arith.constant 5.000000e-01 : f32
    %204 = vector.broadcast %cst_131 : f32 to vector<12x512xf32>
    %205 = arith.mulf %204, %203 : vector<12x512xf32>
    %cst_132 = arith.constant 5.000000e-01 : f32
    %206 = vector.broadcast %cst_132 : f32 to vector<12x512xf32>
    %207 = arith.addf %205, %206 : vector<12x512xf32>
    %c0_133 = arith.constant 0 : index
    %c0_134 = arith.constant 0 : index
    %208 = vector.load %arg7[%c0_133, %c0_134] : memref<1x512xf32, #tpu.memory_space<vmem>>, vector<1x512xf32>
    %209 = vector.broadcast %208 : vector<1x512xf32> to vector<12x512xf32>
    %210 = arith.mulf %207, %209 : vector<12x512xf32>
    %211 = arith.truncf %210 : vector<12x512xf32> to vector<12x512xbf16>
    %c0_135 = arith.constant 0 : index
    %c128_136 = arith.constant 128 : index
    %212 = vector.load %arg13[%c0_135, %c128_136] : memref<16x768xbf16, #tpu.memory_space<vmem>>, vector<12x512xbf16>
    tpu.vector_store %arg13[%c0_135, %c128_136], %211 {strides = array<i32>} : memref<16x768xbf16, #tpu.memory_space<vmem>>, vector<12x512xbf16>,
    %c0_137 = arith.constant 0 : index
    %c0_138 = arith.constant 0 : index
    %213 = vector.load %arg8[%c0_137, %c0_138] : memref<12x400xbf16, #tpu.memory_space<vmem>>, vector<12x400xbf16>
    %cst_139 = arith.constant 0.000000e+00 : f32
    %214 = vector.broadcast %cst_139 : f32 to vector<12x512xf32>
    %c0_140 = arith.constant 0 : index
    %c44 = arith.constant 44 : index
    %215 = vector.load %arg13[%c0_140, %c44] : memref<16x768xbf16, #tpu.memory_space<vmem>>, vector<16x512xbf16>
    %216 = vector.extract_strided_slice %213 {offsets = [0, 0], sizes = [12, 16], strides = [1, 1]} : vector<12x400xbf16> to vector<12x16xbf16>
    %cst_141 = arith.constant dense<0.000000e+00> : vector<12x512xf32>
    %217 = tpu.matmul %216, %215, %cst_141 {dimension_numbers = #tpu.dot_dimension_numbers<[1], [0], [0], [1], [0, 0, 1, 1], [], []>} : vector<12x16xbf16>, vector<16x512xbf16>, vector<12x512xf32> -> vector<12x512xf32>
    %218 = arith.addf %214, %217 : vector<12x512xf32>
    %c0_142 = arith.constant 0 : index
    %c46 = arith.constant 46 : index
    %219 = vector.load %arg13[%c0_142, %c46] : memref<16x768xbf16, #tpu.memory_space<vmem>>, vector<16x512xbf16>
    %220 = vector.extract_strided_slice %213 {offsets = [0, 16], sizes = [12, 16], strides = [1, 1]} : vector<12x400xbf16> to vector<12x16xbf16>
    %cst_143 = arith.constant dense<0.000000e+00> : vector<12x512xf32>
    %221 = tpu.matmul %220, %219, %cst_143 {dimension_numbers = #tpu.dot_dimension_numbers<[1], [0], [0], [1], [0, 0, 1, 1], [], []>} : vector<12x16xbf16>, vector<16x512xbf16>, vector<12x512xf32> -> vector<12x512xf32>
    %222 = arith.addf %218, %221 : vector<12x512xf32>
    %c0_144 = arith.constant 0 : index
    %c48 = arith.constant 48 : index
    %223 = vector.load %arg13[%c0_144, %c48] : memref<16x768xbf16, #tpu.memory_space<vmem>>, vector<16x512xbf16>
    %224 = vector.extract_strided_slice %213 {offsets = [0, 32], sizes = [12, 16], strides = [1, 1]} : vector<12x400xbf16> to vector<12x16xbf16>
    %cst_145 = arith.constant dense<0.000000e+00> : vector<12x512xf32>
    %225 = tpu.matmul %224, %223, %cst_145 {dimension_numbers = #tpu.dot_dimension_numbers<[1], [0], [0], [1], [0, 0, 1, 1], [], []>} : vector<12x16xbf16>, vector<16x512xbf16>, vector<12x512xf32> -> vector<12x512xf32>
    %226 = arith.addf %222, %225 : vector<12x512xf32>
    %c0_146 = arith.constant 0 : index
    %c50 = arith.constant 50 : index
    %227 = vector.load %arg13[%c0_146, %c50] : memref<16x768xbf16, #tpu.memory_space<vmem>>, vector<16x512xbf16>
    %228 = vector.extract_strided_slice %213 {offsets = [0, 48], sizes = [12, 16], strides = [1, 1]} : vector<12x400xbf16> to vector<12x16xbf16>
    %cst_147 = arith.constant dense<0.000000e+00> : vector<12x512xf32>
    %229 = tpu.matmul %228, %227, %cst_147 {dimension_numbers = #tpu.dot_dimension_numbers<[1], [0], [0], [1], [0, 0, 1, 1], [], []>} : vector<12x16xbf16>, vector<16x512xbf16>, vector<12x512xf32> -> vector<12x512xf32>
    %230 = arith.addf %226, %229 : vector<12x512xf32>
    %c0_148 = arith.constant 0 : index
    %c52 = arith.constant 52 : index
    %231 = vector.load %arg13[%c0_148, %c52] : memref<16x768xbf16, #tpu.memory_space<vmem>>, vector<16x512xbf16>
    %232 = vector.extract_strided_slice %213 {offsets = [0, 64], sizes = [12, 16], strides = [1, 1]} : vector<12x400xbf16> to vector<12x16xbf16>
    %cst_149 = arith.constant dense<0.000000e+00> : vector<12x512xf32>
    %233 = tpu.matmul %232, %231, %cst_149 {dimension_numbers = #tpu.dot_dimension_numbers<[1], [0], [0], [1], [0, 0, 1, 1], [], []>} : vector<12x16xbf16>, vector<16x512xbf16>, vector<12x512xf32> -> vector<12x512xf32>
    %234 = arith.addf %230, %233 : vector<12x512xf32>
    %c0_150 = arith.constant 0 : index
    %c84 = arith.constant 84 : index
    %235 = vector.load %arg13[%c0_150, %c84] : memref<16x768xbf16, #tpu.memory_space<vmem>>, vector<16x512xbf16>
    %236 = vector.extract_strided_slice %213 {offsets = [0, 80], sizes = [12, 16], strides = [1, 1]} : vector<12x400xbf16> to vector<12x16xbf16>
    %cst_151 = arith.constant dense<0.000000e+00> : vector<12x512xf32>
    %237 = tpu.matmul %236, %235, %cst_151 {dimension_numbers = #tpu.dot_dimension_numbers<[1], [0], [0], [1], [0, 0, 1, 1], [], []>} : vector<12x16xbf16>, vector<16x512xbf16>, vector<12x512xf32> -> vector<12x512xf32>
    %238 = arith.addf %234, %237 : vector<12x512xf32>
    %c0_152 = arith.constant 0 : index
    %c86_153 = arith.constant 86 : index
    %239 = vector.load %arg13[%c0_152, %c86_153] : memref<16x768xbf16, #tpu.memory_space<vmem>>, vector<16x512xbf16>
    %240 = vector.extract_strided_slice %213 {offsets = [0, 96], sizes = [12, 16], strides = [1, 1]} : vector<12x400xbf16> to vector<12x16xbf16>
    %cst_154 = arith.constant dense<0.000000e+00> : vector<12x512xf32>
    %241 = tpu.matmul %240, %239, %cst_154 {dimension_numbers = #tpu.dot_dimension_numbers<[1], [0], [0], [1], [0, 0, 1, 1], [], []>} : vector<12x16xbf16>, vector<16x512xbf16>, vector<12x512xf32> -> vector<12x512xf32>
    %242 = arith.addf %238, %241 : vector<12x512xf32>
    %c0_155 = arith.constant 0 : index
    %c88_156 = arith.constant 88 : index
    %243 = vector.load %arg13[%c0_155, %c88_156] : memref<16x768xbf16, #tpu.memory_space<vmem>>, vector<16x512xbf16>
    %244 = vector.extract_strided_slice %213 {offsets = [0, 112], sizes = [12, 16], strides = [1, 1]} : vector<12x400xbf16> to vector<12x16xbf16>
    %cst_157 = arith.constant dense<0.000000e+00> : vector<12x512xf32>
    %245 = tpu.matmul %244, %243, %cst_157 {dimension_numbers = #tpu.dot_dimension_numbers<[1], [0], [0], [1], [0, 0, 1, 1], [], []>} : vector<12x16xbf16>, vector<16x512xbf16>, vector<12x512xf32> -> vector<12x512xf32>
    %246 = arith.addf %242, %245 : vector<12x512xf32>
    %c0_158 = arith.constant 0 : index
    %c90_159 = arith.constant 90 : index
    %247 = vector.load %arg13[%c0_158, %c90_159] : memref<16x768xbf16, #tpu.memory_space<vmem>>, vector<16x512xbf16>
    %248 = vector.extract_strided_slice %213 {offsets = [0, 128], sizes = [12, 16], strides = [1, 1]} : vector<12x400xbf16> to vector<12x16xbf16>
    %cst_160 = arith.constant dense<0.000000e+00> : vector<12x512xf32>
    %249 = tpu.matmul %248, %247, %cst_160 {dimension_numbers = #tpu.dot_dimension_numbers<[1], [0], [0], [1], [0, 0, 1, 1], [], []>} : vector<12x16xbf16>, vector<16x512xbf16>, vector<12x512xf32> -> vector<12x512xf32>
    %250 = arith.addf %246, %249 : vector<12x512xf32>
    %c0_161 = arith.constant 0 : index
    %c92 = arith.constant 92 : index
    %251 = vector.load %arg13[%c0_161, %c92] : memref<16x768xbf16, #tpu.memory_space<vmem>>, vector<16x512xbf16>
    %252 = vector.extract_strided_slice %213 {offsets = [0, 144], sizes = [12, 16], strides = [1, 1]} : vector<12x400xbf16> to vector<12x16xbf16>
    %cst_162 = arith.constant dense<0.000000e+00> : vector<12x512xf32>
    %253 = tpu.matmul %252, %251, %cst_162 {dimension_numbers = #tpu.dot_dimension_numbers<[1], [0], [0], [1], [0, 0, 1, 1], [], []>} : vector<12x16xbf16>, vector<16x512xbf16>, vector<12x512xf32> -> vector<12x512xf32>
    %254 = arith.addf %250, %253 : vector<12x512xf32>
    %c0_163 = arith.constant 0 : index
    %c124 = arith.constant 124 : index
    %255 = vector.load %arg13[%c0_163, %c124] : memref<16x768xbf16, #tpu.memory_space<vmem>>, vector<16x512xbf16>
    %256 = vector.extract_strided_slice %213 {offsets = [0, 160], sizes = [12, 16], strides = [1, 1]} : vector<12x400xbf16> to vector<12x16xbf16>
    %cst_164 = arith.constant dense<0.000000e+00> : vector<12x512xf32>
    %257 = tpu.matmul %256, %255, %cst_164 {dimension_numbers = #tpu.dot_dimension_numbers<[1], [0], [0], [1], [0, 0, 1, 1], [], []>} : vector<12x16xbf16>, vector<16x512xbf16>, vector<12x512xf32> -> vector<12x512xf32>
    %258 = arith.addf %254, %257 : vector<12x512xf32>
    %c0_165 = arith.constant 0 : index
    %c126_166 = arith.constant 126 : index
    %259 = vector.load %arg13[%c0_165, %c126_166] : memref<16x768xbf16, #tpu.memory_space<vmem>>, vector<16x512xbf16>
    %260 = vector.extract_strided_slice %213 {offsets = [0, 176], sizes = [12, 16], strides = [1, 1]} : vector<12x400xbf16> to vector<12x16xbf16>
    %cst_167 = arith.constant dense<0.000000e+00> : vector<12x512xf32>
    %261 = tpu.matmul %260, %259, %cst_167 {dimension_numbers = #tpu.dot_dimension_numbers<[1], [0], [0], [1], [0, 0, 1, 1], [], []>} : vector<12x16xbf16>, vector<16x512xbf16>, vector<12x512xf32> -> vector<12x512xf32>
    %262 = arith.addf %258, %261 : vector<12x512xf32>
    %c0_168 = arith.constant 0 : index
    %c128_169 = arith.constant 128 : index
    %263 = vector.load %arg13[%c0_168, %c128_169] : memref<16x768xbf16, #tpu.memory_space<vmem>>, vector<16x512xbf16>
    %264 = vector.extract_strided_slice %213 {offsets = [0, 192], sizes = [12, 16], strides = [1, 1]} : vector<12x400xbf16> to vector<12x16xbf16>
    %cst_170 = arith.constant dense<0.000000e+00> : vector<12x512xf32>
    %265 = tpu.matmul %264, %263, %cst_170 {dimension_numbers = #tpu.dot_dimension_numbers<[1], [0], [0], [1], [0, 0, 1, 1], [], []>} : vector<12x16xbf16>, vector<16x512xbf16>, vector<12x512xf32> -> vector<12x512xf32>
    %266 = arith.addf %262, %265 : vector<12x512xf32>
    %c0_171 = arith.constant 0 : index
    %c130_172 = arith.constant 130 : index
    %267 = vector.load %arg13[%c0_171, %c130_172] : memref<16x768xbf16, #tpu.memory_space<vmem>>, vector<16x512xbf16>
    %268 = vector.extract_strided_slice %213 {offsets = [0, 208], sizes = [12, 16], strides = [1, 1]} : vector<12x400xbf16> to vector<12x16xbf16>
    %cst_173 = arith.constant dense<0.000000e+00> : vector<12x512xf32>
    %269 = tpu.matmul %268, %267, %cst_173 {dimension_numbers = #tpu.dot_dimension_numbers<[1], [0], [0], [1], [0, 0, 1, 1], [], []>} : vector<12x16xbf16>, vector<16x512xbf16>, vector<12x512xf32> -> vector<12x512xf32>
    %270 = arith.addf %266, %269 : vector<12x512xf32>
    %c0_174 = arith.constant 0 : index
    %c132 = arith.constant 132 : index
    %271 = vector.load %arg13[%c0_174, %c132] : memref<16x768xbf16, #tpu.memory_space<vmem>>, vector<16x512xbf16>
    %272 = vector.extract_strided_slice %213 {offsets = [0, 224], sizes = [12, 16], strides = [1, 1]} : vector<12x400xbf16> to vector<12x16xbf16>
    %cst_175 = arith.constant dense<0.000000e+00> : vector<12x512xf32>
    %273 = tpu.matmul %272, %271, %cst_175 {dimension_numbers = #tpu.dot_dimension_numbers<[1], [0], [0], [1], [0, 0, 1, 1], [], []>} : vector<12x16xbf16>, vector<16x512xbf16>, vector<12x512xf32> -> vector<12x512xf32>
    %274 = arith.addf %270, %273 : vector<12x512xf32>
    %c0_176 = arith.constant 0 : index
    %c164 = arith.constant 164 : index
    %275 = vector.load %arg13[%c0_176, %c164] : memref<16x768xbf16, #tpu.memory_space<vmem>>, vector<16x512xbf16>
    %276 = vector.extract_strided_slice %213 {offsets = [0, 240], sizes = [12, 16], strides = [1, 1]} : vector<12x400xbf16> to vector<12x16xbf16>
    %cst_177 = arith.constant dense<0.000000e+00> : vector<12x512xf32>
    %277 = tpu.matmul %276, %275, %cst_177 {dimension_numbers = #tpu.dot_dimension_numbers<[1], [0], [0], [1], [0, 0, 1, 1], [], []>} : vector<12x16xbf16>, vector<16x512xbf16>, vector<12x512xf32> -> vector<12x512xf32>
    %278 = arith.addf %274, %277 : vector<12x512xf32>
    %c0_178 = arith.constant 0 : index
    %c166_179 = arith.constant 166 : index
    %279 = vector.load %arg13[%c0_178, %c166_179] : memref<16x768xbf16, #tpu.memory_space<vmem>>, vector<16x512xbf16>
    %280 = vector.extract_strided_slice %213 {offsets = [0, 256], sizes = [12, 16], strides = [1, 1]} : vector<12x400xbf16> to vector<12x16xbf16>
    %cst_180 = arith.constant dense<0.000000e+00> : vector<12x512xf32>
    %281 = tpu.matmul %280, %279, %cst_180 {dimension_numbers = #tpu.dot_dimension_numbers<[1], [0], [0], [1], [0, 0, 1, 1], [], []>} : vector<12x16xbf16>, vector<16x512xbf16>, vector<12x512xf32> -> vector<12x512xf32>
    %282 = arith.addf %278, %281 : vector<12x512xf32>
    %c0_181 = arith.constant 0 : index
    %c168_182 = arith.constant 168 : index
    %283 = vector.load %arg13[%c0_181, %c168_182] : memref<16x768xbf16, #tpu.memory_space<vmem>>, vector<16x512xbf16>
    %284 = vector.extract_strided_slice %213 {offsets = [0, 272], sizes = [12, 16], strides = [1, 1]} : vector<12x400xbf16> to vector<12x16xbf16>
    %cst_183 = arith.constant dense<0.000000e+00> : vector<12x512xf32>
    %285 = tpu.matmul %284, %283, %cst_183 {dimension_numbers = #tpu.dot_dimension_numbers<[1], [0], [0], [1], [0, 0, 1, 1], [], []>} : vector<12x16xbf16>, vector<16x512xbf16>, vector<12x512xf32> -> vector<12x512xf32>
    %286 = arith.addf %282, %285 : vector<12x512xf32>
    %c0_184 = arith.constant 0 : index
    %c170_185 = arith.constant 170 : index
    %287 = vector.load %arg13[%c0_184, %c170_185] : memref<16x768xbf16, #tpu.memory_space<vmem>>, vector<16x512xbf16>
    %288 = vector.extract_strided_slice %213 {offsets = [0, 288], sizes = [12, 16], strides = [1, 1]} : vector<12x400xbf16> to vector<12x16xbf16>
    %cst_186 = arith.constant dense<0.000000e+00> : vector<12x512xf32>
    %289 = tpu.matmul %288, %287, %cst_186 {dimension_numbers = #tpu.dot_dimension_numbers<[1], [0], [0], [1], [0, 0, 1, 1], [], []>} : vector<12x16xbf16>, vector<16x512xbf16>, vector<12x512xf32> -> vector<12x512xf32>
    %290 = arith.addf %286, %289 : vector<12x512xf32>
    %c0_187 = arith.constant 0 : index
    %c172 = arith.constant 172 : index
    %291 = vector.load %arg13[%c0_187, %c172] : memref<16x768xbf16, #tpu.memory_space<vmem>>, vector<16x512xbf16>
    %292 = vector.extract_strided_slice %213 {offsets = [0, 304], sizes = [12, 16], strides = [1, 1]} : vector<12x400xbf16> to vector<12x16xbf16>
    %cst_188 = arith.constant dense<0.000000e+00> : vector<12x512xf32>
    %293 = tpu.matmul %292, %291, %cst_188 {dimension_numbers = #tpu.dot_dimension_numbers<[1], [0], [0], [1], [0, 0, 1, 1], [], []>} : vector<12x16xbf16>, vector<16x512xbf16>, vector<12x512xf32> -> vector<12x512xf32>
    %294 = arith.addf %290, %293 : vector<12x512xf32>
    %c0_189 = arith.constant 0 : index
    %c204 = arith.constant 204 : index
    %295 = vector.load %arg13[%c0_189, %c204] : memref<16x768xbf16, #tpu.memory_space<vmem>>, vector<16x512xbf16>
    %296 = vector.extract_strided_slice %213 {offsets = [0, 320], sizes = [12, 16], strides = [1, 1]} : vector<12x400xbf16> to vector<12x16xbf16>
    %cst_190 = arith.constant dense<0.000000e+00> : vector<12x512xf32>
    %297 = tpu.matmul %296, %295, %cst_190 {dimension_numbers = #tpu.dot_dimension_numbers<[1], [0], [0], [1], [0, 0, 1, 1], [], []>} : vector<12x16xbf16>, vector<16x512xbf16>, vector<12x512xf32> -> vector<12x512xf32>
    %298 = arith.addf %294, %297 : vector<12x512xf32>
    %c0_191 = arith.constant 0 : index
    %c206 = arith.constant 206 : index
    %299 = vector.load %arg13[%c0_191, %c206] : memref<16x768xbf16, #tpu.memory_space<vmem>>, vector<16x512xbf16>
    %300 = vector.extract_strided_slice %213 {offsets = [0, 336], sizes = [12, 16], strides = [1, 1]} : vector<12x400xbf16> to vector<12x16xbf16>
    %cst_192 = arith.constant dense<0.000000e+00> : vector<12x512xf32>
    %301 = tpu.matmul %300, %299, %cst_192 {dimension_numbers = #tpu.dot_dimension_numbers<[1], [0], [0], [1], [0, 0, 1, 1], [], []>} : vector<12x16xbf16>, vector<16x512xbf16>, vector<12x512xf32> -> vector<12x512xf32>
    %302 = arith.addf %298, %301 : vector<12x512xf32>
    %c0_193 = arith.constant 0 : index
    %c208 = arith.constant 208 : index
    %303 = vector.load %arg13[%c0_193, %c208] : memref<16x768xbf16, #tpu.memory_space<vmem>>, vector<16x512xbf16>
    %304 = vector.extract_strided_slice %213 {offsets = [0, 352], sizes = [12, 16], strides = [1, 1]} : vector<12x400xbf16> to vector<12x16xbf16>
    %cst_194 = arith.constant dense<0.000000e+00> : vector<12x512xf32>
    %305 = tpu.matmul %304, %303, %cst_194 {dimension_numbers = #tpu.dot_dimension_numbers<[1], [0], [0], [1], [0, 0, 1, 1], [], []>} : vector<12x16xbf16>, vector<16x512xbf16>, vector<12x512xf32> -> vector<12x512xf32>
    %306 = arith.addf %302, %305 : vector<12x512xf32>
    %c0_195 = arith.constant 0 : index
    %c210 = arith.constant 210 : index
    %307 = vector.load %arg13[%c0_195, %c210] : memref<16x768xbf16, #tpu.memory_space<vmem>>, vector<16x512xbf16>
    %308 = vector.extract_strided_slice %213 {offsets = [0, 368], sizes = [12, 16], strides = [1, 1]} : vector<12x400xbf16> to vector<12x16xbf16>
    %cst_196 = arith.constant dense<0.000000e+00> : vector<12x512xf32>
    %309 = tpu.matmul %308, %307, %cst_196 {dimension_numbers = #tpu.dot_dimension_numbers<[1], [0], [0], [1], [0, 0, 1, 1], [], []>} : vector<12x16xbf16>, vector<16x512xbf16>, vector<12x512xf32> -> vector<12x512xf32>
    %310 = arith.addf %306, %309 : vector<12x512xf32>
    %c0_197 = arith.constant 0 : index
    %c212 = arith.constant 212 : index
    %311 = vector.load %arg13[%c0_197, %c212] : memref<16x768xbf16, #tpu.memory_space<vmem>>, vector<16x512xbf16>
    %312 = vector.extract_strided_slice %213 {offsets = [0, 384], sizes = [12, 16], strides = [1, 1]} : vector<12x400xbf16> to vector<12x16xbf16>
    %cst_198 = arith.constant dense<0.000000e+00> : vector<12x512xf32>
    %313 = tpu.matmul %312, %311, %cst_198 {dimension_numbers = #tpu.dot_dimension_numbers<[1], [0], [0], [1], [0, 0, 1, 1], [], []>} : vector<12x16xbf16>, vector<16x512xbf16>, vector<12x512xf32> -> vector<12x512xf32>
    %314 = arith.addf %310, %313 : vector<12x512xf32>
    %c0_199 = arith.constant 0 : index
    %c0_200 = arith.constant 0 : index
    %315 = vector.load %arg9[%c0_199, %c0_200] : memref<12x1xf32, #tpu.memory_space<vmem>>, vector<12x1xf32>
    %316 = vector.broadcast %315 : vector<12x1xf32> to vector<12x512xf32>
    %317 = arith.addf %314, %316 : vector<12x512xf32>
    %cst_201 = arith.constant 5.000000e-01 : f32
    %318 = vector.broadcast %cst_201 : f32 to vector<12x512xf32>
    %319 = arith.mulf %318, %317 : vector<12x512xf32>
    %320 = math.tanh %319 : vector<12x512xf32>
    %cst_202 = arith.constant 5.000000e-01 : f32
    %321 = vector.broadcast %cst_202 : f32 to vector<12x512xf32>
    %322 = arith.mulf %321, %320 : vector<12x512xf32>
    %cst_203 = arith.constant 5.000000e-01 : f32
    %323 = vector.broadcast %cst_203 : f32 to vector<12x512xf32>
    %324 = arith.addf %322, %323 : vector<12x512xf32>
    %325 = arith.truncf %324 : vector<12x512xf32> to vector<12x512xbf16>
    %c0_204 = arith.constant 0 : index
    %c0_205 = arith.constant 0 : index
    %326 = vector.load %arg10[%c0_204, %c0_205] : memref<512x128xbf16, #tpu.memory_space<vmem>>, vector<512x128xbf16>
    %cst_206 = arith.constant dense<0.000000e+00> : vector<12x128xf32>
    %327 = tpu.matmul %325, %326, %cst_206 {dimension_numbers = #tpu.dot_dimension_numbers<[1], [0], [0], [1], [0, 0, 1, 1], [], []>} : vector<12x512xbf16>, vector<512x128xbf16>, vector<12x128xf32> -> vector<12x128xf32>
    %c0_207 = arith.constant 0 : index
    %c0_208 = arith.constant 0 : index
    %c0_209 = arith.constant 0 : index
    %328 = vector.load %arg11[%c0_207, %c0_208, %c0_209] : memref<1x12x128xf32, #tpu.memory_space<vmem>>, vector<1x12x128xf32>
    %329 = vector.shape_cast %328 : vector<1x12x128xf32> to vector<12x128xf32>
    %330 = vector.shape_cast %327 : vector<12x128xf32> to vector<1x12x128xf32>
    tpu.vector_store %arg11[%c0_207, %c0_208, %c0_209], %330 {strides = array<i32>} : memref<1x12x128xf32, #tpu.memory_space<vmem>>, vector<1x12x128xf32>,
    return
  }
  func.func @transform_0(%arg0: i32) -> (i32, i32, i32) {
    %c0_i32 = arith.constant 0 : i32
    %c0_i32_0 = arith.constant 0 : i32
    %c0_i32_1 = arith.constant 0 : i32
    return %arg0, %c0_i32, %c0_i32_0 : i32, i32, i32
  }
  func.func @transform_1(%arg0: i32) -> (i32, i32) {
    %c0_i32 = arith.constant 0 : i32
    %c0_i32_0 = arith.constant 0 : i32
    %c0_i32_1 = arith.constant 0 : i32
    return %c0_i32, %c0_i32_0 : i32, i32
  }
  func.func @transform_2(%arg0: i32) -> (i32, i32) {
    %c0_i32 = arith.constant 0 : i32
    %c0_i32_0 = arith.constant 0 : i32
    %c0_i32_1 = arith.constant 0 : i32
    return %c0_i32, %c0_i32_0 : i32, i32
  }
  func.func @transform_3(%arg0: i32) -> (i32, i32) {
    %c0_i32 = arith.constant 0 : i32
    %c0_i32_0 = arith.constant 0 : i32
    %c0_i32_1 = arith.constant 0 : i32
    return %c0_i32, %c0_i32_0 : i32, i32
  }
  func.func @transform_4(%arg0: i32) -> (i32, i32) {
    %c0_i32 = arith.constant 0 : i32
    %c0_i32_0 = arith.constant 0 : i32
    %c0_i32_1 = arith.constant 0 : i32
    return %c0_i32, %c0_i32_0 : i32, i32
  }
  func.func @transform_5(%arg0: i32) -> (i32, i32) {
    %c0_i32 = arith.constant 0 : i32
    %c0_i32_0 = arith.constant 0 : i32
    %c0_i32_1 = arith.constant 0 : i32
    return %c0_i32, %c0_i32_0 : i32, i32
  }
  func.func @transform_6(%arg0: i32) -> (i32, i32) {
    %c0_i32 = arith.constant 0 : i32
    %c0_i32_0 = arith.constant 0 : i32
    %c0_i32_1 = arith.constant 0 : i32
    return %c0_i32, %c0_i32_0 : i32, i32
  }
  func.func @transform_7(%arg0: i32) -> (i32, i32) {
    %c0_i32 = arith.constant 0 : i32
    %c0_i32_0 = arith.constant 0 : i32
    %c0_i32_1 = arith.constant 0 : i32
    return %c0_i32, %c0_i32_0 : i32, i32
  }
  func.func @transform_8(%arg0: i32) -> (i32, i32) {
    %c0_i32 = arith.constant 0 : i32
    %c0_i32_0 = arith.constant 0 : i32
    %c0_i32_1 = arith.constant 0 : i32
    return %c0_i32, %c0_i32_0 : i32, i32
  }
  func.func @transform_9(%arg0: i32) -> (i32, i32) {
    %c0_i32 = arith.constant 0 : i32
    %c0_i32_0 = arith.constant 0 : i32
    %c0_i32_1 = arith.constant 0 : i32
    return %c0_i32, %c0_i32_0 : i32, i32
  }
  func.func @transform_10(%arg0: i32) -> (i32, i32, i32) {
    %c0_i32 = arith.constant 0 : i32
    %c0_i32_0 = arith.constant 0 : i32
    %c0_i32_1 = arith.constant 0 : i32
    return %arg0, %c0_i32, %c0_i32_0 : i32, i32, i32
  }
}

</mosaic_0001>

<llo_original>
// kernel: lenet_forward.1
$region0: #{lenet_forward.1}
  #allocation0 [shape = 'u32[]', space=smem, size = 0x4, offset = 0x4, fixed_abs, tag = 'smem constant byte address 0x4 - core index']
  #allocation1 [shape = 'u32[144,128]{1,0:T(1,128)}', space=vmem, size = 0x12000, scoped, tag = 'internal scratch']
  #allocation2 [shape = 'bf16[16,768]{1,0:T(8,128)(2,1)}', space=vmem, size = 0x6000, scoped, tag = 'scratch operand']
  #allocation3 [shape = 'bf16[16,768]{1,0:T(8,128)(2,1)}', space=vmem, size = 0x6000, scoped, tag = 'scratch operand']
  %s0 = inlined_call_operand.vmem [shape: bf16[4,16,768], index: 0, kind: input, shape index: {}]
  %s1 = inlined_call_operand.vmem [shape: bf16[12,240], index: 1, kind: input, shape index: {}]
  %s2 = inlined_call_operand.vmem [shape: f32[12,1], index: 2, kind: input, shape index: {}]
  %s3 = inlined_call_operand.vmem [shape: f32[1,512], index: 3, kind: input, shape index: {}]
  %s4 = inlined_call_operand.vmem [shape: bf16[12,400], index: 4, kind: input, shape index: {}]
  %s5 = inlined_call_operand.vmem [shape: f32[12,1], index: 5, kind: input, shape index: {}]
  %s6 = inlined_call_operand.vmem [shape: f32[1,512], index: 6, kind: input, shape index: {}]
  %s7 = inlined_call_operand.vmem [shape: bf16[12,400], index: 7, kind: input, shape index: {}]
  %s8 = inlined_call_operand.vmem [shape: f32[12,1], index: 8, kind: input, shape index: {}]
  %s9 = inlined_call_operand.vmem [shape: bf16[512,128], index: 9, kind: input, shape index: {}]
  %s10 = inlined_call_operand.vmem [shape: f32[2,12,128], index: 10, kind: output, shape index: {}]
  %s11 = sld [smem:[#allocation0]]
  $region73: #{lenet_forward.1} parent=0
    _
  %s13 = ssub.s32 1, %s11
  %s14 = scalar_select 0, %s13, %s11
  loop: start=0, step=1, limit=4
  $region2: #{lenet_forward.1} parent=0 // loop_pre_header
    _
  $region3: #{lenet_forward.1} parent=0 // loop_header
    %s16 = sphi 0, %s20
    %p17 = scmp.ge.s32.totalorder %s16, 4
    %s26 = sphi 0, %s28
    %s29 = sphi 0, %s26
    %s30 = sphi 0, %s29
    %s46 = sphi 0, %s30
    %s50 = sphi 0, %s50
    %s52 = sphi 0, %s50
    %s53 = sphi 0, %s52
    %s67 = sphi 0, %s53
    %s71 = sphi 0, %s71
    %s73 = sphi 0, %s71
    %s74 = sphi 0, %s73
    %s88 = sphi 0, %s74
    %s92 = sphi 0, %s92
    %s94 = sphi 0, %s92
    %s95 = sphi 0, %s94
    %s109 = sphi 0, %s95
    %s113 = sphi 0, %s113
    %s115 = sphi 0, %s113
    %s116 = sphi 0, %s115
    %s130 = sphi 0, %s116
    %s134 = sphi 0, %s134
    %s136 = sphi 0, %s134
    %s137 = sphi 0, %s136
    %s151 = sphi 0, %s137
    %s155 = sphi 0, %s155
    %s157 = sphi 0, %s155
    %s158 = sphi 0, %s157
    %s172 = sphi 0, %s158
    %s176 = sphi 0, %s176
    %s178 = sphi 0, %s176
    %s179 = sphi 0, %s178
    %s193 = sphi 0, %s179
    %s197 = sphi 0, %s197
    %s199 = sphi 0, %s197
    %s200 = sphi 0, %s199
    %s214 = sphi 0, %s200
    %s218 = sphi 0, %s218
    %s220 = sphi 0, %s218
    %s221 = sphi 0, %s220
    %s235 = sphi 0, %s221
    %s241 = sphi 0, %s243
    %s244 = sphi 0, %s241
    %s245 = sphi 0, %s244
    %s261 = sphi 0, %s245
  $region4: #{lenet_forward.1} parent=0 // loop_header_branch
    %19 = sbr.rel (%p17) target = $region8
  $region5: #{lenet_forward.1} parent=0 // loop_body
    %s21 = ssub.s32 %s16, 1
    %s22 = ssub.s32 %s16, 2
    %s23 = sadd.s32 %s16, 1
    %s24 = ssub.s32 %s16, %s23
    %p25 = scmp.eq.s32.totalorder %s24, 0
    %s27 = sadd.s32 %s26, 1
    %s28 = scalar_select %p25, %s26, %s27
    %p31 = pneg %p25
    %p32 = scmp.eq.s32.totalorder %s16, 1
    %p33 = por %p31, %p32
    %p34 = scmp.ne.s32.totalorder %s26, %s29
    %p35 = scmp.eq.s32.totalorder %s16, 0
    %p36 = por %p34, %p35
    %p37 = scmp.ne.s32.totalorder %s26, %s29
    %p38 = scmp.eq.s32.totalorder %s21, 1
    %p39 = por %p37, %p38
    %p40 = scmp.ne.s32.totalorder %s29, %s30
    %p41 = scmp.eq.s32.totalorder %s21, 0
    %p42 = por %p40, %p41
    %p43 = scmp.ne.s32.totalorder %s29, %s30
    %p44 = scmp.eq.s32.totalorder %s22, 1
    %p45 = por %p43, %p44
    %p47 = scmp.ne.s32.totalorder %s30, %s46
    %p48 = scmp.eq.s32.totalorder %s22, 0
    %p49 = por %p47, %p48
    %s51 = sadd.s32 %s50, 1
    %p54 = scmp.eq.s32.totalorder %s16, 1
    %p55 = scmp.ne.s32.totalorder %s50, %s52
    %p56 = scmp.eq.s32.totalorder %s16, 0
    %p57 = por %p55, %p56
    %p58 = scmp.ne.s32.totalorder %s50, %s52
    %p59 = scmp.eq.s32.totalorder %s21, 1
    %p60 = por %p58, %p59
    %p61 = scmp.ne.s32.totalorder %s52, %s53
    %p62 = scmp.eq.s32.totalorder %s21, 0
    %p63 = por %p61, %p62
    %p64 = scmp.ne.s32.totalorder %s52, %s53
    %p65 = scmp.eq.s32.totalorder %s22, 1
    %p66 = por %p64, %p65
    %p68 = scmp.ne.s32.totalorder %s53, %s67
    %p69 = scmp.eq.s32.totalorder %s22, 0
    %p70 = por %p68, %p69
    %s72 = sadd.s32 %s71, 1
    %p75 = scmp.eq.s32.totalorder %s16, 1
    %p76 = scmp.ne.s32.totalorder %s71, %s73
    %p77 = scmp.eq.s32.totalorder %s16, 0
    %p78 = por %p76, %p77
    %p79 = scmp.ne.s32.totalorder %s71, %s73
    %p80 = scmp.eq.s32.totalorder %s21, 1
    %p81 = por %p79, %p80
    %p82 = scmp.ne.s32.totalorder %s73, %s74
    %p83 = scmp.eq.s32.totalorder %s21, 0
    %p84 = por %p82, %p83
    %p85 = scmp.ne.s32.totalorder %s73, %s74
    %p86 = scmp.eq.s32.totalorder %s22, 1
    %p87 = por %p85, %p86
    %p89 = scmp.ne.s32.totalorder %s74, %s88
    %p90 = scmp.eq.s32.totalorder %s22, 0
    %p91 = por %p89, %p90
    %s93 = sadd.s32 %s92, 1
    %p96 = scmp.eq.s32.totalorder %s16, 1
    %p97 = scmp.ne.s32.totalorder %s92, %s94
    %p98 = scmp.eq.s32.totalorder %s16, 0
    %p99 = por %p97, %p98
    %p100 = scmp.ne.s32.totalorder %s92, %s94
    %p101 = scmp.eq.s32.totalorder %s21, 1
    %p102 = por %p100, %p101
    %p103 = scmp.ne.s32.totalorder %s94, %s95
    %p104 = scmp.eq.s32.totalorder %s21, 0
    %p105 = por %p103, %p104
    %p106 = scmp.ne.s32.totalorder %s94, %s95
    %p107 = scmp.eq.s32.totalorder %s22, 1
    %p108 = por %p106, %p107
    %p110 = scmp.ne.s32.totalorder %s95, %s109
    %p111 = scmp.eq.s32.totalorder %s22, 0
    %p112 = por %p110, %p111
    %s114 = sadd.s32 %s113, 1
    %p117 = scmp.eq.s32.totalorder %s16, 1
    %p118 = scmp.ne.s32.totalorder %s113, %s115
    %p119 = scmp.eq.s32.totalorder %s16, 0
    %p120 = por %p118, %p119
    %p121 = scmp.ne.s32.totalorder %s113, %s115
    %p122 = scmp.eq.s32.totalorder %s21, 1
    %p123 = por %p121, %p122
    %p124 = scmp.ne.s32.totalorder %s115, %s116
    %p125 = scmp.eq.s32.totalorder %s21, 0
    %p126 = por %p124, %p125
    %p127 = scmp.ne.s32.totalorder %s115, %s116
    %p128 = scmp.eq.s32.totalorder %s22, 1
    %p129 = por %p127, %p128
    %p131 = scmp.ne.s32.totalorder %s116, %s130
    %p132 = scmp.eq.s32.totalorder %s22, 0
    %p133 = por %p131, %p132
    %s135 = sadd.s32 %s134, 1
    %p138 = scmp.eq.s32.totalorder %s16, 1
    %p139 = scmp.ne.s32.totalorder %s134, %s136
    %p140 = scmp.eq.s32.totalorder %s16, 0
    %p141 = por %p139, %p140
    %p142 = scmp.ne.s32.totalorder %s134, %s136
    %p143 = scmp.eq.s32.totalorder %s21, 1
    %p144 = por %p142, %p143
    %p145 = scmp.ne.s32.totalorder %s136, %s137
    %p146 = scmp.eq.s32.totalorder %s21, 0
    %p147 = por %p145, %p146
    %p148 = scmp.ne.s32.totalorder %s136, %s137
    %p149 = scmp.eq.s32.totalorder %s22, 1
    %p150 = por %p148, %p149
    %p152 = scmp.ne.s32.totalorder %s137, %s151
    %p153 = scmp.eq.s32.totalorder %s22, 0
    %p154 = por %p152, %p153
    %s156 = sadd.s32 %s155, 1
    %p159 = scmp.eq.s32.totalorder %s16, 1
    %p160 = scmp.ne.s32.totalorder %s155, %s157
    %p161 = scmp.eq.s32.totalorder %s16, 0
    %p162 = por %p160, %p161
    %p163 = scmp.ne.s32.totalorder %s155, %s157
    %p164 = scmp.eq.s32.totalorder %s21, 1
    %p165 = por %p163, %p164
    %p166 = scmp.ne.s32.totalorder %s157, %s158
    %p167 = scmp.eq.s32.totalorder %s21, 0
    %p168 = por %p166, %p167
    %p169 = scmp.ne.s32.totalorder %s157, %s158
    %p170 = scmp.eq.s32.totalorder %s22, 1
    %p171 = por %p169, %p170
    %p173 = scmp.ne.s32.totalorder %s158, %s172
    %p174 = scmp.eq.s32.totalorder %s22, 0
    %p175 = por %p173, %p174
    %s177 = sadd.s32 %s176, 1
    %p180 = scmp.eq.s32.totalorder %s16, 1
    %p181 = scmp.ne.s32.totalorder %s176, %s178
    %p182 = scmp.eq.s32.totalorder %s16, 0
    %p183 = por %p181, %p182
    %p184 = scmp.ne.s32.totalorder %s176, %s178
    %p185 = scmp.eq.s32.totalorder %s21, 1
    %p186 = por %p184, %p185
    %p187 = scmp.ne.s32.totalorder %s178, %s179
    %p188 = scmp.eq.s32.totalorder %s21, 0
    %p189 = por %p187, %p188
    %p190 = scmp.ne.s32.totalorder %s178, %s179
    %p191 = scmp.eq.s32.totalorder %s22, 1
    %p192 = por %p190, %p191
    %p194 = scmp.ne.s32.totalorder %s179, %s193
    %p195 = scmp.eq.s32.totalorder %s22, 0
    %p196 = por %p194, %p195
    %s198 = sadd.s32 %s197, 1
    %p201 = scmp.eq.s32.totalorder %s16, 1
    %p202 = scmp.ne.s32.totalorder %s197, %s199
    %p203 = scmp.eq.s32.totalorder %s16, 0
    %p204 = por %p202, %p203
    %p205 = scmp.ne.s32.totalorder %s197, %s199
    %p206 = scmp.eq.s32.totalorder %s21, 1
    %p207 = por %p205, %p206
    %p208 = scmp.ne.s32.totalorder %s199, %s200
    %p209 = scmp.eq.s32.totalorder %s21, 0
    %p210 = por %p208, %p209
    %p211 = scmp.ne.s32.totalorder %s199, %s200
    %p212 = scmp.eq.s32.totalorder %s22, 1
    %p213 = por %p211, %p212
    %p215 = scmp.ne.s32.totalorder %s200, %s214
    %p216 = scmp.eq.s32.totalorder %s22, 0
    %p217 = por %p215, %p216
    %s219 = sadd.s32 %s218, 1
    %p222 = scmp.eq.s32.totalorder %s16, 1
    %p223 = scmp.ne.s32.totalorder %s218, %s220
    %p224 = scmp.eq.s32.totalorder %s16, 0
    %p225 = por %p223, %p224
    %p226 = scmp.ne.s32.totalorder %s218, %s220
    %p227 = scmp.eq.s32.totalorder %s21, 1
    %p228 = por %p226, %p227
    %p229 = scmp.ne.s32.totalorder %s220, %s221
    %p230 = scmp.eq.s32.totalorder %s21, 0
    %p231 = por %p229, %p230
    %p232 = scmp.ne.s32.totalorder %s220, %s221
    %p233 = scmp.eq.s32.totalorder %s22, 1
    %p234 = por %p232, %p233
    %p236 = scmp.ne.s32.totalorder %s221, %s235
    %p237 = scmp.eq.s32.totalorder %s22, 0
    %p238 = por %p236, %p237
    %s239 = ssub.s32 %s16, %s23
    %p240 = scmp.eq.s32.totalorder %s239, 0
    %s242 = sadd.s32 %s241, 1
    %s243 = scalar_select %p240, %s241, %s242
    %p246 = pneg %p240
    %p247 = scmp.eq.s32.totalorder %s16, 1
    %p248 = por %p246, %p247
    %p249 = scmp.ne.s32.totalorder %s241, %s244
    %p250 = scmp.eq.s32.totalorder %s16, 0
    %p251 = por %p249, %p250
    %p252 = scmp.ne.s32.totalorder %s241, %s244
    %p253 = scmp.eq.s32.totalorder %s21, 1
    %p254 = por %p252, %p253
    %p255 = scmp.ne.s32.totalorder %s244, %s245
    %p256 = scmp.eq.s32.totalorder %s21, 0
    %p257 = por %p255, %p256
    %p258 = scmp.ne.s32.totalorder %s244, %s245
    %p259 = scmp.eq.s32.totalorder %s22, 1
    %p260 = por %p258, %p259
    %p262 = scmp.ne.s32.totalorder %s245, %s261
    %p263 = scmp.eq.s32.totalorder %s22, 0
    %p264 = por %p262, %p263
    %p265 = scmp.le.s32.totalorder 1, %s16
    %p266 = scmp.lt.s32.totalorder %s16, 3
    %p267 = pnand %p265, %p266
    %p268 = pneg %p267
    // Predicated region
    $region9: #{lenet_forward.1} parent=5 // pred_check
      _
    $region10: #{lenet_forward.1} parent=5 // pred_check_branch
      %270 = sbr.rel (%p267) target = $region12
    $region11: #{lenet_forward.1} parent=5 // pred_region
      %s271 = ssub.s32 %s16, 1
      // Predicated region
      $region13: #{lenet_forward.1} parent=11 // pred_check
        %p272 = pneg %p63
      $region14: #{lenet_forward.1} parent=11 // pred_check_branch
        %274 = sbr.rel (%p272) target = $region16
      $region15: #{lenet_forward.1} parent=11 // pred_region
        _
      $region16: #{lenet_forward.1} parent=11 // pred_fallthru
        _
      // Predicated region
      $region17: #{lenet_forward.1} parent=11 // pred_check
        %p275 = pneg %p84
      $region18: #{lenet_forward.1} parent=11 // pred_check_branch
        %277 = sbr.rel (%p275) target = $region20
      $region19: #{lenet_forward.1} parent=11 // pred_region
        _
      $region20: #{lenet_forward.1} parent=11 // pred_fallthru
        _
      // Predicated region
      $region21: #{lenet_forward.1} parent=11 // pred_check
        %p278 = pneg %p105
      $region22: #{lenet_forward.1} parent=11 // pred_check_branch
        %280 = sbr.rel (%p278) target = $region24
      $region23: #{lenet_forward.1} parent=11 // pred_region
        _
      $region24: #{lenet_forward.1} parent=11 // pred_fallthru
        _
      // Predicated region
      $region25: #{lenet_forward.1} parent=11 // pred_check
        %p281 = pneg %p126
      $region26: #{lenet_forward.1} parent=11 // pred_check_branch
        %283 = sbr.rel (%p281) target = $region28
      $region27: #{lenet_forward.1} parent=11 // pred_region
        _
      $region28: #{lenet_forward.1} parent=11 // pred_fallthru
        _
      // Predicated region
      $region29: #{lenet_forward.1} parent=11 // pred_check
        %p284 = pneg %p147
      $region30: #{lenet_forward.1} parent=11 // pred_check_branch
        %286 = sbr.rel (%p284) target = $region32
      $region31: #{lenet_forward.1} parent=11 // pred_region
        _
      $region32: #{lenet_forward.1} parent=11 // pred_fallthru
        _
      // Predicated region
      $region33: #{lenet_forward.1} parent=11 // pred_check
        %p287 = pneg %p168
      $region34: #{lenet_forward.1} parent=11 // pred_check_branch
        %289 = sbr.rel (%p287) target = $region36
      $region35: #{lenet_forward.1} parent=11 // pred_region
        _
      $region36: #{lenet_forward.1} parent=11 // pred_fallthru
        _
      // Predicated region
      $region37: #{lenet_forward.1} parent=11 // pred_check
        %p290 = pneg %p189
      $region38: #{lenet_forward.1} parent=11 // pred_check_branch
        %292 = sbr.rel (%p290) target = $region40
      $region39: #{lenet_forward.1} parent=11 // pred_region
        _
      $region40: #{lenet_forward.1} parent=11 // pred_fallthru
        _
      // Predicated region
      $region41: #{lenet_forward.1} parent=11 // pred_check
        %p293 = pneg %p210
      $region42: #{lenet_forward.1} parent=11 // pred_check_branch
        %295 = sbr.rel (%p293) target = $region44
      $region43: #{lenet_forward.1} parent=11 // pred_region
        _
      $region44: #{lenet_forward.1} parent=11 // pred_fallthru
        _
      // Predicated region
      $region45: #{lenet_forward.1} parent=11 // pred_check
        %p296 = pneg %p231
      $region46: #{lenet_forward.1} parent=11 // pred_check_branch
        %298 = sbr.rel (%p296) target = $region48
      $region47: #{lenet_forward.1} parent=11 // pred_region
        _
      $region48: #{lenet_forward.1} parent=11 // pred_fallthru
        _
    $region12: #{lenet_forward.1} parent=5 // pred_fallthru
      _
    %p299 = scmp.lt.s32.totalorder %s16, 2
    // Predicated region
    $region49: #{lenet_forward.1} parent=5 // pred_check
      %p300 = pneg %p299
    $region50: #{lenet_forward.1} parent=5 // pred_check_branch
      %302 = sbr.rel (%p300) target = $region52
    $region51: #{lenet_forward.1} parent=5 // pred_region
      // Predicated region
      $region53: #{lenet_forward.1} parent=51 // pred_check
        %p303 = pneg %p36
      $region54: #{lenet_forward.1} parent=51 // pred_check_branch
        %305 = sbr.rel (%p303) target = $region56
      $region55: #{lenet_forward.1} parent=51 // pred_region
        %s306 = smul.u32 2, %s16
        %p307 = scmp.lt.s32.totalorder %s306, 3
        %s308 = scalar_select %p307, %s306, 3
        %s309 = smul.addr %s308, 12
        %s310 = smul.addr %s309, 4
        %s311 = scalar_lea.vmem %s0, %s310
        %s312 = smul.u32 2, %s16
      $region56: #{lenet_forward.1} parent=51 // pred_fallthru
        _
    $region52: #{lenet_forward.1} parent=5 // pred_fallthru
      _
    %p313 = scmp.le.s32.totalorder 1, %s16
    %p314 = scmp.lt.s32.totalorder %s16, 3
    %p315 = pnand %p313, %p314
    %p316 = pneg %p315
    // Predicated region
    $region57: #{lenet_forward.1} parent=5 // pred_check
      _
    $region58: #{lenet_forward.1} parent=5 // pred_check_branch
      %318 = sbr.rel (%p315) target = $region60
    $region59: #{lenet_forward.1} parent=5 // pred_region
      %s319 = ssub.s32 %s16, 1
      %s320 = smul.u32 2, %s21
      %p321 = scmp.lt.s32.totalorder %s320, 3
      %s322 = scalar_select %p321, %s320, 3
      %s323 = smul.addr %s322, 12
      %s324 = smul.addr %s323, 4
      %s325 = scalar_lea.vmem %s0, %s324
      %p326 = pneg %p42
      %p327 = pneg %p39
      %p328 = pneg %p63
      %p329 = pneg %p60
      %p330 = pneg %p84
      %p331 = pneg %p81
      %p332 = pneg %p105
      %p333 = pneg %p102
      %p334 = pneg %p126
      %p335 = pneg %p123
      %p336 = pneg %p147
      %p337 = pneg %p144
      %p338 = pneg %p168
      %p339 = pneg %p165
      %p340 = pneg %p189
      %p341 = pneg %p186
      %p342 = pneg %p210
      %p343 = pneg %p207
      %p344 = pneg %p231
      %p345 = pneg %p228
      %p346 = pneg %p257
      %p347 = pneg %p254
      %p348 = scmp.lt.s32.totalorder %s21, 1
      %s349 = scalar_select %p348, %s21, 1
      %s350 = smul.addr %s349, 2
      %s351 = smul.addr %s350, 8
      %s352 = scalar_lea.vmem %s10, %s351
      %s353 = smul.u32 2, %s21
      %p354 = scmp.lt.s32.totalorder %s353, 3
      %s355 = scalar_select %p354, %s353, 3
      %s356 = smul.addr %s355, 12
      %s357 = smul.addr %s356, 4
      %s358 = scalar_lea.vmem %s0, %s357
      %s359 = smul.u32 2, %s21
      %p360 = scmp.lt.s32.totalorder %s21, 1
      %s361 = scalar_select %p360, %s21, 1
      %s362 = smul.addr %s361, 2
      %s363 = smul.addr %s362, 8
      %s364 = scalar_lea.vmem %s10, %s363
      %366 = vst [vmem:[#allocation2] sm:$0xff] 0
      %367 = vst [vmem:[#allocation2 + $0x8] sm:$0xff] 0
      %368 = vst [vmem:[#allocation2 + $0x10] sm:$0xff] 0
      %369 = vst [vmem:[#allocation2 + $0x18] sm:$0xff] 0
      %370 = vst [vmem:[#allocation2 + $0x20] sm:$0xff] 0
      %371 = vst [vmem:[#allocation2 + $0x28] sm:$0xff] 0
      %372 = vst [vmem:[#allocation3] sm:$0xff] 0
      %373 = vst [vmem:[#allocation3 + $0x8] sm:$0xff] 0
      %374 = vst [vmem:[#allocation3 + $0x10] sm:$0xff] 0
      %375 = vst [vmem:[#allocation3 + $0x18] sm:$0xff] 0
      %376 = vst [vmem:[#allocation3 + $0x20] sm:$0xff] 0
      %377 = vst [vmem:[#allocation3 + $0x28] sm:$0xff] 0
      %v378 = vld [vmem:[%s1] sm:$0xff]
      %v379 = vld [vmem:[%s1 + $0x8] sm:$0x33]
      %v380 = vld [vmem:[%s358 + $0x4] sm:$0xff]
      %v381 = vld [vmem:[%s358 + $0xc] sm:$0xff]
      %v382 = vld [vmem:[%s358 + $0x1c] sm:$0xff]
      %v383 = vld [vmem:[%s358 + $0x24] sm:$0xff]
      %s384 = scalar_lea.vmem %s358, 48
      %v385 = vld [vmem:[%s384 + $0x4] sm:$0xff]
      %v386 = vld [vmem:[%s384 + $0xc] sm:$0xff]
      %v387 = vld [vmem:[%s384 + $0x1c] sm:$0xff]
      %v388 = vld [vmem:[%s384 + $0x24] sm:$0xff]
      %v391 = vunpack.c.l.b16 %v378
      %v392 = vunpack.c.l.b16 %v379
      %v393 = vpack.c.b16 %v392, %v391
      %394 = vrot.lane.b32.xlu0 %v393, 112
      %v395 = vpop.permute.xlu0 %394
      %v400 = vunpack.c.l.b16 %v385
      %v401 = vunpack.c.h.b16 %v385
      %v402 = vunpack.c.l.b16 %v386
      %v403 = vunpack.c.h.b16 %v386
      %v404 = vunpack.c.l.b16 %v387
      %v405 = vunpack.c.h.b16 %v387
      %v406 = vunpack.c.l.b16 %v388
      %v407 = vunpack.c.h.b16 %v388
      %v408 = vpack.c.b16 %v404, %v400
      %v409 = vpack.c.b16 %v405, %v401
      %v410 = vpack.c.b16 %v406, %v402
      %v411 = vpack.c.b16 %v407, %v403
      %vm416 = vcmask 130048
      %v418 = vsel %vm416, %v395, 0
      %420 = vmatprep.subr.bf16.mxu0 0
      %421 = vmatpush1.bf16.msra.mxu0 0
      %422 = vmatprep.subr.bf16.mxu0 0
      %423 = vmatpush1.bf16.msra.mxu0 0
      %424 = vmatprep.subr.bf16.mxu0 0
      %425 = vmatpush1.bf16.msra.mxu0 0
      %426 = vmatprep.subr.bf16.mxu0 0
      %427 = vmatpush1.bf16.msra.mxu0 0
      %428 = vmatprep.subr.bf16.mxu0 0
      %429 = vmatpush1.bf16.msra.mxu0 0
      %430 = vmatprep.subr.bf16.mxu0 0
      %431 = vmatpush1.bf16.msra.mxu0 0
      %432 = vmatprep.subr.bf16.mxu0 0
      %433 = vmatpush1.bf16.msra.mxu0 0
      %434 = vmatprep.subr.bf16.mxu0 %v409
      %435 = vmatpush1.bf16.msra.mxu0 %v408
      %436 = vmatprep.subr.bf16.mxu0 0
      %437 = vmatpush2.bf16.msra.mxu0 0
      %438 = vmatprep.subr.bf16.mxu0 0
      %439 = vmatpush2.bf16.msra.mxu0 0
      %440 = vmatprep.subr.bf16.mxu0 0
      %441 = vmatpush2.bf16.msra.mxu0 0
      %442 = vmatprep.subr.bf16.mxu0 0
      %443 = vmatpush2.bf16.msra.mxu0 0
      %444 = vmatprep.subr.bf16.mxu0 0
      %445 = vmatpush2.bf16.msra.mxu0 0
      %446 = vmatprep.subr.bf16.mxu0 0
      %447 = vmatpush2.bf16.msra.mxu0 0
      %448 = vmatprep.subr.bf16.mxu0 0
      %449 = vmatpush2.bf16.msra.mxu0 0
      %450 = vmatprep.subr.bf16.mxu0 0
      %451 = vmatpush2.bf16.msra.mxu0 0
      %452 = vmatprep.mubr.bf16.mxu0 0
      %453 = vmatmul.mubr.bf16.gmra.mxu0 %v418
      %v454 = vpop.f32.mrf.mxu0
      %v455 = vadd.f32 0.0, %v454
      %v456 = vpop.f32.mrf.mxu0
      %v457 = vadd.f32 0.0, %v456
      %v458 = vpop.f32.mrf.mxu0
      %v459 = vadd.f32 0.0, %v458
      %v460 = vpop.f32.mrf.mxu0
      %v461 = vadd.f32 0.0, %v460
      %462 = vdwg.mxu0
      %463 = vmatprep.subr.bf16.mxu0 0
      %464 = vmatpush1.bf16.msra.mxu0 0
      %465 = vmatprep.subr.bf16.mxu0 0
      %466 = vmatpush1.bf16.msra.mxu0 0
      %467 = vmatprep.subr.bf16.mxu0 0
      %468 = vmatpush1.bf16.msra.mxu0 0
      %469 = vmatprep.subr.bf16.mxu0 0
      %470 = vmatpush1.bf16.msra.mxu0 0
      %471 = vmatprep.subr.bf16.mxu0 0
      %472 = vmatpush1.bf16.msra.mxu0 0
      %473 = vmatprep.subr.bf16.mxu0 0
      %474 = vmatpush1.bf16.msra.mxu0 0
      %475 = vmatprep.subr.bf16.mxu0 0
      %476 = vmatpush1.bf16.msra.mxu0 0
      %477 = vmatprep.subr.bf16.mxu0 %v411
      %478 = vmatpush1.bf16.msra.mxu0 %v410
      %479 = vmatprep.subr.bf16.mxu0 0
      %480 = vmatpush2.bf16.msra.mxu0 0
      %481 = vmatprep.subr.bf16.mxu0 0
      %482 = vmatpush2.bf16.msra.mxu0 0
      %483 = vmatprep.subr.bf16.mxu0 0
      %484 = vmatpush2.bf16.msra.mxu0 0
      %485 = vmatprep.subr.bf16.mxu0 0
      %486 = vmatpush2.bf16.msra.mxu0 0
      %487 = vmatprep.subr.bf16.mxu0 0
      %488 = vmatpush2.bf16.msra.mxu0 0
      %489 = vmatprep.subr.bf16.mxu0 0
      %490 = vmatpush2.bf16.msra.mxu0 0
      %491 = vmatprep.subr.bf16.mxu0 0
      %492 = vmatpush2.bf16.msra.mxu0 0
      %493 = vmatprep.subr.bf16.mxu0 0
      %494 = vmatpush2.bf16.msra.mxu0 0
      %495 = vmatprep.mubr.bf16.mxu0 0
      %496 = vmatmul.mubr.bf16.gmra.mxu0 %v418
      %v497 = vpop.f32.mrf.mxu0
      %v498 = vadd.f32 0.0, %v497
      %v499 = vpop.f32.mrf.mxu0
      %v500 = vadd.f32 0.0, %v499
      %v501 = vpop.f32.mrf.mxu0
      %v502 = vadd.f32 0.0, %v501
      %v503 = vpop.f32.mrf.mxu0
      %v504 = vadd.f32 0.0, %v503
      %505 = vdwg.mxu0
      %v510 = vunpack.c.l.b16 %v380
      %v511 = vunpack.c.h.b16 %v380
      %v512 = vunpack.c.l.b16 %v381
      %v513 = vunpack.c.h.b16 %v381
      %v514 = vunpack.c.l.b16 %v382
      %v515 = vunpack.c.h.b16 %v382
      %v516 = vunpack.c.l.b16 %v383
      %v517 = vunpack.c.h.b16 %v383
      %v518 = vpack.c.b16 %v514, %v510
      %v519 = vpack.c.b16 %v515, %v511
      %v520 = vpack.c.b16 %v516, %v512
      %v521 = vpack.c.b16 %v517, %v513
      %v527 = vsel %vm416, %v393, 0
      %529 = vmatprep.subr.bf16.mxu0 0
      %530 = vmatpush1.bf16.msra.mxu0 0
      %531 = vmatprep.subr.bf16.mxu0 0
      %532 = vmatpush1.bf16.msra.mxu0 0
      %533 = vmatprep.subr.bf16.mxu0 0
      %534 = vmatpush1.bf16.msra.mxu0 0
      %535 = vmatprep.subr.bf16.mxu0 0
      %536 = vmatpush1.bf16.msra.mxu0 0
      %537 = vmatprep.subr.bf16.mxu0 0
      %538 = vmatpush1.bf16.msra.mxu0 0
      %539 = vmatprep.subr.bf16.mxu0 0
      %540 = vmatpush1.bf16.msra.mxu0 0
      %541 = vmatprep.subr.bf16.mxu0 0
      %542 = vmatpush1.bf16.msra.mxu0 0
      %543 = vmatprep.subr.bf16.mxu0 %v519
      %544 = vmatpush1.bf16.msra.mxu0 %v518
      %545 = vmatprep.subr.bf16.mxu0 0
      %546 = vmatpush2.bf16.msra.mxu0 0
      %547 = vmatprep.subr.bf16.mxu0 0
      %548 = vmatpush2.bf16.msra.mxu0 0
      %549 = vmatprep.subr.bf16.mxu0 0
      %550 = vmatpush2.bf16.msra.mxu0 0
      %551 = vmatprep.subr.bf16.mxu0 0
      %552 = vmatpush2.bf16.msra.mxu0 0
      %553 = vmatprep.subr.bf16.mxu0 0
      %554 = vmatpush2.bf16.msra.mxu0 0
      %555 = vmatprep.subr.bf16.mxu0 0
      %556 = vmatpush2.bf16.msra.mxu0 0
      %557 = vmatprep.subr.bf16.mxu0 0
      %558 = vmatpush2.bf16.msra.mxu0 0
      %559 = vmatprep.subr.bf16.mxu0 0
      %560 = vmatpush2.bf16.msra.mxu0 0
      %561 = vmatprep.mubr.bf16.mxu0 0
      %562 = vmatmul.mubr.bf16.gmra.mxu0 %v527
      %v563 = vpop.f32.mrf.mxu0
      %v564 = vadd.f32 %v455, %v563
      %v565 = vpop.f32.mrf.mxu0
      %v566 = vadd.f32 %v457, %v565
      %v567 = vpop.f32.mrf.mxu0
      %v568 = vadd.f32 %v459, %v567
      %v569 = vpop.f32.mrf.mxu0
      %v570 = vadd.f32 %v461, %v569
      %571 = vdwg.mxu0
      %572 = vmatprep.subr.bf16.mxu0 0
      %573 = vmatpush1.bf16.msra.mxu0 0
      %574 = vmatprep.subr.bf16.mxu0 0
      %575 = vmatpush1.bf16.msra.mxu0 0
      %576 = vmatprep.subr.bf16.mxu0 0
      %577 = vmatpush1.bf16.msra.mxu0 0
      %578 = vmatprep.subr.bf16.mxu0 0
      %579 = vmatpush1.bf16.msra.mxu0 0
      %580 = vmatprep.subr.bf16.mxu0 0
      %581 = vmatpush1.bf16.msra.mxu0 0
      %582 = vmatprep.subr.bf16.mxu0 0
      %583 = vmatpush1.bf16.msra.mxu0 0
      %584 = vmatprep.subr.bf16.mxu0 0
      %585 = vmatpush1.bf16.msra.mxu0 0
      %586 = vmatprep.subr.bf16.mxu0 %v521
      %587 = vmatpush1.bf16.msra.mxu0 %v520
      %588 = vmatprep.subr.bf16.mxu0 0
      %589 = vmatpush2.bf16.msra.mxu0 0
      %590 = vmatprep.subr.bf16.mxu0 0
      %591 = vmatpush2.bf16.msra.mxu0 0
      %592 = vmatprep.subr.bf16.mxu0 0
      %593 = vmatpush2.bf16.msra.mxu0 0
      %594 = vmatprep.subr.bf16.mxu0 0
      %595 = vmatpush2.bf16.msra.mxu0 0
      %596 = vmatprep.subr.bf16.mxu0 0
      %597 = vmatpush2.bf16.msra.mxu0 0
      %598 = vmatprep.subr.bf16.mxu0 0
      %599 = vmatpush2.bf16.msra.mxu0 0
      %600 = vmatprep.subr.bf16.mxu0 0
      %601 = vmatpush2.bf16.msra.mxu0 0
      %602 = vmatprep.subr.bf16.mxu0 0
      %603 = vmatpush2.bf16.msra.mxu0 0
      %604 = vmatprep.mubr.bf16.mxu0 0
      %605 = vmatmul.mubr.bf16.gmra.mxu0 %v527
      %v606 = vpop.f32.mrf.mxu0
      %v607 = vadd.f32 %v498, %v606
      %v608 = vpop.f32.mrf.mxu0
      %v609 = vadd.f32 %v500, %v608
      %v610 = vpop.f32.mrf.mxu0
      %v611 = vadd.f32 %v502, %v610
      %v612 = vpop.f32.mrf.mxu0
      %v613 = vadd.f32 %v504, %v612
      %614 = vdwg.mxu0
      %v615 = vld [vmem:[%s358 + $0x4] sm:$0xff]
      %v616 = vld [vmem:[%s358 + $0xc] sm:$0xff]
      %v617 = vld [vmem:[%s358 + $0x14] sm:$0xf]
      %v618 = vld [vmem:[%s358 + $0x1c] sm:$0xff]
      %v619 = vld [vmem:[%s358 + $0x24] sm:$0xff]
      %v620 = vld [vmem:[%s358 + $0x2c] sm:$0xf]
      %621 = vrot.lane.b32.xlu0 %v393, 96
      %v622 = vpop.permute.xlu0 %621
      %v629 = vunpack.c.l.b16 %v615
      %v630 = vunpack.c.h.b16 %v615
      %v631 = vunpack.c.l.b16 %v616
      %v632 = vunpack.c.h.b16 %v616
      %v633 = vunpack.c.l.b16 %v617
      %v634 = vunpack.c.l.b16 %v618
      %v635 = vunpack.c.h.b16 %v618
      %v636 = vunpack.c.l.b16 %v619
      %v637 = vunpack.c.h.b16 %v619
      %v638 = vunpack.c.l.b16 %v620
      %v639 = vpack.c.b16 %v634, %v629
      %v640 = vpack.c.b16 %v635, %v630
      %v641 = vpack.c.b16 %v636, %v631
      %v642 = vpack.c.b16 %v637, %v632
      %v643 = vpack.c.b16 %v638, %v633
      %644 = vrot.lane.b32.xlu0 %v639, 127
      %v645 = vpop.permute.xlu0 %644
      %646 = vrot.lane.b32.xlu0 %v640, 127
      %v647 = vpop.permute.xlu0 %646
      %648 = vrot.lane.b32.xlu0 %v641, 127
      %v649 = vpop.permute.xlu0 %648
      %650 = vrot.lane.b32.xlu0 %v642, 127
      %v651 = vpop.permute.xlu0 %650
      %652 = vrot.lane.b32.xlu0 %v643, 127
      %v653 = vpop.permute.xlu0 %652
      %vm654 = vcmask 1039360
      %v655 = vsel %vm654, %v645, %v647
      %v656 = vsel %vm654, %v647, %v649
      %v657 = vsel %vm654, %v649, %v651
      %v658 = vsel %vm654, %v651, %v653
      %v664 = vsel %vm416, %v622, 0
      %666 = vmatprep.subr.bf16.mxu0 0
      %667 = vmatpush1.bf16.msra.mxu0 0
      %668 = vmatprep.subr.bf16.mxu0 0
      %669 = vmatpush1.bf16.msra.mxu0 0
      %670 = vmatprep.subr.bf16.mxu0 0
      %671 = vmatpush1.bf16.msra.mxu0 0
      %672 = vmatprep.subr.bf16.mxu0 0
      %673 = vmatpush1.bf16.msra.mxu0 0
      %674 = vmatprep.subr.bf16.mxu0 0
      %675 = vmatpush1.bf16.msra.mxu0 0
      %676 = vmatprep.subr.bf16.mxu0 0
      %677 = vmatpush1.bf16.msra.mxu0 0
      %678 = vmatprep.subr.bf16.mxu0 0
      %679 = vmatpush1.bf16.msra.mxu0 0
      %680 = vmatprep.subr.bf16.mxu0 %v656
      %681 = vmatpush1.bf16.msra.mxu0 %v655
      %682 = vmatprep.subr.bf16.mxu0 0
      %683 = vmatpush2.bf16.msra.mxu0 0
      %684 = vmatprep.subr.bf16.mxu0 0
      %685 = vmatpush2.bf16.msra.mxu0 0
      %686 = vmatprep.subr.bf16.mxu0 0
      %687 = vmatpush2.bf16.msra.mxu0 0
      %688 = vmatprep.subr.bf16.mxu0 0
      %689 = vmatpush2.bf16.msra.mxu0 0
      %690 = vmatprep.subr.bf16.mxu0 0
      %691 = vmatpush2.bf16.msra.mxu0 0
      %692 = vmatprep.subr.bf16.mxu0 0
      %693 = vmatpush2.bf16.msra.mxu0 0
      %694 = vmatprep.subr.bf16.mxu0 0
      %695 = vmatpush2.bf16.msra.mxu0 0
      %696 = vmatprep.subr.bf16.mxu0 0
      %697 = vmatpush2.bf16.msra.mxu0 0
      %698 = vmatprep.mubr.bf16.mxu0 0
      %699 = vmatmul.mubr.bf16.gmra.mxu0 %v664
      %v700 = vpop.f32.mrf.mxu0
      %v701 = vadd.f32 0.0, %v700
      %v702 = vpop.f32.mrf.mxu0
      %v703 = vadd.f32 0.0, %v702
      %v704 = vpop.f32.mrf.mxu0
      %v705 = vadd.f32 0.0, %v704
      %v706 = vpop.f32.mrf.mxu0
      %v707 = vadd.f32 0.0, %v706
      %708 = vdwg.mxu0
      %709 = vmatprep.subr.bf16.mxu0 0
      %710 = vmatpush1.bf16.msra.mxu0 0
      %711 = vmatprep.subr.bf16.mxu0 0
      %712 = vmatpush1.bf16.msra.mxu0 0
      %713 = vmatprep.subr.bf16.mxu0 0
      %714 = vmatpush1.bf16.msra.mxu0 0
      %715 = vmatprep.subr.bf16.mxu0 0
      %716 = vmatpush1.bf16.msra.mxu0 0
      %717 = vmatprep.subr.bf16.mxu0 0
      %718 = vmatpush1.bf16.msra.mxu0 0
      %719 = vmatprep.subr.bf16.mxu0 0
      %720 = vmatpush1.bf16.msra.mxu0 0
      %721 = vmatprep.subr.bf16.mxu0 0
      %722 = vmatpush1.bf16.msra.mxu0 0
      %723 = vmatprep.subr.bf16.mxu0 %v658
      %724 = vmatpush1.bf16.msra.mxu0 %v657
      %725 = vmatprep.subr.bf16.mxu0 0
      %726 = vmatpush2.bf16.msra.mxu0 0
      %727 = vmatprep.subr.bf16.mxu0 0
      %728 = vmatpush2.bf16.msra.mxu0 0
      %729 = vmatprep.subr.bf16.mxu0 0
      %730 = vmatpush2.bf16.msra.mxu0 0
      %731 = vmatprep.subr.bf16.mxu0 0
      %732 = vmatpush2.bf16.msra.mxu0 0
      %733 = vmatprep.subr.bf16.mxu0 0
      %734 = vmatpush2.bf16.msra.mxu0 0
      %735 = vmatprep.subr.bf16.mxu0 0
      %736 = vmatpush2.bf16.msra.mxu0 0
      %737 = vmatprep.subr.bf16.mxu0 0
      %738 = vmatpush2.bf16.msra.mxu0 0
      %739 = vmatprep.subr.bf16.mxu0 0
      %740 = vmatpush2.bf16.msra.mxu0 0
      %741 = vmatprep.mubr.bf16.mxu0 0
      %742 = vmatmul.mubr.bf16.gmra.mxu0 %v664
      %v743 = vpop.f32.mrf.mxu0
      %v744 = vadd.f32 0.0, %v743
      %v745 = vpop.f32.mrf.mxu0
      %v746 = vadd.f32 0.0, %v745
      %v747 = vpop.f32.mrf.mxu0
      %v748 = vadd.f32 0.0, %v747
      %v749 = vpop.f32.mrf.mxu0
      %v750 = vadd.f32 0.0, %v749
      %751 = vdwg.mxu0
      %v752 = vadd.f32 %v564, %v701
      %v753 = vadd.f32 %v566, %v703
      %v754 = vadd.f32 %v607, %v744
      %v755 = vadd.f32 %v609, %v746
      %v756 = vadd.f32 %v568, %v705
      %v757 = vadd.f32 %v570, %v707
      %v758 = vadd.f32 %v611, %v748
      %v759 = vadd.f32 %v613, %v750
      %v760 = vld [vmem:[%s384 + $0x4] sm:$0xff]
      %v761 = vld [vmem:[%s384 + $0xc] sm:$0xff]
      %v762 = vld [vmem:[%s384 + $0x14] sm:$0xf]
      %v763 = vld [vmem:[%s384 + $0x1c] sm:$0xff]
      %v764 = vld [vmem:[%s384 + $0x24] sm:$0xff]
      %v765 = vld [vmem:[%s384 + $0x2c] sm:$0xf]
      %766 = vrot.lane.b32.xlu0 %v393, 80
      %v767 = vpop.permute.xlu0 %766
      %v774 = vunpack.c.l.b16 %v760
      %v775 = vunpack.c.h.b16 %v760
      %v776 = vunpack.c.l.b16 %v761
      %v777 = vunpack.c.h.b16 %v761
      %v778 = vunpack.c.l.b16 %v762
      %v779 = vunpack.c.l.b16 %v763
      %v780 = vunpack.c.h.b16 %v763
      %v781 = vunpack.c.l.b16 %v764
      %v782 = vunpack.c.h.b16 %v764
      %v783 = vunpack.c.l.b16 %v765
      %v784 = vpack.c.b16 %v779, %v774
      %v785 = vpack.c.b16 %v780, %v775
      %v786 = vpack.c.b16 %v781, %v776
      %v787 = vpack.c.b16 %v782, %v777
      %v788 = vpack.c.b16 %v783, %v778
      %789 = vrot.lane.b32.xlu0 %v784, 127
      %v790 = vpop.permute.xlu0 %789
      %791 = vrot.lane.b32.xlu0 %v785, 127
      %v792 = vpop.permute.xlu0 %791
      %793 = vrot.lane.b32.xlu0 %v786, 127
      %v794 = vpop.permute.xlu0 %793
      %795 = vrot.lane.b32.xlu0 %v787, 127
      %v796 = vpop.permute.xlu0 %795
      %797 = vrot.lane.b32.xlu0 %v788, 127
      %v798 = vpop.permute.xlu0 %797
      %v799 = vsel %vm654, %v790, %v792
      %v800 = vsel %vm654, %v792, %v794
      %v801 = vsel %vm654, %v794, %v796
      %v802 = vsel %vm654, %v796, %v798
      %v808 = vsel %vm416, %v767, 0
      %810 = vmatprep.subr.bf16.mxu0 0
      %811 = vmatpush1.bf16.msra.mxu0 0
      %812 = vmatprep.subr.bf16.mxu0 0
      %813 = vmatpush1.bf16.msra.mxu0 0
      %814 = vmatprep.subr.bf16.mxu0 0
      %815 = vmatpush1.bf16.msra.mxu0 0
      %816 = vmatprep.subr.bf16.mxu0 0
      %817 = vmatpush1.bf16.msra.mxu0 0
      %818 = vmatprep.subr.bf16.mxu0 0
      %819 = vmatpush1.bf16.msra.mxu0 0
      %820 = vmatprep.subr.bf16.mxu0 0
      %821 = vmatpush1.bf16.msra.mxu0 0
      %822 = vmatprep.subr.bf16.mxu0 0
      %823 = vmatpush1.bf16.msra.mxu0 0
      %824 = vmatprep.subr.bf16.mxu0 %v800
      %825 = vmatpush1.bf16.msra.mxu0 %v799
      %826 = vmatprep.subr.bf16.mxu0 0
      %827 = vmatpush2.bf16.msra.mxu0 0
      %828 = vmatprep.subr.bf16.mxu0 0
      %829 = vmatpush2.bf16.msra.mxu0 0
      %830 = vmatprep.subr.bf16.mxu0 0
      %831 = vmatpush2.bf16.msra.mxu0 0
      %832 = vmatprep.subr.bf16.mxu0 0
      %833 = vmatpush2.bf16.msra.mxu0 0
      %834 = vmatprep.subr.bf16.mxu0 0
      %835 = vmatpush2.bf16.msra.mxu0 0
      %836 = vmatprep.subr.bf16.mxu0 0
      %837 = vmatpush2.bf16.msra.mxu0 0
      %838 = vmatprep.subr.bf16.mxu0 0
      %839 = vmatpush2.bf16.msra.mxu0 0
      %840 = vmatprep.subr.bf16.mxu0 0
      %841 = vmatpush2.bf16.msra.mxu0 0
      %842 = vmatprep.mubr.bf16.mxu0 0
      %843 = vmatmul.mubr.bf16.gmra.mxu0 %v808
      %v844 = vpop.f32.mrf.mxu0
      %v845 = vadd.f32 0.0, %v844
      %v846 = vpop.f32.mrf.mxu0
      %v847 = vadd.f32 0.0, %v846
      %v848 = vpop.f32.mrf.mxu0
      %v849 = vadd.f32 0.0, %v848
      %v850 = vpop.f32.mrf.mxu0
      %v851 = vadd.f32 0.0, %v850
      %852 = vdwg.mxu0
      %853 = vmatprep.subr.bf16.mxu0 0
      %854 = vmatpush1.bf16.msra.mxu0 0
      %855 = vmatprep.subr.bf16.mxu0 0
      %856 = vmatpush1.bf16.msra.mxu0 0
      %857 = vmatprep.subr.bf16.mxu0 0
      %858 = vmatpush1.bf16.msra.mxu0 0
      %859 = vmatprep.subr.bf16.mxu0 0
      %860 = vmatpush1.bf16.msra.mxu0 0
      %861 = vmatprep.subr.bf16.mxu0 0
      %862 = vmatpush1.bf16.msra.mxu0 0
      %863 = vmatprep.subr.bf16.mxu0 0
      %864 = vmatpush1.bf16.msra.mxu0 0
      %865 = vmatprep.subr.bf16.mxu0 0
      %866 = vmatpush1.bf16.msra.mxu0 0
      %867 = vmatprep.subr.bf16.mxu0 %v802
      %868 = vmatpush1.bf16.msra.mxu0 %v801
      %869 = vmatprep.subr.bf16.mxu0 0
      %870 = vmatpush2.bf16.msra.mxu0 0
      %871 = vmatprep.subr.bf16.mxu0 0
      %872 = vmatpush2.bf16.msra.mxu0 0
      %873 = vmatprep.subr.bf16.mxu0 0
      %874 = vmatpush2.bf16.msra.mxu0 0
      %875 = vmatprep.subr.bf16.mxu0 0
      %876 = vmatpush2.bf16.msra.mxu0 0
      %877 = vmatprep.subr.bf16.mxu0 0
      %878 = vmatpush2.bf16.msra.mxu0 0
      %879 = vmatprep.subr.bf16.mxu0 0
      %880 = vmatpush2.bf16.msra.mxu0 0
      %881 = vmatprep.subr.bf16.mxu0 0
      %882 = vmatpush2.bf16.msra.mxu0 0
      %883 = vmatprep.subr.bf16.mxu0 0
      %884 = vmatpush2.bf16.msra.mxu0 0
      %885 = vmatprep.mubr.bf16.mxu0 0
      %886 = vmatmul.mubr.bf16.gmra.mxu0 %v808
      %v887 = vpop.f32.mrf.mxu0
      %v888 = vadd.f32 0.0, %v887
      %v889 = vpop.f32.mrf.mxu0
      %v890 = vadd.f32 0.0, %v889
      %v891 = vpop.f32.mrf.mxu0
      %v892 = vadd.f32 0.0, %v891
      %v893 = vpop.f32.mrf.mxu0
      %v894 = vadd.f32 0.0, %v893
      %895 = vdwg.mxu0
      %v896 = vadd.f32 %v752, %v845
      %v897 = vadd.f32 %v753, %v847
      %v898 = vadd.f32 %v754, %v888
      %v899 = vadd.f32 %v755, %v890
      %v900 = vadd.f32 %v756, %v849
      %v901 = vadd.f32 %v757, %v851
      %v902 = vadd.f32 %v758, %v892
      %v903 = vadd.f32 %v759, %v894
      %904 = vrot.lane.b32.xlu0 %v393, 64
      %v905 = vpop.permute.xlu0 %904
      %906 = vrot.lane.b32.xlu0 %v639, 126
      %v907 = vpop.permute.xlu0 %906
      %908 = vrot.lane.b32.xlu0 %v640, 126
      %v909 = vpop.permute.xlu0 %908
      %910 = vrot.lane.b32.xlu0 %v641, 126
      %v911 = vpop.permute.xlu0 %910
      %912 = vrot.lane.b32.xlu0 %v642, 126
      %v913 = vpop.permute.xlu0 %912
      %914 = vrot.lane.b32.xlu0 %v643, 126
      %v915 = vpop.permute.xlu0 %914
      %vm916 = vcmask 1031168
      %v917 = vsel %vm916, %v907, %v909
      %v918 = vsel %vm916, %v909, %v911
      %v919 = vsel %vm916, %v911, %v913
      %v920 = vsel %vm916, %v913, %v915
      %v926 = vsel %vm416, %v905, 0
      %928 = vmatprep.subr.bf16.mxu0 0
      %929 = vmatpush1.bf16.msra.mxu0 0
      %930 = vmatprep.subr.bf16.mxu0 0
      %931 = vmatpush1.bf16.msra.mxu0 0
      %932 = vmatprep.subr.bf16.mxu0 0
      %933 = vmatpush1.bf16.msra.mxu0 0
      %934 = vmatprep.subr.bf16.mxu0 0
      %935 = vmatpush1.bf16.msra.mxu0 0
      %936 = vmatprep.subr.bf16.mxu0 0
      %937 = vmatpush1.bf16.msra.mxu0 0
      %938 = vmatprep.subr.bf16.mxu0 0
      %939 = vmatpush1.bf16.msra.mxu0 0
      %940 = vmatprep.subr.bf16.mxu0 0
      %941 = vmatpush1.bf16.msra.mxu0 0
      %942 = vmatprep.subr.bf16.mxu0 %v918
      %943 = vmatpush1.bf16.msra.mxu0 %v917
      %944 = vmatprep.subr.bf16.mxu0 0
      %945 = vmatpush2.bf16.msra.mxu0 0
      %946 = vmatprep.subr.bf16.mxu0 0
      %947 = vmatpush2.bf16.msra.mxu0 0
      %948 = vmatprep.subr.bf16.mxu0 0
      %949 = vmatpush2.bf16.msra.mxu0 0
      %950 = vmatprep.subr.bf16.mxu0 0
      %951 = vmatpush2.bf16.msra.mxu0 0
      %952 = vmatprep.subr.bf16.mxu0 0
      %953 = vmatpush2.bf16.msra.mxu0 0
      %954 = vmatprep.subr.bf16.mxu0 0
      %955 = vmatpush2.bf16.msra.mxu0 0
      %956 = vmatprep.subr.bf16.mxu0 0
      %957 = vmatpush2.bf16.msra.mxu0 0
      %958 = vmatprep.subr.bf16.mxu0 0
      %959 = vmatpush2.bf16.msra.mxu0 0
      %960 = vmatprep.mubr.bf16.mxu0 0
      %961 = vmatmul.mubr.bf16.gmra.mxu0 %v926
      %v962 = vpop.f32.mrf.mxu0
      %v963 = vadd.f32 0.0, %v962
      %v964 = vpop.f32.mrf.mxu0
      %v965 = vadd.f32 0.0, %v964
      %v966 = vpop.f32.mrf.mxu0
      %v967 = vadd.f32 0.0, %v966
      %v968 = vpop.f32.mrf.mxu0
      %v969 = vadd.f32 0.0, %v968
      %970 = vdwg.mxu0
      %971 = vmatprep.subr.bf16.mxu0 0
      %972 = vmatpush1.bf16.msra.mxu0 0
      %973 = vmatprep.subr.bf16.mxu0 0
      %974 = vmatpush1.bf16.msra.mxu0 0
      %975 = vmatprep.subr.bf16.mxu0 0
      %976 = vmatpush1.bf16.msra.mxu0 0
      %977 = vmatprep.subr.bf16.mxu0 0
      %978 = vmatpush1.bf16.msra.mxu0 0
      %979 = vmatprep.subr.bf16.mxu0 0
      %980 = vmatpush1.bf16.msra.mxu0 0
      %981 = vmatprep.subr.bf16.mxu0 0
      %982 = vmatpush1.bf16.msra.mxu0 0
      %983 = vmatprep.subr.bf16.mxu0 0
      %984 = vmatpush1.bf16.msra.mxu0 0
      %985 = vmatprep.subr.bf16.mxu0 %v920
      %986 = vmatpush1.bf16.msra.mxu0 %v919
      %987 = vmatprep.subr.bf16.mxu0 0
      %988 = vmatpush2.bf16.msra.mxu0 0
      %989 = vmatprep.subr.bf16.mxu0 0
      %990 = vmatpush2.bf16.msra.mxu0 0
      %991 = vmatprep.subr.bf16.mxu0 0
      %992 = vmatpush2.bf16.msra.mxu0 0
      %993 = vmatprep.subr.bf16.mxu0 0
      %994 = vmatpush2.bf16.msra.mxu0 0
      %995 = vmatprep.subr.bf16.mxu0 0
      %996 = vmatpush2.bf16.msra.mxu0 0
      %997 = vmatprep.subr.bf16.mxu0 0
      %998 = vmatpush2.bf16.msra.mxu0 0
      %999 = vmatprep.subr.bf16.mxu0 0
      %1000 = vmatpush2.bf16.msra.mxu0 0
      %1001 = vmatprep.subr.bf16.mxu0 0
      %1002 = vmatpush2.bf16.msra.mxu0 0
      %1003 = vmatprep.mubr.bf16.mxu0 0
      %1004 = vmatmul.mubr.bf16.gmra.mxu0 %v926
      %v1005 = vpop.f32.mrf.mxu0
      %v1006 = vadd.f32 0.0, %v1005
      %v1007 = vpop.f32.mrf.mxu0
      %v1008 = vadd.f32 0.0, %v1007
      %v1009 = vpop.f32.mrf.mxu0
      %v1010 = vadd.f32 0.0, %v1009
      %v1011 = vpop.f32.mrf.mxu0
      %v1012 = vadd.f32 0.0, %v1011
      %1013 = vdwg.mxu0
      %v1014 = vadd.f32 %v896, %v963
      %v1015 = vadd.f32 %v897, %v965
      %v1016 = vadd.f32 %v898, %v1006
      %v1017 = vadd.f32 %v899, %v1008
      %v1018 = vadd.f32 %v900, %v967
      %v1019 = vadd.f32 %v901, %v969
      %v1020 = vadd.f32 %v902, %v1010
      %v1021 = vadd.f32 %v903, %v1012
      %1022 = vrot.lane.b32.xlu0 %v393, 48
      %v1023 = vpop.permute.xlu0 %1022
      %1024 = vrot.lane.b32.xlu0 %v639, 108
      %v1025 = vpop.permute.xlu0 %1024
      %1026 = vrot.lane.b32.xlu0 %v640, 108
      %v1027 = vpop.permute.xlu0 %1026
      %1028 = vrot.lane.b32.xlu0 %v641, 108
      %v1029 = vpop.permute.xlu0 %1028
      %1030 = vrot.lane.b32.xlu0 %v642, 108
      %v1031 = vpop.permute.xlu0 %1030
      %1032 = vrot.lane.b32.xlu0 %v643, 108
      %v1033 = vpop.permute.xlu0 %1032
      %vm1034 = vcmask 883712
      %v1035 = vsel %vm1034, %v1025, %v1027
      %v1036 = vsel %vm1034, %v1027, %v1029
      %v1037 = vsel %vm1034, %v1029, %v1031
      %v1038 = vsel %vm1034, %v1031, %v1033
      %v1044 = vsel %vm416, %v1023, 0
      %1046 = vmatprep.subr.bf16.mxu0 0
      %1047 = vmatpush1.bf16.msra.mxu0 0
      %1048 = vmatprep.subr.bf16.mxu0 0
      %1049 = vmatpush1.bf16.msra.mxu0 0
      %1050 = vmatprep.subr.bf16.mxu0 0
      %1051 = vmatpush1.bf16.msra.mxu0 0
      %1052 = vmatprep.subr.bf16.mxu0 0
      %1053 = vmatpush1.bf16.msra.mxu0 0
      %1054 = vmatprep.subr.bf16.mxu0 0
      %1055 = vmatpush1.bf16.msra.mxu0 0
      %1056 = vmatprep.subr.bf16.mxu0 0
      %1057 = vmatpush1.bf16.msra.mxu0 0
      %1058 = vmatprep.subr.bf16.mxu0 0
      %1059 = vmatpush1.bf16.msra.mxu0 0
      %1060 = vmatprep.subr.bf16.mxu0 %v1036
      %1061 = vmatpush1.bf16.msra.mxu0 %v1035
      %1062 = vmatprep.subr.bf16.mxu0 0
      %1063 = vmatpush2.bf16.msra.mxu0 0
      %1064 = vmatprep.subr.bf16.mxu0 0
      %1065 = vmatpush2.bf16.msra.mxu0 0
      %1066 = vmatprep.subr.bf16.mxu0 0
      %1067 = vmatpush2.bf16.msra.mxu0 0
      %1068 = vmatprep.subr.bf16.mxu0 0
      %1069 = vmatpush2.bf16.msra.mxu0 0
      %1070 = vmatprep.subr.bf16.mxu0 0
      %1071 = vmatpush2.bf16.msra.mxu0 0
      %1072 = vmatprep.subr.bf16.mxu0 0
      %1073 = vmatpush2.bf16.msra.mxu0 0
      %1074 = vmatprep.subr.bf16.mxu0 0
      %1075 = vmatpush2.bf16.msra.mxu0 0
      %1076 = vmatprep.subr.bf16.mxu0 0
      %1077 = vmatpush2.bf16.msra.mxu0 0
      %1078 = vmatprep.mubr.bf16.mxu0 0
      %1079 = vmatmul.mubr.bf16.gmra.mxu0 %v1044
      %v1080 = vpop.f32.mrf.mxu0
      %v1081 = vadd.f32 0.0, %v1080
      %v1082 = vpop.f32.mrf.mxu0
      %v1083 = vadd.f32 0.0, %v1082
      %v1084 = vpop.f32.mrf.mxu0
      %v1085 = vadd.f32 0.0, %v1084
      %v1086 = vpop.f32.mrf.mxu0
      %v1087 = vadd.f32 0.0, %v1086
      %1088 = vdwg.mxu0
      %1089 = vmatprep.subr.bf16.mxu0 0
      %1090 = vmatpush1.bf16.msra.mxu0 0
      %1091 = vmatprep.subr.bf16.mxu0 0
      %1092 = vmatpush1.bf16.msra.mxu0 0
      %1093 = vmatprep.subr.bf16.mxu0 0
      %1094 = vmatpush1.bf16.msra.mxu0 0
      %1095 = vmatprep.subr.bf16.mxu0 0
      %1096 = vmatpush1.bf16.msra.mxu0 0
      %1097 = vmatprep.subr.bf16.mxu0 0
      %1098 = vmatpush1.bf16.msra.mxu0 0
      %1099 = vmatprep.subr.bf16.mxu0 0
      %1100 = vmatpush1.bf16.msra.mxu0 0
      %1101 = vmatprep.subr.bf16.mxu0 0
      %1102 = vmatpush1.bf16.msra.mxu0 0
      %1103 = vmatprep.subr.bf16.mxu0 %v1038
      %1104 = vmatpush1.bf16.msra.mxu0 %v1037
      %1105 = vmatprep.subr.bf16.mxu0 0
      %1106 = vmatpush2.bf16.msra.mxu0 0
      %1107 = vmatprep.subr.bf16.mxu0 0
      %1108 = vmatpush2.bf16.msra.mxu0 0
      %1109 = vmatprep.subr.bf16.mxu0 0
      %1110 = vmatpush2.bf16.msra.mxu0 0
      %1111 = vmatprep.subr.bf16.mxu0 0
      %1112 = vmatpush2.bf16.msra.mxu0 0
      %1113 = vmatprep.subr.bf16.mxu0 0
      %1114 = vmatpush2.bf16.msra.mxu0 0
      %1115 = vmatprep.subr.bf16.mxu0 0
      %1116 = vmatpush2.bf16.msra.mxu0 0
      %1117 = vmatprep.subr.bf16.mxu0 0
      %1118 = vmatpush2.bf16.msra.mxu0 0
      %1119 = vmatprep.subr.bf16.mxu0 0
      %1120 = vmatpush2.bf16.msra.mxu0 0
      %1121 = vmatprep.mubr.bf16.mxu0 0
      %1122 = vmatmul.mubr.bf16.gmra.mxu0 %v1044
      %v1123 = vpop.f32.mrf.mxu0
      %v1124 = vadd.f32 0.0, %v1123
      %v1125 = vpop.f32.mrf.mxu0
      %v1126 = vadd.f32 0.0, %v1125
      %v1127 = vpop.f32.mrf.mxu0
      %v1128 = vadd.f32 0.0, %v1127
      %v1129 = vpop.f32.mrf.mxu0
      %v1130 = vadd.f32 0.0, %v1129
      %1131 = vdwg.mxu0
      %v1132 = vadd.f32 %v1014, %v1081
      %v1133 = vadd.f32 %v1015, %v1083
      %v1134 = vadd.f32 %v1016, %v1124
      %v1135 = vadd.f32 %v1017, %v1126
      %v1136 = vadd.f32 %v1018, %v1085
      %v1137 = vadd.f32 %v1019, %v1087
      %v1138 = vadd.f32 %v1020, %v1128
      %v1139 = vadd.f32 %v1021, %v1130
      %1140 = vrot.lane.b32.xlu0 %v393, 32
      %v1141 = vpop.permute.xlu0 %1140
      %1142 = vrot.lane.b32.xlu0 %v784, 108
      %v1143 = vpop.permute.xlu0 %1142
      %1144 = vrot.lane.b32.xlu0 %v785, 108
      %v1145 = vpop.permute.xlu0 %1144
      %1146 = vrot.lane.b32.xlu0 %v786, 108
      %v1147 = vpop.permute.xlu0 %1146
      %1148 = vrot.lane.b32.xlu0 %v787, 108
      %v1149 = vpop.permute.xlu0 %1148
      %1150 = vrot.lane.b32.xlu0 %v788, 108
      %v1151 = vpop.permute.xlu0 %1150
      %v1152 = vsel %vm1034, %v1143, %v1145
      %v1153 = vsel %vm1034, %v1145, %v1147
      %v1154 = vsel %vm1034, %v1147, %v1149
      %v1155 = vsel %vm1034, %v1149, %v1151
      %v1161 = vsel %vm416, %v1141, 0
      %1163 = vmatprep.subr.bf16.mxu0 0
      %1164 = vmatpush1.bf16.msra.mxu0 0
      %1165 = vmatprep.subr.bf16.mxu0 0
      %1166 = vmatpush1.bf16.msra.mxu0 0
      %1167 = vmatprep.subr.bf16.mxu0 0
      %1168 = vmatpush1.bf16.msra.mxu0 0
      %1169 = vmatprep.subr.bf16.mxu0 0
      %1170 = vmatpush1.bf16.msra.mxu0 0
      %1171 = vmatprep.subr.bf16.mxu0 0
      %1172 = vmatpush1.bf16.msra.mxu0 0
      %1173 = vmatprep.subr.bf16.mxu0 0
      %1174 = vmatpush1.bf16.msra.mxu0 0
      %1175 = vmatprep.subr.bf16.mxu0 0
      %1176 = vmatpush1.bf16.msra.mxu0 0
      %1177 = vmatprep.subr.bf16.mxu0 %v1153
      %1178 = vmatpush1.bf16.msra.mxu0 %v1152
      %1179 = vmatprep.subr.bf16.mxu0 0
      %1180 = vmatpush2.bf16.msra.mxu0 0
      %1181 = vmatprep.subr.bf16.mxu0 0
      %1182 = vmatpush2.bf16.msra.mxu0 0
      %1183 = vmatprep.subr.bf16.mxu0 0
      %1184 = vmatpush2.bf16.msra.mxu0 0
      %1185 = vmatprep.subr.bf16.mxu0 0
      %1186 = vmatpush2.bf16.msra.mxu0 0
      %1187 = vmatprep.subr.bf16.mxu0 0
      %1188 = vmatpush2.bf16.msra.mxu0 0
      %1189 = vmatprep.subr.bf16.mxu0 0
      %1190 = vmatpush2.bf16.msra.mxu0 0
      %1191 = vmatprep.subr.bf16.mxu0 0
      %1192 = vmatpush2.bf16.msra.mxu0 0
      %1193 = vmatprep.subr.bf16.mxu0 0
      %1194 = vmatpush2.bf16.msra.mxu0 0
      %1195 = vmatprep.mubr.bf16.mxu0 0
      %1196 = vmatmul.mubr.bf16.gmra.mxu0 %v1161
      %v1197 = vpop.f32.mrf.mxu0
      %v1198 = vadd.f32 0.0, %v1197
      %v1199 = vpop.f32.mrf.mxu0
      %v1200 = vadd.f32 0.0, %v1199
      %v1201 = vpop.f32.mrf.mxu0
      %v1202 = vadd.f32 0.0, %v1201
      %v1203 = vpop.f32.mrf.mxu0
      %v1204 = vadd.f32 0.0, %v1203
      %1205 = vdwg.mxu0
      %1206 = vmatprep.subr.bf16.mxu0 0
      %1207 = vmatpush1.bf16.msra.mxu0 0
      %1208 = vmatprep.subr.bf16.mxu0 0
      %1209 = vmatpush1.bf16.msra.mxu0 0
      %1210 = vmatprep.subr.bf16.mxu0 0
      %1211 = vmatpush1.bf16.msra.mxu0 0
      %1212 = vmatprep.subr.bf16.mxu0 0
      %1213 = vmatpush1.bf16.msra.mxu0 0
      %1214 = vmatprep.subr.bf16.mxu0 0
      %1215 = vmatpush1.bf16.msra.mxu0 0
      %1216 = vmatprep.subr.bf16.mxu0 0
      %1217 = vmatpush1.bf16.msra.mxu0 0
      %1218 = vmatprep.subr.bf16.mxu0 0
      %1219 = vmatpush1.bf16.msra.mxu0 0
      %1220 = vmatprep.subr.bf16.mxu0 %v1155
      %1221 = vmatpush1.bf16.msra.mxu0 %v1154
      %1222 = vmatprep.subr.bf16.mxu0 0
      %1223 = vmatpush2.bf16.msra.mxu0 0
      %1224 = vmatprep.subr.bf16.mxu0 0
      %1225 = vmatpush2.bf16.msra.mxu0 0
      %1226 = vmatprep.subr.bf16.mxu0 0
      %1227 = vmatpush2.bf16.msra.mxu0 0
      %1228 = vmatprep.subr.bf16.mxu0 0
      %1229 = vmatpush2.bf16.msra.mxu0 0
      %1230 = vmatprep.subr.bf16.mxu0 0
      %1231 = vmatpush2.bf16.msra.mxu0 0
      %1232 = vmatprep.subr.bf16.mxu0 0
      %1233 = vmatpush2.bf16.msra.mxu0 0
      %1234 = vmatprep.subr.bf16.mxu0 0
      %1235 = vmatpush2.bf16.msra.mxu0 0
      %1236 = vmatprep.subr.bf16.mxu0 0
      %1237 = vmatpush2.bf16.msra.mxu0 0
      %1238 = vmatprep.mubr.bf16.mxu0 0
      %1239 = vmatmul.mubr.bf16.gmra.mxu0 %v1161
      %v1240 = vpop.f32.mrf.mxu0
      %v1241 = vadd.f32 0.0, %v1240
      %v1242 = vpop.f32.mrf.mxu0
      %v1243 = vadd.f32 0.0, %v1242
      %v1244 = vpop.f32.mrf.mxu0
      %v1245 = vadd.f32 0.0, %v1244
      %v1246 = vpop.f32.mrf.mxu0
      %v1247 = vadd.f32 0.0, %v1246
      %1248 = vdwg.mxu0
      %v1249 = vadd.f32 %v1132, %v1198
      %v1250 = vadd.f32 %v1133, %v1200
      %v1251 = vadd.f32 %v1134, %v1241
      %v1252 = vadd.f32 %v1135, %v1243
      %v1253 = vadd.f32 %v1136, %v1202
      %v1254 = vadd.f32 %v1137, %v1204
      %v1255 = vadd.f32 %v1138, %v1245
      %v1256 = vadd.f32 %v1139, %v1247
      %1257 = vrot.lane.b32.xlu0 %v393, 16
      %v1258 = vpop.permute.xlu0 %1257
      %1259 = vrot.lane.b32.xlu0 %v639, 107
      %v1260 = vpop.permute.xlu0 %1259
      %1261 = vrot.lane.b32.xlu0 %v640, 107
      %v1262 = vpop.permute.xlu0 %1261
      %1263 = vrot.lane.b32.xlu0 %v641, 107
      %v1264 = vpop.permute.xlu0 %1263
      %1265 = vrot.lane.b32.xlu0 %v642, 107
      %v1266 = vpop.permute.xlu0 %1265
      %1267 = vrot.lane.b32.xlu0 %v643, 107
      %v1268 = vpop.permute.xlu0 %1267
      %vm1269 = vcmask 875520
      %v1270 = vsel %vm1269, %v1260, %v1262
      %v1271 = vsel %vm1269, %v1262, %v1264
      %v1272 = vsel %vm1269, %v1264, %v1266
      %v1273 = vsel %vm1269, %v1266, %v1268
      %v1279 = vsel %vm416, %v1258, 0
      %1281 = vmatprep.subr.bf16.mxu0 0
      %1282 = vmatpush1.bf16.msra.mxu0 0
      %1283 = vmatprep.subr.bf16.mxu0 0
      %1284 = vmatpush1.bf16.msra.mxu0 0
      %1285 = vmatprep.subr.bf16.mxu0 0
      %1286 = vmatpush1.bf16.msra.mxu0 0
      %1287 = vmatprep.subr.bf16.mxu0 0
      %1288 = vmatpush1.bf16.msra.mxu0 0
      %1289 = vmatprep.subr.bf16.mxu0 0
      %1290 = vmatpush1.bf16.msra.mxu0 0
      %1291 = vmatprep.subr.bf16.mxu0 0
      %1292 = vmatpush1.bf16.msra.mxu0 0
      %1293 = vmatprep.subr.bf16.mxu0 0
      %1294 = vmatpush1.bf16.msra.mxu0 0
      %1295 = vmatprep.subr.bf16.mxu0 %v1271
      %1296 = vmatpush1.bf16.msra.mxu0 %v1270
      %1297 = vmatprep.subr.bf16.mxu0 0
      %1298 = vmatpush2.bf16.msra.mxu0 0
      %1299 = vmatprep.subr.bf16.mxu0 0
      %1300 = vmatpush2.bf16.msra.mxu0 0
      %1301 = vmatprep.subr.bf16.mxu0 0
      %1302 = vmatpush2.bf16.msra.mxu0 0
      %1303 = vmatprep.subr.bf16.mxu0 0
      %1304 = vmatpush2.bf16.msra.mxu0 0
      %1305 = vmatprep.subr.bf16.mxu0 0
      %1306 = vmatpush2.bf16.msra.mxu0 0
      %1307 = vmatprep.subr.bf16.mxu0 0
      %1308 = vmatpush2.bf16.msra.mxu0 0
      %1309 = vmatprep.subr.bf16.mxu0 0
      %1310 = vmatpush2.bf16.msra.mxu0 0
      %1311 = vmatprep.subr.bf16.mxu0 0
      %1312 = vmatpush2.bf16.msra.mxu0 0
      %1313 = vmatprep.mubr.bf16.mxu0 0
      %1314 = vmatmul.mubr.bf16.gmra.mxu0 %v1279
      %v1315 = vpop.f32.mrf.mxu0
      %v1316 = vadd.f32 0.0, %v1315
      %v1317 = vpop.f32.mrf.mxu0
      %v1318 = vadd.f32 0.0, %v1317
      %v1319 = vpop.f32.mrf.mxu0
      %v1320 = vadd.f32 0.0, %v1319
      %v1321 = vpop.f32.mrf.mxu0
      %v1322 = vadd.f32 0.0, %v1321
      %1323 = vdwg.mxu0
      %1324 = vmatprep.subr.bf16.mxu0 0
      %1325 = vmatpush1.bf16.msra.mxu0 0
      %1326 = vmatprep.subr.bf16.mxu0 0
      %1327 = vmatpush1.bf16.msra.mxu0 0
      %1328 = vmatprep.subr.bf16.mxu0 0
      %1329 = vmatpush1.bf16.msra.mxu0 0
      %1330 = vmatprep.subr.bf16.mxu0 0
      %1331 = vmatpush1.bf16.msra.mxu0 0
      %1332 = vmatprep.subr.bf16.mxu0 0
      %1333 = vmatpush1.bf16.msra.mxu0 0
      %1334 = vmatprep.subr.bf16.mxu0 0
      %1335 = vmatpush1.bf16.msra.mxu0 0
      %1336 = vmatprep.subr.bf16.mxu0 0
      %1337 = vmatpush1.bf16.msra.mxu0 0
      %1338 = vmatprep.subr.bf16.mxu0 %v1273
      %1339 = vmatpush1.bf16.msra.mxu0 %v1272
      %1340 = vmatprep.subr.bf16.mxu0 0
      %1341 = vmatpush2.bf16.msra.mxu0 0
      %1342 = vmatprep.subr.bf16.mxu0 0
      %1343 = vmatpush2.bf16.msra.mxu0 0
      %1344 = vmatprep.subr.bf16.mxu0 0
      %1345 = vmatpush2.bf16.msra.mxu0 0
      %1346 = vmatprep.subr.bf16.mxu0 0
      %1347 = vmatpush2.bf16.msra.mxu0 0
      %1348 = vmatprep.subr.bf16.mxu0 0
      %1349 = vmatpush2.bf16.msra.mxu0 0
      %1350 = vmatprep.subr.bf16.mxu0 0
      %1351 = vmatpush2.bf16.msra.mxu0 0
      %1352 = vmatprep.subr.bf16.mxu0 0
      %1353 = vmatpush2.bf16.msra.mxu0 0
      %1354 = vmatprep.subr.bf16.mxu0 0
      %1355 = vmatpush2.bf16.msra.mxu0 0
      %1356 = vmatprep.mubr.bf16.mxu0 0
      %1357 = vmatmul.mubr.bf16.gmra.mxu0 %v1279
      %v1358 = vpop.f32.mrf.mxu0
      %v1359 = vadd.f32 0.0, %v1358
      %v1360 = vpop.f32.mrf.mxu0
      %v1361 = vadd.f32 0.0, %v1360
      %v1362 = vpop.f32.mrf.mxu0
      %v1363 = vadd.f32 0.0, %v1362
      %v1364 = vpop.f32.mrf.mxu0
      %v1365 = vadd.f32 0.0, %v1364
      %1366 = vdwg.mxu0
      %v1367 = vadd.f32 %v1249, %v1316
      %v1368 = vadd.f32 %v1250, %v1318
      %v1369 = vadd.f32 %v1251, %v1359
      %v1370 = vadd.f32 %v1252, %v1361
      %v1371 = vadd.f32 %v1253, %v1320
      %v1372 = vadd.f32 %v1254, %v1322
      %v1373 = vadd.f32 %v1255, %v1363
      %v1374 = vadd.f32 %v1256, %v1365
      %v1375 = vunpack.c.h.b16 %v378
      %v1376 = vunpack.c.h.b16 %v379
      %v1377 = vpack.c.b16 %v1376, %v1375
      %1378 = vrot.lane.b32.xlu0 %v784, 107
      %v1379 = vpop.permute.xlu0 %1378
      %1380 = vrot.lane.b32.xlu0 %v785, 107
      %v1381 = vpop.permute.xlu0 %1380
      %1382 = vrot.lane.b32.xlu0 %v786, 107
      %v1383 = vpop.permute.xlu0 %1382
      %1384 = vrot.lane.b32.xlu0 %v787, 107
      %v1385 = vpop.permute.xlu0 %1384
      %1386 = vrot.lane.b32.xlu0 %v788, 107
      %v1387 = vpop.permute.xlu0 %1386
      %v1388 = vsel %vm1269, %v1379, %v1381
      %v1389 = vsel %vm1269, %v1381, %v1383
      %v1390 = vsel %vm1269, %v1383, %v1385
      %v1391 = vsel %vm1269, %v1385, %v1387
      %v1397 = vsel %vm416, %v1377, 0
      %1399 = vmatprep.subr.bf16.mxu0 0
      %1400 = vmatpush1.bf16.msra.mxu0 0
      %1401 = vmatprep.subr.bf16.mxu0 0
      %1402 = vmatpush1.bf16.msra.mxu0 0
      %1403 = vmatprep.subr.bf16.mxu0 0
      %1404 = vmatpush1.bf16.msra.mxu0 0
      %1405 = vmatprep.subr.bf16.mxu0 0
      %1406 = vmatpush1.bf16.msra.mxu0 0
      %1407 = vmatprep.subr.bf16.mxu0 0
      %1408 = vmatpush1.bf16.msra.mxu0 0
      %1409 = vmatprep.subr.bf16.mxu0 0
      %1410 = vmatpush1.bf16.msra.mxu0 0
      %1411 = vmatprep.subr.bf16.mxu0 0
      %1412 = vmatpush1.bf16.msra.mxu0 0
      %1413 = vmatprep.subr.bf16.mxu0 %v1389
      %1414 = vmatpush1.bf16.msra.mxu0 %v1388
      %1415 = vmatprep.subr.bf16.mxu0 0
      %1416 = vmatpush2.bf16.msra.mxu0 0
      %1417 = vmatprep.subr.bf16.mxu0 0
      %1418 = vmatpush2.bf16.msra.mxu0 0
      %1419 = vmatprep.subr.bf16.mxu0 0
      %1420 = vmatpush2.bf16.msra.mxu0 0
      %1421 = vmatprep.subr.bf16.mxu0 0
      %1422 = vmatpush2.bf16.msra.mxu0 0
      %1423 = vmatprep.subr.bf16.mxu0 0
      %1424 = vmatpush2.bf16.msra.mxu0 0
      %1425 = vmatprep.subr.bf16.mxu0 0
      %1426 = vmatpush2.bf16.msra.mxu0 0
      %1427 = vmatprep.subr.bf16.mxu0 0
      %1428 = vmatpush2.bf16.msra.mxu0 0
      %1429 = vmatprep.subr.bf16.mxu0 0
      %1430 = vmatpush2.bf16.msra.mxu0 0
      %1431 = vmatprep.mubr.bf16.mxu0 0
      %1432 = vmatmul.mubr.bf16.gmra.mxu0 %v1397
      %v1433 = vpop.f32.mrf.mxu0
      %v1434 = vadd.f32 0.0, %v1433
      %v1435 = vpop.f32.mrf.mxu0
      %v1436 = vadd.f32 0.0, %v1435
      %v1437 = vpop.f32.mrf.mxu0
      %v1438 = vadd.f32 0.0, %v1437
      %v1439 = vpop.f32.mrf.mxu0
      %v1440 = vadd.f32 0.0, %v1439
      %1441 = vdwg.mxu0
      %1442 = vmatprep.subr.bf16.mxu0 0
      %1443 = vmatpush1.bf16.msra.mxu0 0
      %1444 = vmatprep.subr.bf16.mxu0 0
      %1445 = vmatpush1.bf16.msra.mxu0 0
      %1446 = vmatprep.subr.bf16.mxu0 0
      %1447 = vmatpush1.bf16.msra.mxu0 0
      %1448 = vmatprep.subr.bf16.mxu0 0
      %1449 = vmatpush1.bf16.msra.mxu0 0
      %1450 = vmatprep.subr.bf16.mxu0 0
      %1451 = vmatpush1.bf16.msra.mxu0 0
      %1452 = vmatprep.subr.bf16.mxu0 0
      %1453 = vmatpush1.bf16.msra.mxu0 0
      %1454 = vmatprep.subr.bf16.mxu0 0
      %1455 = vmatpush1.bf16.msra.mxu0 0
      %1456 = vmatprep.subr.bf16.mxu0 %v1391
      %1457 = vmatpush1.bf16.msra.mxu0 %v1390
      %1458 = vmatprep.subr.bf16.mxu0 0
      %1459 = vmatpush2.bf16.msra.mxu0 0
      %1460 = vmatprep.subr.bf16.mxu0 0
      %1461 = vmatpush2.bf16.msra.mxu0 0
      %1462 = vmatprep.subr.bf16.mxu0 0
      %1463 = vmatpush2.bf16.msra.mxu0 0
      %1464 = vmatprep.subr.bf16.mxu0 0
      %1465 = vmatpush2.bf16.msra.mxu0 0
      %1466 = vmatprep.subr.bf16.mxu0 0
      %1467 = vmatpush2.bf16.msra.mxu0 0
      %1468 = vmatprep.subr.bf16.mxu0 0
      %1469 = vmatpush2.bf16.msra.mxu0 0
      %1470 = vmatprep.subr.bf16.mxu0 0
      %1471 = vmatpush2.bf16.msra.mxu0 0
      %1472 = vmatprep.subr.bf16.mxu0 0
      %1473 = vmatpush2.bf16.msra.mxu0 0
      %1474 = vmatprep.mubr.bf16.mxu0 0
      %1475 = vmatmul.mubr.bf16.gmra.mxu0 %v1397
      %v1476 = vpop.f32.mrf.mxu0
      %v1477 = vadd.f32 0.0, %v1476
      %v1478 = vpop.f32.mrf.mxu0
      %v1479 = vadd.f32 0.0, %v1478
      %v1480 = vpop.f32.mrf.mxu0
      %v1481 = vadd.f32 0.0, %v1480
      %v1482 = vpop.f32.mrf.mxu0
      %v1483 = vadd.f32 0.0, %v1482
      %1484 = vdwg.mxu0
      %v1485 = vadd.f32 %v1367, %v1434
      %v1486 = vadd.f32 %v1368, %v1436
      %v1487 = vadd.f32 %v1369, %v1477
      %v1488 = vadd.f32 %v1370, %v1479
      %v1489 = vadd.f32 %v1371, %v1438
      %v1490 = vadd.f32 %v1372, %v1440
      %v1491 = vadd.f32 %v1373, %v1481
      %v1492 = vadd.f32 %v1374, %v1483
      %1493 = vrot.lane.b32.xlu0 %v1377, 112
      %v1494 = vpop.permute.xlu0 %1493
      %1495 = vrot.lane.b32.xlu0 %v639, 106
      %v1496 = vpop.permute.xlu0 %1495
      %1497 = vrot.lane.b32.xlu0 %v640, 106
      %v1498 = vpop.permute.xlu0 %1497
      %1499 = vrot.lane.b32.xlu0 %v641, 106
      %v1500 = vpop.permute.xlu0 %1499
      %1501 = vrot.lane.b32.xlu0 %v642, 106
      %v1502 = vpop.permute.xlu0 %1501
      %1503 = vrot.lane.b32.xlu0 %v643, 106
      %v1504 = vpop.permute.xlu0 %1503
      %vm1505 = vcmask 867328
      %v1506 = vsel %vm1505, %v1496, %v1498
      %v1507 = vsel %vm1505, %v1498, %v1500
      %v1508 = vsel %vm1505, %v1500, %v1502
      %v1509 = vsel %vm1505, %v1502, %v1504
      %v1515 = vsel %vm416, %v1494, 0
      %1517 = vmatprep.subr.bf16.mxu0 0
      %1518 = vmatpush1.bf16.msra.mxu0 0
      %1519 = vmatprep.subr.bf16.mxu0 0
      %1520 = vmatpush1.bf16.msra.mxu0 0
      %1521 = vmatprep.subr.bf16.mxu0 0
      %1522 = vmatpush1.bf16.msra.mxu0 0
      %1523 = vmatprep.subr.bf16.mxu0 0
      %1524 = vmatpush1.bf16.msra.mxu0 0
      %1525 = vmatprep.subr.bf16.mxu0 0
      %1526 = vmatpush1.bf16.msra.mxu0 0
      %1527 = vmatprep.subr.bf16.mxu0 0
      %1528 = vmatpush1.bf16.msra.mxu0 0
      %1529 = vmatprep.subr.bf16.mxu0 0
      %1530 = vmatpush1.bf16.msra.mxu0 0
      %1531 = vmatprep.subr.bf16.mxu0 %v1507
      %1532 = vmatpush1.bf16.msra.mxu0 %v1506
      %1533 = vmatprep.subr.bf16.mxu0 0
      %1534 = vmatpush2.bf16.msra.mxu0 0
      %1535 = vmatprep.subr.bf16.mxu0 0
      %1536 = vmatpush2.bf16.msra.mxu0 0
      %1537 = vmatprep.subr.bf16.mxu0 0
      %1538 = vmatpush2.bf16.msra.mxu0 0
      %1539 = vmatprep.subr.bf16.mxu0 0
      %1540 = vmatpush2.bf16.msra.mxu0 0
      %1541 = vmatprep.subr.bf16.mxu0 0
      %1542 = vmatpush2.bf16.msra.mxu0 0
      %1543 = vmatprep.subr.bf16.mxu0 0
      %1544 = vmatpush2.bf16.msra.mxu0 0
      %1545 = vmatprep.subr.bf16.mxu0 0
      %1546 = vmatpush2.bf16.msra.mxu0 0
      %1547 = vmatprep.subr.bf16.mxu0 0
      %1548 = vmatpush2.bf16.msra.mxu0 0
      %1549 = vmatprep.mubr.bf16.mxu0 0
      %1550 = vmatmul.mubr.bf16.gmra.mxu0 %v1515
      %v1551 = vpop.f32.mrf.mxu0
      %v1552 = vadd.f32 0.0, %v1551
      %v1553 = vpop.f32.mrf.mxu0
      %v1554 = vadd.f32 0.0, %v1553
      %v1555 = vpop.f32.mrf.mxu0
      %v1556 = vadd.f32 0.0, %v1555
      %v1557 = vpop.f32.mrf.mxu0
      %v1558 = vadd.f32 0.0, %v1557
      %1559 = vdwg.mxu0
      %1560 = vmatprep.subr.bf16.mxu0 0
      %1561 = vmatpush1.bf16.msra.mxu0 0
      %1562 = vmatprep.subr.bf16.mxu0 0
      %1563 = vmatpush1.bf16.msra.mxu0 0
      %1564 = vmatprep.subr.bf16.mxu0 0
      %1565 = vmatpush1.bf16.msra.mxu0 0
      %1566 = vmatprep.subr.bf16.mxu0 0
      %1567 = vmatpush1.bf16.msra.mxu0 0
      %1568 = vmatprep.subr.bf16.mxu0 0
      %1569 = vmatpush1.bf16.msra.mxu0 0
      %1570 = vmatprep.subr.bf16.mxu0 0
      %1571 = vmatpush1.bf16.msra.mxu0 0
      %1572 = vmatprep.subr.bf16.mxu0 0
      %1573 = vmatpush1.bf16.msra.mxu0 0
      %1574 = vmatprep.subr.bf16.mxu0 %v1509
      %1575 = vmatpush1.bf16.msra.mxu0 %v1508
      %1576 = vmatprep.subr.bf16.mxu0 0
      %1577 = vmatpush2.bf16.msra.mxu0 0
      %1578 = vmatprep.subr.bf16.mxu0 0
      %1579 = vmatpush2.bf16.msra.mxu0 0
      %1580 = vmatprep.subr.bf16.mxu0 0
      %1581 = vmatpush2.bf16.msra.mxu0 0
      %1582 = vmatprep.subr.bf16.mxu0 0
      %1583 = vmatpush2.bf16.msra.mxu0 0
      %1584 = vmatprep.subr.bf16.mxu0 0
      %1585 = vmatpush2.bf16.msra.mxu0 0
      %1586 = vmatprep.subr.bf16.mxu0 0
      %1587 = vmatpush2.bf16.msra.mxu0 0
      %1588 = vmatprep.subr.bf16.mxu0 0
      %1589 = vmatpush2.bf16.msra.mxu0 0
      %1590 = vmatprep.subr.bf16.mxu0 0
      %1591 = vmatpush2.bf16.msra.mxu0 0
      %1592 = vmatprep.mubr.bf16.mxu0 0
      %1593 = vmatmul.mubr.bf16.gmra.mxu0 %v1515
      %v1594 = vpop.f32.mrf.mxu0
      %v1595 = vadd.f32 0.0, %v1594
      %v1596 = vpop.f32.mrf.mxu0
      %v1597 = vadd.f32 0.0, %v1596
      %v1598 = vpop.f32.mrf.mxu0
      %v1599 = vadd.f32 0.0, %v1598
      %v1600 = vpop.f32.mrf.mxu0
      %v1601 = vadd.f32 0.0, %v1600
      %1602 = vdwg.mxu0
      %v1603 = vadd.f32 %v1485, %v1552
      %v1604 = vadd.f32 %v1486, %v1554
      %v1605 = vadd.f32 %v1487, %v1595
      %v1606 = vadd.f32 %v1488, %v1597
      %v1607 = vadd.f32 %v1489, %v1556
      %v1608 = vadd.f32 %v1490, %v1558
      %v1609 = vadd.f32 %v1491, %v1599
      %v1610 = vadd.f32 %v1492, %v1601
      %1611 = vrot.lane.b32.xlu0 %v1377, 96
      %v1612 = vpop.permute.xlu0 %1611
      %1613 = vrot.lane.b32.xlu0 %v639, 88
      %v1614 = vpop.permute.xlu0 %1613
      %1615 = vrot.lane.b32.xlu0 %v640, 88
      %v1616 = vpop.permute.xlu0 %1615
      %1617 = vrot.lane.b32.xlu0 %v641, 88
      %v1618 = vpop.permute.xlu0 %1617
      %1619 = vrot.lane.b32.xlu0 %v642, 88
      %v1620 = vpop.permute.xlu0 %1619
      %1621 = vrot.lane.b32.xlu0 %v643, 88
      %v1622 = vpop.permute.xlu0 %1621
      %vm1623 = vcmask 719872
      %v1624 = vsel %vm1623, %v1614, %v1616
      %v1625 = vsel %vm1623, %v1616, %v1618
      %v1626 = vsel %vm1623, %v1618, %v1620
      %v1627 = vsel %vm1623, %v1620, %v1622
      %v1633 = vsel %vm416, %v1612, 0
      %1635 = vmatprep.subr.bf16.mxu0 0
      %1636 = vmatpush1.bf16.msra.mxu0 0
      %1637 = vmatprep.subr.bf16.mxu0 0
      %1638 = vmatpush1.bf16.msra.mxu0 0
      %1639 = vmatprep.subr.bf16.mxu0 0
      %1640 = vmatpush1.bf16.msra.mxu0 0
      %1641 = vmatprep.subr.bf16.mxu0 0
      %1642 = vmatpush1.bf16.msra.mxu0 0
      %1643 = vmatprep.subr.bf16.mxu0 0
      %1644 = vmatpush1.bf16.msra.mxu0 0
      %1645 = vmatprep.subr.bf16.mxu0 0
      %1646 = vmatpush1.bf16.msra.mxu0 0
      %1647 = vmatprep.subr.bf16.mxu0 0
      %1648 = vmatpush1.bf16.msra.mxu0 0
      %1649 = vmatprep.subr.bf16.mxu0 %v1625
      %1650 = vmatpush1.bf16.msra.mxu0 %v1624
      %1651 = vmatprep.subr.bf16.mxu0 0
      %1652 = vmatpush2.bf16.msra.mxu0 0
      %1653 = vmatprep.subr.bf16.mxu0 0
      %1654 = vmatpush2.bf16.msra.mxu0 0
      %1655 = vmatprep.subr.bf16.mxu0 0
      %1656 = vmatpush2.bf16.msra.mxu0 0
      %1657 = vmatprep.subr.bf16.mxu0 0
      %1658 = vmatpush2.bf16.msra.mxu0 0
      %1659 = vmatprep.subr.bf16.mxu0 0
      %1660 = vmatpush2.bf16.msra.mxu0 0
      %1661 = vmatprep.subr.bf16.mxu0 0
      %1662 = vmatpush2.bf16.msra.mxu0 0
      %1663 = vmatprep.subr.bf16.mxu0 0
      %1664 = vmatpush2.bf16.msra.mxu0 0
      %1665 = vmatprep.subr.bf16.mxu0 0
      %1666 = vmatpush2.bf16.msra.mxu0 0
      %1667 = vmatprep.mubr.bf16.mxu0 0
      %1668 = vmatmul.mubr.bf16.gmra.mxu0 %v1633
      %v1669 = vpop.f32.mrf.mxu0
      %v1670 = vadd.f32 0.0, %v1669
      %v1671 = vpop.f32.mrf.mxu0
      %v1672 = vadd.f32 0.0, %v1671
      %v1673 = vpop.f32.mrf.mxu0
      %v1674 = vadd.f32 0.0, %v1673
      %v1675 = vpop.f32.mrf.mxu0
      %v1676 = vadd.f32 0.0, %v1675
      %1677 = vdwg.mxu0
      %1678 = vmatprep.subr.bf16.mxu0 0
      %1679 = vmatpush1.bf16.msra.mxu0 0
      %1680 = vmatprep.subr.bf16.mxu0 0
      %1681 = vmatpush1.bf16.msra.mxu0 0
      %1682 = vmatprep.subr.bf16.mxu0 0
      %1683 = vmatpush1.bf16.msra.mxu0 0
      %1684 = vmatprep.subr.bf16.mxu0 0
      %1685 = vmatpush1.bf16.msra.mxu0 0
      %1686 = vmatprep.subr.bf16.mxu0 0
      %1687 = vmatpush1.bf16.msra.mxu0 0
      %1688 = vmatprep.subr.bf16.mxu0 0
      %1689 = vmatpush1.bf16.msra.mxu0 0
      %1690 = vmatprep.subr.bf16.mxu0 0
      %1691 = vmatpush1.bf16.msra.mxu0 0
      %1692 = vmatprep.subr.bf16.mxu0 %v1627
      %1693 = vmatpush1.bf16.msra.mxu0 %v1626
      %1694 = vmatprep.subr.bf16.mxu0 0
      %1695 = vmatpush2.bf16.msra.mxu0 0
      %1696 = vmatprep.subr.bf16.mxu0 0
      %1697 = vmatpush2.bf16.msra.mxu0 0
      %1698 = vmatprep.subr.bf16.mxu0 0
      %1699 = vmatpush2.bf16.msra.mxu0 0
      %1700 = vmatprep.subr.bf16.mxu0 0
      %1701 = vmatpush2.bf16.msra.mxu0 0
      %1702 = vmatprep.subr.bf16.mxu0 0
      %1703 = vmatpush2.bf16.msra.mxu0 0
      %1704 = vmatprep.subr.bf16.mxu0 0
      %1705 = vmatpush2.bf16.msra.mxu0 0
      %1706 = vmatprep.subr.bf16.mxu0 0
      %1707 = vmatpush2.bf16.msra.mxu0 0
      %1708 = vmatprep.subr.bf16.mxu0 0
      %1709 = vmatpush2.bf16.msra.mxu0 0
      %1710 = vmatprep.mubr.bf16.mxu0 0
      %1711 = vmatmul.mubr.bf16.gmra.mxu0 %v1633
      %v1712 = vpop.f32.mrf.mxu0
      %v1713 = vadd.f32 0.0, %v1712
      %v1714 = vpop.f32.mrf.mxu0
      %v1715 = vadd.f32 0.0, %v1714
      %v1716 = vpop.f32.mrf.mxu0
      %v1717 = vadd.f32 0.0, %v1716
      %v1718 = vpop.f32.mrf.mxu0
      %v1719 = vadd.f32 0.0, %v1718
      %1720 = vdwg.mxu0
      %v1721 = vadd.f32 %v1603, %v1670
      %v1722 = vadd.f32 %v1604, %v1672
      %v1723 = vadd.f32 %v1605, %v1713
      %v1724 = vadd.f32 %v1606, %v1715
      %v1725 = vadd.f32 %v1607, %v1674
      %v1726 = vadd.f32 %v1608, %v1676
      %v1727 = vadd.f32 %v1609, %v1717
      %v1728 = vadd.f32 %v1610, %v1719
      %1729 = vrot.lane.b32.xlu0 %v1377, 80
      %v1730 = vpop.permute.xlu0 %1729
      %1731 = vrot.lane.b32.xlu0 %v784, 88
      %v1732 = vpop.permute.xlu0 %1731
      %1733 = vrot.lane.b32.xlu0 %v785, 88
      %v1734 = vpop.permute.xlu0 %1733
      %1735 = vrot.lane.b32.xlu0 %v786, 88
      %v1736 = vpop.permute.xlu0 %1735
      %1737 = vrot.lane.b32.xlu0 %v787, 88
      %v1738 = vpop.permute.xlu0 %1737
      %1739 = vrot.lane.b32.xlu0 %v788, 88
      %v1740 = vpop.permute.xlu0 %1739
      %v1741 = vsel %vm1623, %v1732, %v1734
      %v1742 = vsel %vm1623, %v1734, %v1736
      %v1743 = vsel %vm1623, %v1736, %v1738
      %v1744 = vsel %vm1623, %v1738, %v1740
      %v1750 = vsel %vm416, %v1730, 0
      %1752 = vmatprep.subr.bf16.mxu0 0
      %1753 = vmatpush1.bf16.msra.mxu0 0
      %1754 = vmatprep.subr.bf16.mxu0 0
      %1755 = vmatpush1.bf16.msra.mxu0 0
      %1756 = vmatprep.subr.bf16.mxu0 0
      %1757 = vmatpush1.bf16.msra.mxu0 0
      %1758 = vmatprep.subr.bf16.mxu0 0
      %1759 = vmatpush1.bf16.msra.mxu0 0
      %1760 = vmatprep.subr.bf16.mxu0 0
      %1761 = vmatpush1.bf16.msra.mxu0 0
      %1762 = vmatprep.subr.bf16.mxu0 0
      %1763 = vmatpush1.bf16.msra.mxu0 0
      %1764 = vmatprep.subr.bf16.mxu0 0
      %1765 = vmatpush1.bf16.msra.mxu0 0
      %1766 = vmatprep.subr.bf16.mxu0 %v1742
      %1767 = vmatpush1.bf16.msra.mxu0 %v1741
      %1768 = vmatprep.subr.bf16.mxu0 0
      %1769 = vmatpush2.bf16.msra.mxu0 0
      %1770 = vmatprep.subr.bf16.mxu0 0
      %1771 = vmatpush2.bf16.msra.mxu0 0
      %1772 = vmatprep.subr.bf16.mxu0 0
      %1773 = vmatpush2.bf16.msra.mxu0 0
      %1774 = vmatprep.subr.bf16.mxu0 0
      %1775 = vmatpush2.bf16.msra.mxu0 0
      %1776 = vmatprep.subr.bf16.mxu0 0
      %1777 = vmatpush2.bf16.msra.mxu0 0
      %1778 = vmatprep.subr.bf16.mxu0 0
      %1779 = vmatpush2.bf16.msra.mxu0 0
      %1780 = vmatprep.subr.bf16.mxu0 0
      %1781 = vmatpush2.bf16.msra.mxu0 0
      %1782 = vmatprep.subr.bf16.mxu0 0
      %1783 = vmatpush2.bf16.msra.mxu0 0
      %1784 = vmatprep.mubr.bf16.mxu0 0
      %1785 = vmatmul.mubr.bf16.gmra.mxu0 %v1750
      %v1786 = vpop.f32.mrf.mxu0
      %v1787 = vadd.f32 0.0, %v1786
      %v1788 = vpop.f32.mrf.mxu0
      %v1789 = vadd.f32 0.0, %v1788
      %v1790 = vpop.f32.mrf.mxu0
      %v1791 = vadd.f32 0.0, %v1790
      %v1792 = vpop.f32.mrf.mxu0
      %v1793 = vadd.f32 0.0, %v1792
      %1794 = vdwg.mxu0
      %1795 = vmatprep.subr.bf16.mxu0 0
      %1796 = vmatpush1.bf16.msra.mxu0 0
      %1797 = vmatprep.subr.bf16.mxu0 0
      %1798 = vmatpush1.bf16.msra.mxu0 0
      %1799 = vmatprep.subr.bf16.mxu0 0
      %1800 = vmatpush1.bf16.msra.mxu0 0
      %1801 = vmatprep.subr.bf16.mxu0 0
      %1802 = vmatpush1.bf16.msra.mxu0 0
      %1803 = vmatprep.subr.bf16.mxu0 0
      %1804 = vmatpush1.bf16.msra.mxu0 0
      %1805 = vmatprep.subr.bf16.mxu0 0
      %1806 = vmatpush1.bf16.msra.mxu0 0
      %1807 = vmatprep.subr.bf16.mxu0 0
      %1808 = vmatpush1.bf16.msra.mxu0 0
      %1809 = vmatprep.subr.bf16.mxu0 %v1744
      %1810 = vmatpush1.bf16.msra.mxu0 %v1743
      %1811 = vmatprep.subr.bf16.mxu0 0
      %1812 = vmatpush2.bf16.msra.mxu0 0
      %1813 = vmatprep.subr.bf16.mxu0 0
      %1814 = vmatpush2.bf16.msra.mxu0 0
      %1815 = vmatprep.subr.bf16.mxu0 0
      %1816 = vmatpush2.bf16.msra.mxu0 0
      %1817 = vmatprep.subr.bf16.mxu0 0
      %1818 = vmatpush2.bf16.msra.mxu0 0
      %1819 = vmatprep.subr.bf16.mxu0 0
      %1820 = vmatpush2.bf16.msra.mxu0 0
      %1821 = vmatprep.subr.bf16.mxu0 0
      %1822 = vmatpush2.bf16.msra.mxu0 0
      %1823 = vmatprep.subr.bf16.mxu0 0
      %1824 = vmatpush2.bf16.msra.mxu0 0
      %1825 = vmatprep.subr.bf16.mxu0 0
      %1826 = vmatpush2.bf16.msra.mxu0 0
      %1827 = vmatprep.mubr.bf16.mxu0 0
      %1828 = vmatmul.mubr.bf16.gmra.mxu0 %v1750
      %v1829 = vpop.f32.mrf.mxu0
      %v1830 = vadd.f32 0.0, %v1829
      %v1831 = vpop.f32.mrf.mxu0
      %v1832 = vadd.f32 0.0, %v1831
      %v1833 = vpop.f32.mrf.mxu0
      %v1834 = vadd.f32 0.0, %v1833
      %v1835 = vpop.f32.mrf.mxu0
      %v1836 = vadd.f32 0.0, %v1835
      %1837 = vdwg.mxu0
      %v1838 = vadd.f32 %v1721, %v1787
      %v1839 = vadd.f32 %v1722, %v1789
      %v1840 = vadd.f32 %v1723, %v1830
      %v1841 = vadd.f32 %v1724, %v1832
      %v1842 = vadd.f32 %v1725, %v1791
      %v1843 = vadd.f32 %v1726, %v1793
      %v1844 = vadd.f32 %v1727, %v1834
      %v1845 = vadd.f32 %v1728, %v1836
      %1846 = vrot.lane.b32.xlu0 %v1377, 64
      %v1847 = vpop.permute.xlu0 %1846
      %1848 = vrot.lane.b32.xlu0 %v639, 87
      %v1849 = vpop.permute.xlu0 %1848
      %1850 = vrot.lane.b32.xlu0 %v640, 87
      %v1851 = vpop.permute.xlu0 %1850
      %1852 = vrot.lane.b32.xlu0 %v641, 87
      %v1853 = vpop.permute.xlu0 %1852
      %1854 = vrot.lane.b32.xlu0 %v642, 87
      %v1855 = vpop.permute.xlu0 %1854
      %1856 = vrot.lane.b32.xlu0 %v643, 87
      %v1857 = vpop.permute.xlu0 %1856
      %vm1858 = vcmask 711680
      %v1859 = vsel %vm1858, %v1849, %v1851
      %v1860 = vsel %vm1858, %v1851, %v1853
      %v1861 = vsel %vm1858, %v1853, %v1855
      %v1862 = vsel %vm1858, %v1855, %v1857
      %v1868 = vsel %vm416, %v1847, 0
      %1870 = vmatprep.subr.bf16.mxu0 0
      %1871 = vmatpush1.bf16.msra.mxu0 0
      %1872 = vmatprep.subr.bf16.mxu0 0
      %1873 = vmatpush1.bf16.msra.mxu0 0
      %1874 = vmatprep.subr.bf16.mxu0 0
      %1875 = vmatpush1.bf16.msra.mxu0 0
      %1876 = vmatprep.subr.bf16.mxu0 0
      %1877 = vmatpush1.bf16.msra.mxu0 0
      %1878 = vmatprep.subr.bf16.mxu0 0
      %1879 = vmatpush1.bf16.msra.mxu0 0
      %1880 = vmatprep.subr.bf16.mxu0 0
      %1881 = vmatpush1.bf16.msra.mxu0 0
      %1882 = vmatprep.subr.bf16.mxu0 0
      %1883 = vmatpush1.bf16.msra.mxu0 0
      %1884 = vmatprep.subr.bf16.mxu0 %v1860
      %1885 = vmatpush1.bf16.msra.mxu0 %v1859
      %1886 = vmatprep.subr.bf16.mxu0 0
      %1887 = vmatpush2.bf16.msra.mxu0 0
      %1888 = vmatprep.subr.bf16.mxu0 0
      %1889 = vmatpush2.bf16.msra.mxu0 0
      %1890 = vmatprep.subr.bf16.mxu0 0
      %1891 = vmatpush2.bf16.msra.mxu0 0
      %1892 = vmatprep.subr.bf16.mxu0 0
      %1893 = vmatpush2.bf16.msra.mxu0 0
      %1894 = vmatprep.subr.bf16.mxu0 0
      %1895 = vmatpush2.bf16.msra.mxu0 0
      %1896 = vmatprep.subr.bf16.mxu0 0
      %1897 = vmatpush2.bf16.msra.mxu0 0
      %1898 = vmatprep.subr.bf16.mxu0 0
      %1899 = vmatpush2.bf16.msra.mxu0 0
      %1900 = vmatprep.subr.bf16.mxu0 0
      %1901 = vmatpush2.bf16.msra.mxu0 0
      %1902 = vmatprep.mubr.bf16.mxu0 0
      %1903 = vmatmul.mubr.bf16.gmra.mxu0 %v1868
      %v1904 = vpop.f32.mrf.mxu0
      %v1905 = vadd.f32 0.0, %v1904
      %v1906 = vpop.f32.mrf.mxu0
      %v1907 = vadd.f32 0.0, %v1906
      %v1908 = vpop.f32.mrf.mxu0
      %v1909 = vadd.f32 0.0, %v1908
      %v1910 = vpop.f32.mrf.mxu0
      %v1911 = vadd.f32 0.0, %v1910
      %1912 = vdwg.mxu0
      %1913 = vmatprep.subr.bf16.mxu0 0
      %1914 = vmatpush1.bf16.msra.mxu0 0
      %1915 = vmatprep.subr.bf16.mxu0 0
      %1916 = vmatpush1.bf16.msra.mxu0 0
      %1917 = vmatprep.subr.bf16.mxu0 0
      %1918 = vmatpush1.bf16.msra.mxu0 0
      %1919 = vmatprep.subr.bf16.mxu0 0
      %1920 = vmatpush1.bf16.msra.mxu0 0
      %1921 = vmatprep.subr.bf16.mxu0 0
      %1922 = vmatpush1.bf16.msra.mxu0 0
      %1923 = vmatprep.subr.bf16.mxu0 0
      %1924 = vmatpush1.bf16.msra.mxu0 0
      %1925 = vmatprep.subr.bf16.mxu0 0
      %1926 = vmatpush1.bf16.msra.mxu0 0
      %1927 = vmatprep.subr.bf16.mxu0 %v1862
      %1928 = vmatpush1.bf16.msra.mxu0 %v1861
      %1929 = vmatprep.subr.bf16.mxu0 0
      %1930 = vmatpush2.bf16.msra.mxu0 0
      %1931 = vmatprep.subr.bf16.mxu0 0
      %1932 = vmatpush2.bf16.msra.mxu0 0
      %1933 = vmatprep.subr.bf16.mxu0 0
      %1934 = vmatpush2.bf16.msra.mxu0 0
      %1935 = vmatprep.subr.bf16.mxu0 0
      %1936 = vmatpush2.bf16.msra.mxu0 0
      %1937 = vmatprep.subr.bf16.mxu0 0
      %1938 = vmatpush2.bf16.msra.mxu0 0
      %1939 = vmatprep.subr.bf16.mxu0 0
      %1940 = vmatpush2.bf16.msra.mxu0 0
      %1941 = vmatprep.subr.bf16.mxu0 0
      %1942 = vmatpush2.bf16.msra.mxu0 0
      %1943 = vmatprep.subr.bf16.mxu0 0
      %1944 = vmatpush2.bf16.msra.mxu0 0
      %1945 = vmatprep.mubr.bf16.mxu0 0
      %1946 = vmatmul.mubr.bf16.gmra.mxu0 %v1868
      %v1947 = vpop.f32.mrf.mxu0
      %v1948 = vadd.f32 0.0, %v1947
      %v1949 = vpop.f32.mrf.mxu0
      %v1950 = vadd.f32 0.0, %v1949
      %v1951 = vpop.f32.mrf.mxu0
      %v1952 = vadd.f32 0.0, %v1951
      %v1953 = vpop.f32.mrf.mxu0
      %v1954 = vadd.f32 0.0, %v1953
      %1955 = vdwg.mxu0
      %v1956 = vadd.f32 %v1838, %v1905
      %v1957 = vadd.f32 %v1839, %v1907
      %v1958 = vadd.f32 %v1840, %v1948
      %v1959 = vadd.f32 %v1841, %v1950
      %v1960 = vadd.f32 %v1842, %v1909
      %v1961 = vadd.f32 %v1843, %v1911
      %v1962 = vadd.f32 %v1844, %v1952
      %v1963 = vadd.f32 %v1845, %v1954
      %1964 = vrot.lane.b32.xlu0 %v1377, 48
      %v1965 = vpop.permute.xlu0 %1964
      %1966 = vrot.lane.b32.xlu0 %v784, 87
      %v1967 = vpop.permute.xlu0 %1966
      %1968 = vrot.lane.b32.xlu0 %v785, 87
      %v1969 = vpop.permute.xlu0 %1968
      %1970 = vrot.lane.b32.xlu0 %v786, 87
      %v1971 = vpop.permute.xlu0 %1970
      %1972 = vrot.lane.b32.xlu0 %v787, 87
      %v1973 = vpop.permute.xlu0 %1972
      %1974 = vrot.lane.b32.xlu0 %v788, 87
      %v1975 = vpop.permute.xlu0 %1974
      %v1976 = vsel %vm1858, %v1967, %v1969
      %v1977 = vsel %vm1858, %v1969, %v1971
      %v1978 = vsel %vm1858, %v1971, %v1973
      %v1979 = vsel %vm1858, %v1973, %v1975
      %v1985 = vsel %vm416, %v1965, 0
      %1987 = vmatprep.subr.bf16.mxu0 0
      %1988 = vmatpush1.bf16.msra.mxu0 0
      %1989 = vmatprep.subr.bf16.mxu0 0
      %1990 = vmatpush1.bf16.msra.mxu0 0
      %1991 = vmatprep.subr.bf16.mxu0 0
      %1992 = vmatpush1.bf16.msra.mxu0 0
      %1993 = vmatprep.subr.bf16.mxu0 0
      %1994 = vmatpush1.bf16.msra.mxu0 0
      %1995 = vmatprep.subr.bf16.mxu0 0
      %1996 = vmatpush1.bf16.msra.mxu0 0
      %1997 = vmatprep.subr.bf16.mxu0 0
      %1998 = vmatpush1.bf16.msra.mxu0 0
      %1999 = vmatprep.subr.bf16.mxu0 0
      %2000 = vmatpush1.bf16.msra.mxu0 0
      %2001 = vmatprep.subr.bf16.mxu0 %v1977
      %2002 = vmatpush1.bf16.msra.mxu0 %v1976
      %2003 = vmatprep.subr.bf16.mxu0 0
      %2004 = vmatpush2.bf16.msra.mxu0 0
      %2005 = vmatprep.subr.bf16.mxu0 0
      %2006 = vmatpush2.bf16.msra.mxu0 0
      %2007 = vmatprep.subr.bf16.mxu0 0
      %2008 = vmatpush2.bf16.msra.mxu0 0
      %2009 = vmatprep.subr.bf16.mxu0 0
      %2010 = vmatpush2.bf16.msra.mxu0 0
      %2011 = vmatprep.subr.bf16.mxu0 0
      %2012 = vmatpush2.bf16.msra.mxu0 0
      %2013 = vmatprep.subr.bf16.mxu0 0
      %2014 = vmatpush2.bf16.msra.mxu0 0
      %2015 = vmatprep.subr.bf16.mxu0 0
      %2016 = vmatpush2.bf16.msra.mxu0 0
      %2017 = vmatprep.subr.bf16.mxu0 0
      %2018 = vmatpush2.bf16.msra.mxu0 0
      %2019 = vmatprep.mubr.bf16.mxu0 0
      %2020 = vmatmul.mubr.bf16.gmra.mxu0 %v1985
      %v2021 = vpop.f32.mrf.mxu0
      %v2022 = vadd.f32 0.0, %v2021
      %v2023 = vpop.f32.mrf.mxu0
      %v2024 = vadd.f32 0.0, %v2023
      %v2025 = vpop.f32.mrf.mxu0
      %v2026 = vadd.f32 0.0, %v2025
      %v2027 = vpop.f32.mrf.mxu0
      %v2028 = vadd.f32 0.0, %v2027
      %2029 = vdwg.mxu0
      %2030 = vmatprep.subr.bf16.mxu0 0
      %2031 = vmatpush1.bf16.msra.mxu0 0
      %2032 = vmatprep.subr.bf16.mxu0 0
      %2033 = vmatpush1.bf16.msra.mxu0 0
      %2034 = vmatprep.subr.bf16.mxu0 0
      %2035 = vmatpush1.bf16.msra.mxu0 0
      %2036 = vmatprep.subr.bf16.mxu0 0
      %2037 = vmatpush1.bf16.msra.mxu0 0
      %2038 = vmatprep.subr.bf16.mxu0 0
      %2039 = vmatpush1.bf16.msra.mxu0 0
      %2040 = vmatprep.subr.bf16.mxu0 0
      %2041 = vmatpush1.bf16.msra.mxu0 0
      %2042 = vmatprep.subr.bf16.mxu0 0
      %2043 = vmatpush1.bf16.msra.mxu0 0
      %2044 = vmatprep.subr.bf16.mxu0 %v1979
      %2045 = vmatpush1.bf16.msra.mxu0 %v1978
      %2046 = vmatprep.subr.bf16.mxu0 0
      %2047 = vmatpush2.bf16.msra.mxu0 0
      %2048 = vmatprep.subr.bf16.mxu0 0
      %2049 = vmatpush2.bf16.msra.mxu0 0
      %2050 = vmatprep.subr.bf16.mxu0 0
      %2051 = vmatpush2.bf16.msra.mxu0 0
      %2052 = vmatprep.subr.bf16.mxu0 0
      %2053 = vmatpush2.bf16.msra.mxu0 0
      %2054 = vmatprep.subr.bf16.mxu0 0
      %2055 = vmatpush2.bf16.msra.mxu0 0
      %2056 = vmatprep.subr.bf16.mxu0 0
      %2057 = vmatpush2.bf16.msra.mxu0 0
      %2058 = vmatprep.subr.bf16.mxu0 0
      %2059 = vmatpush2.bf16.msra.mxu0 0
      %2060 = vmatprep.subr.bf16.mxu0 0
      %2061 = vmatpush2.bf16.msra.mxu0 0
      %2062 = vmatprep.mubr.bf16.mxu0 0
      %2063 = vmatmul.mubr.bf16.gmra.mxu0 %v1985
      %v2064 = vpop.f32.mrf.mxu0
      %v2065 = vadd.f32 0.0, %v2064
      %v2066 = vpop.f32.mrf.mxu0
      %v2067 = vadd.f32 0.0, %v2066
      %v2068 = vpop.f32.mrf.mxu0
      %v2069 = vadd.f32 0.0, %v2068
      %v2070 = vpop.f32.mrf.mxu0
      %v2071 = vadd.f32 0.0, %v2070
      %2072 = vdwg.mxu0
      %v2073 = vadd.f32 %v1956, %v2022
      %v2074 = vadd.f32 %v1957, %v2024
      %v2075 = vadd.f32 %v1958, %v2065
      %v2076 = vadd.f32 %v1959, %v2067
      %v2077 = vadd.f32 %v1960, %v2026
      %v2078 = vadd.f32 %v1961, %v2028
      %v2079 = vadd.f32 %v1962, %v2069
      %v2080 = vadd.f32 %v1963, %v2071
      %2081 = vrot.lane.b32.xlu0 %v1377, 32
      %v2082 = vpop.permute.xlu0 %2081
      %2083 = vrot.lane.b32.xlu0 %v639, 86
      %v2084 = vpop.permute.xlu0 %2083
      %2085 = vrot.lane.b32.xlu0 %v640, 86
      %v2086 = vpop.permute.xlu0 %2085
      %2087 = vrot.lane.b32.xlu0 %v641, 86
      %v2088 = vpop.permute.xlu0 %2087
      %2089 = vrot.lane.b32.xlu0 %v642, 86
      %v2090 = vpop.permute.xlu0 %2089
      %2091 = vrot.lane.b32.xlu0 %v643, 86
      %v2092 = vpop.permute.xlu0 %2091
      %vm2093 = vcmask 703488
      %v2094 = vsel %vm2093, %v2084, %v2086
      %v2095 = vsel %vm2093, %v2086, %v2088
      %v2096 = vsel %vm2093, %v2088, %v2090
      %v2097 = vsel %vm2093, %v2090, %v2092
      %v2103 = vsel %vm416, %v2082, 0
      %2105 = vmatprep.subr.bf16.mxu0 0
      %2106 = vmatpush1.bf16.msra.mxu0 0
      %2107 = vmatprep.subr.bf16.mxu0 0
      %2108 = vmatpush1.bf16.msra.mxu0 0
      %2109 = vmatprep.subr.bf16.mxu0 0
      %2110 = vmatpush1.bf16.msra.mxu0 0
      %2111 = vmatprep.subr.bf16.mxu0 0
      %2112 = vmatpush1.bf16.msra.mxu0 0
      %2113 = vmatprep.subr.bf16.mxu0 0
      %2114 = vmatpush1.bf16.msra.mxu0 0
      %2115 = vmatprep.subr.bf16.mxu0 0
      %2116 = vmatpush1.bf16.msra.mxu0 0
      %2117 = vmatprep.subr.bf16.mxu0 0
      %2118 = vmatpush1.bf16.msra.mxu0 0
      %2119 = vmatprep.subr.bf16.mxu0 %v2095
      %2120 = vmatpush1.bf16.msra.mxu0 %v2094
      %2121 = vmatprep.subr.bf16.mxu0 0
      %2122 = vmatpush2.bf16.msra.mxu0 0
      %2123 = vmatprep.subr.bf16.mxu0 0
      %2124 = vmatpush2.bf16.msra.mxu0 0
      %2125 = vmatprep.subr.bf16.mxu0 0
      %2126 = vmatpush2.bf16.msra.mxu0 0
      %2127 = vmatprep.subr.bf16.mxu0 0
      %2128 = vmatpush2.bf16.msra.mxu0 0
      %2129 = vmatprep.subr.bf16.mxu0 0
      %2130 = vmatpush2.bf16.msra.mxu0 0
      %2131 = vmatprep.subr.bf16.mxu0 0
      %2132 = vmatpush2.bf16.msra.mxu0 0
      %2133 = vmatprep.subr.bf16.mxu0 0
      %2134 = vmatpush2.bf16.msra.mxu0 0
      %2135 = vmatprep.subr.bf16.mxu0 0
      %2136 = vmatpush2.bf16.msra.mxu0 0
      %2137 = vmatprep.mubr.bf16.mxu0 0
      %2138 = vmatmul.mubr.bf16.gmra.mxu0 %v2103
      %v2139 = vpop.f32.mrf.mxu0
      %v2140 = vadd.f32 0.0, %v2139
      %v2141 = vpop.f32.mrf.mxu0
      %v2142 = vadd.f32 0.0, %v2141
      %v2143 = vpop.f32.mrf.mxu0
      %v2144 = vadd.f32 0.0, %v2143
      %v2145 = vpop.f32.mrf.mxu0
      %v2146 = vadd.f32 0.0, %v2145
      %2147 = vdwg.mxu0
      %2148 = vmatprep.subr.bf16.mxu0 0
      %2149 = vmatpush1.bf16.msra.mxu0 0
      %2150 = vmatprep.subr.bf16.mxu0 0
      %2151 = vmatpush1.bf16.msra.mxu0 0
      %2152 = vmatprep.subr.bf16.mxu0 0
      %2153 = vmatpush1.bf16.msra.mxu0 0
      %2154 = vmatprep.subr.bf16.mxu0 0
      %2155 = vmatpush1.bf16.msra.mxu0 0
      %2156 = vmatprep.subr.bf16.mxu0 0
      %2157 = vmatpush1.bf16.msra.mxu0 0
      %2158 = vmatprep.subr.bf16.mxu0 0
      %2159 = vmatpush1.bf16.msra.mxu0 0
      %2160 = vmatprep.subr.bf16.mxu0 0
      %2161 = vmatpush1.bf16.msra.mxu0 0
      %2162 = vmatprep.subr.bf16.mxu0 %v2097
      %2163 = vmatpush1.bf16.msra.mxu0 %v2096
      %2164 = vmatprep.subr.bf16.mxu0 0
      %2165 = vmatpush2.bf16.msra.mxu0 0
      %2166 = vmatprep.subr.bf16.mxu0 0
      %2167 = vmatpush2.bf16.msra.mxu0 0
      %2168 = vmatprep.subr.bf16.mxu0 0
      %2169 = vmatpush2.bf16.msra.mxu0 0
      %2170 = vmatprep.subr.bf16.mxu0 0
      %2171 = vmatpush2.bf16.msra.mxu0 0
      %2172 = vmatprep.subr.bf16.mxu0 0
      %2173 = vmatpush2.bf16.msra.mxu0 0
      %2174 = vmatprep.subr.bf16.mxu0 0
      %2175 = vmatpush2.bf16.msra.mxu0 0
      %2176 = vmatprep.subr.bf16.mxu0 0
      %2177 = vmatpush2.bf16.msra.mxu0 0
      %2178 = vmatprep.subr.bf16.mxu0 0
      %2179 = vmatpush2.bf16.msra.mxu0 0
      %2180 = vmatprep.mubr.bf16.mxu0 0
      %2181 = vmatmul.mubr.bf16.gmra.mxu0 %v2103
      %v2182 = vpop.f32.mrf.mxu0
      %v2183 = vadd.f32 0.0, %v2182
      %v2184 = vpop.f32.mrf.mxu0
      %v2185 = vadd.f32 0.0, %v2184
      %v2186 = vpop.f32.mrf.mxu0
      %v2187 = vadd.f32 0.0, %v2186
      %v2188 = vpop.f32.mrf.mxu0
      %v2189 = vadd.f32 0.0, %v2188
      %2190 = vdwg.mxu0
      %v2191 = vadd.f32 %v2073, %v2140
      %v2192 = vadd.f32 %v2074, %v2142
      %v2193 = vadd.f32 %v2075, %v2183
      %v2194 = vadd.f32 %v2076, %v2185
      %v2195 = vadd.f32 %v2077, %v2144
      %v2196 = vadd.f32 %v2078, %v2146
      %v2197 = vadd.f32 %v2079, %v2187
      %v2198 = vadd.f32 %v2080, %v2189
      %v2199 = vld [vmem:[%s2] sm:$0xff]
      %v2200 = vld [vmem:[%s2 + $0x8] sm:$0xf]
      %2202 = vset.pattern.permute.xlu0 0
      %2203 = vperm.xlu0 %2202, %v2199
      %v2204 = vpop.permute.xlu0 %2203
      %2207 = vset.pattern.permute.xlu0 0
      %2208 = vperm.xlu0 %2207, %v2200
      %v2209 = vpop.permute.xlu0 %2208
      %v2211 = vadd.f32 %v2191, %v2204
      %v2212 = vadd.f32 %v2192, %v2204
      %v2213 = vadd.f32 %v2193, %v2204
      %v2214 = vadd.f32 %v2194, %v2204
      %v2215 = vadd.f32 %v2195, %v2209
      %v2216 = vadd.f32 %v2196, %v2209
      %v2217 = vadd.f32 %v2197, %v2209
      %v2218 = vadd.f32 %v2198, %v2209
      %v2219 = vmul.f32 %v2211, 0.5
      %v2220 = vmul.f32 %v2212, 0.5
      %v2221 = vmul.f32 %v2213, 0.5
      %v2222 = vmul.f32 %v2214, 0.5
      %v2223 = vmul.f32 %v2215, 0.5
      %v2224 = vmul.f32 %v2216, 0.5
      %v2225 = vmul.f32 %v2217, 0.5
      %v2226 = vmul.f32 %v2218, 0.5
      %v2227 = vtanh.pop %v2219
      %v2228 = vtanh.pop %v2220
      %v2229 = vtanh.pop %v2221
      %v2230 = vtanh.pop %v2222
      %v2231 = vtanh.pop %v2223
      %v2232 = vtanh.pop %v2224
      %v2233 = vtanh.pop %v2225
      %v2234 = vtanh.pop %v2226
      %v2235 = vmul.f32 %v2227, 0.5
      %v2236 = vmul.f32 %v2228, 0.5
      %v2237 = vmul.f32 %v2229, 0.5
      %v2238 = vmul.f32 %v2230, 0.5
      %v2239 = vmul.f32 %v2231, 0.5
      %v2240 = vmul.f32 %v2232, 0.5
      %v2241 = vmul.f32 %v2233, 0.5
      %v2242 = vmul.f32 %v2234, 0.5
      %v2243 = vadd.f32 %v2235, 0.5
      %v2244 = vadd.f32 %v2236, 0.5
      %v2245 = vadd.f32 %v2237, 0.5
      %v2246 = vadd.f32 %v2238, 0.5
      %v2247 = vadd.f32 %v2239, 0.5
      %v2248 = vadd.f32 %v2240, 0.5
      %v2249 = vadd.f32 %v2241, 0.5
      %v2250 = vadd.f32 %v2242, 0.5
      %v2251 = vld [vmem:[%s3] sm:$0xf]
      %v2253 = vlaneseq
      %v2254 = vshrl.u32 %v2253, 7
      %v2255 = vsub.s32 0, %v2254
      %v2256 = vrot.slane %v2251, %v2255
      %v2257 = vlaneseq
      %v2258 = vshrl.u32 %v2257, 7
      %v2259 = vsub.s32 1, %v2258
      %v2260 = vrot.slane %v2251, %v2259
      %v2261 = vlaneseq
      %v2262 = vshrl.u32 %v2261, 7
      %v2263 = vsub.s32 2, %v2262
      %v2264 = vrot.slane %v2251, %v2263
      %v2265 = vlaneseq
      %v2266 = vshrl.u32 %v2265, 7
      %v2267 = vsub.s32 3, %v2266
      %v2268 = vrot.slane %v2251, %v2267
      %v2273 = vmul.f32 %v2243, %v2256
      %v2274 = vmul.f32 %v2244, %v2260
      %v2275 = vmul.f32 %v2245, %v2264
      %v2276 = vmul.f32 %v2246, %v2268
      %v2277 = vmul.f32 %v2247, %v2256
      %v2278 = vmul.f32 %v2248, %v2260
      %v2279 = vmul.f32 %v2249, %v2264
      %v2280 = vmul.f32 %v2250, %v2268
      %v2281 = vpack.c.bf16 %v2277, %v2273
      %v2282 = vpack.c.bf16 %v2278, %v2274
      %v2283 = vpack.c.bf16 %v2279, %v2275
      %v2284 = vpack.c.bf16 %v2280, %v2276
      %v2289 = vunpack.c.l.b16 %v2281
      %v2290 = vunpack.c.l.b16 %v2282
      %v2291 = vunpack.c.l.b16 %v2283
      %v2292 = vunpack.c.l.b16 %v2284
      %v2293 = vunpack.c.h.b16 %v2281
      %v2294 = vunpack.c.h.b16 %v2282
      %v2295 = vunpack.c.h.b16 %v2283
      %v2296 = vunpack.c.h.b16 %v2284
      %v2297 = vpack.c.b16 %v2290, %v2289
      %v2298 = vpack.c.b16 %v2292, %v2291
      %v2299 = vpack.c.b16 %v2294, %v2293
      %v2300 = vpack.c.b16 %v2296, %v2295
      %2305 = vst [vmem:[#allocation2 + $0x4] sm:$0xff] %v2297
      %2306 = vst [vmem:[#allocation2 + $0xc] sm:$0xff] %v2298
      %2307 = vst [vmem:[#allocation2 + $0x1c] sm:$0x33] %v2299
      %2308 = vst [vmem:[#allocation2 + $0x24] sm:$0x33] %v2300
      %v2309 = vld [vmem:[%s4] sm:$0xff]
      %v2310 = vld [vmem:[%s4 + $0x8] sm:$0xff]
      %v2311 = vld [vmem:[%s4 + $0x10] sm:$0x33]
      %v2312 = vld [vmem:[%s4 + $0x18] sm:$0x33]
      %v2313 = vld [vmem:[#allocation2] sm:$0xff]
      %v2314 = vld [vmem:[#allocation2 + $0x8] sm:$0xff]
      %v2315 = vld [vmem:[#allocation2 + $0x10] sm:$0xf]
      %v2316 = vld [vmem:[#allocation2 + $0x18] sm:$0xff]
      %v2317 = vld [vmem:[#allocation2 + $0x20] sm:$0xff]
      %v2318 = vld [vmem:[#allocation2 + $0x28] sm:$0xf]
      %v2321 = vunpack.c.l.b16 %v2309
      %v2322 = vunpack.c.l.b16 %v2311
      %v2323 = vpack.c.b16 %v2322, %v2321
      %2324 = vrot.lane.b32.xlu0 %v2323, 112
      %v2325 = vpop.permute.xlu0 %2324
      %v2332 = vunpack.c.l.b16 %v2313
      %v2333 = vunpack.c.h.b16 %v2313
      %v2334 = vunpack.c.l.b16 %v2314
      %v2335 = vunpack.c.h.b16 %v2314
      %v2336 = vunpack.c.l.b16 %v2315
      %v2337 = vunpack.c.l.b16 %v2316
      %v2338 = vunpack.c.h.b16 %v2316
      %v2339 = vunpack.c.l.b16 %v2317
      %v2340 = vunpack.c.h.b16 %v2317
      %v2341 = vunpack.c.l.b16 %v2318
      %v2342 = vpack.c.b16 %v2337, %v2332
      %v2343 = vpack.c.b16 %v2338, %v2333
      %v2344 = vpack.c.b16 %v2339, %v2334
      %v2345 = vpack.c.b16 %v2340, %v2335
      %v2346 = vpack.c.b16 %v2341, %v2336
      %2347 = vrot.lane.b32.xlu0 %v2342, 41
      %v2348 = vpop.permute.xlu0 %2347
      %2349 = vrot.lane.b32.xlu0 %v2343, 41
      %v2350 = vpop.permute.xlu0 %2349
      %2351 = vrot.lane.b32.xlu0 %v2344, 41
      %v2352 = vpop.permute.xlu0 %2351
      %2353 = vrot.lane.b32.xlu0 %v2345, 41
      %v2354 = vpop.permute.xlu0 %2353
      %2355 = vrot.lane.b32.xlu0 %v2346, 41
      %v2356 = vpop.permute.xlu0 %2355
      %vm2357 = vcmask 334848
      %v2358 = vsel %vm2357, %v2348, %v2350
      %v2359 = vsel %vm2357, %v2350, %v2352
      %v2360 = vsel %vm2357, %v2352, %v2354
      %v2361 = vsel %vm2357, %v2354, %v2356
      %v2367 = vsel %vm416, %v2325, 0
      %2369 = vmatprep.subr.bf16.mxu0 0
      %2370 = vmatpush1.bf16.msra.mxu0 0
      %2371 = vmatprep.subr.bf16.mxu0 0
      %2372 = vmatpush1.bf16.msra.mxu0 0
      %2373 = vmatprep.subr.bf16.mxu0 0
      %2374 = vmatpush1.bf16.msra.mxu0 0
      %2375 = vmatprep.subr.bf16.mxu0 0
      %2376 = vmatpush1.bf16.msra.mxu0 0
      %2377 = vmatprep.subr.bf16.mxu0 0
      %2378 = vmatpush1.bf16.msra.mxu0 0
      %2379 = vmatprep.subr.bf16.mxu0 0
      %2380 = vmatpush1.bf16.msra.mxu0 0
      %2381 = vmatprep.subr.bf16.mxu0 0
      %2382 = vmatpush1.bf16.msra.mxu0 0
      %2383 = vmatprep.subr.bf16.mxu0 %v2359
      %2384 = vmatpush1.bf16.msra.mxu0 %v2358
      %2385 = vmatprep.subr.bf16.mxu0 0
      %2386 = vmatpush2.bf16.msra.mxu0 0
      %2387 = vmatprep.subr.bf16.mxu0 0
      %2388 = vmatpush2.bf16.msra.mxu0 0
      %2389 = vmatprep.subr.bf16.mxu0 0
      %2390 = vmatpush2.bf16.msra.mxu0 0
      %2391 = vmatprep.subr.bf16.mxu0 0
      %2392 = vmatpush2.bf16.msra.mxu0 0
      %2393 = vmatprep.subr.bf16.mxu0 0
      %2394 = vmatpush2.bf16.msra.mxu0 0
      %2395 = vmatprep.subr.bf16.mxu0 0
      %2396 = vmatpush2.bf16.msra.mxu0 0
      %2397 = vmatprep.subr.bf16.mxu0 0
      %2398 = vmatpush2.bf16.msra.mxu0 0
      %2399 = vmatprep.subr.bf16.mxu0 0
      %2400 = vmatpush2.bf16.msra.mxu0 0
      %2401 = vmatprep.mubr.bf16.mxu0 0
      %2402 = vmatmul.mubr.bf16.gmra.mxu0 %v2367
      %v2403 = vpop.f32.mrf.mxu0
      %v2404 = vadd.f32 0.0, %v2403
      %v2405 = vpop.f32.mrf.mxu0
      %v2406 = vadd.f32 0.0, %v2405
      %v2407 = vpop.f32.mrf.mxu0
      %v2408 = vadd.f32 0.0, %v2407
      %v2409 = vpop.f32.mrf.mxu0
      %v2410 = vadd.f32 0.0, %v2409
      %2411 = vdwg.mxu0
      %2412 = vmatprep.subr.bf16.mxu0 0
      %2413 = vmatpush1.bf16.msra.mxu0 0
      %2414 = vmatprep.subr.bf16.mxu0 0
      %2415 = vmatpush1.bf16.msra.mxu0 0
      %2416 = vmatprep.subr.bf16.mxu0 0
      %2417 = vmatpush1.bf16.msra.mxu0 0
      %2418 = vmatprep.subr.bf16.mxu0 0
      %2419 = vmatpush1.bf16.msra.mxu0 0
      %2420 = vmatprep.subr.bf16.mxu0 0
      %2421 = vmatpush1.bf16.msra.mxu0 0
      %2422 = vmatprep.subr.bf16.mxu0 0
      %2423 = vmatpush1.bf16.msra.mxu0 0
      %2424 = vmatprep.subr.bf16.mxu0 0
      %2425 = vmatpush1.bf16.msra.mxu0 0
      %2426 = vmatprep.subr.bf16.mxu0 %v2361
      %2427 = vmatpush1.bf16.msra.mxu0 %v2360
      %2428 = vmatprep.subr.bf16.mxu0 0
      %2429 = vmatpush2.bf16.msra.mxu0 0
      %2430 = vmatprep.subr.bf16.mxu0 0
      %2431 = vmatpush2.bf16.msra.mxu0 0
      %2432 = vmatprep.subr.bf16.mxu0 0
      %2433 = vmatpush2.bf16.msra.mxu0 0
      %2434 = vmatprep.subr.bf16.mxu0 0
      %2435 = vmatpush2.bf16.msra.mxu0 0
      %2436 = vmatprep.subr.bf16.mxu0 0
      %2437 = vmatpush2.bf16.msra.mxu0 0
      %2438 = vmatprep.subr.bf16.mxu0 0
      %2439 = vmatpush2.bf16.msra.mxu0 0
      %2440 = vmatprep.subr.bf16.mxu0 0
      %2441 = vmatpush2.bf16.msra.mxu0 0
      %2442 = vmatprep.subr.bf16.mxu0 0
      %2443 = vmatpush2.bf16.msra.mxu0 0
      %2444 = vmatprep.mubr.bf16.mxu0 0
      %2445 = vmatmul.mubr.bf16.gmra.mxu0 %v2367
      %v2446 = vpop.f32.mrf.mxu0
      %v2447 = vadd.f32 0.0, %v2446
      %v2448 = vpop.f32.mrf.mxu0
      %v2449 = vadd.f32 0.0, %v2448
      %v2450 = vpop.f32.mrf.mxu0
      %v2451 = vadd.f32 0.0, %v2450
      %v2452 = vpop.f32.mrf.mxu0
      %v2453 = vadd.f32 0.0, %v2452
      %2454 = vdwg.mxu0
      %2455 = vrot.lane.b32.xlu0 %v2342, 42
      %v2456 = vpop.permute.xlu0 %2455
      %2457 = vrot.lane.b32.xlu0 %v2343, 42
      %v2458 = vpop.permute.xlu0 %2457
      %2459 = vrot.lane.b32.xlu0 %v2344, 42
      %v2460 = vpop.permute.xlu0 %2459
      %2461 = vrot.lane.b32.xlu0 %v2345, 42
      %v2462 = vpop.permute.xlu0 %2461
      %2463 = vrot.lane.b32.xlu0 %v2346, 42
      %v2464 = vpop.permute.xlu0 %2463
      %vm2465 = vcmask 343040
      %v2466 = vsel %vm2465, %v2456, %v2458
      %v2467 = vsel %vm2465, %v2458, %v2460
      %v2468 = vsel %vm2465, %v2460, %v2462
      %v2469 = vsel %vm2465, %v2462, %v2464
      %v2475 = vsel %vm416, %v2323, 0
      %2477 = vmatprep.subr.bf16.mxu0 0
      %2478 = vmatpush1.bf16.msra.mxu0 0
      %2479 = vmatprep.subr.bf16.mxu0 0
      %2480 = vmatpush1.bf16.msra.mxu0 0
      %2481 = vmatprep.subr.bf16.mxu0 0
      %2482 = vmatpush1.bf16.msra.mxu0 0
      %2483 = vmatprep.subr.bf16.mxu0 0
      %2484 = vmatpush1.bf16.msra.mxu0 0
      %2485 = vmatprep.subr.bf16.mxu0 0
      %2486 = vmatpush1.bf16.msra.mxu0 0
      %2487 = vmatprep.subr.bf16.mxu0 0
      %2488 = vmatpush1.bf16.msra.mxu0 0
      %2489 = vmatprep.subr.bf16.mxu0 0
      %2490 = vmatpush1.bf16.msra.mxu0 0
      %2491 = vmatprep.subr.bf16.mxu0 %v2467
      %2492 = vmatpush1.bf16.msra.mxu0 %v2466
      %2493 = vmatprep.subr.bf16.mxu0 0
      %2494 = vmatpush2.bf16.msra.mxu0 0
      %2495 = vmatprep.subr.bf16.mxu0 0
      %2496 = vmatpush2.bf16.msra.mxu0 0
      %2497 = vmatprep.subr.bf16.mxu0 0
      %2498 = vmatpush2.bf16.msra.mxu0 0
      %2499 = vmatprep.subr.bf16.mxu0 0
      %2500 = vmatpush2.bf16.msra.mxu0 0
      %2501 = vmatprep.subr.bf16.mxu0 0
      %2502 = vmatpush2.bf16.msra.mxu0 0
      %2503 = vmatprep.subr.bf16.mxu0 0
      %2504 = vmatpush2.bf16.msra.mxu0 0
      %2505 = vmatprep.subr.bf16.mxu0 0
      %2506 = vmatpush2.bf16.msra.mxu0 0
      %2507 = vmatprep.subr.bf16.mxu0 0
      %2508 = vmatpush2.bf16.msra.mxu0 0
      %2509 = vmatprep.mubr.bf16.mxu0 0
      %2510 = vmatmul.mubr.bf16.gmra.mxu0 %v2475
      %v2511 = vpop.f32.mrf.mxu0
      %v2512 = vadd.f32 %v2404, %v2511
      %v2513 = vpop.f32.mrf.mxu0
      %v2514 = vadd.f32 %v2406, %v2513
      %v2515 = vpop.f32.mrf.mxu0
      %v2516 = vadd.f32 %v2408, %v2515
      %v2517 = vpop.f32.mrf.mxu0
      %v2518 = vadd.f32 %v2410, %v2517
      %2519 = vdwg.mxu0
      %2520 = vmatprep.subr.bf16.mxu0 0
      %2521 = vmatpush1.bf16.msra.mxu0 0
      %2522 = vmatprep.subr.bf16.mxu0 0
      %2523 = vmatpush1.bf16.msra.mxu0 0
      %2524 = vmatprep.subr.bf16.mxu0 0
      %2525 = vmatpush1.bf16.msra.mxu0 0
      %2526 = vmatprep.subr.bf16.mxu0 0
      %2527 = vmatpush1.bf16.msra.mxu0 0
      %2528 = vmatprep.subr.bf16.mxu0 0
      %2529 = vmatpush1.bf16.msra.mxu0 0
      %2530 = vmatprep.subr.bf16.mxu0 0
      %2531 = vmatpush1.bf16.msra.mxu0 0
      %2532 = vmatprep.subr.bf16.mxu0 0
      %2533 = vmatpush1.bf16.msra.mxu0 0
      %2534 = vmatprep.subr.bf16.mxu0 %v2469
      %2535 = vmatpush1.bf16.msra.mxu0 %v2468
      %2536 = vmatprep.subr.bf16.mxu0 0
      %2537 = vmatpush2.bf16.msra.mxu0 0
      %2538 = vmatprep.subr.bf16.mxu0 0
      %2539 = vmatpush2.bf16.msra.mxu0 0
      %2540 = vmatprep.subr.bf16.mxu0 0
      %2541 = vmatpush2.bf16.msra.mxu0 0
      %2542 = vmatprep.subr.bf16.mxu0 0
      %2543 = vmatpush2.bf16.msra.mxu0 0
      %2544 = vmatprep.subr.bf16.mxu0 0
      %2545 = vmatpush2.bf16.msra.mxu0 0
      %2546 = vmatprep.subr.bf16.mxu0 0
      %2547 = vmatpush2.bf16.msra.mxu0 0
      %2548 = vmatprep.subr.bf16.mxu0 0
      %2549 = vmatpush2.bf16.msra.mxu0 0
      %2550 = vmatprep.subr.bf16.mxu0 0
      %2551 = vmatpush2.bf16.msra.mxu0 0
      %2552 = vmatprep.mubr.bf16.mxu0 0
      %2553 = vmatmul.mubr.bf16.gmra.mxu0 %v2475
      %v2554 = vpop.f32.mrf.mxu0
      %v2555 = vadd.f32 %v2447, %v2554
      %v2556 = vpop.f32.mrf.mxu0
      %v2557 = vadd.f32 %v2449, %v2556
      %v2558 = vpop.f32.mrf.mxu0
      %v2559 = vadd.f32 %v2451, %v2558
      %v2560 = vpop.f32.mrf.mxu0
      %v2561 = vadd.f32 %v2453, %v2560
      %2562 = vdwg.mxu0
      %2563 = vrot.lane.b32.xlu0 %v2323, 96
      %v2564 = vpop.permute.xlu0 %2563
      %2565 = vrot.lane.b32.xlu0 %v2342, 40
      %v2566 = vpop.permute.xlu0 %2565
      %2567 = vrot.lane.b32.xlu0 %v2343, 40
      %v2568 = vpop.permute.xlu0 %2567
      %2569 = vrot.lane.b32.xlu0 %v2344, 40
      %v2570 = vpop.permute.xlu0 %2569
      %2571 = vrot.lane.b32.xlu0 %v2345, 40
      %v2572 = vpop.permute.xlu0 %2571
      %2573 = vrot.lane.b32.xlu0 %v2346, 40
      %v2574 = vpop.permute.xlu0 %2573
      %vm2575 = vcmask 326656
      %v2576 = vsel %vm2575, %v2566, %v2568
      %v2577 = vsel %vm2575, %v2568, %v2570
      %v2578 = vsel %vm2575, %v2570, %v2572
      %v2579 = vsel %vm2575, %v2572, %v2574
      %v2585 = vsel %vm416, %v2564, 0
      %2587 = vmatprep.subr.bf16.mxu0 0
      %2588 = vmatpush1.bf16.msra.mxu0 0
      %2589 = vmatprep.subr.bf16.mxu0 0
      %2590 = vmatpush1.bf16.msra.mxu0 0
      %2591 = vmatprep.subr.bf16.mxu0 0
      %2592 = vmatpush1.bf16.msra.mxu0 0
      %2593 = vmatprep.subr.bf16.mxu0 0
      %2594 = vmatpush1.bf16.msra.mxu0 0
      %2595 = vmatprep.subr.bf16.mxu0 0
      %2596 = vmatpush1.bf16.msra.mxu0 0
      %2597 = vmatprep.subr.bf16.mxu0 0
      %2598 = vmatpush1.bf16.msra.mxu0 0
      %2599 = vmatprep.subr.bf16.mxu0 0
      %2600 = vmatpush1.bf16.msra.mxu0 0
      %2601 = vmatprep.subr.bf16.mxu0 %v2577
      %2602 = vmatpush1.bf16.msra.mxu0 %v2576
      %2603 = vmatprep.subr.bf16.mxu0 0
      %2604 = vmatpush2.bf16.msra.mxu0 0
      %2605 = vmatprep.subr.bf16.mxu0 0
      %2606 = vmatpush2.bf16.msra.mxu0 0
      %2607 = vmatprep.subr.bf16.mxu0 0
      %2608 = vmatpush2.bf16.msra.mxu0 0
      %2609 = vmatprep.subr.bf16.mxu0 0
      %2610 = vmatpush2.bf16.msra.mxu0 0
      %2611 = vmatprep.subr.bf16.mxu0 0
      %2612 = vmatpush2.bf16.msra.mxu0 0
      %2613 = vmatprep.subr.bf16.mxu0 0
      %2614 = vmatpush2.bf16.msra.mxu0 0
      %2615 = vmatprep.subr.bf16.mxu0 0
      %2616 = vmatpush2.bf16.msra.mxu0 0
      %2617 = vmatprep.subr.bf16.mxu0 0
      %2618 = vmatpush2.bf16.msra.mxu0 0
      %2619 = vmatprep.mubr.bf16.mxu0 0
      %2620 = vmatmul.mubr.bf16.gmra.mxu0 %v2585
      %v2621 = vpop.f32.mrf.mxu0
      %v2622 = vadd.f32 0.0, %v2621
      %v2623 = vpop.f32.mrf.mxu0
      %v2624 = vadd.f32 0.0, %v2623
      %v2625 = vpop.f32.mrf.mxu0
      %v2626 = vadd.f32 0.0, %v2625
      %v2627 = vpop.f32.mrf.mxu0
      %v2628 = vadd.f32 0.0, %v2627
      %2629 = vdwg.mxu0
      %2630 = vmatprep.subr.bf16.mxu0 0
      %2631 = vmatpush1.bf16.msra.mxu0 0
      %2632 = vmatprep.subr.bf16.mxu0 0
      %2633 = vmatpush1.bf16.msra.mxu0 0
      %2634 = vmatprep.subr.bf16.mxu0 0
      %2635 = vmatpush1.bf16.msra.mxu0 0
      %2636 = vmatprep.subr.bf16.mxu0 0
      %2637 = vmatpush1.bf16.msra.mxu0 0
      %2638 = vmatprep.subr.bf16.mxu0 0
      %2639 = vmatpush1.bf16.msra.mxu0 0
      %2640 = vmatprep.subr.bf16.mxu0 0
      %2641 = vmatpush1.bf16.msra.mxu0 0
      %2642 = vmatprep.subr.bf16.mxu0 0
      %2643 = vmatpush1.bf16.msra.mxu0 0
      %2644 = vmatprep.subr.bf16.mxu0 %v2579
      %2645 = vmatpush1.bf16.msra.mxu0 %v2578
      %2646 = vmatprep.subr.bf16.mxu0 0
      %2647 = vmatpush2.bf16.msra.mxu0 0
      %2648 = vmatprep.subr.bf16.mxu0 0
      %2649 = vmatpush2.bf16.msra.mxu0 0
      %2650 = vmatprep.subr.bf16.mxu0 0
      %2651 = vmatpush2.bf16.msra.mxu0 0
      %2652 = vmatprep.subr.bf16.mxu0 0
      %2653 = vmatpush2.bf16.msra.mxu0 0
      %2654 = vmatprep.subr.bf16.mxu0 0
      %2655 = vmatpush2.bf16.msra.mxu0 0
      %2656 = vmatprep.subr.bf16.mxu0 0
      %2657 = vmatpush2.bf16.msra.mxu0 0
      %2658 = vmatprep.subr.bf16.mxu0 0
      %2659 = vmatpush2.bf16.msra.mxu0 0
      %2660 = vmatprep.subr.bf16.mxu0 0
      %2661 = vmatpush2.bf16.msra.mxu0 0
      %2662 = vmatprep.mubr.bf16.mxu0 0
      %2663 = vmatmul.mubr.bf16.gmra.mxu0 %v2585
      %v2664 = vpop.f32.mrf.mxu0
      %v2665 = vadd.f32 0.0, %v2664
      %v2666 = vpop.f32.mrf.mxu0
      %v2667 = vadd.f32 0.0, %v2666
      %v2668 = vpop.f32.mrf.mxu0
      %v2669 = vadd.f32 0.0, %v2668
      %v2670 = vpop.f32.mrf.mxu0
      %v2671 = vadd.f32 0.0, %v2670
      %2672 = vdwg.mxu0
      %v2673 = vadd.f32 %v2512, %v2622
      %v2674 = vadd.f32 %v2514, %v2624
      %v2675 = vadd.f32 %v2555, %v2665
      %v2676 = vadd.f32 %v2557, %v2667
      %v2677 = vadd.f32 %v2516, %v2626
      %v2678 = vadd.f32 %v2518, %v2628
      %v2679 = vadd.f32 %v2559, %v2669
      %v2680 = vadd.f32 %v2561, %v2671
      %2681 = vrot.lane.b32.xlu0 %v2323, 80
      %v2682 = vpop.permute.xlu0 %2681
      %2683 = vrot.lane.b32.xlu0 %v2342, 39
      %v2684 = vpop.permute.xlu0 %2683
      %2685 = vrot.lane.b32.xlu0 %v2343, 39
      %v2686 = vpop.permute.xlu0 %2685
      %2687 = vrot.lane.b32.xlu0 %v2344, 39
      %v2688 = vpop.permute.xlu0 %2687
      %2689 = vrot.lane.b32.xlu0 %v2345, 39
      %v2690 = vpop.permute.xlu0 %2689
      %2691 = vrot.lane.b32.xlu0 %v2346, 39
      %v2692 = vpop.permute.xlu0 %2691
      %vm2693 = vcmask 318464
      %v2694 = vsel %vm2693, %v2684, %v2686
      %v2695 = vsel %vm2693, %v2686, %v2688
      %v2696 = vsel %vm2693, %v2688, %v2690
      %v2697 = vsel %vm2693, %v2690, %v2692
      %v2703 = vsel %vm416, %v2682, 0
      %2705 = vmatprep.subr.bf16.mxu0 0
      %2706 = vmatpush1.bf16.msra.mxu0 0
      %2707 = vmatprep.subr.bf16.mxu0 0
      %2708 = vmatpush1.bf16.msra.mxu0 0
      %2709 = vmatprep.subr.bf16.mxu0 0
      %2710 = vmatpush1.bf16.msra.mxu0 0
      %2711 = vmatprep.subr.bf16.mxu0 0
      %2712 = vmatpush1.bf16.msra.mxu0 0
      %2713 = vmatprep.subr.bf16.mxu0 0
      %2714 = vmatpush1.bf16.msra.mxu0 0
      %2715 = vmatprep.subr.bf16.mxu0 0
      %2716 = vmatpush1.bf16.msra.mxu0 0
      %2717 = vmatprep.subr.bf16.mxu0 0
      %2718 = vmatpush1.bf16.msra.mxu0 0
      %2719 = vmatprep.subr.bf16.mxu0 %v2695
      %2720 = vmatpush1.bf16.msra.mxu0 %v2694
      %2721 = vmatprep.subr.bf16.mxu0 0
      %2722 = vmatpush2.bf16.msra.mxu0 0
      %2723 = vmatprep.subr.bf16.mxu0 0
      %2724 = vmatpush2.bf16.msra.mxu0 0
      %2725 = vmatprep.subr.bf16.mxu0 0
      %2726 = vmatpush2.bf16.msra.mxu0 0
      %2727 = vmatprep.subr.bf16.mxu0 0
      %2728 = vmatpush2.bf16.msra.mxu0 0
      %2729 = vmatprep.subr.bf16.mxu0 0
      %2730 = vmatpush2.bf16.msra.mxu0 0
      %2731 = vmatprep.subr.bf16.mxu0 0
      %2732 = vmatpush2.bf16.msra.mxu0 0
      %2733 = vmatprep.subr.bf16.mxu0 0
      %2734 = vmatpush2.bf16.msra.mxu0 0
      %2735 = vmatprep.subr.bf16.mxu0 0
      %2736 = vmatpush2.bf16.msra.mxu0 0
      %2737 = vmatprep.mubr.bf16.mxu0 0
      %2738 = vmatmul.mubr.bf16.gmra.mxu0 %v2703
      %v2739 = vpop.f32.mrf.mxu0
      %v2740 = vadd.f32 0.0, %v2739
      %v2741 = vpop.f32.mrf.mxu0
      %v2742 = vadd.f32 0.0, %v2741
      %v2743 = vpop.f32.mrf.mxu0
      %v2744 = vadd.f32 0.0, %v2743
      %v2745 = vpop.f32.mrf.mxu0
      %v2746 = vadd.f32 0.0, %v2745
      %2747 = vdwg.mxu0
      %2748 = vmatprep.subr.bf16.mxu0 0
      %2749 = vmatpush1.bf16.msra.mxu0 0
      %2750 = vmatprep.subr.bf16.mxu0 0
      %2751 = vmatpush1.bf16.msra.mxu0 0
      %2752 = vmatprep.subr.bf16.mxu0 0
      %2753 = vmatpush1.bf16.msra.mxu0 0
      %2754 = vmatprep.subr.bf16.mxu0 0
      %2755 = vmatpush1.bf16.msra.mxu0 0
      %2756 = vmatprep.subr.bf16.mxu0 0
      %2757 = vmatpush1.bf16.msra.mxu0 0
      %2758 = vmatprep.subr.bf16.mxu0 0
      %2759 = vmatpush1.bf16.msra.mxu0 0
      %2760 = vmatprep.subr.bf16.mxu0 0
      %2761 = vmatpush1.bf16.msra.mxu0 0
      %2762 = vmatprep.subr.bf16.mxu0 %v2697
      %2763 = vmatpush1.bf16.msra.mxu0 %v2696
      %2764 = vmatprep.subr.bf16.mxu0 0
      %2765 = vmatpush2.bf16.msra.mxu0 0
      %2766 = vmatprep.subr.bf16.mxu0 0
      %2767 = vmatpush2.bf16.msra.mxu0 0
      %2768 = vmatprep.subr.bf16.mxu0 0
      %2769 = vmatpush2.bf16.msra.mxu0 0
      %2770 = vmatprep.subr.bf16.mxu0 0
      %2771 = vmatpush2.bf16.msra.mxu0 0
      %2772 = vmatprep.subr.bf16.mxu0 0
      %2773 = vmatpush2.bf16.msra.mxu0 0
      %2774 = vmatprep.subr.bf16.mxu0 0
      %2775 = vmatpush2.bf16.msra.mxu0 0
      %2776 = vmatprep.subr.bf16.mxu0 0
      %2777 = vmatpush2.bf16.msra.mxu0 0
      %2778 = vmatprep.subr.bf16.mxu0 0
      %2779 = vmatpush2.bf16.msra.mxu0 0
      %2780 = vmatprep.mubr.bf16.mxu0 0
      %2781 = vmatmul.mubr.bf16.gmra.mxu0 %v2703
      %v2782 = vpop.f32.mrf.mxu0
      %v2783 = vadd.f32 0.0, %v2782
      %v2784 = vpop.f32.mrf.mxu0
      %v2785 = vadd.f32 0.0, %v2784
      %v2786 = vpop.f32.mrf.mxu0
      %v2787 = vadd.f32 0.0, %v2786
      %v2788 = vpop.f32.mrf.mxu0
      %v2789 = vadd.f32 0.0, %v2788
      %2790 = vdwg.mxu0
      %v2791 = vadd.f32 %v2673, %v2740
      %v2792 = vadd.f32 %v2674, %v2742
      %v2793 = vadd.f32 %v2675, %v2783
      %v2794 = vadd.f32 %v2676, %v2785
      %v2795 = vadd.f32 %v2677, %v2744
      %v2796 = vadd.f32 %v2678, %v2746
      %v2797 = vadd.f32 %v2679, %v2787
      %v2798 = vadd.f32 %v2680, %v2789
      %2799 = vrot.lane.b32.xlu0 %v2323, 64
      %v2800 = vpop.permute.xlu0 %2799
      %2801 = vrot.lane.b32.xlu0 %v2342, 38
      %v2802 = vpop.permute.xlu0 %2801
      %2803 = vrot.lane.b32.xlu0 %v2343, 38
      %v2804 = vpop.permute.xlu0 %2803
      %2805 = vrot.lane.b32.xlu0 %v2344, 38
      %v2806 = vpop.permute.xlu0 %2805
      %2807 = vrot.lane.b32.xlu0 %v2345, 38
      %v2808 = vpop.permute.xlu0 %2807
      %2809 = vrot.lane.b32.xlu0 %v2346, 38
      %v2810 = vpop.permute.xlu0 %2809
      %vm2811 = vcmask 310272
      %v2812 = vsel %vm2811, %v2802, %v2804
      %v2813 = vsel %vm2811, %v2804, %v2806
      %v2814 = vsel %vm2811, %v2806, %v2808
      %v2815 = vsel %vm2811, %v2808, %v2810
      %v2821 = vsel %vm416, %v2800, 0
      %2823 = vmatprep.subr.bf16.mxu0 0
      %2824 = vmatpush1.bf16.msra.mxu0 0
      %2825 = vmatprep.subr.bf16.mxu0 0
      %2826 = vmatpush1.bf16.msra.mxu0 0
      %2827 = vmatprep.subr.bf16.mxu0 0
      %2828 = vmatpush1.bf16.msra.mxu0 0
      %2829 = vmatprep.subr.bf16.mxu0 0
      %2830 = vmatpush1.bf16.msra.mxu0 0
      %2831 = vmatprep.subr.bf16.mxu0 0
      %2832 = vmatpush1.bf16.msra.mxu0 0
      %2833 = vmatprep.subr.bf16.mxu0 0
      %2834 = vmatpush1.bf16.msra.mxu0 0
      %2835 = vmatprep.subr.bf16.mxu0 0
      %2836 = vmatpush1.bf16.msra.mxu0 0
      %2837 = vmatprep.subr.bf16.mxu0 %v2813
      %2838 = vmatpush1.bf16.msra.mxu0 %v2812
      %2839 = vmatprep.subr.bf16.mxu0 0
      %2840 = vmatpush2.bf16.msra.mxu0 0
      %2841 = vmatprep.subr.bf16.mxu0 0
      %2842 = vmatpush2.bf16.msra.mxu0 0
      %2843 = vmatprep.subr.bf16.mxu0 0
      %2844 = vmatpush2.bf16.msra.mxu0 0
      %2845 = vmatprep.subr.bf16.mxu0 0
      %2846 = vmatpush2.bf16.msra.mxu0 0
      %2847 = vmatprep.subr.bf16.mxu0 0
      %2848 = vmatpush2.bf16.msra.mxu0 0
      %2849 = vmatprep.subr.bf16.mxu0 0
      %2850 = vmatpush2.bf16.msra.mxu0 0
      %2851 = vmatprep.subr.bf16.mxu0 0
      %2852 = vmatpush2.bf16.msra.mxu0 0
      %2853 = vmatprep.subr.bf16.mxu0 0
      %2854 = vmatpush2.bf16.msra.mxu0 0
      %2855 = vmatprep.mubr.bf16.mxu0 0
      %2856 = vmatmul.mubr.bf16.gmra.mxu0 %v2821
      %v2857 = vpop.f32.mrf.mxu0
      %v2858 = vadd.f32 0.0, %v2857
      %v2859 = vpop.f32.mrf.mxu0
      %v2860 = vadd.f32 0.0, %v2859
      %v2861 = vpop.f32.mrf.mxu0
      %v2862 = vadd.f32 0.0, %v2861
      %v2863 = vpop.f32.mrf.mxu0
      %v2864 = vadd.f32 0.0, %v2863
      %2865 = vdwg.mxu0
      %2866 = vmatprep.subr.bf16.mxu0 0
      %2867 = vmatpush1.bf16.msra.mxu0 0
      %2868 = vmatprep.subr.bf16.mxu0 0
      %2869 = vmatpush1.bf16.msra.mxu0 0
      %2870 = vmatprep.subr.bf16.mxu0 0
      %2871 = vmatpush1.bf16.msra.mxu0 0
      %2872 = vmatprep.subr.bf16.mxu0 0
      %2873 = vmatpush1.bf16.msra.mxu0 0
      %2874 = vmatprep.subr.bf16.mxu0 0
      %2875 = vmatpush1.bf16.msra.mxu0 0
      %2876 = vmatprep.subr.bf16.mxu0 0
      %2877 = vmatpush1.bf16.msra.mxu0 0
      %2878 = vmatprep.subr.bf16.mxu0 0
      %2879 = vmatpush1.bf16.msra.mxu0 0
      %2880 = vmatprep.subr.bf16.mxu0 %v2815
      %2881 = vmatpush1.bf16.msra.mxu0 %v2814
      %2882 = vmatprep.subr.bf16.mxu0 0
      %2883 = vmatpush2.bf16.msra.mxu0 0
      %2884 = vmatprep.subr.bf16.mxu0 0
      %2885 = vmatpush2.bf16.msra.mxu0 0
      %2886 = vmatprep.subr.bf16.mxu0 0
      %2887 = vmatpush2.bf16.msra.mxu0 0
      %2888 = vmatprep.subr.bf16.mxu0 0
      %2889 = vmatpush2.bf16.msra.mxu0 0
      %2890 = vmatprep.subr.bf16.mxu0 0
      %2891 = vmatpush2.bf16.msra.mxu0 0
      %2892 = vmatprep.subr.bf16.mxu0 0
      %2893 = vmatpush2.bf16.msra.mxu0 0
      %2894 = vmatprep.subr.bf16.mxu0 0
      %2895 = vmatpush2.bf16.msra.mxu0 0
      %2896 = vmatprep.subr.bf16.mxu0 0
      %2897 = vmatpush2.bf16.msra.mxu0 0
      %2898 = vmatprep.mubr.bf16.mxu0 0
      %2899 = vmatmul.mubr.bf16.gmra.mxu0 %v2821
      %v2900 = vpop.f32.mrf.mxu0
      %v2901 = vadd.f32 0.0, %v2900
      %v2902 = vpop.f32.mrf.mxu0
      %v2903 = vadd.f32 0.0, %v2902
      %v2904 = vpop.f32.mrf.mxu0
      %v2905 = vadd.f32 0.0, %v2904
      %v2906 = vpop.f32.mrf.mxu0
      %v2907 = vadd.f32 0.0, %v2906
      %2908 = vdwg.mxu0
      %v2909 = vadd.f32 %v2791, %v2858
      %v2910 = vadd.f32 %v2792, %v2860
      %v2911 = vadd.f32 %v2793, %v2901
      %v2912 = vadd.f32 %v2794, %v2903
      %v2913 = vadd.f32 %v2795, %v2862
      %v2914 = vadd.f32 %v2796, %v2864
      %v2915 = vadd.f32 %v2797, %v2905
      %v2916 = vadd.f32 %v2798, %v2907
      %2917 = vrot.lane.b32.xlu0 %v2323, 48
      %v2918 = vpop.permute.xlu0 %2917
      %2919 = vrot.lane.b32.xlu0 %v2342, 22
      %v2920 = vpop.permute.xlu0 %2919
      %2921 = vrot.lane.b32.xlu0 %v2343, 22
      %v2922 = vpop.permute.xlu0 %2921
      %2923 = vrot.lane.b32.xlu0 %v2344, 22
      %v2924 = vpop.permute.xlu0 %2923
      %2925 = vrot.lane.b32.xlu0 %v2345, 22
      %v2926 = vpop.permute.xlu0 %2925
      %2927 = vrot.lane.b32.xlu0 %v2346, 22
      %v2928 = vpop.permute.xlu0 %2927
      %vm2929 = vcmask 179200
      %v2930 = vsel %vm2929, %v2920, %v2922
      %v2931 = vsel %vm2929, %v2922, %v2924
      %v2932 = vsel %vm2929, %v2924, %v2926
      %v2933 = vsel %vm2929, %v2926, %v2928
      %v2939 = vsel %vm416, %v2918, 0
      %2941 = vmatprep.subr.bf16.mxu0 0
      %2942 = vmatpush1.bf16.msra.mxu0 0
      %2943 = vmatprep.subr.bf16.mxu0 0
      %2944 = vmatpush1.bf16.msra.mxu0 0
      %2945 = vmatprep.subr.bf16.mxu0 0
      %2946 = vmatpush1.bf16.msra.mxu0 0
      %2947 = vmatprep.subr.bf16.mxu0 0
      %2948 = vmatpush1.bf16.msra.mxu0 0
      %2949 = vmatprep.subr.bf16.mxu0 0
      %2950 = vmatpush1.bf16.msra.mxu0 0
      %2951 = vmatprep.subr.bf16.mxu0 0
      %2952 = vmatpush1.bf16.msra.mxu0 0
      %2953 = vmatprep.subr.bf16.mxu0 0
      %2954 = vmatpush1.bf16.msra.mxu0 0
      %2955 = vmatprep.subr.bf16.mxu0 %v2931
      %2956 = vmatpush1.bf16.msra.mxu0 %v2930
      %2957 = vmatprep.subr.bf16.mxu0 0
      %2958 = vmatpush2.bf16.msra.mxu0 0
      %2959 = vmatprep.subr.bf16.mxu0 0
      %2960 = vmatpush2.bf16.msra.mxu0 0
      %2961 = vmatprep.subr.bf16.mxu0 0
      %2962 = vmatpush2.bf16.msra.mxu0 0
      %2963 = vmatprep.subr.bf16.mxu0 0
      %2964 = vmatpush2.bf16.msra.mxu0 0
      %2965 = vmatprep.subr.bf16.mxu0 0
      %2966 = vmatpush2.bf16.msra.mxu0 0
      %2967 = vmatprep.subr.bf16.mxu0 0
      %2968 = vmatpush2.bf16.msra.mxu0 0
      %2969 = vmatprep.subr.bf16.mxu0 0
      %2970 = vmatpush2.bf16.msra.mxu0 0
      %2971 = vmatprep.subr.bf16.mxu0 0
      %2972 = vmatpush2.bf16.msra.mxu0 0
      %2973 = vmatprep.mubr.bf16.mxu0 0
      %2974 = vmatmul.mubr.bf16.gmra.mxu0 %v2939
      %v2975 = vpop.f32.mrf.mxu0
      %v2976 = vadd.f32 0.0, %v2975
      %v2977 = vpop.f32.mrf.mxu0
      %v2978 = vadd.f32 0.0, %v2977
      %v2979 = vpop.f32.mrf.mxu0
      %v2980 = vadd.f32 0.0, %v2979
      %v2981 = vpop.f32.mrf.mxu0
      %v2982 = vadd.f32 0.0, %v2981
      %2983 = vdwg.mxu0
      %2984 = vmatprep.subr.bf16.mxu0 0
      %2985 = vmatpush1.bf16.msra.mxu0 0
      %2986 = vmatprep.subr.bf16.mxu0 0
      %2987 = vmatpush1.bf16.msra.mxu0 0
      %2988 = vmatprep.subr.bf16.mxu0 0
      %2989 = vmatpush1.bf16.msra.mxu0 0
      %2990 = vmatprep.subr.bf16.mxu0 0
      %2991 = vmatpush1.bf16.msra.mxu0 0
      %2992 = vmatprep.subr.bf16.mxu0 0
      %2993 = vmatpush1.bf16.msra.mxu0 0
      %2994 = vmatprep.subr.bf16.mxu0 0
      %2995 = vmatpush1.bf16.msra.mxu0 0
      %2996 = vmatprep.subr.bf16.mxu0 0
      %2997 = vmatpush1.bf16.msra.mxu0 0
      %2998 = vmatprep.subr.bf16.mxu0 %v2933
      %2999 = vmatpush1.bf16.msra.mxu0 %v2932
      %3000 = vmatprep.subr.bf16.mxu0 0
      %3001 = vmatpush2.bf16.msra.mxu0 0
      %3002 = vmatprep.subr.bf16.mxu0 0
      %3003 = vmatpush2.bf16.msra.mxu0 0
      %3004 = vmatprep.subr.bf16.mxu0 0
      %3005 = vmatpush2.bf16.msra.mxu0 0
      %3006 = vmatprep.subr.bf16.mxu0 0
      %3007 = vmatpush2.bf16.msra.mxu0 0
      %3008 = vmatprep.subr.bf16.mxu0 0
      %3009 = vmatpush2.bf16.msra.mxu0 0
      %3010 = vmatprep.subr.bf16.mxu0 0
      %3011 = vmatpush2.bf16.msra.mxu0 0
      %3012 = vmatprep.subr.bf16.mxu0 0
      %3013 = vmatpush2.bf16.msra.mxu0 0
      %3014 = vmatprep.subr.bf16.mxu0 0
      %3015 = vmatpush2.bf16.msra.mxu0 0
      %3016 = vmatprep.mubr.bf16.mxu0 0
      %3017 = vmatmul.mubr.bf16.gmra.mxu0 %v2939
      %v3018 = vpop.f32.mrf.mxu0
      %v3019 = vadd.f32 0.0, %v3018
      %v3020 = vpop.f32.mrf.mxu0
      %v3021 = vadd.f32 0.0, %v3020
      %v3022 = vpop.f32.mrf.mxu0
      %v3023 = vadd.f32 0.0, %v3022
      %v3024 = vpop.f32.mrf.mxu0
      %v3025 = vadd.f32 0.0, %v3024
      %3026 = vdwg.mxu0
      %v3027 = vadd.f32 %v2909, %v2976
      %v3028 = vadd.f32 %v2910, %v2978
      %v3029 = vadd.f32 %v2911, %v3019
      %v3030 = vadd.f32 %v2912, %v3021
      %v3031 = vadd.f32 %v2913, %v2980
      %v3032 = vadd.f32 %v2914, %v2982
      %v3033 = vadd.f32 %v2915, %v3023
      %v3034 = vadd.f32 %v2916, %v3025
      %3035 = vrot.lane.b32.xlu0 %v2323, 32
      %v3036 = vpop.permute.xlu0 %3035
      %3037 = vrot.lane.b32.xlu0 %v2342, 21
      %v3038 = vpop.permute.xlu0 %3037
      %3039 = vrot.lane.b32.xlu0 %v2343, 21
      %v3040 = vpop.permute.xlu0 %3039
      %3041 = vrot.lane.b32.xlu0 %v2344, 21
      %v3042 = vpop.permute.xlu0 %3041
      %3043 = vrot.lane.b32.xlu0 %v2345, 21
      %v3044 = vpop.permute.xlu0 %3043
      %3045 = vrot.lane.b32.xlu0 %v2346, 21
      %v3046 = vpop.permute.xlu0 %3045
      %vm3047 = vcmask 171008
      %v3048 = vsel %vm3047, %v3038, %v3040
      %v3049 = vsel %vm3047, %v3040, %v3042
      %v3050 = vsel %vm3047, %v3042, %v3044
      %v3051 = vsel %vm3047, %v3044, %v3046
      %v3057 = vsel %vm416, %v3036, 0
      %3059 = vmatprep.subr.bf16.mxu0 0
      %3060 = vmatpush1.bf16.msra.mxu0 0
      %3061 = vmatprep.subr.bf16.mxu0 0
      %3062 = vmatpush1.bf16.msra.mxu0 0
      %3063 = vmatprep.subr.bf16.mxu0 0
      %3064 = vmatpush1.bf16.msra.mxu0 0
      %3065 = vmatprep.subr.bf16.mxu0 0
      %3066 = vmatpush1.bf16.msra.mxu0 0
      %3067 = vmatprep.subr.bf16.mxu0 0
      %3068 = vmatpush1.bf16.msra.mxu0 0
      %3069 = vmatprep.subr.bf16.mxu0 0
      %3070 = vmatpush1.bf16.msra.mxu0 0
      %3071 = vmatprep.subr.bf16.mxu0 0
      %3072 = vmatpush1.bf16.msra.mxu0 0
      %3073 = vmatprep.subr.bf16.mxu0 %v3049
      %3074 = vmatpush1.bf16.msra.mxu0 %v3048
      %3075 = vmatprep.subr.bf16.mxu0 0
      %3076 = vmatpush2.bf16.msra.mxu0 0
      %3077 = vmatprep.subr.bf16.mxu0 0
      %3078 = vmatpush2.bf16.msra.mxu0 0
      %3079 = vmatprep.subr.bf16.mxu0 0
      %3080 = vmatpush2.bf16.msra.mxu0 0
      %3081 = vmatprep.subr.bf16.mxu0 0
      %3082 = vmatpush2.bf16.msra.mxu0 0
      %3083 = vmatprep.subr.bf16.mxu0 0
      %3084 = vmatpush2.bf16.msra.mxu0 0
      %3085 = vmatprep.subr.bf16.mxu0 0
      %3086 = vmatpush2.bf16.msra.mxu0 0
      %3087 = vmatprep.subr.bf16.mxu0 0
      %3088 = vmatpush2.bf16.msra.mxu0 0
      %3089 = vmatprep.subr.bf16.mxu0 0
      %3090 = vmatpush2.bf16.msra.mxu0 0
      %3091 = vmatprep.mubr.bf16.mxu0 0
      %3092 = vmatmul.mubr.bf16.gmra.mxu0 %v3057
      %v3093 = vpop.f32.mrf.mxu0
      %v3094 = vadd.f32 0.0, %v3093
      %v3095 = vpop.f32.mrf.mxu0
      %v3096 = vadd.f32 0.0, %v3095
      %v3097 = vpop.f32.mrf.mxu0
      %v3098 = vadd.f32 0.0, %v3097
      %v3099 = vpop.f32.mrf.mxu0
      %v3100 = vadd.f32 0.0, %v3099
      %3101 = vdwg.mxu0
      %3102 = vmatprep.subr.bf16.mxu0 0
      %3103 = vmatpush1.bf16.msra.mxu0 0
      %3104 = vmatprep.subr.bf16.mxu0 0
      %3105 = vmatpush1.bf16.msra.mxu0 0
      %3106 = vmatprep.subr.bf16.mxu0 0
      %3107 = vmatpush1.bf16.msra.mxu0 0
      %3108 = vmatprep.subr.bf16.mxu0 0
      %3109 = vmatpush1.bf16.msra.mxu0 0
      %3110 = vmatprep.subr.bf16.mxu0 0
      %3111 = vmatpush1.bf16.msra.mxu0 0
      %3112 = vmatprep.subr.bf16.mxu0 0
      %3113 = vmatpush1.bf16.msra.mxu0 0
      %3114 = vmatprep.subr.bf16.mxu0 0
      %3115 = vmatpush1.bf16.msra.mxu0 0
      %3116 = vmatprep.subr.bf16.mxu0 %v3051
      %3117 = vmatpush1.bf16.msra.mxu0 %v3050
      %3118 = vmatprep.subr.bf16.mxu0 0
      %3119 = vmatpush2.bf16.msra.mxu0 0
      %3120 = vmatprep.subr.bf16.mxu0 0
      %3121 = vmatpush2.bf16.msra.mxu0 0
      %3122 = vmatprep.subr.bf16.mxu0 0
      %3123 = vmatpush2.bf16.msra.mxu0 0
      %3124 = vmatprep.subr.bf16.mxu0 0
      %3125 = vmatpush2.bf16.msra.mxu0 0
      %3126 = vmatprep.subr.bf16.mxu0 0
      %3127 = vmatpush2.bf16.msra.mxu0 0
      %3128 = vmatprep.subr.bf16.mxu0 0
      %3129 = vmatpush2.bf16.msra.mxu0 0
      %3130 = vmatprep.subr.bf16.mxu0 0
      %3131 = vmatpush2.bf16.msra.mxu0 0
      %3132 = vmatprep.subr.bf16.mxu0 0
      %3133 = vmatpush2.bf16.msra.mxu0 0
      %3134 = vmatprep.mubr.bf16.mxu0 0
      %3135 = vmatmul.mubr.bf16.gmra.mxu0 %v3057
      %v3136 = vpop.f32.mrf.mxu0
      %v3137 = vadd.f32 0.0, %v3136
      %v3138 = vpop.f32.mrf.mxu0
      %v3139 = vadd.f32 0.0, %v3138
      %v3140 = vpop.f32.mrf.mxu0
      %v3141 = vadd.f32 0.0, %v3140
      %v3142 = vpop.f32.mrf.mxu0
      %v3143 = vadd.f32 0.0, %v3142
      %3144 = vdwg.mxu0
      %v3145 = vadd.f32 %v3027, %v3094
      %v3146 = vadd.f32 %v3028, %v3096
      %v3147 = vadd.f32 %v3029, %v3137
      %v3148 = vadd.f32 %v3030, %v3139
      %v3149 = vadd.f32 %v3031, %v3098
      %v3150 = vadd.f32 %v3032, %v3100
      %v3151 = vadd.f32 %v3033, %v3141
      %v3152 = vadd.f32 %v3034, %v3143
      %3153 = vrot.lane.b32.xlu0 %v2323, 16
      %v3154 = vpop.permute.xlu0 %3153
      %3155 = vrot.lane.b32.xlu0 %v2342, 20
      %v3156 = vpop.permute.xlu0 %3155
      %3157 = vrot.lane.b32.xlu0 %v2343, 20
      %v3158 = vpop.permute.xlu0 %3157
      %3159 = vrot.lane.b32.xlu0 %v2344, 20
      %v3160 = vpop.permute.xlu0 %3159
      %3161 = vrot.lane.b32.xlu0 %v2345, 20
      %v3162 = vpop.permute.xlu0 %3161
      %3163 = vrot.lane.b32.xlu0 %v2346, 20
      %v3164 = vpop.permute.xlu0 %3163
      %vm3165 = vcmask 162816
      %v3166 = vsel %vm3165, %v3156, %v3158
      %v3167 = vsel %vm3165, %v3158, %v3160
      %v3168 = vsel %vm3165, %v3160, %v3162
      %v3169 = vsel %vm3165, %v3162, %v3164
      %v3175 = vsel %vm416, %v3154, 0
      %3177 = vmatprep.subr.bf16.mxu0 0
      %3178 = vmatpush1.bf16.msra.mxu0 0
      %3179 = vmatprep.subr.bf16.mxu0 0
      %3180 = vmatpush1.bf16.msra.mxu0 0
      %3181 = vmatprep.subr.bf16.mxu0 0
      %3182 = vmatpush1.bf16.msra.mxu0 0
      %3183 = vmatprep.subr.bf16.mxu0 0
      %3184 = vmatpush1.bf16.msra.mxu0 0
      %3185 = vmatprep.subr.bf16.mxu0 0
      %3186 = vmatpush1.bf16.msra.mxu0 0
      %3187 = vmatprep.subr.bf16.mxu0 0
      %3188 = vmatpush1.bf16.msra.mxu0 0
      %3189 = vmatprep.subr.bf16.mxu0 0
      %3190 = vmatpush1.bf16.msra.mxu0 0
      %3191 = vmatprep.subr.bf16.mxu0 %v3167
      %3192 = vmatpush1.bf16.msra.mxu0 %v3166
      %3193 = vmatprep.subr.bf16.mxu0 0
      %3194 = vmatpush2.bf16.msra.mxu0 0
      %3195 = vmatprep.subr.bf16.mxu0 0
      %3196 = vmatpush2.bf16.msra.mxu0 0
      %3197 = vmatprep.subr.bf16.mxu0 0
      %3198 = vmatpush2.bf16.msra.mxu0 0
      %3199 = vmatprep.subr.bf16.mxu0 0
      %3200 = vmatpush2.bf16.msra.mxu0 0
      %3201 = vmatprep.subr.bf16.mxu0 0
      %3202 = vmatpush2.bf16.msra.mxu0 0
      %3203 = vmatprep.subr.bf16.mxu0 0
      %3204 = vmatpush2.bf16.msra.mxu0 0
      %3205 = vmatprep.subr.bf16.mxu0 0
      %3206 = vmatpush2.bf16.msra.mxu0 0
      %3207 = vmatprep.subr.bf16.mxu0 0
      %3208 = vmatpush2.bf16.msra.mxu0 0
      %3209 = vmatprep.mubr.bf16.mxu0 0
      %3210 = vmatmul.mubr.bf16.gmra.mxu0 %v3175
      %v3211 = vpop.f32.mrf.mxu0
      %v3212 = vadd.f32 0.0, %v3211
      %v3213 = vpop.f32.mrf.mxu0
      %v3214 = vadd.f32 0.0, %v3213
      %v3215 = vpop.f32.mrf.mxu0
      %v3216 = vadd.f32 0.0, %v3215
      %v3217 = vpop.f32.mrf.mxu0
      %v3218 = vadd.f32 0.0, %v3217
      %3219 = vdwg.mxu0
      %3220 = vmatprep.subr.bf16.mxu0 0
      %3221 = vmatpush1.bf16.msra.mxu0 0
      %3222 = vmatprep.subr.bf16.mxu0 0
      %3223 = vmatpush1.bf16.msra.mxu0 0
      %3224 = vmatprep.subr.bf16.mxu0 0
      %3225 = vmatpush1.bf16.msra.mxu0 0
      %3226 = vmatprep.subr.bf16.mxu0 0
      %3227 = vmatpush1.bf16.msra.mxu0 0
      %3228 = vmatprep.subr.bf16.mxu0 0
      %3229 = vmatpush1.bf16.msra.mxu0 0
      %3230 = vmatprep.subr.bf16.mxu0 0
      %3231 = vmatpush1.bf16.msra.mxu0 0
      %3232 = vmatprep.subr.bf16.mxu0 0
      %3233 = vmatpush1.bf16.msra.mxu0 0
      %3234 = vmatprep.subr.bf16.mxu0 %v3169
      %3235 = vmatpush1.bf16.msra.mxu0 %v3168
      %3236 = vmatprep.subr.bf16.mxu0 0
      %3237 = vmatpush2.bf16.msra.mxu0 0
      %3238 = vmatprep.subr.bf16.mxu0 0
      %3239 = vmatpush2.bf16.msra.mxu0 0
      %3240 = vmatprep.subr.bf16.mxu0 0
      %3241 = vmatpush2.bf16.msra.mxu0 0
      %3242 = vmatprep.subr.bf16.mxu0 0
      %3243 = vmatpush2.bf16.msra.mxu0 0
      %3244 = vmatprep.subr.bf16.mxu0 0
      %3245 = vmatpush2.bf16.msra.mxu0 0
      %3246 = vmatprep.subr.bf16.mxu0 0
      %3247 = vmatpush2.bf16.msra.mxu0 0
      %3248 = vmatprep.subr.bf16.mxu0 0
      %3249 = vmatpush2.bf16.msra.mxu0 0
      %3250 = vmatprep.subr.bf16.mxu0 0
      %3251 = vmatpush2.bf16.msra.mxu0 0
      %3252 = vmatprep.mubr.bf16.mxu0 0
      %3253 = vmatmul.mubr.bf16.gmra.mxu0 %v3175
      %v3254 = vpop.f32.mrf.mxu0
      %v3255 = vadd.f32 0.0, %v3254
      %v3256 = vpop.f32.mrf.mxu0
      %v3257 = vadd.f32 0.0, %v3256
      %v3258 = vpop.f32.mrf.mxu0
      %v3259 = vadd.f32 0.0, %v3258
      %v3260 = vpop.f32.mrf.mxu0
      %v3261 = vadd.f32 0.0, %v3260
      %3262 = vdwg.mxu0
      %v3263 = vadd.f32 %v3145, %v3212
      %v3264 = vadd.f32 %v3146, %v3214
      %v3265 = vadd.f32 %v3147, %v3255
      %v3266 = vadd.f32 %v3148, %v3257
      %v3267 = vadd.f32 %v3149, %v3216
      %v3268 = vadd.f32 %v3150, %v3218
      %v3269 = vadd.f32 %v3151, %v3259
      %v3270 = vadd.f32 %v3152, %v3261
      %v3271 = vunpack.c.h.b16 %v2309
      %v3272 = vunpack.c.h.b16 %v2311
      %v3273 = vpack.c.b16 %v3272, %v3271
      %3274 = vrot.lane.b32.xlu0 %v2342, 19
      %v3275 = vpop.permute.xlu0 %3274
      %3276 = vrot.lane.b32.xlu0 %v2343, 19
      %v3277 = vpop.permute.xlu0 %3276
      %3278 = vrot.lane.b32.xlu0 %v2344, 19
      %v3279 = vpop.permute.xlu0 %3278
      %3280 = vrot.lane.b32.xlu0 %v2345, 19
      %v3281 = vpop.permute.xlu0 %3280
      %3282 = vrot.lane.b32.xlu0 %v2346, 19
      %v3283 = vpop.permute.xlu0 %3282
      %vm3284 = vcmask 154624
      %v3285 = vsel %vm3284, %v3275, %v3277
      %v3286 = vsel %vm3284, %v3277, %v3279
      %v3287 = vsel %vm3284, %v3279, %v3281
      %v3288 = vsel %vm3284, %v3281, %v3283
      %v3294 = vsel %vm416, %v3273, 0
      %3296 = vmatprep.subr.bf16.mxu0 0
      %3297 = vmatpush1.bf16.msra.mxu0 0
      %3298 = vmatprep.subr.bf16.mxu0 0
      %3299 = vmatpush1.bf16.msra.mxu0 0
      %3300 = vmatprep.subr.bf16.mxu0 0
      %3301 = vmatpush1.bf16.msra.mxu0 0
      %3302 = vmatprep.subr.bf16.mxu0 0
      %3303 = vmatpush1.bf16.msra.mxu0 0
      %3304 = vmatprep.subr.bf16.mxu0 0
      %3305 = vmatpush1.bf16.msra.mxu0 0
      %3306 = vmatprep.subr.bf16.mxu0 0
      %3307 = vmatpush1.bf16.msra.mxu0 0
      %3308 = vmatprep.subr.bf16.mxu0 0
      %3309 = vmatpush1.bf16.msra.mxu0 0
      %3310 = vmatprep.subr.bf16.mxu0 %v3286
      %3311 = vmatpush1.bf16.msra.mxu0 %v3285
      %3312 = vmatprep.subr.bf16.mxu0 0
      %3313 = vmatpush2.bf16.msra.mxu0 0
      %3314 = vmatprep.subr.bf16.mxu0 0
      %3315 = vmatpush2.bf16.msra.mxu0 0
      %3316 = vmatprep.subr.bf16.mxu0 0
      %3317 = vmatpush2.bf16.msra.mxu0 0
      %3318 = vmatprep.subr.bf16.mxu0 0
      %3319 = vmatpush2.bf16.msra.mxu0 0
      %3320 = vmatprep.subr.bf16.mxu0 0
      %3321 = vmatpush2.bf16.msra.mxu0 0
      %3322 = vmatprep.subr.bf16.mxu0 0
      %3323 = vmatpush2.bf16.msra.mxu0 0
      %3324 = vmatprep.subr.bf16.mxu0 0
      %3325 = vmatpush2.bf16.msra.mxu0 0
      %3326 = vmatprep.subr.bf16.mxu0 0
      %3327 = vmatpush2.bf16.msra.mxu0 0
      %3328 = vmatprep.mubr.bf16.mxu0 0
      %3329 = vmatmul.mubr.bf16.gmra.mxu0 %v3294
      %v3330 = vpop.f32.mrf.mxu0
      %v3331 = vadd.f32 0.0, %v3330
      %v3332 = vpop.f32.mrf.mxu0
      %v3333 = vadd.f32 0.0, %v3332
      %v3334 = vpop.f32.mrf.mxu0
      %v3335 = vadd.f32 0.0, %v3334
      %v3336 = vpop.f32.mrf.mxu0
      %v3337 = vadd.f32 0.0, %v3336
      %3338 = vdwg.mxu0
      %3339 = vmatprep.subr.bf16.mxu0 0
      %3340 = vmatpush1.bf16.msra.mxu0 0
      %3341 = vmatprep.subr.bf16.mxu0 0
      %3342 = vmatpush1.bf16.msra.mxu0 0
      %3343 = vmatprep.subr.bf16.mxu0 0
      %3344 = vmatpush1.bf16.msra.mxu0 0
      %3345 = vmatprep.subr.bf16.mxu0 0
      %3346 = vmatpush1.bf16.msra.mxu0 0
      %3347 = vmatprep.subr.bf16.mxu0 0
      %3348 = vmatpush1.bf16.msra.mxu0 0
      %3349 = vmatprep.subr.bf16.mxu0 0
      %3350 = vmatpush1.bf16.msra.mxu0 0
      %3351 = vmatprep.subr.bf16.mxu0 0
      %3352 = vmatpush1.bf16.msra.mxu0 0
      %3353 = vmatprep.subr.bf16.mxu0 %v3288
      %3354 = vmatpush1.bf16.msra.mxu0 %v3287
      %3355 = vmatprep.subr.bf16.mxu0 0
      %3356 = vmatpush2.bf16.msra.mxu0 0
      %3357 = vmatprep.subr.bf16.mxu0 0
      %3358 = vmatpush2.bf16.msra.mxu0 0
      %3359 = vmatprep.subr.bf16.mxu0 0
      %3360 = vmatpush2.bf16.msra.mxu0 0
      %3361 = vmatprep.subr.bf16.mxu0 0
      %3362 = vmatpush2.bf16.msra.mxu0 0
      %3363 = vmatprep.subr.bf16.mxu0 0
      %3364 = vmatpush2.bf16.msra.mxu0 0
      %3365 = vmatprep.subr.bf16.mxu0 0
      %3366 = vmatpush2.bf16.msra.mxu0 0
      %3367 = vmatprep.subr.bf16.mxu0 0
      %3368 = vmatpush2.bf16.msra.mxu0 0
      %3369 = vmatprep.subr.bf16.mxu0 0
      %3370 = vmatpush2.bf16.msra.mxu0 0
      %3371 = vmatprep.mubr.bf16.mxu0 0
      %3372 = vmatmul.mubr.bf16.gmra.mxu0 %v3294
      %v3373 = vpop.f32.mrf.mxu0
      %v3374 = vadd.f32 0.0, %v3373
      %v3375 = vpop.f32.mrf.mxu0
      %v3376 = vadd.f32 0.0, %v3375
      %v3377 = vpop.f32.mrf.mxu0
      %v3378 = vadd.f32 0.0, %v3377
      %v3379 = vpop.f32.mrf.mxu0
      %v3380 = vadd.f32 0.0, %v3379
      %3381 = vdwg.mxu0
      %v3382 = vadd.f32 %v3263, %v3331
      %v3383 = vadd.f32 %v3264, %v3333
      %v3384 = vadd.f32 %v3265, %v3374
      %v3385 = vadd.f32 %v3266, %v3376
      %v3386 = vadd.f32 %v3267, %v3335
      %v3387 = vadd.f32 %v3268, %v3337
      %v3388 = vadd.f32 %v3269, %v3378
      %v3389 = vadd.f32 %v3270, %v3380
      %3390 = vrot.lane.b32.xlu0 %v3273, 112
      %v3391 = vpop.permute.xlu0 %3390
      %3392 = vrot.lane.b32.xlu0 %v2342, 18
      %v3393 = vpop.permute.xlu0 %3392
      %3394 = vrot.lane.b32.xlu0 %v2343, 18
      %v3395 = vpop.permute.xlu0 %3394
      %3396 = vrot.lane.b32.xlu0 %v2344, 18
      %v3397 = vpop.permute.xlu0 %3396
      %3398 = vrot.lane.b32.xlu0 %v2345, 18
      %v3399 = vpop.permute.xlu0 %3398
      %3400 = vrot.lane.b32.xlu0 %v2346, 18
      %v3401 = vpop.permute.xlu0 %3400
      %vm3402 = vcmask 146432
      %v3403 = vsel %vm3402, %v3393, %v3395
      %v3404 = vsel %vm3402, %v3395, %v3397
      %v3405 = vsel %vm3402, %v3397, %v3399
      %v3406 = vsel %vm3402, %v3399, %v3401
      %v3412 = vsel %vm416, %v3391, 0
      %3414 = vmatprep.subr.bf16.mxu0 0
      %3415 = vmatpush1.bf16.msra.mxu0 0
      %3416 = vmatprep.subr.bf16.mxu0 0
      %3417 = vmatpush1.bf16.msra.mxu0 0
      %3418 = vmatprep.subr.bf16.mxu0 0
      %3419 = vmatpush1.bf16.msra.mxu0 0
      %3420 = vmatprep.subr.bf16.mxu0 0
      %3421 = vmatpush1.bf16.msra.mxu0 0
      %3422 = vmatprep.subr.bf16.mxu0 0
      %3423 = vmatpush1.bf16.msra.mxu0 0
      %3424 = vmatprep.subr.bf16.mxu0 0
      %3425 = vmatpush1.bf16.msra.mxu0 0
      %3426 = vmatprep.subr.bf16.mxu0 0
      %3427 = vmatpush1.bf16.msra.mxu0 0
      %3428 = vmatprep.subr.bf16.mxu0 %v3404
      %3429 = vmatpush1.bf16.msra.mxu0 %v3403
      %3430 = vmatprep.subr.bf16.mxu0 0
      %3431 = vmatpush2.bf16.msra.mxu0 0
      %3432 = vmatprep.subr.bf16.mxu0 0
      %3433 = vmatpush2.bf16.msra.mxu0 0
      %3434 = vmatprep.subr.bf16.mxu0 0
      %3435 = vmatpush2.bf16.msra.mxu0 0
      %3436 = vmatprep.subr.bf16.mxu0 0
      %3437 = vmatpush2.bf16.msra.mxu0 0
      %3438 = vmatprep.subr.bf16.mxu0 0
      %3439 = vmatpush2.bf16.msra.mxu0 0
      %3440 = vmatprep.subr.bf16.mxu0 0
      %3441 = vmatpush2.bf16.msra.mxu0 0
      %3442 = vmatprep.subr.bf16.mxu0 0
      %3443 = vmatpush2.bf16.msra.mxu0 0
      %3444 = vmatprep.subr.bf16.mxu0 0
      %3445 = vmatpush2.bf16.msra.mxu0 0
      %3446 = vmatprep.mubr.bf16.mxu0 0
      %3447 = vmatmul.mubr.bf16.gmra.mxu0 %v3412
      %v3448 = vpop.f32.mrf.mxu0
      %v3449 = vadd.f32 0.0, %v3448
      %v3450 = vpop.f32.mrf.mxu0
      %v3451 = vadd.f32 0.0, %v3450
      %v3452 = vpop.f32.mrf.mxu0
      %v3453 = vadd.f32 0.0, %v3452
      %v3454 = vpop.f32.mrf.mxu0
      %v3455 = vadd.f32 0.0, %v3454
      %3456 = vdwg.mxu0
      %3457 = vmatprep.subr.bf16.mxu0 0
      %3458 = vmatpush1.bf16.msra.mxu0 0
      %3459 = vmatprep.subr.bf16.mxu0 0
      %3460 = vmatpush1.bf16.msra.mxu0 0
      %3461 = vmatprep.subr.bf16.mxu0 0
      %3462 = vmatpush1.bf16.msra.mxu0 0
      %3463 = vmatprep.subr.bf16.mxu0 0
      %3464 = vmatpush1.bf16.msra.mxu0 0
      %3465 = vmatprep.subr.bf16.mxu0 0
      %3466 = vmatpush1.bf16.msra.mxu0 0
      %3467 = vmatprep.subr.bf16.mxu0 0
      %3468 = vmatpush1.bf16.msra.mxu0 0
      %3469 = vmatprep.subr.bf16.mxu0 0
      %3470 = vmatpush1.bf16.msra.mxu0 0
      %3471 = vmatprep.subr.bf16.mxu0 %v3406
      %3472 = vmatpush1.bf16.msra.mxu0 %v3405
      %3473 = vmatprep.subr.bf16.mxu0 0
      %3474 = vmatpush2.bf16.msra.mxu0 0
      %3475 = vmatprep.subr.bf16.mxu0 0
      %3476 = vmatpush2.bf16.msra.mxu0 0
      %3477 = vmatprep.subr.bf16.mxu0 0
      %3478 = vmatpush2.bf16.msra.mxu0 0
      %3479 = vmatprep.subr.bf16.mxu0 0
      %3480 = vmatpush2.bf16.msra.mxu0 0
      %3481 = vmatprep.subr.bf16.mxu0 0
      %3482 = vmatpush2.bf16.msra.mxu0 0
      %3483 = vmatprep.subr.bf16.mxu0 0
      %3484 = vmatpush2.bf16.msra.mxu0 0
      %3485 = vmatprep.subr.bf16.mxu0 0
      %3486 = vmatpush2.bf16.msra.mxu0 0
      %3487 = vmatprep.subr.bf16.mxu0 0
      %3488 = vmatpush2.bf16.msra.mxu0 0
      %3489 = vmatprep.mubr.bf16.mxu0 0
      %3490 = vmatmul.mubr.bf16.gmra.mxu0 %v3412
      %v3491 = vpop.f32.mrf.mxu0
      %v3492 = vadd.f32 0.0, %v3491
      %v3493 = vpop.f32.mrf.mxu0
      %v3494 = vadd.f32 0.0, %v3493
      %v3495 = vpop.f32.mrf.mxu0
      %v3496 = vadd.f32 0.0, %v3495
      %v3497 = vpop.f32.mrf.mxu0
      %v3498 = vadd.f32 0.0, %v3497
      %3499 = vdwg.mxu0
      %v3500 = vadd.f32 %v3382, %v3449
      %v3501 = vadd.f32 %v3383, %v3451
      %v3502 = vadd.f32 %v3384, %v3492
      %v3503 = vadd.f32 %v3385, %v3494
      %v3504 = vadd.f32 %v3386, %v3453
      %v3505 = vadd.f32 %v3387, %v3455
      %v3506 = vadd.f32 %v3388, %v3496
      %v3507 = vadd.f32 %v3389, %v3498
      %3508 = vrot.lane.b32.xlu0 %v3273, 96
      %v3509 = vpop.permute.xlu0 %3508
      %3510 = vrot.lane.b32.xlu0 %v2342, 2
      %v3511 = vpop.permute.xlu0 %3510
      %3512 = vrot.lane.b32.xlu0 %v2343, 2
      %v3513 = vpop.permute.xlu0 %3512
      %3514 = vrot.lane.b32.xlu0 %v2344, 2
      %v3515 = vpop.permute.xlu0 %3514
      %3516 = vrot.lane.b32.xlu0 %v2345, 2
      %v3517 = vpop.permute.xlu0 %3516
      %3518 = vrot.lane.b32.xlu0 %v2346, 2
      %v3519 = vpop.permute.xlu0 %3518
      %vm3520 = vcmask 15360
      %v3521 = vsel %vm3520, %v3511, %v3513
      %v3522 = vsel %vm3520, %v3513, %v3515
      %v3523 = vsel %vm3520, %v3515, %v3517
      %v3524 = vsel %vm3520, %v3517, %v3519
      %v3530 = vsel %vm416, %v3509, 0
      %3532 = vmatprep.subr.bf16.mxu0 0
      %3533 = vmatpush1.bf16.msra.mxu0 0
      %3534 = vmatprep.subr.bf16.mxu0 0
      %3535 = vmatpush1.bf16.msra.mxu0 0
      %3536 = vmatprep.subr.bf16.mxu0 0
      %3537 = vmatpush1.bf16.msra.mxu0 0
      %3538 = vmatprep.subr.bf16.mxu0 0
      %3539 = vmatpush1.bf16.msra.mxu0 0
      %3540 = vmatprep.subr.bf16.mxu0 0
      %3541 = vmatpush1.bf16.msra.mxu0 0
      %3542 = vmatprep.subr.bf16.mxu0 0
      %3543 = vmatpush1.bf16.msra.mxu0 0
      %3544 = vmatprep.subr.bf16.mxu0 0
      %3545 = vmatpush1.bf16.msra.mxu0 0
      %3546 = vmatprep.subr.bf16.mxu0 %v3522
      %3547 = vmatpush1.bf16.msra.mxu0 %v3521
      %3548 = vmatprep.subr.bf16.mxu0 0
      %3549 = vmatpush2.bf16.msra.mxu0 0
      %3550 = vmatprep.subr.bf16.mxu0 0
      %3551 = vmatpush2.bf16.msra.mxu0 0
      %3552 = vmatprep.subr.bf16.mxu0 0
      %3553 = vmatpush2.bf16.msra.mxu0 0
      %3554 = vmatprep.subr.bf16.mxu0 0
      %3555 = vmatpush2.bf16.msra.mxu0 0
      %3556 = vmatprep.subr.bf16.mxu0 0
      %3557 = vmatpush2.bf16.msra.mxu0 0
      %3558 = vmatprep.subr.bf16.mxu0 0
      %3559 = vmatpush2.bf16.msra.mxu0 0
      %3560 = vmatprep.subr.bf16.mxu0 0
      %3561 = vmatpush2.bf16.msra.mxu0 0
      %3562 = vmatprep.subr.bf16.mxu0 0
      %3563 = vmatpush2.bf16.msra.mxu0 0
      %3564 = vmatprep.mubr.bf16.mxu0 0
      %3565 = vmatmul.mubr.bf16.gmra.mxu0 %v3530
      %v3566 = vpop.f32.mrf.mxu0
      %v3567 = vadd.f32 0.0, %v3566
      %v3568 = vpop.f32.mrf.mxu0
      %v3569 = vadd.f32 0.0, %v3568
      %v3570 = vpop.f32.mrf.mxu0
      %v3571 = vadd.f32 0.0, %v3570
      %v3572 = vpop.f32.mrf.mxu0
      %v3573 = vadd.f32 0.0, %v3572
      %3574 = vdwg.mxu0
      %3575 = vmatprep.subr.bf16.mxu0 0
      %3576 = vmatpush1.bf16.msra.mxu0 0
      %3577 = vmatprep.subr.bf16.mxu0 0
      %3578 = vmatpush1.bf16.msra.mxu0 0
      %3579 = vmatprep.subr.bf16.mxu0 0
      %3580 = vmatpush1.bf16.msra.mxu0 0
      %3581 = vmatprep.subr.bf16.mxu0 0
      %3582 = vmatpush1.bf16.msra.mxu0 0
      %3583 = vmatprep.subr.bf16.mxu0 0
      %3584 = vmatpush1.bf16.msra.mxu0 0
      %3585 = vmatprep.subr.bf16.mxu0 0
      %3586 = vmatpush1.bf16.msra.mxu0 0
      %3587 = vmatprep.subr.bf16.mxu0 0
      %3588 = vmatpush1.bf16.msra.mxu0 0
      %3589 = vmatprep.subr.bf16.mxu0 %v3524
      %3590 = vmatpush1.bf16.msra.mxu0 %v3523
      %3591 = vmatprep.subr.bf16.mxu0 0
      %3592 = vmatpush2.bf16.msra.mxu0 0
      %3593 = vmatprep.subr.bf16.mxu0 0
      %3594 = vmatpush2.bf16.msra.mxu0 0
      %3595 = vmatprep.subr.bf16.mxu0 0
      %3596 = vmatpush2.bf16.msra.mxu0 0
      %3597 = vmatprep.subr.bf16.mxu0 0
      %3598 = vmatpush2.bf16.msra.mxu0 0
      %3599 = vmatprep.subr.bf16.mxu0 0
      %3600 = vmatpush2.bf16.msra.mxu0 0
      %3601 = vmatprep.subr.bf16.mxu0 0
      %3602 = vmatpush2.bf16.msra.mxu0 0
      %3603 = vmatprep.subr.bf16.mxu0 0
      %3604 = vmatpush2.bf16.msra.mxu0 0
      %3605 = vmatprep.subr.bf16.mxu0 0
      %3606 = vmatpush2.bf16.msra.mxu0 0
      %3607 = vmatprep.mubr.bf16.mxu0 0
      %3608 = vmatmul.mubr.bf16.gmra.mxu0 %v3530
      %v3609 = vpop.f32.mrf.mxu0
      %v3610 = vadd.f32 0.0, %v3609
      %v3611 = vpop.f32.mrf.mxu0
      %v3612 = vadd.f32 0.0, %v3611
      %v3613 = vpop.f32.mrf.mxu0
      %v3614 = vadd.f32 0.0, %v3613
      %v3615 = vpop.f32.mrf.mxu0
      %v3616 = vadd.f32 0.0, %v3615
      %3617 = vdwg.mxu0
      %v3618 = vadd.f32 %v3500, %v3567
      %v3619 = vadd.f32 %v3501, %v3569
      %v3620 = vadd.f32 %v3502, %v3610
      %v3621 = vadd.f32 %v3503, %v3612
      %v3622 = vadd.f32 %v3504, %v3571
      %v3623 = vadd.f32 %v3505, %v3573
      %v3624 = vadd.f32 %v3506, %v3614
      %v3625 = vadd.f32 %v3507, %v3616
      %3626 = vrot.lane.b32.xlu0 %v3273, 80
      %v3627 = vpop.permute.xlu0 %3626
      %3628 = vrot.lane.b32.xlu0 %v2342, 1
      %v3629 = vpop.permute.xlu0 %3628
      %3630 = vrot.lane.b32.xlu0 %v2343, 1
      %v3631 = vpop.permute.xlu0 %3630
      %3632 = vrot.lane.b32.xlu0 %v2344, 1
      %v3633 = vpop.permute.xlu0 %3632
      %3634 = vrot.lane.b32.xlu0 %v2345, 1
      %v3635 = vpop.permute.xlu0 %3634
      %3636 = vrot.lane.b32.xlu0 %v2346, 1
      %v3637 = vpop.permute.xlu0 %3636
      %vm3638 = vcmask 7168
      %v3639 = vsel %vm3638, %v3629, %v3631
      %v3640 = vsel %vm3638, %v3631, %v3633
      %v3641 = vsel %vm3638, %v3633, %v3635
      %v3642 = vsel %vm3638, %v3635, %v3637
      %v3648 = vsel %vm416, %v3627, 0
      %3650 = vmatprep.subr.bf16.mxu0 0
      %3651 = vmatpush1.bf16.msra.mxu0 0
      %3652 = vmatprep.subr.bf16.mxu0 0
      %3653 = vmatpush1.bf16.msra.mxu0 0
      %3654 = vmatprep.subr.bf16.mxu0 0
      %3655 = vmatpush1.bf16.msra.mxu0 0
      %3656 = vmatprep.subr.bf16.mxu0 0
      %3657 = vmatpush1.bf16.msra.mxu0 0
      %3658 = vmatprep.subr.bf16.mxu0 0
      %3659 = vmatpush1.bf16.msra.mxu0 0
      %3660 = vmatprep.subr.bf16.mxu0 0
      %3661 = vmatpush1.bf16.msra.mxu0 0
      %3662 = vmatprep.subr.bf16.mxu0 0
      %3663 = vmatpush1.bf16.msra.mxu0 0
      %3664 = vmatprep.subr.bf16.mxu0 %v3640
      %3665 = vmatpush1.bf16.msra.mxu0 %v3639
      %3666 = vmatprep.subr.bf16.mxu0 0
      %3667 = vmatpush2.bf16.msra.mxu0 0
      %3668 = vmatprep.subr.bf16.mxu0 0
      %3669 = vmatpush2.bf16.msra.mxu0 0
      %3670 = vmatprep.subr.bf16.mxu0 0
      %3671 = vmatpush2.bf16.msra.mxu0 0
      %3672 = vmatprep.subr.bf16.mxu0 0
      %3673 = vmatpush2.bf16.msra.mxu0 0
      %3674 = vmatprep.subr.bf16.mxu0 0
      %3675 = vmatpush2.bf16.msra.mxu0 0
      %3676 = vmatprep.subr.bf16.mxu0 0
      %3677 = vmatpush2.bf16.msra.mxu0 0
      %3678 = vmatprep.subr.bf16.mxu0 0
      %3679 = vmatpush2.bf16.msra.mxu0 0
      %3680 = vmatprep.subr.bf16.mxu0 0
      %3681 = vmatpush2.bf16.msra.mxu0 0
      %3682 = vmatprep.mubr.bf16.mxu0 0
      %3683 = vmatmul.mubr.bf16.gmra.mxu0 %v3648
      %v3684 = vpop.f32.mrf.mxu0
      %v3685 = vadd.f32 0.0, %v3684
      %v3686 = vpop.f32.mrf.mxu0
      %v3687 = vadd.f32 0.0, %v3686
      %v3688 = vpop.f32.mrf.mxu0
      %v3689 = vadd.f32 0.0, %v3688
      %v3690 = vpop.f32.mrf.mxu0
      %v3691 = vadd.f32 0.0, %v3690
      %3692 = vdwg.mxu0
      %3693 = vmatprep.subr.bf16.mxu0 0
      %3694 = vmatpush1.bf16.msra.mxu0 0
      %3695 = vmatprep.subr.bf16.mxu0 0
      %3696 = vmatpush1.bf16.msra.mxu0 0
      %3697 = vmatprep.subr.bf16.mxu0 0
      %3698 = vmatpush1.bf16.msra.mxu0 0
      %3699 = vmatprep.subr.bf16.mxu0 0
      %3700 = vmatpush1.bf16.msra.mxu0 0
      %3701 = vmatprep.subr.bf16.mxu0 0
      %3702 = vmatpush1.bf16.msra.mxu0 0
      %3703 = vmatprep.subr.bf16.mxu0 0
      %3704 = vmatpush1.bf16.msra.mxu0 0
      %3705 = vmatprep.subr.bf16.mxu0 0
      %3706 = vmatpush1.bf16.msra.mxu0 0
      %3707 = vmatprep.subr.bf16.mxu0 %v3642
      %3708 = vmatpush1.bf16.msra.mxu0 %v3641
      %3709 = vmatprep.subr.bf16.mxu0 0
      %3710 = vmatpush2.bf16.msra.mxu0 0
      %3711 = vmatprep.subr.bf16.mxu0 0
      %3712 = vmatpush2.bf16.msra.mxu0 0
      %3713 = vmatprep.subr.bf16.mxu0 0
      %3714 = vmatpush2.bf16.msra.mxu0 0
      %3715 = vmatprep.subr.bf16.mxu0 0
      %3716 = vmatpush2.bf16.msra.mxu0 0
      %3717 = vmatprep.subr.bf16.mxu0 0
      %3718 = vmatpush2.bf16.msra.mxu0 0
      %3719 = vmatprep.subr.bf16.mxu0 0
      %3720 = vmatpush2.bf16.msra.mxu0 0
      %3721 = vmatprep.subr.bf16.mxu0 0
      %3722 = vmatpush2.bf16.msra.mxu0 0
      %3723 = vmatprep.subr.bf16.mxu0 0
      %3724 = vmatpush2.bf16.msra.mxu0 0
      %3725 = vmatprep.mubr.bf16.mxu0 0
      %3726 = vmatmul.mubr.bf16.gmra.mxu0 %v3648
      %v3727 = vpop.f32.mrf.mxu0
      %v3728 = vadd.f32 0.0, %v3727
      %v3729 = vpop.f32.mrf.mxu0
      %v3730 = vadd.f32 0.0, %v3729
      %v3731 = vpop.f32.mrf.mxu0
      %v3732 = vadd.f32 0.0, %v3731
      %v3733 = vpop.f32.mrf.mxu0
      %v3734 = vadd.f32 0.0, %v3733
      %3735 = vdwg.mxu0
      %v3736 = vadd.f32 %v3618, %v3685
      %v3737 = vadd.f32 %v3619, %v3687
      %v3738 = vadd.f32 %v3620, %v3728
      %v3739 = vadd.f32 %v3621, %v3730
      %v3740 = vadd.f32 %v3622, %v3689
      %v3741 = vadd.f32 %v3623, %v3691
      %v3742 = vadd.f32 %v3624, %v3732
      %v3743 = vadd.f32 %v3625, %v3734
      %v3744 = vld [vmem:[#allocation2 + $0x4] sm:$0xff]
      %v3745 = vld [vmem:[#allocation2 + $0xc] sm:$0xff]
      %v3746 = vld [vmem:[#allocation2 + $0x1c] sm:$0xff]
      %v3747 = vld [vmem:[#allocation2 + $0x24] sm:$0xff]
      %3748 = vrot.lane.b32.xlu0 %v3273, 64
      %v3749 = vpop.permute.xlu0 %3748
      %v3754 = vunpack.c.l.b16 %v3744
      %v3755 = vunpack.c.h.b16 %v3744
      %v3756 = vunpack.c.l.b16 %v3745
      %v3757 = vunpack.c.h.b16 %v3745
      %v3758 = vunpack.c.l.b16 %v3746
      %v3759 = vunpack.c.h.b16 %v3746
      %v3760 = vunpack.c.l.b16 %v3747
      %v3761 = vunpack.c.h.b16 %v3747
      %v3762 = vpack.c.b16 %v3758, %v3754
      %v3763 = vpack.c.b16 %v3759, %v3755
      %v3764 = vpack.c.b16 %v3760, %v3756
      %v3765 = vpack.c.b16 %v3761, %v3757
      %v3771 = vsel %vm416, %v3749, 0
      %3773 = vmatprep.subr.bf16.mxu0 0
      %3774 = vmatpush1.bf16.msra.mxu0 0
      %3775 = vmatprep.subr.bf16.mxu0 0
      %3776 = vmatpush1.bf16.msra.mxu0 0
      %3777 = vmatprep.subr.bf16.mxu0 0
      %3778 = vmatpush1.bf16.msra.mxu0 0
      %3779 = vmatprep.subr.bf16.mxu0 0
      %3780 = vmatpush1.bf16.msra.mxu0 0
      %3781 = vmatprep.subr.bf16.mxu0 0
      %3782 = vmatpush1.bf16.msra.mxu0 0
      %3783 = vmatprep.subr.bf16.mxu0 0
      %3784 = vmatpush1.bf16.msra.mxu0 0
      %3785 = vmatprep.subr.bf16.mxu0 0
      %3786 = vmatpush1.bf16.msra.mxu0 0
      %3787 = vmatprep.subr.bf16.mxu0 %v3763
      %3788 = vmatpush1.bf16.msra.mxu0 %v3762
      %3789 = vmatprep.subr.bf16.mxu0 0
      %3790 = vmatpush2.bf16.msra.mxu0 0
      %3791 = vmatprep.subr.bf16.mxu0 0
      %3792 = vmatpush2.bf16.msra.mxu0 0
      %3793 = vmatprep.subr.bf16.mxu0 0
      %3794 = vmatpush2.bf16.msra.mxu0 0
      %3795 = vmatprep.subr.bf16.mxu0 0
      %3796 = vmatpush2.bf16.msra.mxu0 0
      %3797 = vmatprep.subr.bf16.mxu0 0
      %3798 = vmatpush2.bf16.msra.mxu0 0
      %3799 = vmatprep.subr.bf16.mxu0 0
      %3800 = vmatpush2.bf16.msra.mxu0 0
      %3801 = vmatprep.subr.bf16.mxu0 0
      %3802 = vmatpush2.bf16.msra.mxu0 0
      %3803 = vmatprep.subr.bf16.mxu0 0
      %3804 = vmatpush2.bf16.msra.mxu0 0
      %3805 = vmatprep.mubr.bf16.mxu0 0
      %3806 = vmatmul.mubr.bf16.gmra.mxu0 %v3771
      %v3807 = vpop.f32.mrf.mxu0
      %v3808 = vadd.f32 0.0, %v3807
      %v3809 = vpop.f32.mrf.mxu0
      %v3810 = vadd.f32 0.0, %v3809
      %v3811 = vpop.f32.mrf.mxu0
      %v3812 = vadd.f32 0.0, %v3811
      %v3813 = vpop.f32.mrf.mxu0
      %v3814 = vadd.f32 0.0, %v3813
      %3815 = vdwg.mxu0
      %3816 = vmatprep.subr.bf16.mxu0 0
      %3817 = vmatpush1.bf16.msra.mxu0 0
      %3818 = vmatprep.subr.bf16.mxu0 0
      %3819 = vmatpush1.bf16.msra.mxu0 0
      %3820 = vmatprep.subr.bf16.mxu0 0
      %3821 = vmatpush1.bf16.msra.mxu0 0
      %3822 = vmatprep.subr.bf16.mxu0 0
      %3823 = vmatpush1.bf16.msra.mxu0 0
      %3824 = vmatprep.subr.bf16.mxu0 0
      %3825 = vmatpush1.bf16.msra.mxu0 0
      %3826 = vmatprep.subr.bf16.mxu0 0
      %3827 = vmatpush1.bf16.msra.mxu0 0
      %3828 = vmatprep.subr.bf16.mxu0 0
      %3829 = vmatpush1.bf16.msra.mxu0 0
      %3830 = vmatprep.subr.bf16.mxu0 %v3765
      %3831 = vmatpush1.bf16.msra.mxu0 %v3764
      %3832 = vmatprep.subr.bf16.mxu0 0
      %3833 = vmatpush2.bf16.msra.mxu0 0
      %3834 = vmatprep.subr.bf16.mxu0 0
      %3835 = vmatpush2.bf16.msra.mxu0 0
      %3836 = vmatprep.subr.bf16.mxu0 0
      %3837 = vmatpush2.bf16.msra.mxu0 0
      %3838 = vmatprep.subr.bf16.mxu0 0
      %3839 = vmatpush2.bf16.msra.mxu0 0
      %3840 = vmatprep.subr.bf16.mxu0 0
      %3841 = vmatpush2.bf16.msra.mxu0 0
      %3842 = vmatprep.subr.bf16.mxu0 0
      %3843 = vmatpush2.bf16.msra.mxu0 0
      %3844 = vmatprep.subr.bf16.mxu0 0
      %3845 = vmatpush2.bf16.msra.mxu0 0
      %3846 = vmatprep.subr.bf16.mxu0 0
      %3847 = vmatpush2.bf16.msra.mxu0 0
      %3848 = vmatprep.mubr.bf16.mxu0 0
      %3849 = vmatmul.mubr.bf16.gmra.mxu0 %v3771
      %v3850 = vpop.f32.mrf.mxu0
      %v3851 = vadd.f32 0.0, %v3850
      %v3852 = vpop.f32.mrf.mxu0
      %v3853 = vadd.f32 0.0, %v3852
      %v3854 = vpop.f32.mrf.mxu0
      %v3855 = vadd.f32 0.0, %v3854
      %v3856 = vpop.f32.mrf.mxu0
      %v3857 = vadd.f32 0.0, %v3856
      %3858 = vdwg.mxu0
      %v3859 = vadd.f32 %v3736, %v3808
      %v3860 = vadd.f32 %v3737, %v3810
      %v3861 = vadd.f32 %v3738, %v3851
      %v3862 = vadd.f32 %v3739, %v3853
      %v3863 = vadd.f32 %v3740, %v3812
      %v3864 = vadd.f32 %v3741, %v3814
      %v3865 = vadd.f32 %v3742, %v3855
      %v3866 = vadd.f32 %v3743, %v3857
      %v3867 = vld [vmem:[#allocation2 + $0x4] sm:$0xff]
      %v3868 = vld [vmem:[#allocation2 + $0xc] sm:$0xff]
      %v3869 = vld [vmem:[#allocation2 + $0x14] sm:$0xf]
      %v3870 = vld [vmem:[#allocation2 + $0x1c] sm:$0xff]
      %v3871 = vld [vmem:[#allocation2 + $0x24] sm:$0xff]
      %v3872 = vld [vmem:[#allocation2 + $0x2c] sm:$0xf]
      %3873 = vrot.lane.b32.xlu0 %v3273, 48
      %v3874 = vpop.permute.xlu0 %3873
      %v3881 = vunpack.c.l.b16 %v3867
      %v3882 = vunpack.c.h.b16 %v3867
      %v3883 = vunpack.c.l.b16 %v3868
      %v3884 = vunpack.c.h.b16 %v3868
      %v3885 = vunpack.c.l.b16 %v3869
      %v3886 = vunpack.c.l.b16 %v3870
      %v3887 = vunpack.c.h.b16 %v3870
      %v3888 = vunpack.c.l.b16 %v3871
      %v3889 = vunpack.c.h.b16 %v3871
      %v3890 = vunpack.c.l.b16 %v3872
      %v3891 = vpack.c.b16 %v3886, %v3881
      %v3892 = vpack.c.b16 %v3887, %v3882
      %v3893 = vpack.c.b16 %v3888, %v3883
      %v3894 = vpack.c.b16 %v3889, %v3884
      %v3895 = vpack.c.b16 %v3890, %v3885
      %3896 = vrot.lane.b32.xlu0 %v3891, 127
      %v3897 = vpop.permute.xlu0 %3896
      %3898 = vrot.lane.b32.xlu0 %v3892, 127
      %v3899 = vpop.permute.xlu0 %3898
      %3900 = vrot.lane.b32.xlu0 %v3893, 127
      %v3901 = vpop.permute.xlu0 %3900
      %3902 = vrot.lane.b32.xlu0 %v3894, 127
      %v3903 = vpop.permute.xlu0 %3902
      %3904 = vrot.lane.b32.xlu0 %v3895, 127
      %v3905 = vpop.permute.xlu0 %3904
      %v3906 = vsel %vm654, %v3897, %v3899
      %v3907 = vsel %vm654, %v3899, %v3901
      %v3908 = vsel %vm654, %v3901, %v3903
      %v3909 = vsel %vm654, %v3903, %v3905
      %v3915 = vsel %vm416, %v3874, 0
      %3917 = vmatprep.subr.bf16.mxu0 0
      %3918 = vmatpush1.bf16.msra.mxu0 0
      %3919 = vmatprep.subr.bf16.mxu0 0
      %3920 = vmatpush1.bf16.msra.mxu0 0
      %3921 = vmatprep.subr.bf16.mxu0 0
      %3922 = vmatpush1.bf16.msra.mxu0 0
      %3923 = vmatprep.subr.bf16.mxu0 0
      %3924 = vmatpush1.bf16.msra.mxu0 0
      %3925 = vmatprep.subr.bf16.mxu0 0
      %3926 = vmatpush1.bf16.msra.mxu0 0
      %3927 = vmatprep.subr.bf16.mxu0 0
      %3928 = vmatpush1.bf16.msra.mxu0 0
      %3929 = vmatprep.subr.bf16.mxu0 0
      %3930 = vmatpush1.bf16.msra.mxu0 0
      %3931 = vmatprep.subr.bf16.mxu0 %v3907
      %3932 = vmatpush1.bf16.msra.mxu0 %v3906
      %3933 = vmatprep.subr.bf16.mxu0 0
      %3934 = vmatpush2.bf16.msra.mxu0 0
      %3935 = vmatprep.subr.bf16.mxu0 0
      %3936 = vmatpush2.bf16.msra.mxu0 0
      %3937 = vmatprep.subr.bf16.mxu0 0
      %3938 = vmatpush2.bf16.msra.mxu0 0
      %3939 = vmatprep.subr.bf16.mxu0 0
      %3940 = vmatpush2.bf16.msra.mxu0 0
      %3941 = vmatprep.subr.bf16.mxu0 0
      %3942 = vmatpush2.bf16.msra.mxu0 0
      %3943 = vmatprep.subr.bf16.mxu0 0
      %3944 = vmatpush2.bf16.msra.mxu0 0
      %3945 = vmatprep.subr.bf16.mxu0 0
      %3946 = vmatpush2.bf16.msra.mxu0 0
      %3947 = vmatprep.subr.bf16.mxu0 0
      %3948 = vmatpush2.bf16.msra.mxu0 0
      %3949 = vmatprep.mubr.bf16.mxu0 0
      %3950 = vmatmul.mubr.bf16.gmra.mxu0 %v3915
      %v3951 = vpop.f32.mrf.mxu0
      %v3952 = vadd.f32 0.0, %v3951
      %v3953 = vpop.f32.mrf.mxu0
      %v3954 = vadd.f32 0.0, %v3953
      %v3955 = vpop.f32.mrf.mxu0
      %v3956 = vadd.f32 0.0, %v3955
      %v3957 = vpop.f32.mrf.mxu0
      %v3958 = vadd.f32 0.0, %v3957
      %3959 = vdwg.mxu0
      %3960 = vmatprep.subr.bf16.mxu0 0
      %3961 = vmatpush1.bf16.msra.mxu0 0
      %3962 = vmatprep.subr.bf16.mxu0 0
      %3963 = vmatpush1.bf16.msra.mxu0 0
      %3964 = vmatprep.subr.bf16.mxu0 0
      %3965 = vmatpush1.bf16.msra.mxu0 0
      %3966 = vmatprep.subr.bf16.mxu0 0
      %3967 = vmatpush1.bf16.msra.mxu0 0
      %3968 = vmatprep.subr.bf16.mxu0 0
      %3969 = vmatpush1.bf16.msra.mxu0 0
      %3970 = vmatprep.subr.bf16.mxu0 0
      %3971 = vmatpush1.bf16.msra.mxu0 0
      %3972 = vmatprep.subr.bf16.mxu0 0
      %3973 = vmatpush1.bf16.msra.mxu0 0
      %3974 = vmatprep.subr.bf16.mxu0 %v3909
      %3975 = vmatpush1.bf16.msra.mxu0 %v3908
      %3976 = vmatprep.subr.bf16.mxu0 0
      %3977 = vmatpush2.bf16.msra.mxu0 0
      %3978 = vmatprep.subr.bf16.mxu0 0
      %3979 = vmatpush2.bf16.msra.mxu0 0
      %3980 = vmatprep.subr.bf16.mxu0 0
      %3981 = vmatpush2.bf16.msra.mxu0 0
      %3982 = vmatprep.subr.bf16.mxu0 0
      %3983 = vmatpush2.bf16.msra.mxu0 0
      %3984 = vmatprep.subr.bf16.mxu0 0
      %3985 = vmatpush2.bf16.msra.mxu0 0
      %3986 = vmatprep.subr.bf16.mxu0 0
      %3987 = vmatpush2.bf16.msra.mxu0 0
      %3988 = vmatprep.subr.bf16.mxu0 0
      %3989 = vmatpush2.bf16.msra.mxu0 0
      %3990 = vmatprep.subr.bf16.mxu0 0
      %3991 = vmatpush2.bf16.msra.mxu0 0
      %3992 = vmatprep.mubr.bf16.mxu0 0
      %3993 = vmatmul.mubr.bf16.gmra.mxu0 %v3915
      %v3994 = vpop.f32.mrf.mxu0
      %v3995 = vadd.f32 0.0, %v3994
      %v3996 = vpop.f32.mrf.mxu0
      %v3997 = vadd.f32 0.0, %v3996
      %v3998 = vpop.f32.mrf.mxu0
      %v3999 = vadd.f32 0.0, %v3998
      %v4000 = vpop.f32.mrf.mxu0
      %v4001 = vadd.f32 0.0, %v4000
      %4002 = vdwg.mxu0
      %v4003 = vadd.f32 %v3859, %v3952
      %v4004 = vadd.f32 %v3860, %v3954
      %v4005 = vadd.f32 %v3861, %v3995
      %v4006 = vadd.f32 %v3862, %v3997
      %v4007 = vadd.f32 %v3863, %v3956
      %v4008 = vadd.f32 %v3864, %v3958
      %v4009 = vadd.f32 %v3865, %v3999
      %v4010 = vadd.f32 %v3866, %v4001
      %4011 = vrot.lane.b32.xlu0 %v3273, 32
      %v4012 = vpop.permute.xlu0 %4011
      %4013 = vrot.lane.b32.xlu0 %v3891, 126
      %v4014 = vpop.permute.xlu0 %4013
      %4015 = vrot.lane.b32.xlu0 %v3892, 126
      %v4016 = vpop.permute.xlu0 %4015
      %4017 = vrot.lane.b32.xlu0 %v3893, 126
      %v4018 = vpop.permute.xlu0 %4017
      %4019 = vrot.lane.b32.xlu0 %v3894, 126
      %v4020 = vpop.permute.xlu0 %4019
      %4021 = vrot.lane.b32.xlu0 %v3895, 126
      %v4022 = vpop.permute.xlu0 %4021
      %v4023 = vsel %vm916, %v4014, %v4016
      %v4024 = vsel %vm916, %v4016, %v4018
      %v4025 = vsel %vm916, %v4018, %v4020
      %v4026 = vsel %vm916, %v4020, %v4022
      %v4032 = vsel %vm416, %v4012, 0
      %4034 = vmatprep.subr.bf16.mxu0 0
      %4035 = vmatpush1.bf16.msra.mxu0 0
      %4036 = vmatprep.subr.bf16.mxu0 0
      %4037 = vmatpush1.bf16.msra.mxu0 0
      %4038 = vmatprep.subr.bf16.mxu0 0
      %4039 = vmatpush1.bf16.msra.mxu0 0
      %4040 = vmatprep.subr.bf16.mxu0 0
      %4041 = vmatpush1.bf16.msra.mxu0 0
      %4042 = vmatprep.subr.bf16.mxu0 0
      %4043 = vmatpush1.bf16.msra.mxu0 0
      %4044 = vmatprep.subr.bf16.mxu0 0
      %4045 = vmatpush1.bf16.msra.mxu0 0
      %4046 = vmatprep.subr.bf16.mxu0 0
      %4047 = vmatpush1.bf16.msra.mxu0 0
      %4048 = vmatprep.subr.bf16.mxu0 %v4024
      %4049 = vmatpush1.bf16.msra.mxu0 %v4023
      %4050 = vmatprep.subr.bf16.mxu0 0
      %4051 = vmatpush2.bf16.msra.mxu0 0
      %4052 = vmatprep.subr.bf16.mxu0 0
      %4053 = vmatpush2.bf16.msra.mxu0 0
      %4054 = vmatprep.subr.bf16.mxu0 0
      %4055 = vmatpush2.bf16.msra.mxu0 0
      %4056 = vmatprep.subr.bf16.mxu0 0
      %4057 = vmatpush2.bf16.msra.mxu0 0
      %4058 = vmatprep.subr.bf16.mxu0 0
      %4059 = vmatpush2.bf16.msra.mxu0 0
      %4060 = vmatprep.subr.bf16.mxu0 0
      %4061 = vmatpush2.bf16.msra.mxu0 0
      %4062 = vmatprep.subr.bf16.mxu0 0
      %4063 = vmatpush2.bf16.msra.mxu0 0
      %4064 = vmatprep.subr.bf16.mxu0 0
      %4065 = vmatpush2.bf16.msra.mxu0 0
      %4066 = vmatprep.mubr.bf16.mxu0 0
      %4067 = vmatmul.mubr.bf16.gmra.mxu0 %v4032
      %v4068 = vpop.f32.mrf.mxu0
      %v4069 = vadd.f32 0.0, %v4068
      %v4070 = vpop.f32.mrf.mxu0
      %v4071 = vadd.f32 0.0, %v4070
      %v4072 = vpop.f32.mrf.mxu0
      %v4073 = vadd.f32 0.0, %v4072
      %v4074 = vpop.f32.mrf.mxu0
      %v4075 = vadd.f32 0.0, %v4074
      %4076 = vdwg.mxu0
      %4077 = vmatprep.subr.bf16.mxu0 0
      %4078 = vmatpush1.bf16.msra.mxu0 0
      %4079 = vmatprep.subr.bf16.mxu0 0
      %4080 = vmatpush1.bf16.msra.mxu0 0
      %4081 = vmatprep.subr.bf16.mxu0 0
      %4082 = vmatpush1.bf16.msra.mxu0 0
      %4083 = vmatprep.subr.bf16.mxu0 0
      %4084 = vmatpush1.bf16.msra.mxu0 0
      %4085 = vmatprep.subr.bf16.mxu0 0
      %4086 = vmatpush1.bf16.msra.mxu0 0
      %4087 = vmatprep.subr.bf16.mxu0 0
      %4088 = vmatpush1.bf16.msra.mxu0 0
      %4089 = vmatprep.subr.bf16.mxu0 0
      %4090 = vmatpush1.bf16.msra.mxu0 0
      %4091 = vmatprep.subr.bf16.mxu0 %v4026
      %4092 = vmatpush1.bf16.msra.mxu0 %v4025
      %4093 = vmatprep.subr.bf16.mxu0 0
      %4094 = vmatpush2.bf16.msra.mxu0 0
      %4095 = vmatprep.subr.bf16.mxu0 0
      %4096 = vmatpush2.bf16.msra.mxu0 0
      %4097 = vmatprep.subr.bf16.mxu0 0
      %4098 = vmatpush2.bf16.msra.mxu0 0
      %4099 = vmatprep.subr.bf16.mxu0 0
      %4100 = vmatpush2.bf16.msra.mxu0 0
      %4101 = vmatprep.subr.bf16.mxu0 0
      %4102 = vmatpush2.bf16.msra.mxu0 0
      %4103 = vmatprep.subr.bf16.mxu0 0
      %4104 = vmatpush2.bf16.msra.mxu0 0
      %4105 = vmatprep.subr.bf16.mxu0 0
      %4106 = vmatpush2.bf16.msra.mxu0 0
      %4107 = vmatprep.subr.bf16.mxu0 0
      %4108 = vmatpush2.bf16.msra.mxu0 0
      %4109 = vmatprep.mubr.bf16.mxu0 0
      %4110 = vmatmul.mubr.bf16.gmra.mxu0 %v4032
      %v4111 = vpop.f32.mrf.mxu0
      %v4112 = vadd.f32 0.0, %v4111
      %v4113 = vpop.f32.mrf.mxu0
      %v4114 = vadd.f32 0.0, %v4113
      %v4115 = vpop.f32.mrf.mxu0
      %v4116 = vadd.f32 0.0, %v4115
      %v4117 = vpop.f32.mrf.mxu0
      %v4118 = vadd.f32 0.0, %v4117
      %4119 = vdwg.mxu0
      %v4120 = vadd.f32 %v4003, %v4069
      %v4121 = vadd.f32 %v4004, %v4071
      %v4122 = vadd.f32 %v4005, %v4112
      %v4123 = vadd.f32 %v4006, %v4114
      %v4124 = vadd.f32 %v4007, %v4073
      %v4125 = vadd.f32 %v4008, %v4075
      %v4126 = vadd.f32 %v4009, %v4116
      %v4127 = vadd.f32 %v4010, %v4118
      %4128 = vrot.lane.b32.xlu0 %v3273, 16
      %v4129 = vpop.permute.xlu0 %4128
      %4130 = vrot.lane.b32.xlu0 %v3891, 110
      %v4131 = vpop.permute.xlu0 %4130
      %4132 = vrot.lane.b32.xlu0 %v3892, 110
      %v4133 = vpop.permute.xlu0 %4132
      %4134 = vrot.lane.b32.xlu0 %v3893, 110
      %v4135 = vpop.permute.xlu0 %4134
      %4136 = vrot.lane.b32.xlu0 %v3894, 110
      %v4137 = vpop.permute.xlu0 %4136
      %4138 = vrot.lane.b32.xlu0 %v3895, 110
      %v4139 = vpop.permute.xlu0 %4138
      %vm4140 = vcmask 900096
      %v4141 = vsel %vm4140, %v4131, %v4133
      %v4142 = vsel %vm4140, %v4133, %v4135
      %v4143 = vsel %vm4140, %v4135, %v4137
      %v4144 = vsel %vm4140, %v4137, %v4139
      %v4150 = vsel %vm416, %v4129, 0
      %4152 = vmatprep.subr.bf16.mxu0 0
      %4153 = vmatpush1.bf16.msra.mxu0 0
      %4154 = vmatprep.subr.bf16.mxu0 0
      %4155 = vmatpush1.bf16.msra.mxu0 0
      %4156 = vmatprep.subr.bf16.mxu0 0
      %4157 = vmatpush1.bf16.msra.mxu0 0
      %4158 = vmatprep.subr.bf16.mxu0 0
      %4159 = vmatpush1.bf16.msra.mxu0 0
      %4160 = vmatprep.subr.bf16.mxu0 0
      %4161 = vmatpush1.bf16.msra.mxu0 0
      %4162 = vmatprep.subr.bf16.mxu0 0
      %4163 = vmatpush1.bf16.msra.mxu0 0
      %4164 = vmatprep.subr.bf16.mxu0 0
      %4165 = vmatpush1.bf16.msra.mxu0 0
      %4166 = vmatprep.subr.bf16.mxu0 %v4142
      %4167 = vmatpush1.bf16.msra.mxu0 %v4141
      %4168 = vmatprep.subr.bf16.mxu0 0
      %4169 = vmatpush2.bf16.msra.mxu0 0
      %4170 = vmatprep.subr.bf16.mxu0 0
      %4171 = vmatpush2.bf16.msra.mxu0 0
      %4172 = vmatprep.subr.bf16.mxu0 0
      %4173 = vmatpush2.bf16.msra.mxu0 0
      %4174 = vmatprep.subr.bf16.mxu0 0
      %4175 = vmatpush2.bf16.msra.mxu0 0
      %4176 = vmatprep.subr.bf16.mxu0 0
      %4177 = vmatpush2.bf16.msra.mxu0 0
      %4178 = vmatprep.subr.bf16.mxu0 0
      %4179 = vmatpush2.bf16.msra.mxu0 0
      %4180 = vmatprep.subr.bf16.mxu0 0
      %4181 = vmatpush2.bf16.msra.mxu0 0
      %4182 = vmatprep.subr.bf16.mxu0 0
      %4183 = vmatpush2.bf16.msra.mxu0 0
      %4184 = vmatprep.mubr.bf16.mxu0 0
      %4185 = vmatmul.mubr.bf16.gmra.mxu0 %v4150
      %v4186 = vpop.f32.mrf.mxu0
      %v4187 = vadd.f32 0.0, %v4186
      %v4188 = vpop.f32.mrf.mxu0
      %v4189 = vadd.f32 0.0, %v4188
      %v4190 = vpop.f32.mrf.mxu0
      %v4191 = vadd.f32 0.0, %v4190
      %v4192 = vpop.f32.mrf.mxu0
      %v4193 = vadd.f32 0.0, %v4192
      %4194 = vdwg.mxu0
      %4195 = vmatprep.subr.bf16.mxu0 0
      %4196 = vmatpush1.bf16.msra.mxu0 0
      %4197 = vmatprep.subr.bf16.mxu0 0
      %4198 = vmatpush1.bf16.msra.mxu0 0
      %4199 = vmatprep.subr.bf16.mxu0 0
      %4200 = vmatpush1.bf16.msra.mxu0 0
      %4201 = vmatprep.subr.bf16.mxu0 0
      %4202 = vmatpush1.bf16.msra.mxu0 0
      %4203 = vmatprep.subr.bf16.mxu0 0
      %4204 = vmatpush1.bf16.msra.mxu0 0
      %4205 = vmatprep.subr.bf16.mxu0 0
      %4206 = vmatpush1.bf16.msra.mxu0 0
      %4207 = vmatprep.subr.bf16.mxu0 0
      %4208 = vmatpush1.bf16.msra.mxu0 0
      %4209 = vmatprep.subr.bf16.mxu0 %v4144
      %4210 = vmatpush1.bf16.msra.mxu0 %v4143
      %4211 = vmatprep.subr.bf16.mxu0 0
      %4212 = vmatpush2.bf16.msra.mxu0 0
      %4213 = vmatprep.subr.bf16.mxu0 0
      %4214 = vmatpush2.bf16.msra.mxu0 0
      %4215 = vmatprep.subr.bf16.mxu0 0
      %4216 = vmatpush2.bf16.msra.mxu0 0
      %4217 = vmatprep.subr.bf16.mxu0 0
      %4218 = vmatpush2.bf16.msra.mxu0 0
      %4219 = vmatprep.subr.bf16.mxu0 0
      %4220 = vmatpush2.bf16.msra.mxu0 0
      %4221 = vmatprep.subr.bf16.mxu0 0
      %4222 = vmatpush2.bf16.msra.mxu0 0
      %4223 = vmatprep.subr.bf16.mxu0 0
      %4224 = vmatpush2.bf16.msra.mxu0 0
      %4225 = vmatprep.subr.bf16.mxu0 0
      %4226 = vmatpush2.bf16.msra.mxu0 0
      %4227 = vmatprep.mubr.bf16.mxu0 0
      %4228 = vmatmul.mubr.bf16.gmra.mxu0 %v4150
      %v4229 = vpop.f32.mrf.mxu0
      %v4230 = vadd.f32 0.0, %v4229
      %v4231 = vpop.f32.mrf.mxu0
      %v4232 = vadd.f32 0.0, %v4231
      %v4233 = vpop.f32.mrf.mxu0
      %v4234 = vadd.f32 0.0, %v4233
      %v4235 = vpop.f32.mrf.mxu0
      %v4236 = vadd.f32 0.0, %v4235
      %4237 = vdwg.mxu0
      %v4238 = vadd.f32 %v4120, %v4187
      %v4239 = vadd.f32 %v4121, %v4189
      %v4240 = vadd.f32 %v4122, %v4230
      %v4241 = vadd.f32 %v4123, %v4232
      %v4242 = vadd.f32 %v4124, %v4191
      %v4243 = vadd.f32 %v4125, %v4193
      %v4244 = vadd.f32 %v4126, %v4234
      %v4245 = vadd.f32 %v4127, %v4236
      %v4248 = vunpack.c.l.b16 %v2310
      %v4249 = vunpack.c.l.b16 %v2312
      %v4250 = vpack.c.b16 %v4249, %v4248
      %4251 = vrot.lane.b32.xlu0 %v3891, 109
      %v4252 = vpop.permute.xlu0 %4251
      %4253 = vrot.lane.b32.xlu0 %v3892, 109
      %v4254 = vpop.permute.xlu0 %4253
      %4255 = vrot.lane.b32.xlu0 %v3893, 109
      %v4256 = vpop.permute.xlu0 %4255
      %4257 = vrot.lane.b32.xlu0 %v3894, 109
      %v4258 = vpop.permute.xlu0 %4257
      %4259 = vrot.lane.b32.xlu0 %v3895, 109
      %v4260 = vpop.permute.xlu0 %4259
      %vm4261 = vcmask 891904
      %v4262 = vsel %vm4261, %v4252, %v4254
      %v4263 = vsel %vm4261, %v4254, %v4256
      %v4264 = vsel %vm4261, %v4256, %v4258
      %v4265 = vsel %vm4261, %v4258, %v4260
      %v4271 = vsel %vm416, %v4250, 0
      %4273 = vmatprep.subr.bf16.mxu0 0
      %4274 = vmatpush1.bf16.msra.mxu0 0
      %4275 = vmatprep.subr.bf16.mxu0 0
      %4276 = vmatpush1.bf16.msra.mxu0 0
      %4277 = vmatprep.subr.bf16.mxu0 0
      %4278 = vmatpush1.bf16.msra.mxu0 0
      %4279 = vmatprep.subr.bf16.mxu0 0
      %4280 = vmatpush1.bf16.msra.mxu0 0
      %4281 = vmatprep.subr.bf16.mxu0 0
      %4282 = vmatpush1.bf16.msra.mxu0 0
      %4283 = vmatprep.subr.bf16.mxu0 0
      %4284 = vmatpush1.bf16.msra.mxu0 0
      %4285 = vmatprep.subr.bf16.mxu0 0
      %4286 = vmatpush1.bf16.msra.mxu0 0
      %4287 = vmatprep.subr.bf16.mxu0 %v4263
      %4288 = vmatpush1.bf16.msra.mxu0 %v4262
      %4289 = vmatprep.subr.bf16.mxu0 0
      %4290 = vmatpush2.bf16.msra.mxu0 0
      %4291 = vmatprep.subr.bf16.mxu0 0
      %4292 = vmatpush2.bf16.msra.mxu0 0
      %4293 = vmatprep.subr.bf16.mxu0 0
      %4294 = vmatpush2.bf16.msra.mxu0 0
      %4295 = vmatprep.subr.bf16.mxu0 0
      %4296 = vmatpush2.bf16.msra.mxu0 0
      %4297 = vmatprep.subr.bf16.mxu0 0
      %4298 = vmatpush2.bf16.msra.mxu0 0
      %4299 = vmatprep.subr.bf16.mxu0 0
      %4300 = vmatpush2.bf16.msra.mxu0 0
      %4301 = vmatprep.subr.bf16.mxu0 0
      %4302 = vmatpush2.bf16.msra.mxu0 0
      %4303 = vmatprep.subr.bf16.mxu0 0
      %4304 = vmatpush2.bf16.msra.mxu0 0
      %4305 = vmatprep.mubr.bf16.mxu0 0
      %4306 = vmatmul.mubr.bf16.gmra.mxu0 %v4271
      %v4307 = vpop.f32.mrf.mxu0
      %v4308 = vadd.f32 0.0, %v4307
      %v4309 = vpop.f32.mrf.mxu0
      %v4310 = vadd.f32 0.0, %v4309
      %v4311 = vpop.f32.mrf.mxu0
      %v4312 = vadd.f32 0.0, %v4311
      %v4313 = vpop.f32.mrf.mxu0
      %v4314 = vadd.f32 0.0, %v4313
      %4315 = vdwg.mxu0
      %4316 = vmatprep.subr.bf16.mxu0 0
      %4317 = vmatpush1.bf16.msra.mxu0 0
      %4318 = vmatprep.subr.bf16.mxu0 0
      %4319 = vmatpush1.bf16.msra.mxu0 0
      %4320 = vmatprep.subr.bf16.mxu0 0
      %4321 = vmatpush1.bf16.msra.mxu0 0
      %4322 = vmatprep.subr.bf16.mxu0 0
      %4323 = vmatpush1.bf16.msra.mxu0 0
      %4324 = vmatprep.subr.bf16.mxu0 0
      %4325 = vmatpush1.bf16.msra.mxu0 0
      %4326 = vmatprep.subr.bf16.mxu0 0
      %4327 = vmatpush1.bf16.msra.mxu0 0
      %4328 = vmatprep.subr.bf16.mxu0 0
      %4329 = vmatpush1.bf16.msra.mxu0 0
      %4330 = vmatprep.subr.bf16.mxu0 %v4265
      %4331 = vmatpush1.bf16.msra.mxu0 %v4264
      %4332 = vmatprep.subr.bf16.mxu0 0
      %4333 = vmatpush2.bf16.msra.mxu0 0
      %4334 = vmatprep.subr.bf16.mxu0 0
      %4335 = vmatpush2.bf16.msra.mxu0 0
      %4336 = vmatprep.subr.bf16.mxu0 0
      %4337 = vmatpush2.bf16.msra.mxu0 0
      %4338 = vmatprep.subr.bf16.mxu0 0
      %4339 = vmatpush2.bf16.msra.mxu0 0
      %4340 = vmatprep.subr.bf16.mxu0 0
      %4341 = vmatpush2.bf16.msra.mxu0 0
      %4342 = vmatprep.subr.bf16.mxu0 0
      %4343 = vmatpush2.bf16.msra.mxu0 0
      %4344 = vmatprep.subr.bf16.mxu0 0
      %4345 = vmatpush2.bf16.msra.mxu0 0
      %4346 = vmatprep.subr.bf16.mxu0 0
      %4347 = vmatpush2.bf16.msra.mxu0 0
      %4348 = vmatprep.mubr.bf16.mxu0 0
      %4349 = vmatmul.mubr.bf16.gmra.mxu0 %v4271
      %v4350 = vpop.f32.mrf.mxu0
      %v4351 = vadd.f32 0.0, %v4350
      %v4352 = vpop.f32.mrf.mxu0
      %v4353 = vadd.f32 0.0, %v4352
      %v4354 = vpop.f32.mrf.mxu0
      %v4355 = vadd.f32 0.0, %v4354
      %v4356 = vpop.f32.mrf.mxu0
      %v4357 = vadd.f32 0.0, %v4356
      %4358 = vdwg.mxu0
      %v4359 = vadd.f32 %v4238, %v4308
      %v4360 = vadd.f32 %v4239, %v4310
      %v4361 = vadd.f32 %v4240, %v4351
      %v4362 = vadd.f32 %v4241, %v4353
      %v4363 = vadd.f32 %v4242, %v4312
      %v4364 = vadd.f32 %v4243, %v4314
      %v4365 = vadd.f32 %v4244, %v4355
      %v4366 = vadd.f32 %v4245, %v4357
      %4367 = vrot.lane.b32.xlu0 %v4250, 112
      %v4368 = vpop.permute.xlu0 %4367
      %4369 = vrot.lane.b32.xlu0 %v3891, 108
      %v4370 = vpop.permute.xlu0 %4369
      %4371 = vrot.lane.b32.xlu0 %v3892, 108
      %v4372 = vpop.permute.xlu0 %4371
      %4373 = vrot.lane.b32.xlu0 %v3893, 108
      %v4374 = vpop.permute.xlu0 %4373
      %4375 = vrot.lane.b32.xlu0 %v3894, 108
      %v4376 = vpop.permute.xlu0 %4375
      %4377 = vrot.lane.b32.xlu0 %v3895, 108
      %v4378 = vpop.permute.xlu0 %4377
      %v4379 = vsel %vm1034, %v4370, %v4372
      %v4380 = vsel %vm1034, %v4372, %v4374
      %v4381 = vsel %vm1034, %v4374, %v4376
      %v4382 = vsel %vm1034, %v4376, %v4378
      %v4388 = vsel %vm416, %v4368, 0
      %4390 = vmatprep.subr.bf16.mxu0 0
      %4391 = vmatpush1.bf16.msra.mxu0 0
      %4392 = vmatprep.subr.bf16.mxu0 0
      %4393 = vmatpush1.bf16.msra.mxu0 0
      %4394 = vmatprep.subr.bf16.mxu0 0
      %4395 = vmatpush1.bf16.msra.mxu0 0
      %4396 = vmatprep.subr.bf16.mxu0 0
      %4397 = vmatpush1.bf16.msra.mxu0 0
      %4398 = vmatprep.subr.bf16.mxu0 0
      %4399 = vmatpush1.bf16.msra.mxu0 0
      %4400 = vmatprep.subr.bf16.mxu0 0
      %4401 = vmatpush1.bf16.msra.mxu0 0
      %4402 = vmatprep.subr.bf16.mxu0 0
      %4403 = vmatpush1.bf16.msra.mxu0 0
      %4404 = vmatprep.subr.bf16.mxu0 %v4380
      %4405 = vmatpush1.bf16.msra.mxu0 %v4379
      %4406 = vmatprep.subr.bf16.mxu0 0
      %4407 = vmatpush2.bf16.msra.mxu0 0
      %4408 = vmatprep.subr.bf16.mxu0 0
      %4409 = vmatpush2.bf16.msra.mxu0 0
      %4410 = vmatprep.subr.bf16.mxu0 0
      %4411 = vmatpush2.bf16.msra.mxu0 0
      %4412 = vmatprep.subr.bf16.mxu0 0
      %4413 = vmatpush2.bf16.msra.mxu0 0
      %4414 = vmatprep.subr.bf16.mxu0 0
      %4415 = vmatpush2.bf16.msra.mxu0 0
      %4416 = vmatprep.subr.bf16.mxu0 0
      %4417 = vmatpush2.bf16.msra.mxu0 0
      %4418 = vmatprep.subr.bf16.mxu0 0
      %4419 = vmatpush2.bf16.msra.mxu0 0
      %4420 = vmatprep.subr.bf16.mxu0 0
      %4421 = vmatpush2.bf16.msra.mxu0 0
      %4422 = vmatprep.mubr.bf16.mxu0 0
      %4423 = vmatmul.mubr.bf16.gmra.mxu0 %v4388
      %v4424 = vpop.f32.mrf.mxu0
      %v4425 = vadd.f32 0.0, %v4424
      %v4426 = vpop.f32.mrf.mxu0
      %v4427 = vadd.f32 0.0, %v4426
      %v4428 = vpop.f32.mrf.mxu0
      %v4429 = vadd.f32 0.0, %v4428
      %v4430 = vpop.f32.mrf.mxu0
      %v4431 = vadd.f32 0.0, %v4430
      %4432 = vdwg.mxu0
      %4433 = vmatprep.subr.bf16.mxu0 0
      %4434 = vmatpush1.bf16.msra.mxu0 0
      %4435 = vmatprep.subr.bf16.mxu0 0
      %4436 = vmatpush1.bf16.msra.mxu0 0
      %4437 = vmatprep.subr.bf16.mxu0 0
      %4438 = vmatpush1.bf16.msra.mxu0 0
      %4439 = vmatprep.subr.bf16.mxu0 0
      %4440 = vmatpush1.bf16.msra.mxu0 0
      %4441 = vmatprep.subr.bf16.mxu0 0
      %4442 = vmatpush1.bf16.msra.mxu0 0
      %4443 = vmatprep.subr.bf16.mxu0 0
      %4444 = vmatpush1.bf16.msra.mxu0 0
      %4445 = vmatprep.subr.bf16.mxu0 0
      %4446 = vmatpush1.bf16.msra.mxu0 0
      %4447 = vmatprep.subr.bf16.mxu0 %v4382
      %4448 = vmatpush1.bf16.msra.mxu0 %v4381
      %4449 = vmatprep.subr.bf16.mxu0 0
      %4450 = vmatpush2.bf16.msra.mxu0 0
      %4451 = vmatprep.subr.bf16.mxu0 0
      %4452 = vmatpush2.bf16.msra.mxu0 0
      %4453 = vmatprep.subr.bf16.mxu0 0
      %4454 = vmatpush2.bf16.msra.mxu0 0
      %4455 = vmatprep.subr.bf16.mxu0 0
      %4456 = vmatpush2.bf16.msra.mxu0 0
      %4457 = vmatprep.subr.bf16.mxu0 0
      %4458 = vmatpush2.bf16.msra.mxu0 0
      %4459 = vmatprep.subr.bf16.mxu0 0
      %4460 = vmatpush2.bf16.msra.mxu0 0
      %4461 = vmatprep.subr.bf16.mxu0 0
      %4462 = vmatpush2.bf16.msra.mxu0 0
      %4463 = vmatprep.subr.bf16.mxu0 0
      %4464 = vmatpush2.bf16.msra.mxu0 0
      %4465 = vmatprep.mubr.bf16.mxu0 0
      %4466 = vmatmul.mubr.bf16.gmra.mxu0 %v4388
      %v4467 = vpop.f32.mrf.mxu0
      %v4468 = vadd.f32 0.0, %v4467
      %v4469 = vpop.f32.mrf.mxu0
      %v4470 = vadd.f32 0.0, %v4469
      %v4471 = vpop.f32.mrf.mxu0
      %v4472 = vadd.f32 0.0, %v4471
      %v4473 = vpop.f32.mrf.mxu0
      %v4474 = vadd.f32 0.0, %v4473
      %4475 = vdwg.mxu0
      %v4476 = vadd.f32 %v4359, %v4425
      %v4477 = vadd.f32 %v4360, %v4427
      %v4478 = vadd.f32 %v4361, %v4468
      %v4479 = vadd.f32 %v4362, %v4470
      %v4480 = vadd.f32 %v4363, %v4429
      %v4481 = vadd.f32 %v4364, %v4431
      %v4482 = vadd.f32 %v4365, %v4472
      %v4483 = vadd.f32 %v4366, %v4474
      %4484 = vrot.lane.b32.xlu0 %v4250, 96
      %v4485 = vpop.permute.xlu0 %4484
      %4486 = vrot.lane.b32.xlu0 %v3891, 107
      %v4487 = vpop.permute.xlu0 %4486
      %4488 = vrot.lane.b32.xlu0 %v3892, 107
      %v4489 = vpop.permute.xlu0 %4488
      %4490 = vrot.lane.b32.xlu0 %v3893, 107
      %v4491 = vpop.permute.xlu0 %4490
      %4492 = vrot.lane.b32.xlu0 %v3894, 107
      %v4493 = vpop.permute.xlu0 %4492
      %4494 = vrot.lane.b32.xlu0 %v3895, 107
      %v4495 = vpop.permute.xlu0 %4494
      %v4496 = vsel %vm1269, %v4487, %v4489
      %v4497 = vsel %vm1269, %v4489, %v4491
      %v4498 = vsel %vm1269, %v4491, %v4493
      %v4499 = vsel %vm1269, %v4493, %v4495
      %v4505 = vsel %vm416, %v4485, 0
      %4507 = vmatprep.subr.bf16.mxu0 0
      %4508 = vmatpush1.bf16.msra.mxu0 0
      %4509 = vmatprep.subr.bf16.mxu0 0
      %4510 = vmatpush1.bf16.msra.mxu0 0
      %4511 = vmatprep.subr.bf16.mxu0 0
      %4512 = vmatpush1.bf16.msra.mxu0 0
      %4513 = vmatprep.subr.bf16.mxu0 0
      %4514 = vmatpush1.bf16.msra.mxu0 0
      %4515 = vmatprep.subr.bf16.mxu0 0
      %4516 = vmatpush1.bf16.msra.mxu0 0
      %4517 = vmatprep.subr.bf16.mxu0 0
      %4518 = vmatpush1.bf16.msra.mxu0 0
      %4519 = vmatprep.subr.bf16.mxu0 0
      %4520 = vmatpush1.bf16.msra.mxu0 0
      %4521 = vmatprep.subr.bf16.mxu0 %v4497
      %4522 = vmatpush1.bf16.msra.mxu0 %v4496
      %4523 = vmatprep.subr.bf16.mxu0 0
      %4524 = vmatpush2.bf16.msra.mxu0 0
      %4525 = vmatprep.subr.bf16.mxu0 0
      %4526 = vmatpush2.bf16.msra.mxu0 0
      %4527 = vmatprep.subr.bf16.mxu0 0
      %4528 = vmatpush2.bf16.msra.mxu0 0
      %4529 = vmatprep.subr.bf16.mxu0 0
      %4530 = vmatpush2.bf16.msra.mxu0 0
      %4531 = vmatprep.subr.bf16.mxu0 0
      %4532 = vmatpush2.bf16.msra.mxu0 0
      %4533 = vmatprep.subr.bf16.mxu0 0
      %4534 = vmatpush2.bf16.msra.mxu0 0
      %4535 = vmatprep.subr.bf16.mxu0 0
      %4536 = vmatpush2.bf16.msra.mxu0 0
      %4537 = vmatprep.subr.bf16.mxu0 0
      %4538 = vmatpush2.bf16.msra.mxu0 0
      %4539 = vmatprep.mubr.bf16.mxu0 0
      %4540 = vmatmul.mubr.bf16.gmra.mxu0 %v4505
      %v4541 = vpop.f32.mrf.mxu0
      %v4542 = vadd.f32 0.0, %v4541
      %v4543 = vpop.f32.mrf.mxu0
      %v4544 = vadd.f32 0.0, %v4543
      %v4545 = vpop.f32.mrf.mxu0
      %v4546 = vadd.f32 0.0, %v4545
      %v4547 = vpop.f32.mrf.mxu0
      %v4548 = vadd.f32 0.0, %v4547
      %4549 = vdwg.mxu0
      %4550 = vmatprep.subr.bf16.mxu0 0
      %4551 = vmatpush1.bf16.msra.mxu0 0
      %4552 = vmatprep.subr.bf16.mxu0 0
      %4553 = vmatpush1.bf16.msra.mxu0 0
      %4554 = vmatprep.subr.bf16.mxu0 0
      %4555 = vmatpush1.bf16.msra.mxu0 0
      %4556 = vmatprep.subr.bf16.mxu0 0
      %4557 = vmatpush1.bf16.msra.mxu0 0
      %4558 = vmatprep.subr.bf16.mxu0 0
      %4559 = vmatpush1.bf16.msra.mxu0 0
      %4560 = vmatprep.subr.bf16.mxu0 0
      %4561 = vmatpush1.bf16.msra.mxu0 0
      %4562 = vmatprep.subr.bf16.mxu0 0
      %4563 = vmatpush1.bf16.msra.mxu0 0
      %4564 = vmatprep.subr.bf16.mxu0 %v4499
      %4565 = vmatpush1.bf16.msra.mxu0 %v4498
      %4566 = vmatprep.subr.bf16.mxu0 0
      %4567 = vmatpush2.bf16.msra.mxu0 0
      %4568 = vmatprep.subr.bf16.mxu0 0
      %4569 = vmatpush2.bf16.msra.mxu0 0
      %4570 = vmatprep.subr.bf16.mxu0 0
      %4571 = vmatpush2.bf16.msra.mxu0 0
      %4572 = vmatprep.subr.bf16.mxu0 0
      %4573 = vmatpush2.bf16.msra.mxu0 0
      %4574 = vmatprep.subr.bf16.mxu0 0
      %4575 = vmatpush2.bf16.msra.mxu0 0
      %4576 = vmatprep.subr.bf16.mxu0 0
      %4577 = vmatpush2.bf16.msra.mxu0 0
      %4578 = vmatprep.subr.bf16.mxu0 0
      %4579 = vmatpush2.bf16.msra.mxu0 0
      %4580 = vmatprep.subr.bf16.mxu0 0
      %4581 = vmatpush2.bf16.msra.mxu0 0
      %4582 = vmatprep.mubr.bf16.mxu0 0
      %4583 = vmatmul.mubr.bf16.gmra.mxu0 %v4505
      %v4584 = vpop.f32.mrf.mxu0
      %v4585 = vadd.f32 0.0, %v4584
      %v4586 = vpop.f32.mrf.mxu0
      %v4587 = vadd.f32 0.0, %v4586
      %v4588 = vpop.f32.mrf.mxu0
      %v4589 = vadd.f32 0.0, %v4588
      %v4590 = vpop.f32.mrf.mxu0
      %v4591 = vadd.f32 0.0, %v4590
      %4592 = vdwg.mxu0
      %v4593 = vadd.f32 %v4476, %v4542
      %v4594 = vadd.f32 %v4477, %v4544
      %v4595 = vadd.f32 %v4478, %v4585
      %v4596 = vadd.f32 %v4479, %v4587
      %v4597 = vadd.f32 %v4480, %v4546
      %v4598 = vadd.f32 %v4481, %v4548
      %v4599 = vadd.f32 %v4482, %v4589
      %v4600 = vadd.f32 %v4483, %v4591
      %4601 = vrot.lane.b32.xlu0 %v4250, 80
      %v4602 = vpop.permute.xlu0 %4601
      %4603 = vrot.lane.b32.xlu0 %v3891, 106
      %v4604 = vpop.permute.xlu0 %4603
      %4605 = vrot.lane.b32.xlu0 %v3892, 106
      %v4606 = vpop.permute.xlu0 %4605
      %4607 = vrot.lane.b32.xlu0 %v3893, 106
      %v4608 = vpop.permute.xlu0 %4607
      %4609 = vrot.lane.b32.xlu0 %v3894, 106
      %v4610 = vpop.permute.xlu0 %4609
      %4611 = vrot.lane.b32.xlu0 %v3895, 106
      %v4612 = vpop.permute.xlu0 %4611
      %v4613 = vsel %vm1505, %v4604, %v4606
      %v4614 = vsel %vm1505, %v4606, %v4608
      %v4615 = vsel %vm1505, %v4608, %v4610
      %v4616 = vsel %vm1505, %v4610, %v4612
      %v4622 = vsel %vm416, %v4602, 0
      %4624 = vmatprep.subr.bf16.mxu0 0
      %4625 = vmatpush1.bf16.msra.mxu0 0
      %4626 = vmatprep.subr.bf16.mxu0 0
      %4627 = vmatpush1.bf16.msra.mxu0 0
      %4628 = vmatprep.subr.bf16.mxu0 0
      %4629 = vmatpush1.bf16.msra.mxu0 0
      %4630 = vmatprep.subr.bf16.mxu0 0
      %4631 = vmatpush1.bf16.msra.mxu0 0
      %4632 = vmatprep.subr.bf16.mxu0 0
      %4633 = vmatpush1.bf16.msra.mxu0 0
      %4634 = vmatprep.subr.bf16.mxu0 0
      %4635 = vmatpush1.bf16.msra.mxu0 0
      %4636 = vmatprep.subr.bf16.mxu0 0
      %4637 = vmatpush1.bf16.msra.mxu0 0
      %4638 = vmatprep.subr.bf16.mxu0 %v4614
      %4639 = vmatpush1.bf16.msra.mxu0 %v4613
      %4640 = vmatprep.subr.bf16.mxu0 0
      %4641 = vmatpush2.bf16.msra.mxu0 0
      %4642 = vmatprep.subr.bf16.mxu0 0
      %4643 = vmatpush2.bf16.msra.mxu0 0
      %4644 = vmatprep.subr.bf16.mxu0 0
      %4645 = vmatpush2.bf16.msra.mxu0 0
      %4646 = vmatprep.subr.bf16.mxu0 0
      %4647 = vmatpush2.bf16.msra.mxu0 0
      %4648 = vmatprep.subr.bf16.mxu0 0
      %4649 = vmatpush2.bf16.msra.mxu0 0
      %4650 = vmatprep.subr.bf16.mxu0 0
      %4651 = vmatpush2.bf16.msra.mxu0 0
      %4652 = vmatprep.subr.bf16.mxu0 0
      %4653 = vmatpush2.bf16.msra.mxu0 0
      %4654 = vmatprep.subr.bf16.mxu0 0
      %4655 = vmatpush2.bf16.msra.mxu0 0
      %4656 = vmatprep.mubr.bf16.mxu0 0
      %4657 = vmatmul.mubr.bf16.gmra.mxu0 %v4622
      %v4658 = vpop.f32.mrf.mxu0
      %v4659 = vadd.f32 0.0, %v4658
      %v4660 = vpop.f32.mrf.mxu0
      %v4661 = vadd.f32 0.0, %v4660
      %v4662 = vpop.f32.mrf.mxu0
      %v4663 = vadd.f32 0.0, %v4662
      %v4664 = vpop.f32.mrf.mxu0
      %v4665 = vadd.f32 0.0, %v4664
      %4666 = vdwg.mxu0
      %4667 = vmatprep.subr.bf16.mxu0 0
      %4668 = vmatpush1.bf16.msra.mxu0 0
      %4669 = vmatprep.subr.bf16.mxu0 0
      %4670 = vmatpush1.bf16.msra.mxu0 0
      %4671 = vmatprep.subr.bf16.mxu0 0
      %4672 = vmatpush1.bf16.msra.mxu0 0
      %4673 = vmatprep.subr.bf16.mxu0 0
      %4674 = vmatpush1.bf16.msra.mxu0 0
      %4675 = vmatprep.subr.bf16.mxu0 0
      %4676 = vmatpush1.bf16.msra.mxu0 0
      %4677 = vmatprep.subr.bf16.mxu0 0
      %4678 = vmatpush1.bf16.msra.mxu0 0
      %4679 = vmatprep.subr.bf16.mxu0 0
      %4680 = vmatpush1.bf16.msra.mxu0 0
      %4681 = vmatprep.subr.bf16.mxu0 %v4616
      %4682 = vmatpush1.bf16.msra.mxu0 %v4615
      %4683 = vmatprep.subr.bf16.mxu0 0
      %4684 = vmatpush2.bf16.msra.mxu0 0
      %4685 = vmatprep.subr.bf16.mxu0 0
      %4686 = vmatpush2.bf16.msra.mxu0 0
      %4687 = vmatprep.subr.bf16.mxu0 0
      %4688 = vmatpush2.bf16.msra.mxu0 0
      %4689 = vmatprep.subr.bf16.mxu0 0
      %4690 = vmatpush2.bf16.msra.mxu0 0
      %4691 = vmatprep.subr.bf16.mxu0 0
      %4692 = vmatpush2.bf16.msra.mxu0 0
      %4693 = vmatprep.subr.bf16.mxu0 0
      %4694 = vmatpush2.bf16.msra.mxu0 0
      %4695 = vmatprep.subr.bf16.mxu0 0
      %4696 = vmatpush2.bf16.msra.mxu0 0
      %4697 = vmatprep.subr.bf16.mxu0 0
      %4698 = vmatpush2.bf16.msra.mxu0 0
      %4699 = vmatprep.mubr.bf16.mxu0 0
      %4700 = vmatmul.mubr.bf16.gmra.mxu0 %v4622
      %v4701 = vpop.f32.mrf.mxu0
      %v4702 = vadd.f32 0.0, %v4701
      %v4703 = vpop.f32.mrf.mxu0
      %v4704 = vadd.f32 0.0, %v4703
      %v4705 = vpop.f32.mrf.mxu0
      %v4706 = vadd.f32 0.0, %v4705
      %v4707 = vpop.f32.mrf.mxu0
      %v4708 = vadd.f32 0.0, %v4707
      %4709 = vdwg.mxu0
      %v4710 = vadd.f32 %v4593, %v4659
      %v4711 = vadd.f32 %v4594, %v4661
      %v4712 = vadd.f32 %v4595, %v4702
      %v4713 = vadd.f32 %v4596, %v4704
      %v4714 = vadd.f32 %v4597, %v4663
      %v4715 = vadd.f32 %v4598, %v4665
      %v4716 = vadd.f32 %v4599, %v4706
      %v4717 = vadd.f32 %v4600, %v4708
      %4718 = vrot.lane.b32.xlu0 %v4250, 64
      %v4719 = vpop.permute.xlu0 %4718
      %4720 = vrot.lane.b32.xlu0 %v3891, 90
      %v4721 = vpop.permute.xlu0 %4720
      %4722 = vrot.lane.b32.xlu0 %v3892, 90
      %v4723 = vpop.permute.xlu0 %4722
      %4724 = vrot.lane.b32.xlu0 %v3893, 90
      %v4725 = vpop.permute.xlu0 %4724
      %4726 = vrot.lane.b32.xlu0 %v3894, 90
      %v4727 = vpop.permute.xlu0 %4726
      %4728 = vrot.lane.b32.xlu0 %v3895, 90
      %v4729 = vpop.permute.xlu0 %4728
      %vm4730 = vcmask 736256
      %v4731 = vsel %vm4730, %v4721, %v4723
      %v4732 = vsel %vm4730, %v4723, %v4725
      %v4733 = vsel %vm4730, %v4725, %v4727
      %v4734 = vsel %vm4730, %v4727, %v4729
      %v4740 = vsel %vm416, %v4719, 0
      %4742 = vmatprep.subr.bf16.mxu0 0
      %4743 = vmatpush1.bf16.msra.mxu0 0
      %4744 = vmatprep.subr.bf16.mxu0 0
      %4745 = vmatpush1.bf16.msra.mxu0 0
      %4746 = vmatprep.subr.bf16.mxu0 0
      %4747 = vmatpush1.bf16.msra.mxu0 0
      %4748 = vmatprep.subr.bf16.mxu0 0
      %4749 = vmatpush1.bf16.msra.mxu0 0
      %4750 = vmatprep.subr.bf16.mxu0 0
      %4751 = vmatpush1.bf16.msra.mxu0 0
      %4752 = vmatprep.subr.bf16.mxu0 0
      %4753 = vmatpush1.bf16.msra.mxu0 0
      %4754 = vmatprep.subr.bf16.mxu0 0
      %4755 = vmatpush1.bf16.msra.mxu0 0
      %4756 = vmatprep.subr.bf16.mxu0 %v4732
      %4757 = vmatpush1.bf16.msra.mxu0 %v4731
      %4758 = vmatprep.subr.bf16.mxu0 0
      %4759 = vmatpush2.bf16.msra.mxu0 0
      %4760 = vmatprep.subr.bf16.mxu0 0
      %4761 = vmatpush2.bf16.msra.mxu0 0
      %4762 = vmatprep.subr.bf16.mxu0 0
      %4763 = vmatpush2.bf16.msra.mxu0 0
      %4764 = vmatprep.subr.bf16.mxu0 0
      %4765 = vmatpush2.bf16.msra.mxu0 0
      %4766 = vmatprep.subr.bf16.mxu0 0
      %4767 = vmatpush2.bf16.msra.mxu0 0
      %4768 = vmatprep.subr.bf16.mxu0 0
      %4769 = vmatpush2.bf16.msra.mxu0 0
      %4770 = vmatprep.subr.bf16.mxu0 0
      %4771 = vmatpush2.bf16.msra.mxu0 0
      %4772 = vmatprep.subr.bf16.mxu0 0
      %4773 = vmatpush2.bf16.msra.mxu0 0
      %4774 = vmatprep.mubr.bf16.mxu0 0
      %4775 = vmatmul.mubr.bf16.gmra.mxu0 %v4740
      %v4776 = vpop.f32.mrf.mxu0
      %v4777 = vadd.f32 0.0, %v4776
      %v4778 = vpop.f32.mrf.mxu0
      %v4779 = vadd.f32 0.0, %v4778
      %v4780 = vpop.f32.mrf.mxu0
      %v4781 = vadd.f32 0.0, %v4780
      %v4782 = vpop.f32.mrf.mxu0
      %v4783 = vadd.f32 0.0, %v4782
      %4784 = vdwg.mxu0
      %4785 = vmatprep.subr.bf16.mxu0 0
      %4786 = vmatpush1.bf16.msra.mxu0 0
      %4787 = vmatprep.subr.bf16.mxu0 0
      %4788 = vmatpush1.bf16.msra.mxu0 0
      %4789 = vmatprep.subr.bf16.mxu0 0
      %4790 = vmatpush1.bf16.msra.mxu0 0
      %4791 = vmatprep.subr.bf16.mxu0 0
      %4792 = vmatpush1.bf16.msra.mxu0 0
      %4793 = vmatprep.subr.bf16.mxu0 0
      %4794 = vmatpush1.bf16.msra.mxu0 0
      %4795 = vmatprep.subr.bf16.mxu0 0
      %4796 = vmatpush1.bf16.msra.mxu0 0
      %4797 = vmatprep.subr.bf16.mxu0 0
      %4798 = vmatpush1.bf16.msra.mxu0 0
      %4799 = vmatprep.subr.bf16.mxu0 %v4734
      %4800 = vmatpush1.bf16.msra.mxu0 %v4733
      %4801 = vmatprep.subr.bf16.mxu0 0
      %4802 = vmatpush2.bf16.msra.mxu0 0
      %4803 = vmatprep.subr.bf16.mxu0 0
      %4804 = vmatpush2.bf16.msra.mxu0 0
      %4805 = vmatprep.subr.bf16.mxu0 0
      %4806 = vmatpush2.bf16.msra.mxu0 0
      %4807 = vmatprep.subr.bf16.mxu0 0
      %4808 = vmatpush2.bf16.msra.mxu0 0
      %4809 = vmatprep.subr.bf16.mxu0 0
      %4810 = vmatpush2.bf16.msra.mxu0 0
      %4811 = vmatprep.subr.bf16.mxu0 0
      %4812 = vmatpush2.bf16.msra.mxu0 0
      %4813 = vmatprep.subr.bf16.mxu0 0
      %4814 = vmatpush2.bf16.msra.mxu0 0
      %4815 = vmatprep.subr.bf16.mxu0 0
      %4816 = vmatpush2.bf16.msra.mxu0 0
      %4817 = vmatprep.mubr.bf16.mxu0 0
      %4818 = vmatmul.mubr.bf16.gmra.mxu0 %v4740
      %v4819 = vpop.f32.mrf.mxu0
      %v4820 = vadd.f32 0.0, %v4819
      %v4821 = vpop.f32.mrf.mxu0
      %v4822 = vadd.f32 0.0, %v4821
      %v4823 = vpop.f32.mrf.mxu0
      %v4824 = vadd.f32 0.0, %v4823
      %v4825 = vpop.f32.mrf.mxu0
      %v4826 = vadd.f32 0.0, %v4825
      %4827 = vdwg.mxu0
      %v4828 = vadd.f32 %v4710, %v4777
      %v4829 = vadd.f32 %v4711, %v4779
      %v4830 = vadd.f32 %v4712, %v4820
      %v4831 = vadd.f32 %v4713, %v4822
      %v4832 = vadd.f32 %v4714, %v4781
      %v4833 = vadd.f32 %v4715, %v4783
      %v4834 = vadd.f32 %v4716, %v4824
      %v4835 = vadd.f32 %v4717, %v4826
      %4836 = vrot.lane.b32.xlu0 %v4250, 48
      %v4837 = vpop.permute.xlu0 %4836
      %4838 = vrot.lane.b32.xlu0 %v3891, 89
      %v4839 = vpop.permute.xlu0 %4838
      %4840 = vrot.lane.b32.xlu0 %v3892, 89
      %v4841 = vpop.permute.xlu0 %4840
      %4842 = vrot.lane.b32.xlu0 %v3893, 89
      %v4843 = vpop.permute.xlu0 %4842
      %4844 = vrot.lane.b32.xlu0 %v3894, 89
      %v4845 = vpop.permute.xlu0 %4844
      %4846 = vrot.lane.b32.xlu0 %v3895, 89
      %v4847 = vpop.permute.xlu0 %4846
      %vm4848 = vcmask 728064
      %v4849 = vsel %vm4848, %v4839, %v4841
      %v4850 = vsel %vm4848, %v4841, %v4843
      %v4851 = vsel %vm4848, %v4843, %v4845
      %v4852 = vsel %vm4848, %v4845, %v4847
      %v4858 = vsel %vm416, %v4837, 0
      %4860 = vmatprep.subr.bf16.mxu0 0
      %4861 = vmatpush1.bf16.msra.mxu0 0
      %4862 = vmatprep.subr.bf16.mxu0 0
      %4863 = vmatpush1.bf16.msra.mxu0 0
      %4864 = vmatprep.subr.bf16.mxu0 0
      %4865 = vmatpush1.bf16.msra.mxu0 0
      %4866 = vmatprep.subr.bf16.mxu0 0
      %4867 = vmatpush1.bf16.msra.mxu0 0
      %4868 = vmatprep.subr.bf16.mxu0 0
      %4869 = vmatpush1.bf16.msra.mxu0 0
      %4870 = vmatprep.subr.bf16.mxu0 0
      %4871 = vmatpush1.bf16.msra.mxu0 0
      %4872 = vmatprep.subr.bf16.mxu0 0
      %4873 = vmatpush1.bf16.msra.mxu0 0
      %4874 = vmatprep.subr.bf16.mxu0 %v4850
      %4875 = vmatpush1.bf16.msra.mxu0 %v4849
      %4876 = vmatprep.subr.bf16.mxu0 0
      %4877 = vmatpush2.bf16.msra.mxu0 0
      %4878 = vmatprep.subr.bf16.mxu0 0
      %4879 = vmatpush2.bf16.msra.mxu0 0
      %4880 = vmatprep.subr.bf16.mxu0 0
      %4881 = vmatpush2.bf16.msra.mxu0 0
      %4882 = vmatprep.subr.bf16.mxu0 0
      %4883 = vmatpush2.bf16.msra.mxu0 0
      %4884 = vmatprep.subr.bf16.mxu0 0
      %4885 = vmatpush2.bf16.msra.mxu0 0
      %4886 = vmatprep.subr.bf16.mxu0 0
      %4887 = vmatpush2.bf16.msra.mxu0 0
      %4888 = vmatprep.subr.bf16.mxu0 0
      %4889 = vmatpush2.bf16.msra.mxu0 0
      %4890 = vmatprep.subr.bf16.mxu0 0
      %4891 = vmatpush2.bf16.msra.mxu0 0
      %4892 = vmatprep.mubr.bf16.mxu0 0
      %4893 = vmatmul.mubr.bf16.gmra.mxu0 %v4858
      %v4894 = vpop.f32.mrf.mxu0
      %v4895 = vadd.f32 0.0, %v4894
      %v4896 = vpop.f32.mrf.mxu0
      %v4897 = vadd.f32 0.0, %v4896
      %v4898 = vpop.f32.mrf.mxu0
      %v4899 = vadd.f32 0.0, %v4898
      %v4900 = vpop.f32.mrf.mxu0
      %v4901 = vadd.f32 0.0, %v4900
      %4902 = vdwg.mxu0
      %4903 = vmatprep.subr.bf16.mxu0 0
      %4904 = vmatpush1.bf16.msra.mxu0 0
      %4905 = vmatprep.subr.bf16.mxu0 0
      %4906 = vmatpush1.bf16.msra.mxu0 0
      %4907 = vmatprep.subr.bf16.mxu0 0
      %4908 = vmatpush1.bf16.msra.mxu0 0
      %4909 = vmatprep.subr.bf16.mxu0 0
      %4910 = vmatpush1.bf16.msra.mxu0 0
      %4911 = vmatprep.subr.bf16.mxu0 0
      %4912 = vmatpush1.bf16.msra.mxu0 0
      %4913 = vmatprep.subr.bf16.mxu0 0
      %4914 = vmatpush1.bf16.msra.mxu0 0
      %4915 = vmatprep.subr.bf16.mxu0 0
      %4916 = vmatpush1.bf16.msra.mxu0 0
      %4917 = vmatprep.subr.bf16.mxu0 %v4852
      %4918 = vmatpush1.bf16.msra.mxu0 %v4851
      %4919 = vmatprep.subr.bf16.mxu0 0
      %4920 = vmatpush2.bf16.msra.mxu0 0
      %4921 = vmatprep.subr.bf16.mxu0 0
      %4922 = vmatpush2.bf16.msra.mxu0 0
      %4923 = vmatprep.subr.bf16.mxu0 0
      %4924 = vmatpush2.bf16.msra.mxu0 0
      %4925 = vmatprep.subr.bf16.mxu0 0
      %4926 = vmatpush2.bf16.msra.mxu0 0
      %4927 = vmatprep.subr.bf16.mxu0 0
      %4928 = vmatpush2.bf16.msra.mxu0 0
      %4929 = vmatprep.subr.bf16.mxu0 0
      %4930 = vmatpush2.bf16.msra.mxu0 0
      %4931 = vmatprep.subr.bf16.mxu0 0
      %4932 = vmatpush2.bf16.msra.mxu0 0
      %4933 = vmatprep.subr.bf16.mxu0 0
      %4934 = vmatpush2.bf16.msra.mxu0 0
      %4935 = vmatprep.mubr.bf16.mxu0 0
      %4936 = vmatmul.mubr.bf16.gmra.mxu0 %v4858
      %v4937 = vpop.f32.mrf.mxu0
      %v4938 = vadd.f32 0.0, %v4937
      %v4939 = vpop.f32.mrf.mxu0
      %v4940 = vadd.f32 0.0, %v4939
      %v4941 = vpop.f32.mrf.mxu0
      %v4942 = vadd.f32 0.0, %v4941
      %v4943 = vpop.f32.mrf.mxu0
      %v4944 = vadd.f32 0.0, %v4943
      %4945 = vdwg.mxu0
      %v4946 = vadd.f32 %v4828, %v4895
      %v4947 = vadd.f32 %v4829, %v4897
      %v4948 = vadd.f32 %v4830, %v4938
      %v4949 = vadd.f32 %v4831, %v4940
      %v4950 = vadd.f32 %v4832, %v4899
      %v4951 = vadd.f32 %v4833, %v4901
      %v4952 = vadd.f32 %v4834, %v4942
      %v4953 = vadd.f32 %v4835, %v4944
      %4954 = vrot.lane.b32.xlu0 %v4250, 32
      %v4955 = vpop.permute.xlu0 %4954
      %4956 = vrot.lane.b32.xlu0 %v3891, 88
      %v4957 = vpop.permute.xlu0 %4956
      %4958 = vrot.lane.b32.xlu0 %v3892, 88
      %v4959 = vpop.permute.xlu0 %4958
      %4960 = vrot.lane.b32.xlu0 %v3893, 88
      %v4961 = vpop.permute.xlu0 %4960
      %4962 = vrot.lane.b32.xlu0 %v3894, 88
      %v4963 = vpop.permute.xlu0 %4962
      %4964 = vrot.lane.b32.xlu0 %v3895, 88
      %v4965 = vpop.permute.xlu0 %4964
      %v4966 = vsel %vm1623, %v4957, %v4959
      %v4967 = vsel %vm1623, %v4959, %v4961
      %v4968 = vsel %vm1623, %v4961, %v4963
      %v4969 = vsel %vm1623, %v4963, %v4965
      %v4975 = vsel %vm416, %v4955, 0
      %4977 = vmatprep.subr.bf16.mxu0 0
      %4978 = vmatpush1.bf16.msra.mxu0 0
      %4979 = vmatprep.subr.bf16.mxu0 0
      %4980 = vmatpush1.bf16.msra.mxu0 0
      %4981 = vmatprep.subr.bf16.mxu0 0
      %4982 = vmatpush1.bf16.msra.mxu0 0
      %4983 = vmatprep.subr.bf16.mxu0 0
      %4984 = vmatpush1.bf16.msra.mxu0 0
      %4985 = vmatprep.subr.bf16.mxu0 0
      %4986 = vmatpush1.bf16.msra.mxu0 0
      %4987 = vmatprep.subr.bf16.mxu0 0
      %4988 = vmatpush1.bf16.msra.mxu0 0
      %4989 = vmatprep.subr.bf16.mxu0 0
      %4990 = vmatpush1.bf16.msra.mxu0 0
      %4991 = vmatprep.subr.bf16.mxu0 %v4967
      %4992 = vmatpush1.bf16.msra.mxu0 %v4966
      %4993 = vmatprep.subr.bf16.mxu0 0
      %4994 = vmatpush2.bf16.msra.mxu0 0
      %4995 = vmatprep.subr.bf16.mxu0 0
      %4996 = vmatpush2.bf16.msra.mxu0 0
      %4997 = vmatprep.subr.bf16.mxu0 0
      %4998 = vmatpush2.bf16.msra.mxu0 0
      %4999 = vmatprep.subr.bf16.mxu0 0
      %5000 = vmatpush2.bf16.msra.mxu0 0
      %5001 = vmatprep.subr.bf16.mxu0 0
      %5002 = vmatpush2.bf16.msra.mxu0 0
      %5003 = vmatprep.subr.bf16.mxu0 0
      %5004 = vmatpush2.bf16.msra.mxu0 0
      %5005 = vmatprep.subr.bf16.mxu0 0
      %5006 = vmatpush2.bf16.msra.mxu0 0
      %5007 = vmatprep.subr.bf16.mxu0 0
      %5008 = vmatpush2.bf16.msra.mxu0 0
      %5009 = vmatprep.mubr.bf16.mxu0 0
      %5010 = vmatmul.mubr.bf16.gmra.mxu0 %v4975
      %v5011 = vpop.f32.mrf.mxu0
      %v5012 = vadd.f32 0.0, %v5011
      %v5013 = vpop.f32.mrf.mxu0
      %v5014 = vadd.f32 0.0, %v5013
      %v5015 = vpop.f32.mrf.mxu0
      %v5016 = vadd.f32 0.0, %v5015
      %v5017 = vpop.f32.mrf.mxu0
      %v5018 = vadd.f32 0.0, %v5017
      %5019 = vdwg.mxu0
      %5020 = vmatprep.subr.bf16.mxu0 0
      %5021 = vmatpush1.bf16.msra.mxu0 0
      %5022 = vmatprep.subr.bf16.mxu0 0
      %5023 = vmatpush1.bf16.msra.mxu0 0
      %5024 = vmatprep.subr.bf16.mxu0 0
      %5025 = vmatpush1.bf16.msra.mxu0 0
      %5026 = vmatprep.subr.bf16.mxu0 0
      %5027 = vmatpush1.bf16.msra.mxu0 0
      %5028 = vmatprep.subr.bf16.mxu0 0
      %5029 = vmatpush1.bf16.msra.mxu0 0
      %5030 = vmatprep.subr.bf16.mxu0 0
      %5031 = vmatpush1.bf16.msra.mxu0 0
      %5032 = vmatprep.subr.bf16.mxu0 0
      %5033 = vmatpush1.bf16.msra.mxu0 0
      %5034 = vmatprep.subr.bf16.mxu0 %v4969
      %5035 = vmatpush1.bf16.msra.mxu0 %v4968
      %5036 = vmatprep.subr.bf16.mxu0 0
      %5037 = vmatpush2.bf16.msra.mxu0 0
      %5038 = vmatprep.subr.bf16.mxu0 0
      %5039 = vmatpush2.bf16.msra.mxu0 0
      %5040 = vmatprep.subr.bf16.mxu0 0
      %5041 = vmatpush2.bf16.msra.mxu0 0
      %5042 = vmatprep.subr.bf16.mxu0 0
      %5043 = vmatpush2.bf16.msra.mxu0 0
      %5044 = vmatprep.subr.bf16.mxu0 0
      %5045 = vmatpush2.bf16.msra.mxu0 0
      %5046 = vmatprep.subr.bf16.mxu0 0
      %5047 = vmatpush2.bf16.msra.mxu0 0
      %5048 = vmatprep.subr.bf16.mxu0 0
      %5049 = vmatpush2.bf16.msra.mxu0 0
      %5050 = vmatprep.subr.bf16.mxu0 0
      %5051 = vmatpush2.bf16.msra.mxu0 0
      %5052 = vmatprep.mubr.bf16.mxu0 0
      %5053 = vmatmul.mubr.bf16.gmra.mxu0 %v4975
      %v5054 = vpop.f32.mrf.mxu0
      %v5055 = vadd.f32 0.0, %v5054
      %v5056 = vpop.f32.mrf.mxu0
      %v5057 = vadd.f32 0.0, %v5056
      %v5058 = vpop.f32.mrf.mxu0
      %v5059 = vadd.f32 0.0, %v5058
      %v5060 = vpop.f32.mrf.mxu0
      %v5061 = vadd.f32 0.0, %v5060
      %5062 = vdwg.mxu0
      %v5063 = vadd.f32 %v4946, %v5012
      %v5064 = vadd.f32 %v4947, %v5014
      %v5065 = vadd.f32 %v4948, %v5055
      %v5066 = vadd.f32 %v4949, %v5057
      %v5067 = vadd.f32 %v4950, %v5016
      %v5068 = vadd.f32 %v4951, %v5018
      %v5069 = vadd.f32 %v4952, %v5059
      %v5070 = vadd.f32 %v4953, %v5061
      %5071 = vrot.lane.b32.xlu0 %v4250, 16
      %v5072 = vpop.permute.xlu0 %5071
      %5073 = vrot.lane.b32.xlu0 %v3891, 87
      %v5074 = vpop.permute.xlu0 %5073
      %5075 = vrot.lane.b32.xlu0 %v3892, 87
      %v5076 = vpop.permute.xlu0 %5075
      %5077 = vrot.lane.b32.xlu0 %v3893, 87
      %v5078 = vpop.permute.xlu0 %5077
      %5079 = vrot.lane.b32.xlu0 %v3894, 87
      %v5080 = vpop.permute.xlu0 %5079
      %5081 = vrot.lane.b32.xlu0 %v3895, 87
      %v5082 = vpop.permute.xlu0 %5081
      %v5083 = vsel %vm1858, %v5074, %v5076
      %v5084 = vsel %vm1858, %v5076, %v5078
      %v5085 = vsel %vm1858, %v5078, %v5080
      %v5086 = vsel %vm1858, %v5080, %v5082
      %v5092 = vsel %vm416, %v5072, 0
      %5094 = vmatprep.subr.bf16.mxu0 0
      %5095 = vmatpush1.bf16.msra.mxu0 0
      %5096 = vmatprep.subr.bf16.mxu0 0
      %5097 = vmatpush1.bf16.msra.mxu0 0
      %5098 = vmatprep.subr.bf16.mxu0 0
      %5099 = vmatpush1.bf16.msra.mxu0 0
      %5100 = vmatprep.subr.bf16.mxu0 0
      %5101 = vmatpush1.bf16.msra.mxu0 0
      %5102 = vmatprep.subr.bf16.mxu0 0
      %5103 = vmatpush1.bf16.msra.mxu0 0
      %5104 = vmatprep.subr.bf16.mxu0 0
      %5105 = vmatpush1.bf16.msra.mxu0 0
      %5106 = vmatprep.subr.bf16.mxu0 0
      %5107 = vmatpush1.bf16.msra.mxu0 0
      %5108 = vmatprep.subr.bf16.mxu0 %v5084
      %5109 = vmatpush1.bf16.msra.mxu0 %v5083
      %5110 = vmatprep.subr.bf16.mxu0 0
      %5111 = vmatpush2.bf16.msra.mxu0 0
      %5112 = vmatprep.subr.bf16.mxu0 0
      %5113 = vmatpush2.bf16.msra.mxu0 0
      %5114 = vmatprep.subr.bf16.mxu0 0
      %5115 = vmatpush2.bf16.msra.mxu0 0
      %5116 = vmatprep.subr.bf16.mxu0 0
      %5117 = vmatpush2.bf16.msra.mxu0 0
      %5118 = vmatprep.subr.bf16.mxu0 0
      %5119 = vmatpush2.bf16.msra.mxu0 0
      %5120 = vmatprep.subr.bf16.mxu0 0
      %5121 = vmatpush2.bf16.msra.mxu0 0
      %5122 = vmatprep.subr.bf16.mxu0 0
      %5123 = vmatpush2.bf16.msra.mxu0 0
      %5124 = vmatprep.subr.bf16.mxu0 0
      %5125 = vmatpush2.bf16.msra.mxu0 0
      %5126 = vmatprep.mubr.bf16.mxu0 0
      %5127 = vmatmul.mubr.bf16.gmra.mxu0 %v5092
      %v5128 = vpop.f32.mrf.mxu0
      %v5129 = vadd.f32 0.0, %v5128
      %v5130 = vpop.f32.mrf.mxu0
      %v5131 = vadd.f32 0.0, %v5130
      %v5132 = vpop.f32.mrf.mxu0
      %v5133 = vadd.f32 0.0, %v5132
      %v5134 = vpop.f32.mrf.mxu0
      %v5135 = vadd.f32 0.0, %v5134
      %5136 = vdwg.mxu0
      %5137 = vmatprep.subr.bf16.mxu0 0
      %5138 = vmatpush1.bf16.msra.mxu0 0
      %5139 = vmatprep.subr.bf16.mxu0 0
      %5140 = vmatpush1.bf16.msra.mxu0 0
      %5141 = vmatprep.subr.bf16.mxu0 0
      %5142 = vmatpush1.bf16.msra.mxu0 0
      %5143 = vmatprep.subr.bf16.mxu0 0
      %5144 = vmatpush1.bf16.msra.mxu0 0
      %5145 = vmatprep.subr.bf16.mxu0 0
      %5146 = vmatpush1.bf16.msra.mxu0 0
      %5147 = vmatprep.subr.bf16.mxu0 0
      %5148 = vmatpush1.bf16.msra.mxu0 0
      %5149 = vmatprep.subr.bf16.mxu0 0
      %5150 = vmatpush1.bf16.msra.mxu0 0
      %5151 = vmatprep.subr.bf16.mxu0 %v5086
      %5152 = vmatpush1.bf16.msra.mxu0 %v5085
      %5153 = vmatprep.subr.bf16.mxu0 0
      %5154 = vmatpush2.bf16.msra.mxu0 0
      %5155 = vmatprep.subr.bf16.mxu0 0
      %5156 = vmatpush2.bf16.msra.mxu0 0
      %5157 = vmatprep.subr.bf16.mxu0 0
      %5158 = vmatpush2.bf16.msra.mxu0 0
      %5159 = vmatprep.subr.bf16.mxu0 0
      %5160 = vmatpush2.bf16.msra.mxu0 0
      %5161 = vmatprep.subr.bf16.mxu0 0
      %5162 = vmatpush2.bf16.msra.mxu0 0
      %5163 = vmatprep.subr.bf16.mxu0 0
      %5164 = vmatpush2.bf16.msra.mxu0 0
      %5165 = vmatprep.subr.bf16.mxu0 0
      %5166 = vmatpush2.bf16.msra.mxu0 0
      %5167 = vmatprep.subr.bf16.mxu0 0
      %5168 = vmatpush2.bf16.msra.mxu0 0
      %5169 = vmatprep.mubr.bf16.mxu0 0
      %5170 = vmatmul.mubr.bf16.gmra.mxu0 %v5092
      %v5171 = vpop.f32.mrf.mxu0
      %v5172 = vadd.f32 0.0, %v5171
      %v5173 = vpop.f32.mrf.mxu0
      %v5174 = vadd.f32 0.0, %v5173
      %v5175 = vpop.f32.mrf.mxu0
      %v5176 = vadd.f32 0.0, %v5175
      %v5177 = vpop.f32.mrf.mxu0
      %v5178 = vadd.f32 0.0, %v5177
      %5179 = vdwg.mxu0
      %v5180 = vadd.f32 %v5063, %v5129
      %v5181 = vadd.f32 %v5064, %v5131
      %v5182 = vadd.f32 %v5065, %v5172
      %v5183 = vadd.f32 %v5066, %v5174
      %v5184 = vadd.f32 %v5067, %v5133
      %v5185 = vadd.f32 %v5068, %v5135
      %v5186 = vadd.f32 %v5069, %v5176
      %v5187 = vadd.f32 %v5070, %v5178
      %v5188 = vunpack.c.h.b16 %v2310
      %v5189 = vunpack.c.h.b16 %v2312
      %v5190 = vpack.c.b16 %v5189, %v5188
      %5191 = vrot.lane.b32.xlu0 %v3891, 86
      %v5192 = vpop.permute.xlu0 %5191
      %5193 = vrot.lane.b32.xlu0 %v3892, 86
      %v5194 = vpop.permute.xlu0 %5193
      %5195 = vrot.lane.b32.xlu0 %v3893, 86
      %v5196 = vpop.permute.xlu0 %5195
      %5197 = vrot.lane.b32.xlu0 %v3894, 86
      %v5198 = vpop.permute.xlu0 %5197
      %5199 = vrot.lane.b32.xlu0 %v3895, 86
      %v5200 = vpop.permute.xlu0 %5199
      %v5201 = vsel %vm2093, %v5192, %v5194
      %v5202 = vsel %vm2093, %v5194, %v5196
      %v5203 = vsel %vm2093, %v5196, %v5198
      %v5204 = vsel %vm2093, %v5198, %v5200
      %v5210 = vsel %vm416, %v5190, 0
      %5212 = vmatprep.subr.bf16.mxu0 0
      %5213 = vmatpush1.bf16.msra.mxu0 0
      %5214 = vmatprep.subr.bf16.mxu0 0
      %5215 = vmatpush1.bf16.msra.mxu0 0
      %5216 = vmatprep.subr.bf16.mxu0 0
      %5217 = vmatpush1.bf16.msra.mxu0 0
      %5218 = vmatprep.subr.bf16.mxu0 0
      %5219 = vmatpush1.bf16.msra.mxu0 0
      %5220 = vmatprep.subr.bf16.mxu0 0
      %5221 = vmatpush1.bf16.msra.mxu0 0
      %5222 = vmatprep.subr.bf16.mxu0 0
      %5223 = vmatpush1.bf16.msra.mxu0 0
      %5224 = vmatprep.subr.bf16.mxu0 0
      %5225 = vmatpush1.bf16.msra.mxu0 0
      %5226 = vmatprep.subr.bf16.mxu0 %v5202
      %5227 = vmatpush1.bf16.msra.mxu0 %v5201
      %5228 = vmatprep.subr.bf16.mxu0 0
      %5229 = vmatpush2.bf16.msra.mxu0 0
      %5230 = vmatprep.subr.bf16.mxu0 0
      %5231 = vmatpush2.bf16.msra.mxu0 0
      %5232 = vmatprep.subr.bf16.mxu0 0
      %5233 = vmatpush2.bf16.msra.mxu0 0
      %5234 = vmatprep.subr.bf16.mxu0 0
      %5235 = vmatpush2.bf16.msra.mxu0 0
      %5236 = vmatprep.subr.bf16.mxu0 0
      %5237 = vmatpush2.bf16.msra.mxu0 0
      %5238 = vmatprep.subr.bf16.mxu0 0
      %5239 = vmatpush2.bf16.msra.mxu0 0
      %5240 = vmatprep.subr.bf16.mxu0 0
      %5241 = vmatpush2.bf16.msra.mxu0 0
      %5242 = vmatprep.subr.bf16.mxu0 0
      %5243 = vmatpush2.bf16.msra.mxu0 0
      %5244 = vmatprep.mubr.bf16.mxu0 0
      %5245 = vmatmul.mubr.bf16.gmra.mxu0 %v5210
      %v5246 = vpop.f32.mrf.mxu0
      %v5247 = vadd.f32 0.0, %v5246
      %v5248 = vpop.f32.mrf.mxu0
      %v5249 = vadd.f32 0.0, %v5248
      %v5250 = vpop.f32.mrf.mxu0
      %v5251 = vadd.f32 0.0, %v5250
      %v5252 = vpop.f32.mrf.mxu0
      %v5253 = vadd.f32 0.0, %v5252
      %5254 = vdwg.mxu0
      %5255 = vmatprep.subr.bf16.mxu0 0
      %5256 = vmatpush1.bf16.msra.mxu0 0
      %5257 = vmatprep.subr.bf16.mxu0 0
      %5258 = vmatpush1.bf16.msra.mxu0 0
      %5259 = vmatprep.subr.bf16.mxu0 0
      %5260 = vmatpush1.bf16.msra.mxu0 0
      %5261 = vmatprep.subr.bf16.mxu0 0
      %5262 = vmatpush1.bf16.msra.mxu0 0
      %5263 = vmatprep.subr.bf16.mxu0 0
      %5264 = vmatpush1.bf16.msra.mxu0 0
      %5265 = vmatprep.subr.bf16.mxu0 0
      %5266 = vmatpush1.bf16.msra.mxu0 0
      %5267 = vmatprep.subr.bf16.mxu0 0
      %5268 = vmatpush1.bf16.msra.mxu0 0
      %5269 = vmatprep.subr.bf16.mxu0 %v5204
      %5270 = vmatpush1.bf16.msra.mxu0 %v5203
      %5271 = vmatprep.subr.bf16.mxu0 0
      %5272 = vmatpush2.bf16.msra.mxu0 0
      %5273 = vmatprep.subr.bf16.mxu0 0
      %5274 = vmatpush2.bf16.msra.mxu0 0
      %5275 = vmatprep.subr.bf16.mxu0 0
      %5276 = vmatpush2.bf16.msra.mxu0 0
      %5277 = vmatprep.subr.bf16.mxu0 0
      %5278 = vmatpush2.bf16.msra.mxu0 0
      %5279 = vmatprep.subr.bf16.mxu0 0
      %5280 = vmatpush2.bf16.msra.mxu0 0
      %5281 = vmatprep.subr.bf16.mxu0 0
      %5282 = vmatpush2.bf16.msra.mxu0 0
      %5283 = vmatprep.subr.bf16.mxu0 0
      %5284 = vmatpush2.bf16.msra.mxu0 0
      %5285 = vmatprep.subr.bf16.mxu0 0
      %5286 = vmatpush2.bf16.msra.mxu0 0
      %5287 = vmatprep.mubr.bf16.mxu0 0
      %5288 = vmatmul.mubr.bf16.gmra.mxu0 %v5210
      %v5289 = vpop.f32.mrf.mxu0
      %v5290 = vadd.f32 0.0, %v5289
      %v5291 = vpop.f32.mrf.mxu0
      %v5292 = vadd.f32 0.0, %v5291
      %v5293 = vpop.f32.mrf.mxu0
      %v5294 = vadd.f32 0.0, %v5293
      %v5295 = vpop.f32.mrf.mxu0
      %v5296 = vadd.f32 0.0, %v5295
      %5297 = vdwg.mxu0
      %v5298 = vadd.f32 %v5180, %v5247
      %v5299 = vadd.f32 %v5181, %v5249
      %v5300 = vadd.f32 %v5182, %v5290
      %v5301 = vadd.f32 %v5183, %v5292
      %v5302 = vadd.f32 %v5184, %v5251
      %v5303 = vadd.f32 %v5185, %v5253
      %v5304 = vadd.f32 %v5186, %v5294
      %v5305 = vadd.f32 %v5187, %v5296
      %v5306 = vld [vmem:[%s5] sm:$0xff]
      %v5307 = vld [vmem:[%s5 + $0x8] sm:$0xf]
      %5309 = vset.pattern.permute.xlu0 0
      %5310 = vperm.xlu0 %5309, %v5306
      %v5311 = vpop.permute.xlu0 %5310
      %5314 = vset.pattern.permute.xlu0 0
      %5315 = vperm.xlu0 %5314, %v5307
      %v5316 = vpop.permute.xlu0 %5315
      %v5318 = vadd.f32 %v5298, %v5311
      %v5319 = vadd.f32 %v5299, %v5311
      %v5320 = vadd.f32 %v5300, %v5311
      %v5321 = vadd.f32 %v5301, %v5311
      %v5322 = vadd.f32 %v5302, %v5316
      %v5323 = vadd.f32 %v5303, %v5316
      %v5324 = vadd.f32 %v5304, %v5316
      %v5325 = vadd.f32 %v5305, %v5316
      %v5326 = vmul.f32 %v5318, 0.5
      %v5327 = vmul.f32 %v5319, 0.5
      %v5328 = vmul.f32 %v5320, 0.5
      %v5329 = vmul.f32 %v5321, 0.5
      %v5330 = vmul.f32 %v5322, 0.5
      %v5331 = vmul.f32 %v5323, 0.5
      %v5332 = vmul.f32 %v5324, 0.5
      %v5333 = vmul.f32 %v5325, 0.5
      %v5334 = vtanh.pop %v5326
      %v5335 = vtanh.pop %v5327
      %v5336 = vtanh.pop %v5328
      %v5337 = vtanh.pop %v5329
      %v5338 = vtanh.pop %v5330
      %v5339 = vtanh.pop %v5331
      %v5340 = vtanh.pop %v5332
      %v5341 = vtanh.pop %v5333
      %v5342 = vmul.f32 %v5334, 0.5
      %v5343 = vmul.f32 %v5335, 0.5
      %v5344 = vmul.f32 %v5336, 0.5
      %v5345 = vmul.f32 %v5337, 0.5
      %v5346 = vmul.f32 %v5338, 0.5
      %v5347 = vmul.f32 %v5339, 0.5
      %v5348 = vmul.f32 %v5340, 0.5
      %v5349 = vmul.f32 %v5341, 0.5
      %v5350 = vadd.f32 %v5342, 0.5
      %v5351 = vadd.f32 %v5343, 0.5
      %v5352 = vadd.f32 %v5344, 0.5
      %v5353 = vadd.f32 %v5345, 0.5
      %v5354 = vadd.f32 %v5346, 0.5
      %v5355 = vadd.f32 %v5347, 0.5
      %v5356 = vadd.f32 %v5348, 0.5
      %v5357 = vadd.f32 %v5349, 0.5
      %v5358 = vld [vmem:[%s6] sm:$0xf]
      %v5360 = vlaneseq
      %v5361 = vshrl.u32 %v5360, 7
      %v5362 = vsub.s32 0, %v5361
      %v5363 = vrot.slane %v5358, %v5362
      %v5364 = vlaneseq
      %v5365 = vshrl.u32 %v5364, 7
      %v5366 = vsub.s32 1, %v5365
      %v5367 = vrot.slane %v5358, %v5366
      %v5368 = vlaneseq
      %v5369 = vshrl.u32 %v5368, 7
      %v5370 = vsub.s32 2, %v5369
      %v5371 = vrot.slane %v5358, %v5370
      %v5372 = vlaneseq
      %v5373 = vshrl.u32 %v5372, 7
      %v5374 = vsub.s32 3, %v5373
      %v5375 = vrot.slane %v5358, %v5374
      %v5380 = vmul.f32 %v5350, %v5363
      %v5381 = vmul.f32 %v5351, %v5367
      %v5382 = vmul.f32 %v5352, %v5371
      %v5383 = vmul.f32 %v5353, %v5375
      %v5384 = vmul.f32 %v5354, %v5363
      %v5385 = vmul.f32 %v5355, %v5367
      %v5386 = vmul.f32 %v5356, %v5371
      %v5387 = vmul.f32 %v5357, %v5375
      %v5388 = vpack.c.bf16 %v5384, %v5380
      %v5389 = vpack.c.bf16 %v5385, %v5381
      %v5390 = vpack.c.bf16 %v5386, %v5382
      %v5391 = vpack.c.bf16 %v5387, %v5383
      %v5396 = vunpack.c.l.b16 %v5388
      %v5397 = vunpack.c.l.b16 %v5389
      %v5398 = vunpack.c.l.b16 %v5390
      %v5399 = vunpack.c.l.b16 %v5391
      %v5400 = vunpack.c.h.b16 %v5388
      %v5401 = vunpack.c.h.b16 %v5389
      %v5402 = vunpack.c.h.b16 %v5390
      %v5403 = vunpack.c.h.b16 %v5391
      %v5404 = vpack.c.b16 %v5397, %v5396
      %v5405 = vpack.c.b16 %v5399, %v5398
      %v5406 = vpack.c.b16 %v5401, %v5400
      %v5407 = vpack.c.b16 %v5403, %v5402
      %5412 = vst [vmem:[#allocation3 + $0x4] sm:$0xff] %v5404
      %5413 = vst [vmem:[#allocation3 + $0xc] sm:$0xff] %v5405
      %5414 = vst [vmem:[#allocation3 + $0x1c] sm:$0x33] %v5406
      %5415 = vst [vmem:[#allocation3 + $0x24] sm:$0x33] %v5407
      %v5416 = vld [vmem:[%s7] sm:$0xff]
      %v5417 = vld [vmem:[%s7 + $0x8] sm:$0xff]
      %v5418 = vld [vmem:[%s7 + $0x10] sm:$0x33]
      %v5419 = vld [vmem:[%s7 + $0x18] sm:$0x33]
      %v5420 = vld [vmem:[#allocation3] sm:$0xff]
      %v5421 = vld [vmem:[#allocation3 + $0x8] sm:$0xff]
      %v5422 = vld [vmem:[#allocation3 + $0x10] sm:$0xf]
      %v5423 = vld [vmem:[#allocation3 + $0x18] sm:$0xff]
      %v5424 = vld [vmem:[#allocation3 + $0x20] sm:$0xff]
      %v5425 = vld [vmem:[#allocation3 + $0x28] sm:$0xf]
      %v5428 = vunpack.c.l.b16 %v5416
      %v5429 = vunpack.c.l.b16 %v5418
      %v5430 = vpack.c.b16 %v5429, %v5428
      %5431 = vrot.lane.b32.xlu0 %v5430, 112
      %v5432 = vpop.permute.xlu0 %5431
      %v5439 = vunpack.c.l.b16 %v5420
      %v5440 = vunpack.c.h.b16 %v5420
      %v5441 = vunpack.c.l.b16 %v5421
      %v5442 = vunpack.c.h.b16 %v5421
      %v5443 = vunpack.c.l.b16 %v5422
      %v5444 = vunpack.c.l.b16 %v5423
      %v5445 = vunpack.c.h.b16 %v5423
      %v5446 = vunpack.c.l.b16 %v5424
      %v5447 = vunpack.c.h.b16 %v5424
      %v5448 = vunpack.c.l.b16 %v5425
      %v5449 = vpack.c.b16 %v5444, %v5439
      %v5450 = vpack.c.b16 %v5445, %v5440
      %v5451 = vpack.c.b16 %v5446, %v5441
      %v5452 = vpack.c.b16 %v5447, %v5442
      %v5453 = vpack.c.b16 %v5448, %v5443
      %5454 = vrot.lane.b32.xlu0 %v5449, 82
      %v5455 = vpop.permute.xlu0 %5454
      %5456 = vrot.lane.b32.xlu0 %v5450, 82
      %v5457 = vpop.permute.xlu0 %5456
      %5458 = vrot.lane.b32.xlu0 %v5451, 82
      %v5459 = vpop.permute.xlu0 %5458
      %5460 = vrot.lane.b32.xlu0 %v5452, 82
      %v5461 = vpop.permute.xlu0 %5460
      %5462 = vrot.lane.b32.xlu0 %v5453, 82
      %v5463 = vpop.permute.xlu0 %5462
      %vm5464 = vcmask 670720
      %v5465 = vsel %vm5464, %v5455, %v5457
      %v5466 = vsel %vm5464, %v5457, %v5459
      %v5467 = vsel %vm5464, %v5459, %v5461
      %v5468 = vsel %vm5464, %v5461, %v5463
      %v5474 = vsel %vm416, %v5432, 0
      %5476 = vmatprep.subr.bf16.mxu0 0
      %5477 = vmatpush1.bf16.msra.mxu0 0
      %5478 = vmatprep.subr.bf16.mxu0 0
      %5479 = vmatpush1.bf16.msra.mxu0 0
      %5480 = vmatprep.subr.bf16.mxu0 0
      %5481 = vmatpush1.bf16.msra.mxu0 0
      %5482 = vmatprep.subr.bf16.mxu0 0
      %5483 = vmatpush1.bf16.msra.mxu0 0
      %5484 = vmatprep.subr.bf16.mxu0 0
      %5485 = vmatpush1.bf16.msra.mxu0 0
      %5486 = vmatprep.subr.bf16.mxu0 0
      %5487 = vmatpush1.bf16.msra.mxu0 0
      %5488 = vmatprep.subr.bf16.mxu0 0
      %5489 = vmatpush1.bf16.msra.mxu0 0
      %5490 = vmatprep.subr.bf16.mxu0 %v5466
      %5491 = vmatpush1.bf16.msra.mxu0 %v5465
      %5492 = vmatprep.subr.bf16.mxu0 0
      %5493 = vmatpush2.bf16.msra.mxu0 0
      %5494 = vmatprep.subr.bf16.mxu0 0
      %5495 = vmatpush2.bf16.msra.mxu0 0
      %5496 = vmatprep.subr.bf16.mxu0 0
      %5497 = vmatpush2.bf16.msra.mxu0 0
      %5498 = vmatprep.subr.bf16.mxu0 0
      %5499 = vmatpush2.bf16.msra.mxu0 0
      %5500 = vmatprep.subr.bf16.mxu0 0
      %5501 = vmatpush2.bf16.msra.mxu0 0
      %5502 = vmatprep.subr.bf16.mxu0 0
      %5503 = vmatpush2.bf16.msra.mxu0 0
      %5504 = vmatprep.subr.bf16.mxu0 0
      %5505 = vmatpush2.bf16.msra.mxu0 0
      %5506 = vmatprep.subr.bf16.mxu0 0
      %5507 = vmatpush2.bf16.msra.mxu0 0
      %5508 = vmatprep.mubr.bf16.mxu0 0
      %5509 = vmatmul.mubr.bf16.gmra.mxu0 %v5474
      %v5510 = vpop.f32.mrf.mxu0
      %v5511 = vadd.f32 0.0, %v5510
      %v5512 = vpop.f32.mrf.mxu0
      %v5513 = vadd.f32 0.0, %v5512
      %v5514 = vpop.f32.mrf.mxu0
      %v5515 = vadd.f32 0.0, %v5514
      %v5516 = vpop.f32.mrf.mxu0
      %v5517 = vadd.f32 0.0, %v5516
      %5518 = vdwg.mxu0
      %5519 = vmatprep.subr.bf16.mxu0 0
      %5520 = vmatpush1.bf16.msra.mxu0 0
      %5521 = vmatprep.subr.bf16.mxu0 0
      %5522 = vmatpush1.bf16.msra.mxu0 0
      %5523 = vmatprep.subr.bf16.mxu0 0
      %5524 = vmatpush1.bf16.msra.mxu0 0
      %5525 = vmatprep.subr.bf16.mxu0 0
      %5526 = vmatpush1.bf16.msra.mxu0 0
      %5527 = vmatprep.subr.bf16.mxu0 0
      %5528 = vmatpush1.bf16.msra.mxu0 0
      %5529 = vmatprep.subr.bf16.mxu0 0
      %5530 = vmatpush1.bf16.msra.mxu0 0
      %5531 = vmatprep.subr.bf16.mxu0 0
      %5532 = vmatpush1.bf16.msra.mxu0 0
      %5533 = vmatprep.subr.bf16.mxu0 %v5468
      %5534 = vmatpush1.bf16.msra.mxu0 %v5467
      %5535 = vmatprep.subr.bf16.mxu0 0
      %5536 = vmatpush2.bf16.msra.mxu0 0
      %5537 = vmatprep.subr.bf16.mxu0 0
      %5538 = vmatpush2.bf16.msra.mxu0 0
      %5539 = vmatprep.subr.bf16.mxu0 0
      %5540 = vmatpush2.bf16.msra.mxu0 0
      %5541 = vmatprep.subr.bf16.mxu0 0
      %5542 = vmatpush2.bf16.msra.mxu0 0
      %5543 = vmatprep.subr.bf16.mxu0 0
      %5544 = vmatpush2.bf16.msra.mxu0 0
      %5545 = vmatprep.subr.bf16.mxu0 0
      %5546 = vmatpush2.bf16.msra.mxu0 0
      %5547 = vmatprep.subr.bf16.mxu0 0
      %5548 = vmatpush2.bf16.msra.mxu0 0
      %5549 = vmatprep.subr.bf16.mxu0 0
      %5550 = vmatpush2.bf16.msra.mxu0 0
      %5551 = vmatprep.mubr.bf16.mxu0 0
      %5552 = vmatmul.mubr.bf16.gmra.mxu0 %v5474
      %v5553 = vpop.f32.mrf.mxu0
      %v5554 = vadd.f32 0.0, %v5553
      %v5555 = vpop.f32.mrf.mxu0
      %v5556 = vadd.f32 0.0, %v5555
      %v5557 = vpop.f32.mrf.mxu0
      %v5558 = vadd.f32 0.0, %v5557
      %v5559 = vpop.f32.mrf.mxu0
      %v5560 = vadd.f32 0.0, %v5559
      %5561 = vdwg.mxu0
      %5562 = vrot.lane.b32.xlu0 %v5449, 84
      %v5563 = vpop.permute.xlu0 %5562
      %5564 = vrot.lane.b32.xlu0 %v5450, 84
      %v5565 = vpop.permute.xlu0 %5564
      %5566 = vrot.lane.b32.xlu0 %v5451, 84
      %v5567 = vpop.permute.xlu0 %5566
      %5568 = vrot.lane.b32.xlu0 %v5452, 84
      %v5569 = vpop.permute.xlu0 %5568
      %5570 = vrot.lane.b32.xlu0 %v5453, 84
      %v5571 = vpop.permute.xlu0 %5570
      %vm5572 = vcmask 687104
      %v5573 = vsel %vm5572, %v5563, %v5565
      %v5574 = vsel %vm5572, %v5565, %v5567
      %v5575 = vsel %vm5572, %v5567, %v5569
      %v5576 = vsel %vm5572, %v5569, %v5571
      %v5582 = vsel %vm416, %v5430, 0
      %5584 = vmatprep.subr.bf16.mxu0 0
      %5585 = vmatpush1.bf16.msra.mxu0 0
      %5586 = vmatprep.subr.bf16.mxu0 0
      %5587 = vmatpush1.bf16.msra.mxu0 0
      %5588 = vmatprep.subr.bf16.mxu0 0
      %5589 = vmatpush1.bf16.msra.mxu0 0
      %5590 = vmatprep.subr.bf16.mxu0 0
      %5591 = vmatpush1.bf16.msra.mxu0 0
      %5592 = vmatprep.subr.bf16.mxu0 0
      %5593 = vmatpush1.bf16.msra.mxu0 0
      %5594 = vmatprep.subr.bf16.mxu0 0
      %5595 = vmatpush1.bf16.msra.mxu0 0
      %5596 = vmatprep.subr.bf16.mxu0 0
      %5597 = vmatpush1.bf16.msra.mxu0 0
      %5598 = vmatprep.subr.bf16.mxu0 %v5574
      %5599 = vmatpush1.bf16.msra.mxu0 %v5573
      %5600 = vmatprep.subr.bf16.mxu0 0
      %5601 = vmatpush2.bf16.msra.mxu0 0
      %5602 = vmatprep.subr.bf16.mxu0 0
      %5603 = vmatpush2.bf16.msra.mxu0 0
      %5604 = vmatprep.subr.bf16.mxu0 0
      %5605 = vmatpush2.bf16.msra.mxu0 0
      %5606 = vmatprep.subr.bf16.mxu0 0
      %5607 = vmatpush2.bf16.msra.mxu0 0
      %5608 = vmatprep.subr.bf16.mxu0 0
      %5609 = vmatpush2.bf16.msra.mxu0 0
      %5610 = vmatprep.subr.bf16.mxu0 0
      %5611 = vmatpush2.bf16.msra.mxu0 0
      %5612 = vmatprep.subr.bf16.mxu0 0
      %5613 = vmatpush2.bf16.msra.mxu0 0
      %5614 = vmatprep.subr.bf16.mxu0 0
      %5615 = vmatpush2.bf16.msra.mxu0 0
      %5616 = vmatprep.mubr.bf16.mxu0 0
      %5617 = vmatmul.mubr.bf16.gmra.mxu0 %v5582
      %v5618 = vpop.f32.mrf.mxu0
      %v5619 = vadd.f32 %v5511, %v5618
      %v5620 = vpop.f32.mrf.mxu0
      %v5621 = vadd.f32 %v5513, %v5620
      %v5622 = vpop.f32.mrf.mxu0
      %v5623 = vadd.f32 %v5515, %v5622
      %v5624 = vpop.f32.mrf.mxu0
      %v5625 = vadd.f32 %v5517, %v5624
      %5626 = vdwg.mxu0
      %5627 = vmatprep.subr.bf16.mxu0 0
      %5628 = vmatpush1.bf16.msra.mxu0 0
      %5629 = vmatprep.subr.bf16.mxu0 0
      %5630 = vmatpush1.bf16.msra.mxu0 0
      %5631 = vmatprep.subr.bf16.mxu0 0
      %5632 = vmatpush1.bf16.msra.mxu0 0
      %5633 = vmatprep.subr.bf16.mxu0 0
      %5634 = vmatpush1.bf16.msra.mxu0 0
      %5635 = vmatprep.subr.bf16.mxu0 0
      %5636 = vmatpush1.bf16.msra.mxu0 0
      %5637 = vmatprep.subr.bf16.mxu0 0
      %5638 = vmatpush1.bf16.msra.mxu0 0
      %5639 = vmatprep.subr.bf16.mxu0 0
      %5640 = vmatpush1.bf16.msra.mxu0 0
      %5641 = vmatprep.subr.bf16.mxu0 %v5576
      %5642 = vmatpush1.bf16.msra.mxu0 %v5575
      %5643 = vmatprep.subr.bf16.mxu0 0
      %5644 = vmatpush2.bf16.msra.mxu0 0
      %5645 = vmatprep.subr.bf16.mxu0 0
      %5646 = vmatpush2.bf16.msra.mxu0 0
      %5647 = vmatprep.subr.bf16.mxu0 0
      %5648 = vmatpush2.bf16.msra.mxu0 0
      %5649 = vmatprep.subr.bf16.mxu0 0
      %5650 = vmatpush2.bf16.msra.mxu0 0
      %5651 = vmatprep.subr.bf16.mxu0 0
      %5652 = vmatpush2.bf16.msra.mxu0 0
      %5653 = vmatprep.subr.bf16.mxu0 0
      %5654 = vmatpush2.bf16.msra.mxu0 0
      %5655 = vmatprep.subr.bf16.mxu0 0
      %5656 = vmatpush2.bf16.msra.mxu0 0
      %5657 = vmatprep.subr.bf16.mxu0 0
      %5658 = vmatpush2.bf16.msra.mxu0 0
      %5659 = vmatprep.mubr.bf16.mxu0 0
      %5660 = vmatmul.mubr.bf16.gmra.mxu0 %v5582
      %v5661 = vpop.f32.mrf.mxu0
      %v5662 = vadd.f32 %v5554, %v5661
      %v5663 = vpop.f32.mrf.mxu0
      %v5664 = vadd.f32 %v5556, %v5663
      %v5665 = vpop.f32.mrf.mxu0
      %v5666 = vadd.f32 %v5558, %v5665
      %v5667 = vpop.f32.mrf.mxu0
      %v5668 = vadd.f32 %v5560, %v5667
      %5669 = vdwg.mxu0
      %5670 = vrot.lane.b32.xlu0 %v5430, 96
      %v5671 = vpop.permute.xlu0 %5670
      %5672 = vrot.lane.b32.xlu0 %v5449, 80
      %v5673 = vpop.permute.xlu0 %5672
      %5674 = vrot.lane.b32.xlu0 %v5450, 80
      %v5675 = vpop.permute.xlu0 %5674
      %5676 = vrot.lane.b32.xlu0 %v5451, 80
      %v5677 = vpop.permute.xlu0 %5676
      %5678 = vrot.lane.b32.xlu0 %v5452, 80
      %v5679 = vpop.permute.xlu0 %5678
      %5680 = vrot.lane.b32.xlu0 %v5453, 80
      %v5681 = vpop.permute.xlu0 %5680
      %vm5682 = vcmask 654336
      %v5683 = vsel %vm5682, %v5673, %v5675
      %v5684 = vsel %vm5682, %v5675, %v5677
      %v5685 = vsel %vm5682, %v5677, %v5679
      %v5686 = vsel %vm5682, %v5679, %v5681
      %v5692 = vsel %vm416, %v5671, 0
      %5694 = vmatprep.subr.bf16.mxu0 0
      %5695 = vmatpush1.bf16.msra.mxu0 0
      %5696 = vmatprep.subr.bf16.mxu0 0
      %5697 = vmatpush1.bf16.msra.mxu0 0
      %5698 = vmatprep.subr.bf16.mxu0 0
      %5699 = vmatpush1.bf16.msra.mxu0 0
      %5700 = vmatprep.subr.bf16.mxu0 0
      %5701 = vmatpush1.bf16.msra.mxu0 0
      %5702 = vmatprep.subr.bf16.mxu0 0
      %5703 = vmatpush1.bf16.msra.mxu0 0
      %5704 = vmatprep.subr.bf16.mxu0 0
      %5705 = vmatpush1.bf16.msra.mxu0 0
      %5706 = vmatprep.subr.bf16.mxu0 0
      %5707 = vmatpush1.bf16.msra.mxu0 0
      %5708 = vmatprep.subr.bf16.mxu0 %v5684
      %5709 = vmatpush1.bf16.msra.mxu0 %v5683
      %5710 = vmatprep.subr.bf16.mxu0 0
      %5711 = vmatpush2.bf16.msra.mxu0 0
      %5712 = vmatprep.subr.bf16.mxu0 0
      %5713 = vmatpush2.bf16.msra.mxu0 0
      %5714 = vmatprep.subr.bf16.mxu0 0
      %5715 = vmatpush2.bf16.msra.mxu0 0
      %5716 = vmatprep.subr.bf16.mxu0 0
      %5717 = vmatpush2.bf16.msra.mxu0 0
      %5718 = vmatprep.subr.bf16.mxu0 0
      %5719 = vmatpush2.bf16.msra.mxu0 0
      %5720 = vmatprep.subr.bf16.mxu0 0
      %5721 = vmatpush2.bf16.msra.mxu0 0
      %5722 = vmatprep.subr.bf16.mxu0 0
      %5723 = vmatpush2.bf16.msra.mxu0 0
      %5724 = vmatprep.subr.bf16.mxu0 0
      %5725 = vmatpush2.bf16.msra.mxu0 0
      %5726 = vmatprep.mubr.bf16.mxu0 0
      %5727 = vmatmul.mubr.bf16.gmra.mxu0 %v5692
      %v5728 = vpop.f32.mrf.mxu0
      %v5729 = vadd.f32 0.0, %v5728
      %v5730 = vpop.f32.mrf.mxu0
      %v5731 = vadd.f32 0.0, %v5730
      %v5732 = vpop.f32.mrf.mxu0
      %v5733 = vadd.f32 0.0, %v5732
      %v5734 = vpop.f32.mrf.mxu0
      %v5735 = vadd.f32 0.0, %v5734
      %5736 = vdwg.mxu0
      %5737 = vmatprep.subr.bf16.mxu0 0
      %5738 = vmatpush1.bf16.msra.mxu0 0
      %5739 = vmatprep.subr.bf16.mxu0 0
      %5740 = vmatpush1.bf16.msra.mxu0 0
      %5741 = vmatprep.subr.bf16.mxu0 0
      %5742 = vmatpush1.bf16.msra.mxu0 0
      %5743 = vmatprep.subr.bf16.mxu0 0
      %5744 = vmatpush1.bf16.msra.mxu0 0
      %5745 = vmatprep.subr.bf16.mxu0 0
      %5746 = vmatpush1.bf16.msra.mxu0 0
      %5747 = vmatprep.subr.bf16.mxu0 0
      %5748 = vmatpush1.bf16.msra.mxu0 0
      %5749 = vmatprep.subr.bf16.mxu0 0
      %5750 = vmatpush1.bf16.msra.mxu0 0
      %5751 = vmatprep.subr.bf16.mxu0 %v5686
      %5752 = vmatpush1.bf16.msra.mxu0 %v5685
      %5753 = vmatprep.subr.bf16.mxu0 0
      %5754 = vmatpush2.bf16.msra.mxu0 0
      %5755 = vmatprep.subr.bf16.mxu0 0
      %5756 = vmatpush2.bf16.msra.mxu0 0
      %5757 = vmatprep.subr.bf16.mxu0 0
      %5758 = vmatpush2.bf16.msra.mxu0 0
      %5759 = vmatprep.subr.bf16.mxu0 0
      %5760 = vmatpush2.bf16.msra.mxu0 0
      %5761 = vmatprep.subr.bf16.mxu0 0
      %5762 = vmatpush2.bf16.msra.mxu0 0
      %5763 = vmatprep.subr.bf16.mxu0 0
      %5764 = vmatpush2.bf16.msra.mxu0 0
      %5765 = vmatprep.subr.bf16.mxu0 0
      %5766 = vmatpush2.bf16.msra.mxu0 0
      %5767 = vmatprep.subr.bf16.mxu0 0
      %5768 = vmatpush2.bf16.msra.mxu0 0
      %5769 = vmatprep.mubr.bf16.mxu0 0
      %5770 = vmatmul.mubr.bf16.gmra.mxu0 %v5692
      %v5771 = vpop.f32.mrf.mxu0
      %v5772 = vadd.f32 0.0, %v5771
      %v5773 = vpop.f32.mrf.mxu0
      %v5774 = vadd.f32 0.0, %v5773
      %v5775 = vpop.f32.mrf.mxu0
      %v5776 = vadd.f32 0.0, %v5775
      %v5777 = vpop.f32.mrf.mxu0
      %v5778 = vadd.f32 0.0, %v5777
      %5779 = vdwg.mxu0
      %v5780 = vadd.f32 %v5619, %v5729
      %v5781 = vadd.f32 %v5621, %v5731
      %v5782 = vadd.f32 %v5662, %v5772
      %v5783 = vadd.f32 %v5664, %v5774
      %v5784 = vadd.f32 %v5623, %v5733
      %v5785 = vadd.f32 %v5625, %v5735
      %v5786 = vadd.f32 %v5666, %v5776
      %v5787 = vadd.f32 %v5668, %v5778
      %5788 = vrot.lane.b32.xlu0 %v5430, 80
      %v5789 = vpop.permute.xlu0 %5788
      %5790 = vrot.lane.b32.xlu0 %v5449, 78
      %v5791 = vpop.permute.xlu0 %5790
      %5792 = vrot.lane.b32.xlu0 %v5450, 78
      %v5793 = vpop.permute.xlu0 %5792
      %5794 = vrot.lane.b32.xlu0 %v5451, 78
      %v5795 = vpop.permute.xlu0 %5794
      %5796 = vrot.lane.b32.xlu0 %v5452, 78
      %v5797 = vpop.permute.xlu0 %5796
      %5798 = vrot.lane.b32.xlu0 %v5453, 78
      %v5799 = vpop.permute.xlu0 %5798
      %vm5800 = vcmask 637952
      %v5801 = vsel %vm5800, %v5791, %v5793
      %v5802 = vsel %vm5800, %v5793, %v5795
      %v5803 = vsel %vm5800, %v5795, %v5797
      %v5804 = vsel %vm5800, %v5797, %v5799
      %v5810 = vsel %vm416, %v5789, 0
      %5812 = vmatprep.subr.bf16.mxu0 0
      %5813 = vmatpush1.bf16.msra.mxu0 0
      %5814 = vmatprep.subr.bf16.mxu0 0
      %5815 = vmatpush1.bf16.msra.mxu0 0
      %5816 = vmatprep.subr.bf16.mxu0 0
      %5817 = vmatpush1.bf16.msra.mxu0 0
      %5818 = vmatprep.subr.bf16.mxu0 0
      %5819 = vmatpush1.bf16.msra.mxu0 0
      %5820 = vmatprep.subr.bf16.mxu0 0
      %5821 = vmatpush1.bf16.msra.mxu0 0
      %5822 = vmatprep.subr.bf16.mxu0 0
      %5823 = vmatpush1.bf16.msra.mxu0 0
      %5824 = vmatprep.subr.bf16.mxu0 0
      %5825 = vmatpush1.bf16.msra.mxu0 0
      %5826 = vmatprep.subr.bf16.mxu0 %v5802
      %5827 = vmatpush1.bf16.msra.mxu0 %v5801
      %5828 = vmatprep.subr.bf16.mxu0 0
      %5829 = vmatpush2.bf16.msra.mxu0 0
      %5830 = vmatprep.subr.bf16.mxu0 0
      %5831 = vmatpush2.bf16.msra.mxu0 0
      %5832 = vmatprep.subr.bf16.mxu0 0
      %5833 = vmatpush2.bf16.msra.mxu0 0
      %5834 = vmatprep.subr.bf16.mxu0 0
      %5835 = vmatpush2.bf16.msra.mxu0 0
      %5836 = vmatprep.subr.bf16.mxu0 0
      %5837 = vmatpush2.bf16.msra.mxu0 0
      %5838 = vmatprep.subr.bf16.mxu0 0
      %5839 = vmatpush2.bf16.msra.mxu0 0
      %5840 = vmatprep.subr.bf16.mxu0 0
      %5841 = vmatpush2.bf16.msra.mxu0 0
      %5842 = vmatprep.subr.bf16.mxu0 0
      %5843 = vmatpush2.bf16.msra.mxu0 0
      %5844 = vmatprep.mubr.bf16.mxu0 0
      %5845 = vmatmul.mubr.bf16.gmra.mxu0 %v5810
      %v5846 = vpop.f32.mrf.mxu0
      %v5847 = vadd.f32 0.0, %v5846
      %v5848 = vpop.f32.mrf.mxu0
      %v5849 = vadd.f32 0.0, %v5848
      %v5850 = vpop.f32.mrf.mxu0
      %v5851 = vadd.f32 0.0, %v5850
      %v5852 = vpop.f32.mrf.mxu0
      %v5853 = vadd.f32 0.0, %v5852
      %5854 = vdwg.mxu0
      %5855 = vmatprep.subr.bf16.mxu0 0
      %5856 = vmatpush1.bf16.msra.mxu0 0
      %5857 = vmatprep.subr.bf16.mxu0 0
      %5858 = vmatpush1.bf16.msra.mxu0 0
      %5859 = vmatprep.subr.bf16.mxu0 0
      %5860 = vmatpush1.bf16.msra.mxu0 0
      %5861 = vmatprep.subr.bf16.mxu0 0
      %5862 = vmatpush1.bf16.msra.mxu0 0
      %5863 = vmatprep.subr.bf16.mxu0 0
      %5864 = vmatpush1.bf16.msra.mxu0 0
      %5865 = vmatprep.subr.bf16.mxu0 0
      %5866 = vmatpush1.bf16.msra.mxu0 0
      %5867 = vmatprep.subr.bf16.mxu0 0
      %5868 = vmatpush1.bf16.msra.mxu0 0
      %5869 = vmatprep.subr.bf16.mxu0 %v5804
      %5870 = vmatpush1.bf16.msra.mxu0 %v5803
      %5871 = vmatprep.subr.bf16.mxu0 0
      %5872 = vmatpush2.bf16.msra.mxu0 0
      %5873 = vmatprep.subr.bf16.mxu0 0
      %5874 = vmatpush2.bf16.msra.mxu0 0
      %5875 = vmatprep.subr.bf16.mxu0 0
      %5876 = vmatpush2.bf16.msra.mxu0 0
      %5877 = vmatprep.subr.bf16.mxu0 0
      %5878 = vmatpush2.bf16.msra.mxu0 0
      %5879 = vmatprep.subr.bf16.mxu0 0
      %5880 = vmatpush2.bf16.msra.mxu0 0
      %5881 = vmatprep.subr.bf16.mxu0 0
      %5882 = vmatpush2.bf16.msra.mxu0 0
      %5883 = vmatprep.subr.bf16.mxu0 0
      %5884 = vmatpush2.bf16.msra.mxu0 0
      %5885 = vmatprep.subr.bf16.mxu0 0
      %5886 = vmatpush2.bf16.msra.mxu0 0
      %5887 = vmatprep.mubr.bf16.mxu0 0
      %5888 = vmatmul.mubr.bf16.gmra.mxu0 %v5810
      %v5889 = vpop.f32.mrf.mxu0
      %v5890 = vadd.f32 0.0, %v5889
      %v5891 = vpop.f32.mrf.mxu0
      %v5892 = vadd.f32 0.0, %v5891
      %v5893 = vpop.f32.mrf.mxu0
      %v5894 = vadd.f32 0.0, %v5893
      %v5895 = vpop.f32.mrf.mxu0
      %v5896 = vadd.f32 0.0, %v5895
      %5897 = vdwg.mxu0
      %v5898 = vadd.f32 %v5780, %v5847
      %v5899 = vadd.f32 %v5781, %v5849
      %v5900 = vadd.f32 %v5782, %v5890
      %v5901 = vadd.f32 %v5783, %v5892
      %v5902 = vadd.f32 %v5784, %v5851
      %v5903 = vadd.f32 %v5785, %v5853
      %v5904 = vadd.f32 %v5786, %v5894
      %v5905 = vadd.f32 %v5787, %v5896
      %5906 = vrot.lane.b32.xlu0 %v5430, 64
      %v5907 = vpop.permute.xlu0 %5906
      %5908 = vrot.lane.b32.xlu0 %v5449, 76
      %v5909 = vpop.permute.xlu0 %5908
      %5910 = vrot.lane.b32.xlu0 %v5450, 76
      %v5911 = vpop.permute.xlu0 %5910
      %5912 = vrot.lane.b32.xlu0 %v5451, 76
      %v5913 = vpop.permute.xlu0 %5912
      %5914 = vrot.lane.b32.xlu0 %v5452, 76
      %v5915 = vpop.permute.xlu0 %5914
      %5916 = vrot.lane.b32.xlu0 %v5453, 76
      %v5917 = vpop.permute.xlu0 %5916
      %vm5918 = vcmask 621568
      %v5919 = vsel %vm5918, %v5909, %v5911
      %v5920 = vsel %vm5918, %v5911, %v5913
      %v5921 = vsel %vm5918, %v5913, %v5915
      %v5922 = vsel %vm5918, %v5915, %v5917
      %v5928 = vsel %vm416, %v5907, 0
      %5930 = vmatprep.subr.bf16.mxu0 0
      %5931 = vmatpush1.bf16.msra.mxu0 0
      %5932 = vmatprep.subr.bf16.mxu0 0
      %5933 = vmatpush1.bf16.msra.mxu0 0
      %5934 = vmatprep.subr.bf16.mxu0 0
      %5935 = vmatpush1.bf16.msra.mxu0 0
      %5936 = vmatprep.subr.bf16.mxu0 0
      %5937 = vmatpush1.bf16.msra.mxu0 0
      %5938 = vmatprep.subr.bf16.mxu0 0
      %5939 = vmatpush1.bf16.msra.mxu0 0
      %5940 = vmatprep.subr.bf16.mxu0 0
      %5941 = vmatpush1.bf16.msra.mxu0 0
      %5942 = vmatprep.subr.bf16.mxu0 0
      %5943 = vmatpush1.bf16.msra.mxu0 0
      %5944 = vmatprep.subr.bf16.mxu0 %v5920
      %5945 = vmatpush1.bf16.msra.mxu0 %v5919
      %5946 = vmatprep.subr.bf16.mxu0 0
      %5947 = vmatpush2.bf16.msra.mxu0 0
      %5948 = vmatprep.subr.bf16.mxu0 0
      %5949 = vmatpush2.bf16.msra.mxu0 0
      %5950 = vmatprep.subr.bf16.mxu0 0
      %5951 = vmatpush2.bf16.msra.mxu0 0
      %5952 = vmatprep.subr.bf16.mxu0 0
      %5953 = vmatpush2.bf16.msra.mxu0 0
      %5954 = vmatprep.subr.bf16.mxu0 0
      %5955 = vmatpush2.bf16.msra.mxu0 0
      %5956 = vmatprep.subr.bf16.mxu0 0
      %5957 = vmatpush2.bf16.msra.mxu0 0
      %5958 = vmatprep.subr.bf16.mxu0 0
      %5959 = vmatpush2.bf16.msra.mxu0 0
      %5960 = vmatprep.subr.bf16.mxu0 0
      %5961 = vmatpush2.bf16.msra.mxu0 0
      %5962 = vmatprep.mubr.bf16.mxu0 0
      %5963 = vmatmul.mubr.bf16.gmra.mxu0 %v5928
      %v5964 = vpop.f32.mrf.mxu0
      %v5965 = vadd.f32 0.0, %v5964
      %v5966 = vpop.f32.mrf.mxu0
      %v5967 = vadd.f32 0.0, %v5966
      %v5968 = vpop.f32.mrf.mxu0
      %v5969 = vadd.f32 0.0, %v5968
      %v5970 = vpop.f32.mrf.mxu0
      %v5971 = vadd.f32 0.0, %v5970
      %5972 = vdwg.mxu0
      %5973 = vmatprep.subr.bf16.mxu0 0
      %5974 = vmatpush1.bf16.msra.mxu0 0
      %5975 = vmatprep.subr.bf16.mxu0 0
      %5976 = vmatpush1.bf16.msra.mxu0 0
      %5977 = vmatprep.subr.bf16.mxu0 0
      %5978 = vmatpush1.bf16.msra.mxu0 0
      %5979 = vmatprep.subr.bf16.mxu0 0
      %5980 = vmatpush1.bf16.msra.mxu0 0
      %5981 = vmatprep.subr.bf16.mxu0 0
      %5982 = vmatpush1.bf16.msra.mxu0 0
      %5983 = vmatprep.subr.bf16.mxu0 0
      %5984 = vmatpush1.bf16.msra.mxu0 0
      %5985 = vmatprep.subr.bf16.mxu0 0
      %5986 = vmatpush1.bf16.msra.mxu0 0
      %5987 = vmatprep.subr.bf16.mxu0 %v5922
      %5988 = vmatpush1.bf16.msra.mxu0 %v5921
      %5989 = vmatprep.subr.bf16.mxu0 0
      %5990 = vmatpush2.bf16.msra.mxu0 0
      %5991 = vmatprep.subr.bf16.mxu0 0
      %5992 = vmatpush2.bf16.msra.mxu0 0
      %5993 = vmatprep.subr.bf16.mxu0 0
      %5994 = vmatpush2.bf16.msra.mxu0 0
      %5995 = vmatprep.subr.bf16.mxu0 0
      %5996 = vmatpush2.bf16.msra.mxu0 0
      %5997 = vmatprep.subr.bf16.mxu0 0
      %5998 = vmatpush2.bf16.msra.mxu0 0
      %5999 = vmatprep.subr.bf16.mxu0 0
      %6000 = vmatpush2.bf16.msra.mxu0 0
      %6001 = vmatprep.subr.bf16.mxu0 0
      %6002 = vmatpush2.bf16.msra.mxu0 0
      %6003 = vmatprep.subr.bf16.mxu0 0
      %6004 = vmatpush2.bf16.msra.mxu0 0
      %6005 = vmatprep.mubr.bf16.mxu0 0
      %6006 = vmatmul.mubr.bf16.gmra.mxu0 %v5928
      %v6007 = vpop.f32.mrf.mxu0
      %v6008 = vadd.f32 0.0, %v6007
      %v6009 = vpop.f32.mrf.mxu0
      %v6010 = vadd.f32 0.0, %v6009
      %v6011 = vpop.f32.mrf.mxu0
      %v6012 = vadd.f32 0.0, %v6011
      %v6013 = vpop.f32.mrf.mxu0
      %v6014 = vadd.f32 0.0, %v6013
      %6015 = vdwg.mxu0
      %v6016 = vadd.f32 %v5898, %v5965
      %v6017 = vadd.f32 %v5899, %v5967
      %v6018 = vadd.f32 %v5900, %v6008
      %v6019 = vadd.f32 %v5901, %v6010
      %v6020 = vadd.f32 %v5902, %v5969
      %v6021 = vadd.f32 %v5903, %v5971
      %v6022 = vadd.f32 %v5904, %v6012
      %v6023 = vadd.f32 %v5905, %v6014
      %6024 = vrot.lane.b32.xlu0 %v5430, 48
      %v6025 = vpop.permute.xlu0 %6024
      %6026 = vrot.lane.b32.xlu0 %v5449, 44
      %v6027 = vpop.permute.xlu0 %6026
      %6028 = vrot.lane.b32.xlu0 %v5450, 44
      %v6029 = vpop.permute.xlu0 %6028
      %6030 = vrot.lane.b32.xlu0 %v5451, 44
      %v6031 = vpop.permute.xlu0 %6030
      %6032 = vrot.lane.b32.xlu0 %v5452, 44
      %v6033 = vpop.permute.xlu0 %6032
      %6034 = vrot.lane.b32.xlu0 %v5453, 44
      %v6035 = vpop.permute.xlu0 %6034
      %vm6036 = vcmask 359424
      %v6037 = vsel %vm6036, %v6027, %v6029
      %v6038 = vsel %vm6036, %v6029, %v6031
      %v6039 = vsel %vm6036, %v6031, %v6033
      %v6040 = vsel %vm6036, %v6033, %v6035
      %v6046 = vsel %vm416, %v6025, 0
      %6048 = vmatprep.subr.bf16.mxu0 0
      %6049 = vmatpush1.bf16.msra.mxu0 0
      %6050 = vmatprep.subr.bf16.mxu0 0
      %6051 = vmatpush1.bf16.msra.mxu0 0
      %6052 = vmatprep.subr.bf16.mxu0 0
      %6053 = vmatpush1.bf16.msra.mxu0 0
      %6054 = vmatprep.subr.bf16.mxu0 0
      %6055 = vmatpush1.bf16.msra.mxu0 0
      %6056 = vmatprep.subr.bf16.mxu0 0
      %6057 = vmatpush1.bf16.msra.mxu0 0
      %6058 = vmatprep.subr.bf16.mxu0 0
      %6059 = vmatpush1.bf16.msra.mxu0 0
      %6060 = vmatprep.subr.bf16.mxu0 0
      %6061 = vmatpush1.bf16.msra.mxu0 0
      %6062 = vmatprep.subr.bf16.mxu0 %v6038
      %6063 = vmatpush1.bf16.msra.mxu0 %v6037
      %6064 = vmatprep.subr.bf16.mxu0 0
      %6065 = vmatpush2.bf16.msra.mxu0 0
      %6066 = vmatprep.subr.bf16.mxu0 0
      %6067 = vmatpush2.bf16.msra.mxu0 0
      %6068 = vmatprep.subr.bf16.mxu0 0
      %6069 = vmatpush2.bf16.msra.mxu0 0
      %6070 = vmatprep.subr.bf16.mxu0 0
      %6071 = vmatpush2.bf16.msra.mxu0 0
      %6072 = vmatprep.subr.bf16.mxu0 0
      %6073 = vmatpush2.bf16.msra.mxu0 0
      %6074 = vmatprep.subr.bf16.mxu0 0
      %6075 = vmatpush2.bf16.msra.mxu0 0
      %6076 = vmatprep.subr.bf16.mxu0 0
      %6077 = vmatpush2.bf16.msra.mxu0 0
      %6078 = vmatprep.subr.bf16.mxu0 0
      %6079 = vmatpush2.bf16.msra.mxu0 0
      %6080 = vmatprep.mubr.bf16.mxu0 0
      %6081 = vmatmul.mubr.bf16.gmra.mxu0 %v6046
      %v6082 = vpop.f32.mrf.mxu0
      %v6083 = vadd.f32 0.0, %v6082
      %v6084 = vpop.f32.mrf.mxu0
      %v6085 = vadd.f32 0.0, %v6084
      %v6086 = vpop.f32.mrf.mxu0
      %v6087 = vadd.f32 0.0, %v6086
      %v6088 = vpop.f32.mrf.mxu0
      %v6089 = vadd.f32 0.0, %v6088
      %6090 = vdwg.mxu0
      %6091 = vmatprep.subr.bf16.mxu0 0
      %6092 = vmatpush1.bf16.msra.mxu0 0
      %6093 = vmatprep.subr.bf16.mxu0 0
      %6094 = vmatpush1.bf16.msra.mxu0 0
      %6095 = vmatprep.subr.bf16.mxu0 0
      %6096 = vmatpush1.bf16.msra.mxu0 0
      %6097 = vmatprep.subr.bf16.mxu0 0
      %6098 = vmatpush1.bf16.msra.mxu0 0
      %6099 = vmatprep.subr.bf16.mxu0 0
      %6100 = vmatpush1.bf16.msra.mxu0 0
      %6101 = vmatprep.subr.bf16.mxu0 0
      %6102 = vmatpush1.bf16.msra.mxu0 0
      %6103 = vmatprep.subr.bf16.mxu0 0
      %6104 = vmatpush1.bf16.msra.mxu0 0
      %6105 = vmatprep.subr.bf16.mxu0 %v6040
      %6106 = vmatpush1.bf16.msra.mxu0 %v6039
      %6107 = vmatprep.subr.bf16.mxu0 0
      %6108 = vmatpush2.bf16.msra.mxu0 0
      %6109 = vmatprep.subr.bf16.mxu0 0
      %6110 = vmatpush2.bf16.msra.mxu0 0
      %6111 = vmatprep.subr.bf16.mxu0 0
      %6112 = vmatpush2.bf16.msra.mxu0 0
      %6113 = vmatprep.subr.bf16.mxu0 0
      %6114 = vmatpush2.bf16.msra.mxu0 0
      %6115 = vmatprep.subr.bf16.mxu0 0
      %6116 = vmatpush2.bf16.msra.mxu0 0
      %6117 = vmatprep.subr.bf16.mxu0 0
      %6118 = vmatpush2.bf16.msra.mxu0 0
      %6119 = vmatprep.subr.bf16.mxu0 0
      %6120 = vmatpush2.bf16.msra.mxu0 0
      %6121 = vmatprep.subr.bf16.mxu0 0
      %6122 = vmatpush2.bf16.msra.mxu0 0
      %6123 = vmatprep.mubr.bf16.mxu0 0
      %6124 = vmatmul.mubr.bf16.gmra.mxu0 %v6046
      %v6125 = vpop.f32.mrf.mxu0
      %v6126 = vadd.f32 0.0, %v6125
      %v6127 = vpop.f32.mrf.mxu0
      %v6128 = vadd.f32 0.0, %v6127
      %v6129 = vpop.f32.mrf.mxu0
      %v6130 = vadd.f32 0.0, %v6129
      %v6131 = vpop.f32.mrf.mxu0
      %v6132 = vadd.f32 0.0, %v6131
      %6133 = vdwg.mxu0
      %v6134 = vadd.f32 %v6016, %v6083
      %v6135 = vadd.f32 %v6017, %v6085
      %v6136 = vadd.f32 %v6018, %v6126
      %v6137 = vadd.f32 %v6019, %v6128
      %v6138 = vadd.f32 %v6020, %v6087
      %v6139 = vadd.f32 %v6021, %v6089
      %v6140 = vadd.f32 %v6022, %v6130
      %v6141 = vadd.f32 %v6023, %v6132
      %6142 = vrot.lane.b32.xlu0 %v5430, 32
      %v6143 = vpop.permute.xlu0 %6142
      %6144 = vrot.lane.b32.xlu0 %v5449, 42
      %v6145 = vpop.permute.xlu0 %6144
      %6146 = vrot.lane.b32.xlu0 %v5450, 42
      %v6147 = vpop.permute.xlu0 %6146
      %6148 = vrot.lane.b32.xlu0 %v5451, 42
      %v6149 = vpop.permute.xlu0 %6148
      %6150 = vrot.lane.b32.xlu0 %v5452, 42
      %v6151 = vpop.permute.xlu0 %6150
      %6152 = vrot.lane.b32.xlu0 %v5453, 42
      %v6153 = vpop.permute.xlu0 %6152
      %v6154 = vsel %vm2465, %v6145, %v6147
      %v6155 = vsel %vm2465, %v6147, %v6149
      %v6156 = vsel %vm2465, %v6149, %v6151
      %v6157 = vsel %vm2465, %v6151, %v6153
      %v6163 = vsel %vm416, %v6143, 0
      %6165 = vmatprep.subr.bf16.mxu0 0
      %6166 = vmatpush1.bf16.msra.mxu0 0
      %6167 = vmatprep.subr.bf16.mxu0 0
      %6168 = vmatpush1.bf16.msra.mxu0 0
      %6169 = vmatprep.subr.bf16.mxu0 0
      %6170 = vmatpush1.bf16.msra.mxu0 0
      %6171 = vmatprep.subr.bf16.mxu0 0
      %6172 = vmatpush1.bf16.msra.mxu0 0
      %6173 = vmatprep.subr.bf16.mxu0 0
      %6174 = vmatpush1.bf16.msra.mxu0 0
      %6175 = vmatprep.subr.bf16.mxu0 0
      %6176 = vmatpush1.bf16.msra.mxu0 0
      %6177 = vmatprep.subr.bf16.mxu0 0
      %6178 = vmatpush1.bf16.msra.mxu0 0
      %6179 = vmatprep.subr.bf16.mxu0 %v6155
      %6180 = vmatpush1.bf16.msra.mxu0 %v6154
      %6181 = vmatprep.subr.bf16.mxu0 0
      %6182 = vmatpush2.bf16.msra.mxu0 0
      %6183 = vmatprep.subr.bf16.mxu0 0
      %6184 = vmatpush2.bf16.msra.mxu0 0
      %6185 = vmatprep.subr.bf16.mxu0 0
      %6186 = vmatpush2.bf16.msra.mxu0 0
      %6187 = vmatprep.subr.bf16.mxu0 0
      %6188 = vmatpush2.bf16.msra.mxu0 0
      %6189 = vmatprep.subr.bf16.mxu0 0
      %6190 = vmatpush2.bf16.msra.mxu0 0
      %6191 = vmatprep.subr.bf16.mxu0 0
      %6192 = vmatpush2.bf16.msra.mxu0 0
      %6193 = vmatprep.subr.bf16.mxu0 0
      %6194 = vmatpush2.bf16.msra.mxu0 0
      %6195 = vmatprep.subr.bf16.mxu0 0
      %6196 = vmatpush2.bf16.msra.mxu0 0
      %6197 = vmatprep.mubr.bf16.mxu0 0
      %6198 = vmatmul.mubr.bf16.gmra.mxu0 %v6163
      %v6199 = vpop.f32.mrf.mxu0
      %v6200 = vadd.f32 0.0, %v6199
      %v6201 = vpop.f32.mrf.mxu0
      %v6202 = vadd.f32 0.0, %v6201
      %v6203 = vpop.f32.mrf.mxu0
      %v6204 = vadd.f32 0.0, %v6203
      %v6205 = vpop.f32.mrf.mxu0
      %v6206 = vadd.f32 0.0, %v6205
      %6207 = vdwg.mxu0
      %6208 = vmatprep.subr.bf16.mxu0 0
      %6209 = vmatpush1.bf16.msra.mxu0 0
      %6210 = vmatprep.subr.bf16.mxu0 0
      %6211 = vmatpush1.bf16.msra.mxu0 0
      %6212 = vmatprep.subr.bf16.mxu0 0
      %6213 = vmatpush1.bf16.msra.mxu0 0
      %6214 = vmatprep.subr.bf16.mxu0 0
      %6215 = vmatpush1.bf16.msra.mxu0 0
      %6216 = vmatprep.subr.bf16.mxu0 0
      %6217 = vmatpush1.bf16.msra.mxu0 0
      %6218 = vmatprep.subr.bf16.mxu0 0
      %6219 = vmatpush1.bf16.msra.mxu0 0
      %6220 = vmatprep.subr.bf16.mxu0 0
      %6221 = vmatpush1.bf16.msra.mxu0 0
      %6222 = vmatprep.subr.bf16.mxu0 %v6157
      %6223 = vmatpush1.bf16.msra.mxu0 %v6156
      %6224 = vmatprep.subr.bf16.mxu0 0
      %6225 = vmatpush2.bf16.msra.mxu0 0
      %6226 = vmatprep.subr.bf16.mxu0 0
      %6227 = vmatpush2.bf16.msra.mxu0 0
      %6228 = vmatprep.subr.bf16.mxu0 0
      %6229 = vmatpush2.bf16.msra.mxu0 0
      %6230 = vmatprep.subr.bf16.mxu0 0
      %6231 = vmatpush2.bf16.msra.mxu0 0
      %6232 = vmatprep.subr.bf16.mxu0 0
      %6233 = vmatpush2.bf16.msra.mxu0 0
      %6234 = vmatprep.subr.bf16.mxu0 0
      %6235 = vmatpush2.bf16.msra.mxu0 0
      %6236 = vmatprep.subr.bf16.mxu0 0
      %6237 = vmatpush2.bf16.msra.mxu0 0
      %6238 = vmatprep.subr.bf16.mxu0 0
      %6239 = vmatpush2.bf16.msra.mxu0 0
      %6240 = vmatprep.mubr.bf16.mxu0 0
      %6241 = vmatmul.mubr.bf16.gmra.mxu0 %v6163
      %v6242 = vpop.f32.mrf.mxu0
      %v6243 = vadd.f32 0.0, %v6242
      %v6244 = vpop.f32.mrf.mxu0
      %v6245 = vadd.f32 0.0, %v6244
      %v6246 = vpop.f32.mrf.mxu0
      %v6247 = vadd.f32 0.0, %v6246
      %v6248 = vpop.f32.mrf.mxu0
      %v6249 = vadd.f32 0.0, %v6248
      %6250 = vdwg.mxu0
      %v6251 = vadd.f32 %v6134, %v6200
      %v6252 = vadd.f32 %v6135, %v6202
      %v6253 = vadd.f32 %v6136, %v6243
      %v6254 = vadd.f32 %v6137, %v6245
      %v6255 = vadd.f32 %v6138, %v6204
      %v6256 = vadd.f32 %v6139, %v6206
      %v6257 = vadd.f32 %v6140, %v6247
      %v6258 = vadd.f32 %v6141, %v6249
      %6259 = vrot.lane.b32.xlu0 %v5430, 16
      %v6260 = vpop.permute.xlu0 %6259
      %6261 = vrot.lane.b32.xlu0 %v5449, 40
      %v6262 = vpop.permute.xlu0 %6261
      %6263 = vrot.lane.b32.xlu0 %v5450, 40
      %v6264 = vpop.permute.xlu0 %6263
      %6265 = vrot.lane.b32.xlu0 %v5451, 40
      %v6266 = vpop.permute.xlu0 %6265
      %6267 = vrot.lane.b32.xlu0 %v5452, 40
      %v6268 = vpop.permute.xlu0 %6267
      %6269 = vrot.lane.b32.xlu0 %v5453, 40
      %v6270 = vpop.permute.xlu0 %6269
      %v6271 = vsel %vm2575, %v6262, %v6264
      %v6272 = vsel %vm2575, %v6264, %v6266
      %v6273 = vsel %vm2575, %v6266, %v6268
      %v6274 = vsel %vm2575, %v6268, %v6270
      %v6280 = vsel %vm416, %v6260, 0
      %6282 = vmatprep.subr.bf16.mxu0 0
      %6283 = vmatpush1.bf16.msra.mxu0 0
      %6284 = vmatprep.subr.bf16.mxu0 0
      %6285 = vmatpush1.bf16.msra.mxu0 0
      %6286 = vmatprep.subr.bf16.mxu0 0
      %6287 = vmatpush1.bf16.msra.mxu0 0
      %6288 = vmatprep.subr.bf16.mxu0 0
      %6289 = vmatpush1.bf16.msra.mxu0 0
      %6290 = vmatprep.subr.bf16.mxu0 0
      %6291 = vmatpush1.bf16.msra.mxu0 0
      %6292 = vmatprep.subr.bf16.mxu0 0
      %6293 = vmatpush1.bf16.msra.mxu0 0
      %6294 = vmatprep.subr.bf16.mxu0 0
      %6295 = vmatpush1.bf16.msra.mxu0 0
      %6296 = vmatprep.subr.bf16.mxu0 %v6272
      %6297 = vmatpush1.bf16.msra.mxu0 %v6271
      %6298 = vmatprep.subr.bf16.mxu0 0
      %6299 = vmatpush2.bf16.msra.mxu0 0
      %6300 = vmatprep.subr.bf16.mxu0 0
      %6301 = vmatpush2.bf16.msra.mxu0 0
      %6302 = vmatprep.subr.bf16.mxu0 0
      %6303 = vmatpush2.bf16.msra.mxu0 0
      %6304 = vmatprep.subr.bf16.mxu0 0
      %6305 = vmatpush2.bf16.msra.mxu0 0
      %6306 = vmatprep.subr.bf16.mxu0 0
      %6307 = vmatpush2.bf16.msra.mxu0 0
      %6308 = vmatprep.subr.bf16.mxu0 0
      %6309 = vmatpush2.bf16.msra.mxu0 0
      %6310 = vmatprep.subr.bf16.mxu0 0
      %6311 = vmatpush2.bf16.msra.mxu0 0
      %6312 = vmatprep.subr.bf16.mxu0 0
      %6313 = vmatpush2.bf16.msra.mxu0 0
      %6314 = vmatprep.mubr.bf16.mxu0 0
      %6315 = vmatmul.mubr.bf16.gmra.mxu0 %v6280
      %v6316 = vpop.f32.mrf.mxu0
      %v6317 = vadd.f32 0.0, %v6316
      %v6318 = vpop.f32.mrf.mxu0
      %v6319 = vadd.f32 0.0, %v6318
      %v6320 = vpop.f32.mrf.mxu0
      %v6321 = vadd.f32 0.0, %v6320
      %v6322 = vpop.f32.mrf.mxu0
      %v6323 = vadd.f32 0.0, %v6322
      %6324 = vdwg.mxu0
      %6325 = vmatprep.subr.bf16.mxu0 0
      %6326 = vmatpush1.bf16.msra.mxu0 0
      %6327 = vmatprep.subr.bf16.mxu0 0
      %6328 = vmatpush1.bf16.msra.mxu0 0
      %6329 = vmatprep.subr.bf16.mxu0 0
      %6330 = vmatpush1.bf16.msra.mxu0 0
      %6331 = vmatprep.subr.bf16.mxu0 0
      %6332 = vmatpush1.bf16.msra.mxu0 0
      %6333 = vmatprep.subr.bf16.mxu0 0
      %6334 = vmatpush1.bf16.msra.mxu0 0
      %6335 = vmatprep.subr.bf16.mxu0 0
      %6336 = vmatpush1.bf16.msra.mxu0 0
      %6337 = vmatprep.subr.bf16.mxu0 0
      %6338 = vmatpush1.bf16.msra.mxu0 0
      %6339 = vmatprep.subr.bf16.mxu0 %v6274
      %6340 = vmatpush1.bf16.msra.mxu0 %v6273
      %6341 = vmatprep.subr.bf16.mxu0 0
      %6342 = vmatpush2.bf16.msra.mxu0 0
      %6343 = vmatprep.subr.bf16.mxu0 0
      %6344 = vmatpush2.bf16.msra.mxu0 0
      %6345 = vmatprep.subr.bf16.mxu0 0
      %6346 = vmatpush2.bf16.msra.mxu0 0
      %6347 = vmatprep.subr.bf16.mxu0 0
      %6348 = vmatpush2.bf16.msra.mxu0 0
      %6349 = vmatprep.subr.bf16.mxu0 0
      %6350 = vmatpush2.bf16.msra.mxu0 0
      %6351 = vmatprep.subr.bf16.mxu0 0
      %6352 = vmatpush2.bf16.msra.mxu0 0
      %6353 = vmatprep.subr.bf16.mxu0 0
      %6354 = vmatpush2.bf16.msra.mxu0 0
      %6355 = vmatprep.subr.bf16.mxu0 0
      %6356 = vmatpush2.bf16.msra.mxu0 0
      %6357 = vmatprep.mubr.bf16.mxu0 0
      %6358 = vmatmul.mubr.bf16.gmra.mxu0 %v6280
      %v6359 = vpop.f32.mrf.mxu0
      %v6360 = vadd.f32 0.0, %v6359
      %v6361 = vpop.f32.mrf.mxu0
      %v6362 = vadd.f32 0.0, %v6361
      %v6363 = vpop.f32.mrf.mxu0
      %v6364 = vadd.f32 0.0, %v6363
      %v6365 = vpop.f32.mrf.mxu0
      %v6366 = vadd.f32 0.0, %v6365
      %6367 = vdwg.mxu0
      %v6368 = vadd.f32 %v6251, %v6317
      %v6369 = vadd.f32 %v6252, %v6319
      %v6370 = vadd.f32 %v6253, %v6360
      %v6371 = vadd.f32 %v6254, %v6362
      %v6372 = vadd.f32 %v6255, %v6321
      %v6373 = vadd.f32 %v6256, %v6323
      %v6374 = vadd.f32 %v6257, %v6364
      %v6375 = vadd.f32 %v6258, %v6366
      %v6376 = vunpack.c.h.b16 %v5416
      %v6377 = vunpack.c.h.b16 %v5418
      %v6378 = vpack.c.b16 %v6377, %v6376
      %6379 = vrot.lane.b32.xlu0 %v5449, 38
      %v6380 = vpop.permute.xlu0 %6379
      %6381 = vrot.lane.b32.xlu0 %v5450, 38
      %v6382 = vpop.permute.xlu0 %6381
      %6383 = vrot.lane.b32.xlu0 %v5451, 38
      %v6384 = vpop.permute.xlu0 %6383
      %6385 = vrot.lane.b32.xlu0 %v5452, 38
      %v6386 = vpop.permute.xlu0 %6385
      %6387 = vrot.lane.b32.xlu0 %v5453, 38
      %v6388 = vpop.permute.xlu0 %6387
      %v6389 = vsel %vm2811, %v6380, %v6382
      %v6390 = vsel %vm2811, %v6382, %v6384
      %v6391 = vsel %vm2811, %v6384, %v6386
      %v6392 = vsel %vm2811, %v6386, %v6388
      %v6398 = vsel %vm416, %v6378, 0
      %6400 = vmatprep.subr.bf16.mxu0 0
      %6401 = vmatpush1.bf16.msra.mxu0 0
      %6402 = vmatprep.subr.bf16.mxu0 0
      %6403 = vmatpush1.bf16.msra.mxu0 0
      %6404 = vmatprep.subr.bf16.mxu0 0
      %6405 = vmatpush1.bf16.msra.mxu0 0
      %6406 = vmatprep.subr.bf16.mxu0 0
      %6407 = vmatpush1.bf16.msra.mxu0 0
      %6408 = vmatprep.subr.bf16.mxu0 0
      %6409 = vmatpush1.bf16.msra.mxu0 0
      %6410 = vmatprep.subr.bf16.mxu0 0
      %6411 = vmatpush1.bf16.msra.mxu0 0
      %6412 = vmatprep.subr.bf16.mxu0 0
      %6413 = vmatpush1.bf16.msra.mxu0 0
      %6414 = vmatprep.subr.bf16.mxu0 %v6390
      %6415 = vmatpush1.bf16.msra.mxu0 %v6389
      %6416 = vmatprep.subr.bf16.mxu0 0
      %6417 = vmatpush2.bf16.msra.mxu0 0
      %6418 = vmatprep.subr.bf16.mxu0 0
      %6419 = vmatpush2.bf16.msra.mxu0 0
      %6420 = vmatprep.subr.bf16.mxu0 0
      %6421 = vmatpush2.bf16.msra.mxu0 0
      %6422 = vmatprep.subr.bf16.mxu0 0
      %6423 = vmatpush2.bf16.msra.mxu0 0
      %6424 = vmatprep.subr.bf16.mxu0 0
      %6425 = vmatpush2.bf16.msra.mxu0 0
      %6426 = vmatprep.subr.bf16.mxu0 0
      %6427 = vmatpush2.bf16.msra.mxu0 0
      %6428 = vmatprep.subr.bf16.mxu0 0
      %6429 = vmatpush2.bf16.msra.mxu0 0
      %6430 = vmatprep.subr.bf16.mxu0 0
      %6431 = vmatpush2.bf16.msra.mxu0 0
      %6432 = vmatprep.mubr.bf16.mxu0 0
      %6433 = vmatmul.mubr.bf16.gmra.mxu0 %v6398
      %v6434 = vpop.f32.mrf.mxu0
      %v6435 = vadd.f32 0.0, %v6434
      %v6436 = vpop.f32.mrf.mxu0
      %v6437 = vadd.f32 0.0, %v6436
      %v6438 = vpop.f32.mrf.mxu0
      %v6439 = vadd.f32 0.0, %v6438
      %v6440 = vpop.f32.mrf.mxu0
      %v6441 = vadd.f32 0.0, %v6440
      %6442 = vdwg.mxu0
      %6443 = vmatprep.subr.bf16.mxu0 0
      %6444 = vmatpush1.bf16.msra.mxu0 0
      %6445 = vmatprep.subr.bf16.mxu0 0
      %6446 = vmatpush1.bf16.msra.mxu0 0
      %6447 = vmatprep.subr.bf16.mxu0 0
      %6448 = vmatpush1.bf16.msra.mxu0 0
      %6449 = vmatprep.subr.bf16.mxu0 0
      %6450 = vmatpush1.bf16.msra.mxu0 0
      %6451 = vmatprep.subr.bf16.mxu0 0
      %6452 = vmatpush1.bf16.msra.mxu0 0
      %6453 = vmatprep.subr.bf16.mxu0 0
      %6454 = vmatpush1.bf16.msra.mxu0 0
      %6455 = vmatprep.subr.bf16.mxu0 0
      %6456 = vmatpush1.bf16.msra.mxu0 0
      %6457 = vmatprep.subr.bf16.mxu0 %v6392
      %6458 = vmatpush1.bf16.msra.mxu0 %v6391
      %6459 = vmatprep.subr.bf16.mxu0 0
      %6460 = vmatpush2.bf16.msra.mxu0 0
      %6461 = vmatprep.subr.bf16.mxu0 0
      %6462 = vmatpush2.bf16.msra.mxu0 0
      %6463 = vmatprep.subr.bf16.mxu0 0
      %6464 = vmatpush2.bf16.msra.mxu0 0
      %6465 = vmatprep.subr.bf16.mxu0 0
      %6466 = vmatpush2.bf16.msra.mxu0 0
      %6467 = vmatprep.subr.bf16.mxu0 0
      %6468 = vmatpush2.bf16.msra.mxu0 0
      %6469 = vmatprep.subr.bf16.mxu0 0
      %6470 = vmatpush2.bf16.msra.mxu0 0
      %6471 = vmatprep.subr.bf16.mxu0 0
      %6472 = vmatpush2.bf16.msra.mxu0 0
      %6473 = vmatprep.subr.bf16.mxu0 0
      %6474 = vmatpush2.bf16.msra.mxu0 0
      %6475 = vmatprep.mubr.bf16.mxu0 0
      %6476 = vmatmul.mubr.bf16.gmra.mxu0 %v6398
      %v6477 = vpop.f32.mrf.mxu0
      %v6478 = vadd.f32 0.0, %v6477
      %v6479 = vpop.f32.mrf.mxu0
      %v6480 = vadd.f32 0.0, %v6479
      %v6481 = vpop.f32.mrf.mxu0
      %v6482 = vadd.f32 0.0, %v6481
      %v6483 = vpop.f32.mrf.mxu0
      %v6484 = vadd.f32 0.0, %v6483
      %6485 = vdwg.mxu0
      %v6486 = vadd.f32 %v6368, %v6435
      %v6487 = vadd.f32 %v6369, %v6437
      %v6488 = vadd.f32 %v6370, %v6478
      %v6489 = vadd.f32 %v6371, %v6480
      %v6490 = vadd.f32 %v6372, %v6439
      %v6491 = vadd.f32 %v6373, %v6441
      %v6492 = vadd.f32 %v6374, %v6482
      %v6493 = vadd.f32 %v6375, %v6484
      %6494 = vrot.lane.b32.xlu0 %v6378, 112
      %v6495 = vpop.permute.xlu0 %6494
      %6496 = vrot.lane.b32.xlu0 %v5449, 36
      %v6497 = vpop.permute.xlu0 %6496
      %6498 = vrot.lane.b32.xlu0 %v5450, 36
      %v6499 = vpop.permute.xlu0 %6498
      %6500 = vrot.lane.b32.xlu0 %v5451, 36
      %v6501 = vpop.permute.xlu0 %6500
      %6502 = vrot.lane.b32.xlu0 %v5452, 36
      %v6503 = vpop.permute.xlu0 %6502
      %6504 = vrot.lane.b32.xlu0 %v5453, 36
      %v6505 = vpop.permute.xlu0 %6504
      %vm6506 = vcmask 293888
      %v6507 = vsel %vm6506, %v6497, %v6499
      %v6508 = vsel %vm6506, %v6499, %v6501
      %v6509 = vsel %vm6506, %v6501, %v6503
      %v6510 = vsel %vm6506, %v6503, %v6505
      %v6516 = vsel %vm416, %v6495, 0
      %6518 = vmatprep.subr.bf16.mxu0 0
      %6519 = vmatpush1.bf16.msra.mxu0 0
      %6520 = vmatprep.subr.bf16.mxu0 0
      %6521 = vmatpush1.bf16.msra.mxu0 0
      %6522 = vmatprep.subr.bf16.mxu0 0
      %6523 = vmatpush1.bf16.msra.mxu0 0
      %6524 = vmatprep.subr.bf16.mxu0 0
      %6525 = vmatpush1.bf16.msra.mxu0 0
      %6526 = vmatprep.subr.bf16.mxu0 0
      %6527 = vmatpush1.bf16.msra.mxu0 0
      %6528 = vmatprep.subr.bf16.mxu0 0
      %6529 = vmatpush1.bf16.msra.mxu0 0
      %6530 = vmatprep.subr.bf16.mxu0 0
      %6531 = vmatpush1.bf16.msra.mxu0 0
      %6532 = vmatprep.subr.bf16.mxu0 %v6508
      %6533 = vmatpush1.bf16.msra.mxu0 %v6507
      %6534 = vmatprep.subr.bf16.mxu0 0
      %6535 = vmatpush2.bf16.msra.mxu0 0
      %6536 = vmatprep.subr.bf16.mxu0 0
      %6537 = vmatpush2.bf16.msra.mxu0 0
      %6538 = vmatprep.subr.bf16.mxu0 0
      %6539 = vmatpush2.bf16.msra.mxu0 0
      %6540 = vmatprep.subr.bf16.mxu0 0
      %6541 = vmatpush2.bf16.msra.mxu0 0
      %6542 = vmatprep.subr.bf16.mxu0 0
      %6543 = vmatpush2.bf16.msra.mxu0 0
      %6544 = vmatprep.subr.bf16.mxu0 0
      %6545 = vmatpush2.bf16.msra.mxu0 0
      %6546 = vmatprep.subr.bf16.mxu0 0
      %6547 = vmatpush2.bf16.msra.mxu0 0
      %6548 = vmatprep.subr.bf16.mxu0 0
      %6549 = vmatpush2.bf16.msra.mxu0 0
      %6550 = vmatprep.mubr.bf16.mxu0 0
      %6551 = vmatmul.mubr.bf16.gmra.mxu0 %v6516
      %v6552 = vpop.f32.mrf.mxu0
      %v6553 = vadd.f32 0.0, %v6552
      %v6554 = vpop.f32.mrf.mxu0
      %v6555 = vadd.f32 0.0, %v6554
      %v6556 = vpop.f32.mrf.mxu0
      %v6557 = vadd.f32 0.0, %v6556
      %v6558 = vpop.f32.mrf.mxu0
      %v6559 = vadd.f32 0.0, %v6558
      %6560 = vdwg.mxu0
      %6561 = vmatprep.subr.bf16.mxu0 0
      %6562 = vmatpush1.bf16.msra.mxu0 0
      %6563 = vmatprep.subr.bf16.mxu0 0
      %6564 = vmatpush1.bf16.msra.mxu0 0
      %6565 = vmatprep.subr.bf16.mxu0 0
      %6566 = vmatpush1.bf16.msra.mxu0 0
      %6567 = vmatprep.subr.bf16.mxu0 0
      %6568 = vmatpush1.bf16.msra.mxu0 0
      %6569 = vmatprep.subr.bf16.mxu0 0
      %6570 = vmatpush1.bf16.msra.mxu0 0
      %6571 = vmatprep.subr.bf16.mxu0 0
      %6572 = vmatpush1.bf16.msra.mxu0 0
      %6573 = vmatprep.subr.bf16.mxu0 0
      %6574 = vmatpush1.bf16.msra.mxu0 0
      %6575 = vmatprep.subr.bf16.mxu0 %v6510
      %6576 = vmatpush1.bf16.msra.mxu0 %v6509
      %6577 = vmatprep.subr.bf16.mxu0 0
      %6578 = vmatpush2.bf16.msra.mxu0 0
      %6579 = vmatprep.subr.bf16.mxu0 0
      %6580 = vmatpush2.bf16.msra.mxu0 0
      %6581 = vmatprep.subr.bf16.mxu0 0
      %6582 = vmatpush2.bf16.msra.mxu0 0
      %6583 = vmatprep.subr.bf16.mxu0 0
      %6584 = vmatpush2.bf16.msra.mxu0 0
      %6585 = vmatprep.subr.bf16.mxu0 0
      %6586 = vmatpush2.bf16.msra.mxu0 0
      %6587 = vmatprep.subr.bf16.mxu0 0
      %6588 = vmatpush2.bf16.msra.mxu0 0
      %6589 = vmatprep.subr.bf16.mxu0 0
      %6590 = vmatpush2.bf16.msra.mxu0 0
      %6591 = vmatprep.subr.bf16.mxu0 0
      %6592 = vmatpush2.bf16.msra.mxu0 0
      %6593 = vmatprep.mubr.bf16.mxu0 0
      %6594 = vmatmul.mubr.bf16.gmra.mxu0 %v6516
      %v6595 = vpop.f32.mrf.mxu0
      %v6596 = vadd.f32 0.0, %v6595
      %v6597 = vpop.f32.mrf.mxu0
      %v6598 = vadd.f32 0.0, %v6597
      %v6599 = vpop.f32.mrf.mxu0
      %v6600 = vadd.f32 0.0, %v6599
      %v6601 = vpop.f32.mrf.mxu0
      %v6602 = vadd.f32 0.0, %v6601
      %6603 = vdwg.mxu0
      %v6604 = vadd.f32 %v6486, %v6553
      %v6605 = vadd.f32 %v6487, %v6555
      %v6606 = vadd.f32 %v6488, %v6596
      %v6607 = vadd.f32 %v6489, %v6598
      %v6608 = vadd.f32 %v6490, %v6557
      %v6609 = vadd.f32 %v6491, %v6559
      %v6610 = vadd.f32 %v6492, %v6600
      %v6611 = vadd.f32 %v6493, %v6602
      %6612 = vrot.lane.b32.xlu0 %v6378, 96
      %v6613 = vpop.permute.xlu0 %6612
      %6614 = vrot.lane.b32.xlu0 %v5449, 4
      %v6615 = vpop.permute.xlu0 %6614
      %6616 = vrot.lane.b32.xlu0 %v5450, 4
      %v6617 = vpop.permute.xlu0 %6616
      %6618 = vrot.lane.b32.xlu0 %v5451, 4
      %v6619 = vpop.permute.xlu0 %6618
      %6620 = vrot.lane.b32.xlu0 %v5452, 4
      %v6621 = vpop.permute.xlu0 %6620
      %6622 = vrot.lane.b32.xlu0 %v5453, 4
      %v6623 = vpop.permute.xlu0 %6622
      %vm6624 = vcmask 31744
      %v6625 = vsel %vm6624, %v6615, %v6617
      %v6626 = vsel %vm6624, %v6617, %v6619
      %v6627 = vsel %vm6624, %v6619, %v6621
      %v6628 = vsel %vm6624, %v6621, %v6623
      %v6634 = vsel %vm416, %v6613, 0
      %6636 = vmatprep.subr.bf16.mxu0 0
      %6637 = vmatpush1.bf16.msra.mxu0 0
      %6638 = vmatprep.subr.bf16.mxu0 0
      %6639 = vmatpush1.bf16.msra.mxu0 0
      %6640 = vmatprep.subr.bf16.mxu0 0
      %6641 = vmatpush1.bf16.msra.mxu0 0
      %6642 = vmatprep.subr.bf16.mxu0 0
      %6643 = vmatpush1.bf16.msra.mxu0 0
      %6644 = vmatprep.subr.bf16.mxu0 0
      %6645 = vmatpush1.bf16.msra.mxu0 0
      %6646 = vmatprep.subr.bf16.mxu0 0
      %6647 = vmatpush1.bf16.msra.mxu0 0
      %6648 = vmatprep.subr.bf16.mxu0 0
      %6649 = vmatpush1.bf16.msra.mxu0 0
      %6650 = vmatprep.subr.bf16.mxu0 %v6626
      %6651 = vmatpush1.bf16.msra.mxu0 %v6625
      %6652 = vmatprep.subr.bf16.mxu0 0
      %6653 = vmatpush2.bf16.msra.mxu0 0
      %6654 = vmatprep.subr.bf16.mxu0 0
      %6655 = vmatpush2.bf16.msra.mxu0 0
      %6656 = vmatprep.subr.bf16.mxu0 0
      %6657 = vmatpush2.bf16.msra.mxu0 0
      %6658 = vmatprep.subr.bf16.mxu0 0
      %6659 = vmatpush2.bf16.msra.mxu0 0
      %6660 = vmatprep.subr.bf16.mxu0 0
      %6661 = vmatpush2.bf16.msra.mxu0 0
      %6662 = vmatprep.subr.bf16.mxu0 0
      %6663 = vmatpush2.bf16.msra.mxu0 0
      %6664 = vmatprep.subr.bf16.mxu0 0
      %6665 = vmatpush2.bf16.msra.mxu0 0
      %6666 = vmatprep.subr.bf16.mxu0 0
      %6667 = vmatpush2.bf16.msra.mxu0 0
      %6668 = vmatprep.mubr.bf16.mxu0 0
      %6669 = vmatmul.mubr.bf16.gmra.mxu0 %v6634
      %v6670 = vpop.f32.mrf.mxu0
      %v6671 = vadd.f32 0.0, %v6670
      %v6672 = vpop.f32.mrf.mxu0
      %v6673 = vadd.f32 0.0, %v6672
      %v6674 = vpop.f32.mrf.mxu0
      %v6675 = vadd.f32 0.0, %v6674
      %v6676 = vpop.f32.mrf.mxu0
      %v6677 = vadd.f32 0.0, %v6676
      %6678 = vdwg.mxu0
      %6679 = vmatprep.subr.bf16.mxu0 0
      %6680 = vmatpush1.bf16.msra.mxu0 0
      %6681 = vmatprep.subr.bf16.mxu0 0
      %6682 = vmatpush1.bf16.msra.mxu0 0
      %6683 = vmatprep.subr.bf16.mxu0 0
      %6684 = vmatpush1.bf16.msra.mxu0 0
      %6685 = vmatprep.subr.bf16.mxu0 0
      %6686 = vmatpush1.bf16.msra.mxu0 0
      %6687 = vmatprep.subr.bf16.mxu0 0
      %6688 = vmatpush1.bf16.msra.mxu0 0
      %6689 = vmatprep.subr.bf16.mxu0 0
      %6690 = vmatpush1.bf16.msra.mxu0 0
      %6691 = vmatprep.subr.bf16.mxu0 0
      %6692 = vmatpush1.bf16.msra.mxu0 0
      %6693 = vmatprep.subr.bf16.mxu0 %v6628
      %6694 = vmatpush1.bf16.msra.mxu0 %v6627
      %6695 = vmatprep.subr.bf16.mxu0 0
      %6696 = vmatpush2.bf16.msra.mxu0 0
      %6697 = vmatprep.subr.bf16.mxu0 0
      %6698 = vmatpush2.bf16.msra.mxu0 0
      %6699 = vmatprep.subr.bf16.mxu0 0
      %6700 = vmatpush2.bf16.msra.mxu0 0
      %6701 = vmatprep.subr.bf16.mxu0 0
      %6702 = vmatpush2.bf16.msra.mxu0 0
      %6703 = vmatprep.subr.bf16.mxu0 0
      %6704 = vmatpush2.bf16.msra.mxu0 0
      %6705 = vmatprep.subr.bf16.mxu0 0
      %6706 = vmatpush2.bf16.msra.mxu0 0
      %6707 = vmatprep.subr.bf16.mxu0 0
      %6708 = vmatpush2.bf16.msra.mxu0 0
      %6709 = vmatprep.subr.bf16.mxu0 0
      %6710 = vmatpush2.bf16.msra.mxu0 0
      %6711 = vmatprep.mubr.bf16.mxu0 0
      %6712 = vmatmul.mubr.bf16.gmra.mxu0 %v6634
      %v6713 = vpop.f32.mrf.mxu0
      %v6714 = vadd.f32 0.0, %v6713
      %v6715 = vpop.f32.mrf.mxu0
      %v6716 = vadd.f32 0.0, %v6715
      %v6717 = vpop.f32.mrf.mxu0
      %v6718 = vadd.f32 0.0, %v6717
      %v6719 = vpop.f32.mrf.mxu0
      %v6720 = vadd.f32 0.0, %v6719
      %6721 = vdwg.mxu0
      %v6722 = vadd.f32 %v6604, %v6671
      %v6723 = vadd.f32 %v6605, %v6673
      %v6724 = vadd.f32 %v6606, %v6714
      %v6725 = vadd.f32 %v6607, %v6716
      %v6726 = vadd.f32 %v6608, %v6675
      %v6727 = vadd.f32 %v6609, %v6677
      %v6728 = vadd.f32 %v6610, %v6718
      %v6729 = vadd.f32 %v6611, %v6720
      %6730 = vrot.lane.b32.xlu0 %v6378, 80
      %v6731 = vpop.permute.xlu0 %6730
      %6732 = vrot.lane.b32.xlu0 %v5449, 2
      %v6733 = vpop.permute.xlu0 %6732
      %6734 = vrot.lane.b32.xlu0 %v5450, 2
      %v6735 = vpop.permute.xlu0 %6734
      %6736 = vrot.lane.b32.xlu0 %v5451, 2
      %v6737 = vpop.permute.xlu0 %6736
      %6738 = vrot.lane.b32.xlu0 %v5452, 2
      %v6739 = vpop.permute.xlu0 %6738
      %6740 = vrot.lane.b32.xlu0 %v5453, 2
      %v6741 = vpop.permute.xlu0 %6740
      %v6742 = vsel %vm3520, %v6733, %v6735
      %v6743 = vsel %vm3520, %v6735, %v6737
      %v6744 = vsel %vm3520, %v6737, %v6739
      %v6745 = vsel %vm3520, %v6739, %v6741
      %v6751 = vsel %vm416, %v6731, 0
      %6753 = vmatprep.subr.bf16.mxu0 0
      %6754 = vmatpush1.bf16.msra.mxu0 0
      %6755 = vmatprep.subr.bf16.mxu0 0
      %6756 = vmatpush1.bf16.msra.mxu0 0
      %6757 = vmatprep.subr.bf16.mxu0 0
      %6758 = vmatpush1.bf16.msra.mxu0 0
      %6759 = vmatprep.subr.bf16.mxu0 0
      %6760 = vmatpush1.bf16.msra.mxu0 0
      %6761 = vmatprep.subr.bf16.mxu0 0
      %6762 = vmatpush1.bf16.msra.mxu0 0
      %6763 = vmatprep.subr.bf16.mxu0 0
      %6764 = vmatpush1.bf16.msra.mxu0 0
      %6765 = vmatprep.subr.bf16.mxu0 0
      %6766 = vmatpush1.bf16.msra.mxu0 0
      %6767 = vmatprep.subr.bf16.mxu0 %v6743
      %6768 = vmatpush1.bf16.msra.mxu0 %v6742
      %6769 = vmatprep.subr.bf16.mxu0 0
      %6770 = vmatpush2.bf16.msra.mxu0 0
      %6771 = vmatprep.subr.bf16.mxu0 0
      %6772 = vmatpush2.bf16.msra.mxu0 0
      %6773 = vmatprep.subr.bf16.mxu0 0
      %6774 = vmatpush2.bf16.msra.mxu0 0
      %6775 = vmatprep.subr.bf16.mxu0 0
      %6776 = vmatpush2.bf16.msra.mxu0 0
      %6777 = vmatprep.subr.bf16.mxu0 0
      %6778 = vmatpush2.bf16.msra.mxu0 0
      %6779 = vmatprep.subr.bf16.mxu0 0
      %6780 = vmatpush2.bf16.msra.mxu0 0
      %6781 = vmatprep.subr.bf16.mxu0 0
      %6782 = vmatpush2.bf16.msra.mxu0 0
      %6783 = vmatprep.subr.bf16.mxu0 0
      %6784 = vmatpush2.bf16.msra.mxu0 0
      %6785 = vmatprep.mubr.bf16.mxu0 0
      %6786 = vmatmul.mubr.bf16.gmra.mxu0 %v6751
      %v6787 = vpop.f32.mrf.mxu0
      %v6788 = vadd.f32 0.0, %v6787
      %v6789 = vpop.f32.mrf.mxu0
      %v6790 = vadd.f32 0.0, %v6789
      %v6791 = vpop.f32.mrf.mxu0
      %v6792 = vadd.f32 0.0, %v6791
      %v6793 = vpop.f32.mrf.mxu0
      %v6794 = vadd.f32 0.0, %v6793
      %6795 = vdwg.mxu0
      %6796 = vmatprep.subr.bf16.mxu0 0
      %6797 = vmatpush1.bf16.msra.mxu0 0
      %6798 = vmatprep.subr.bf16.mxu0 0
      %6799 = vmatpush1.bf16.msra.mxu0 0
      %6800 = vmatprep.subr.bf16.mxu0 0
      %6801 = vmatpush1.bf16.msra.mxu0 0
      %6802 = vmatprep.subr.bf16.mxu0 0
      %6803 = vmatpush1.bf16.msra.mxu0 0
      %6804 = vmatprep.subr.bf16.mxu0 0
      %6805 = vmatpush1.bf16.msra.mxu0 0
      %6806 = vmatprep.subr.bf16.mxu0 0
      %6807 = vmatpush1.bf16.msra.mxu0 0
      %6808 = vmatprep.subr.bf16.mxu0 0
      %6809 = vmatpush1.bf16.msra.mxu0 0
      %6810 = vmatprep.subr.bf16.mxu0 %v6745
      %6811 = vmatpush1.bf16.msra.mxu0 %v6744
      %6812 = vmatprep.subr.bf16.mxu0 0
      %6813 = vmatpush2.bf16.msra.mxu0 0
      %6814 = vmatprep.subr.bf16.mxu0 0
      %6815 = vmatpush2.bf16.msra.mxu0 0
      %6816 = vmatprep.subr.bf16.mxu0 0
      %6817 = vmatpush2.bf16.msra.mxu0 0
      %6818 = vmatprep.subr.bf16.mxu0 0
      %6819 = vmatpush2.bf16.msra.mxu0 0
      %6820 = vmatprep.subr.bf16.mxu0 0
      %6821 = vmatpush2.bf16.msra.mxu0 0
      %6822 = vmatprep.subr.bf16.mxu0 0
      %6823 = vmatpush2.bf16.msra.mxu0 0
      %6824 = vmatprep.subr.bf16.mxu0 0
      %6825 = vmatpush2.bf16.msra.mxu0 0
      %6826 = vmatprep.subr.bf16.mxu0 0
      %6827 = vmatpush2.bf16.msra.mxu0 0
      %6828 = vmatprep.mubr.bf16.mxu0 0
      %6829 = vmatmul.mubr.bf16.gmra.mxu0 %v6751
      %v6830 = vpop.f32.mrf.mxu0
      %v6831 = vadd.f32 0.0, %v6830
      %v6832 = vpop.f32.mrf.mxu0
      %v6833 = vadd.f32 0.0, %v6832
      %v6834 = vpop.f32.mrf.mxu0
      %v6835 = vadd.f32 0.0, %v6834
      %v6836 = vpop.f32.mrf.mxu0
      %v6837 = vadd.f32 0.0, %v6836
      %6838 = vdwg.mxu0
      %v6839 = vadd.f32 %v6722, %v6788
      %v6840 = vadd.f32 %v6723, %v6790
      %v6841 = vadd.f32 %v6724, %v6831
      %v6842 = vadd.f32 %v6725, %v6833
      %v6843 = vadd.f32 %v6726, %v6792
      %v6844 = vadd.f32 %v6727, %v6794
      %v6845 = vadd.f32 %v6728, %v6835
      %v6846 = vadd.f32 %v6729, %v6837
      %v6847 = vld [vmem:[#allocation3 + $0x4] sm:$0xff]
      %v6848 = vld [vmem:[#allocation3 + $0xc] sm:$0xff]
      %v6849 = vld [vmem:[#allocation3 + $0x1c] sm:$0xff]
      %v6850 = vld [vmem:[#allocation3 + $0x24] sm:$0xff]
      %6851 = vrot.lane.b32.xlu0 %v6378, 64
      %v6852 = vpop.permute.xlu0 %6851
      %v6857 = vunpack.c.l.b16 %v6847
      %v6858 = vunpack.c.h.b16 %v6847
      %v6859 = vunpack.c.l.b16 %v6848
      %v6860 = vunpack.c.h.b16 %v6848
      %v6861 = vunpack.c.l.b16 %v6849
      %v6862 = vunpack.c.h.b16 %v6849
      %v6863 = vunpack.c.l.b16 %v6850
      %v6864 = vunpack.c.h.b16 %v6850
      %v6865 = vpack.c.b16 %v6861, %v6857
      %v6866 = vpack.c.b16 %v6862, %v6858
      %v6867 = vpack.c.b16 %v6863, %v6859
      %v6868 = vpack.c.b16 %v6864, %v6860
      %v6874 = vsel %vm416, %v6852, 0
      %6876 = vmatprep.subr.bf16.mxu0 0
      %6877 = vmatpush1.bf16.msra.mxu0 0
      %6878 = vmatprep.subr.bf16.mxu0 0
      %6879 = vmatpush1.bf16.msra.mxu0 0
      %6880 = vmatprep.subr.bf16.mxu0 0
      %6881 = vmatpush1.bf16.msra.mxu0 0
      %6882 = vmatprep.subr.bf16.mxu0 0
      %6883 = vmatpush1.bf16.msra.mxu0 0
      %6884 = vmatprep.subr.bf16.mxu0 0
      %6885 = vmatpush1.bf16.msra.mxu0 0
      %6886 = vmatprep.subr.bf16.mxu0 0
      %6887 = vmatpush1.bf16.msra.mxu0 0
      %6888 = vmatprep.subr.bf16.mxu0 0
      %6889 = vmatpush1.bf16.msra.mxu0 0
      %6890 = vmatprep.subr.bf16.mxu0 %v6866
      %6891 = vmatpush1.bf16.msra.mxu0 %v6865
      %6892 = vmatprep.subr.bf16.mxu0 0
      %6893 = vmatpush2.bf16.msra.mxu0 0
      %6894 = vmatprep.subr.bf16.mxu0 0
      %6895 = vmatpush2.bf16.msra.mxu0 0
      %6896 = vmatprep.subr.bf16.mxu0 0
      %6897 = vmatpush2.bf16.msra.mxu0 0
      %6898 = vmatprep.subr.bf16.mxu0 0
      %6899 = vmatpush2.bf16.msra.mxu0 0
      %6900 = vmatprep.subr.bf16.mxu0 0
      %6901 = vmatpush2.bf16.msra.mxu0 0
      %6902 = vmatprep.subr.bf16.mxu0 0
      %6903 = vmatpush2.bf16.msra.mxu0 0
      %6904 = vmatprep.subr.bf16.mxu0 0
      %6905 = vmatpush2.bf16.msra.mxu0 0
      %6906 = vmatprep.subr.bf16.mxu0 0
      %6907 = vmatpush2.bf16.msra.mxu0 0
      %6908 = vmatprep.mubr.bf16.mxu0 0
      %6909 = vmatmul.mubr.bf16.gmra.mxu0 %v6874
      %v6910 = vpop.f32.mrf.mxu0
      %v6911 = vadd.f32 0.0, %v6910
      %v6912 = vpop.f32.mrf.mxu0
      %v6913 = vadd.f32 0.0, %v6912
      %v6914 = vpop.f32.mrf.mxu0
      %v6915 = vadd.f32 0.0, %v6914
      %v6916 = vpop.f32.mrf.mxu0
      %v6917 = vadd.f32 0.0, %v6916
      %6918 = vdwg.mxu0
      %6919 = vmatprep.subr.bf16.mxu0 0
      %6920 = vmatpush1.bf16.msra.mxu0 0
      %6921 = vmatprep.subr.bf16.mxu0 0
      %6922 = vmatpush1.bf16.msra.mxu0 0
      %6923 = vmatprep.subr.bf16.mxu0 0
      %6924 = vmatpush1.bf16.msra.mxu0 0
      %6925 = vmatprep.subr.bf16.mxu0 0
      %6926 = vmatpush1.bf16.msra.mxu0 0
      %6927 = vmatprep.subr.bf16.mxu0 0
      %6928 = vmatpush1.bf16.msra.mxu0 0
      %6929 = vmatprep.subr.bf16.mxu0 0
      %6930 = vmatpush1.bf16.msra.mxu0 0
      %6931 = vmatprep.subr.bf16.mxu0 0
      %6932 = vmatpush1.bf16.msra.mxu0 0
      %6933 = vmatprep.subr.bf16.mxu0 %v6868
      %6934 = vmatpush1.bf16.msra.mxu0 %v6867
      %6935 = vmatprep.subr.bf16.mxu0 0
      %6936 = vmatpush2.bf16.msra.mxu0 0
      %6937 = vmatprep.subr.bf16.mxu0 0
      %6938 = vmatpush2.bf16.msra.mxu0 0
      %6939 = vmatprep.subr.bf16.mxu0 0
      %6940 = vmatpush2.bf16.msra.mxu0 0
      %6941 = vmatprep.subr.bf16.mxu0 0
      %6942 = vmatpush2.bf16.msra.mxu0 0
      %6943 = vmatprep.subr.bf16.mxu0 0
      %6944 = vmatpush2.bf16.msra.mxu0 0
      %6945 = vmatprep.subr.bf16.mxu0 0
      %6946 = vmatpush2.bf16.msra.mxu0 0
      %6947 = vmatprep.subr.bf16.mxu0 0
      %6948 = vmatpush2.bf16.msra.mxu0 0
      %6949 = vmatprep.subr.bf16.mxu0 0
      %6950 = vmatpush2.bf16.msra.mxu0 0
      %6951 = vmatprep.mubr.bf16.mxu0 0
      %6952 = vmatmul.mubr.bf16.gmra.mxu0 %v6874
      %v6953 = vpop.f32.mrf.mxu0
      %v6954 = vadd.f32 0.0, %v6953
      %v6955 = vpop.f32.mrf.mxu0
      %v6956 = vadd.f32 0.0, %v6955
      %v6957 = vpop.f32.mrf.mxu0
      %v6958 = vadd.f32 0.0, %v6957
      %v6959 = vpop.f32.mrf.mxu0
      %v6960 = vadd.f32 0.0, %v6959
      %6961 = vdwg.mxu0
      %v6962 = vadd.f32 %v6839, %v6911
      %v6963 = vadd.f32 %v6840, %v6913
      %v6964 = vadd.f32 %v6841, %v6954
      %v6965 = vadd.f32 %v6842, %v6956
      %v6966 = vadd.f32 %v6843, %v6915
      %v6967 = vadd.f32 %v6844, %v6917
      %v6968 = vadd.f32 %v6845, %v6958
      %v6969 = vadd.f32 %v6846, %v6960
      %v6970 = vld [vmem:[#allocation3 + $0x4] sm:$0xff]
      %v6971 = vld [vmem:[#allocation3 + $0xc] sm:$0xff]
      %v6972 = vld [vmem:[#allocation3 + $0x14] sm:$0xf]
      %v6973 = vld [vmem:[#allocation3 + $0x1c] sm:$0xff]
      %v6974 = vld [vmem:[#allocation3 + $0x24] sm:$0xff]
      %v6975 = vld [vmem:[#allocation3 + $0x2c] sm:$0xf]
      %6976 = vrot.lane.b32.xlu0 %v6378, 48
      %v6977 = vpop.permute.xlu0 %6976
      %v6984 = vunpack.c.l.b16 %v6970
      %v6985 = vunpack.c.h.b16 %v6970
      %v6986 = vunpack.c.l.b16 %v6971
      %v6987 = vunpack.c.h.b16 %v6971
      %v6988 = vunpack.c.l.b16 %v6972
      %v6989 = vunpack.c.l.b16 %v6973
      %v6990 = vunpack.c.h.b16 %v6973
      %v6991 = vunpack.c.l.b16 %v6974
      %v6992 = vunpack.c.h.b16 %v6974
      %v6993 = vunpack.c.l.b16 %v6975
      %v6994 = vpack.c.b16 %v6989, %v6984
      %v6995 = vpack.c.b16 %v6990, %v6985
      %v6996 = vpack.c.b16 %v6991, %v6986
      %v6997 = vpack.c.b16 %v6992, %v6987
      %v6998 = vpack.c.b16 %v6993, %v6988
      %6999 = vrot.lane.b32.xlu0 %v6994, 126
      %v7000 = vpop.permute.xlu0 %6999
      %7001 = vrot.lane.b32.xlu0 %v6995, 126
      %v7002 = vpop.permute.xlu0 %7001
      %7003 = vrot.lane.b32.xlu0 %v6996, 126
      %v7004 = vpop.permute.xlu0 %7003
      %7005 = vrot.lane.b32.xlu0 %v6997, 126
      %v7006 = vpop.permute.xlu0 %7005
      %7007 = vrot.lane.b32.xlu0 %v6998, 126
      %v7008 = vpop.permute.xlu0 %7007
      %v7009 = vsel %vm916, %v7000, %v7002
      %v7010 = vsel %vm916, %v7002, %v7004
      %v7011 = vsel %vm916, %v7004, %v7006
      %v7012 = vsel %vm916, %v7006, %v7008
      %v7018 = vsel %vm416, %v6977, 0
      %7020 = vmatprep.subr.bf16.mxu0 0
      %7021 = vmatpush1.bf16.msra.mxu0 0
      %7022 = vmatprep.subr.bf16.mxu0 0
      %7023 = vmatpush1.bf16.msra.mxu0 0
      %7024 = vmatprep.subr.bf16.mxu0 0
      %7025 = vmatpush1.bf16.msra.mxu0 0
      %7026 = vmatprep.subr.bf16.mxu0 0
      %7027 = vmatpush1.bf16.msra.mxu0 0
      %7028 = vmatprep.subr.bf16.mxu0 0
      %7029 = vmatpush1.bf16.msra.mxu0 0
      %7030 = vmatprep.subr.bf16.mxu0 0
      %7031 = vmatpush1.bf16.msra.mxu0 0
      %7032 = vmatprep.subr.bf16.mxu0 0
      %7033 = vmatpush1.bf16.msra.mxu0 0
      %7034 = vmatprep.subr.bf16.mxu0 %v7010
      %7035 = vmatpush1.bf16.msra.mxu0 %v7009
      %7036 = vmatprep.subr.bf16.mxu0 0
      %7037 = vmatpush2.bf16.msra.mxu0 0
      %7038 = vmatprep.subr.bf16.mxu0 0
      %7039 = vmatpush2.bf16.msra.mxu0 0
      %7040 = vmatprep.subr.bf16.mxu0 0
      %7041 = vmatpush2.bf16.msra.mxu0 0
      %7042 = vmatprep.subr.bf16.mxu0 0
      %7043 = vmatpush2.bf16.msra.mxu0 0
      %7044 = vmatprep.subr.bf16.mxu0 0
      %7045 = vmatpush2.bf16.msra.mxu0 0
      %7046 = vmatprep.subr.bf16.mxu0 0
      %7047 = vmatpush2.bf16.msra.mxu0 0
      %7048 = vmatprep.subr.bf16.mxu0 0
      %7049 = vmatpush2.bf16.msra.mxu0 0
      %7050 = vmatprep.subr.bf16.mxu0 0
      %7051 = vmatpush2.bf16.msra.mxu0 0
      %7052 = vmatprep.mubr.bf16.mxu0 0
      %7053 = vmatmul.mubr.bf16.gmra.mxu0 %v7018
      %v7054 = vpop.f32.mrf.mxu0
      %v7055 = vadd.f32 0.0, %v7054
      %v7056 = vpop.f32.mrf.mxu0
      %v7057 = vadd.f32 0.0, %v7056
      %v7058 = vpop.f32.mrf.mxu0
      %v7059 = vadd.f32 0.0, %v7058
      %v7060 = vpop.f32.mrf.mxu0
      %v7061 = vadd.f32 0.0, %v7060
      %7062 = vdwg.mxu0
      %7063 = vmatprep.subr.bf16.mxu0 0
      %7064 = vmatpush1.bf16.msra.mxu0 0
      %7065 = vmatprep.subr.bf16.mxu0 0
      %7066 = vmatpush1.bf16.msra.mxu0 0
      %7067 = vmatprep.subr.bf16.mxu0 0
      %7068 = vmatpush1.bf16.msra.mxu0 0
      %7069 = vmatprep.subr.bf16.mxu0 0
      %7070 = vmatpush1.bf16.msra.mxu0 0
      %7071 = vmatprep.subr.bf16.mxu0 0
      %7072 = vmatpush1.bf16.msra.mxu0 0
      %7073 = vmatprep.subr.bf16.mxu0 0
      %7074 = vmatpush1.bf16.msra.mxu0 0
      %7075 = vmatprep.subr.bf16.mxu0 0
      %7076 = vmatpush1.bf16.msra.mxu0 0
      %7077 = vmatprep.subr.bf16.mxu0 %v7012
      %7078 = vmatpush1.bf16.msra.mxu0 %v7011
      %7079 = vmatprep.subr.bf16.mxu0 0
      %7080 = vmatpush2.bf16.msra.mxu0 0
      %7081 = vmatprep.subr.bf16.mxu0 0
      %7082 = vmatpush2.bf16.msra.mxu0 0
      %7083 = vmatprep.subr.bf16.mxu0 0
      %7084 = vmatpush2.bf16.msra.mxu0 0
      %7085 = vmatprep.subr.bf16.mxu0 0
      %7086 = vmatpush2.bf16.msra.mxu0 0
      %7087 = vmatprep.subr.bf16.mxu0 0
      %7088 = vmatpush2.bf16.msra.mxu0 0
      %7089 = vmatprep.subr.bf16.mxu0 0
      %7090 = vmatpush2.bf16.msra.mxu0 0
      %7091 = vmatprep.subr.bf16.mxu0 0
      %7092 = vmatpush2.bf16.msra.mxu0 0
      %7093 = vmatprep.subr.bf16.mxu0 0
      %7094 = vmatpush2.bf16.msra.mxu0 0
      %7095 = vmatprep.mubr.bf16.mxu0 0
      %7096 = vmatmul.mubr.bf16.gmra.mxu0 %v7018
      %v7097 = vpop.f32.mrf.mxu0
      %v7098 = vadd.f32 0.0, %v7097
      %v7099 = vpop.f32.mrf.mxu0
      %v7100 = vadd.f32 0.0, %v7099
      %v7101 = vpop.f32.mrf.mxu0
      %v7102 = vadd.f32 0.0, %v7101
      %v7103 = vpop.f32.mrf.mxu0
      %v7104 = vadd.f32 0.0, %v7103
      %7105 = vdwg.mxu0
      %v7106 = vadd.f32 %v6962, %v7055
      %v7107 = vadd.f32 %v6963, %v7057
      %v7108 = vadd.f32 %v6964, %v7098
      %v7109 = vadd.f32 %v6965, %v7100
      %v7110 = vadd.f32 %v6966, %v7059
      %v7111 = vadd.f32 %v6967, %v7061
      %v7112 = vadd.f32 %v6968, %v7102
      %v7113 = vadd.f32 %v6969, %v7104
      %7114 = vrot.lane.b32.xlu0 %v6378, 32
      %v7115 = vpop.permute.xlu0 %7114
      %7116 = vrot.lane.b32.xlu0 %v6994, 124
      %v7117 = vpop.permute.xlu0 %7116
      %7118 = vrot.lane.b32.xlu0 %v6995, 124
      %v7119 = vpop.permute.xlu0 %7118
      %7120 = vrot.lane.b32.xlu0 %v6996, 124
      %v7121 = vpop.permute.xlu0 %7120
      %7122 = vrot.lane.b32.xlu0 %v6997, 124
      %v7123 = vpop.permute.xlu0 %7122
      %7124 = vrot.lane.b32.xlu0 %v6998, 124
      %v7125 = vpop.permute.xlu0 %7124
      %vm7126 = vcmask 1014784
      %v7127 = vsel %vm7126, %v7117, %v7119
      %v7128 = vsel %vm7126, %v7119, %v7121
      %v7129 = vsel %vm7126, %v7121, %v7123
      %v7130 = vsel %vm7126, %v7123, %v7125
      %v7136 = vsel %vm416, %v7115, 0
      %7138 = vmatprep.subr.bf16.mxu0 0
      %7139 = vmatpush1.bf16.msra.mxu0 0
      %7140 = vmatprep.subr.bf16.mxu0 0
      %7141 = vmatpush1.bf16.msra.mxu0 0
      %7142 = vmatprep.subr.bf16.mxu0 0
      %7143 = vmatpush1.bf16.msra.mxu0 0
      %7144 = vmatprep.subr.bf16.mxu0 0
      %7145 = vmatpush1.bf16.msra.mxu0 0
      %7146 = vmatprep.subr.bf16.mxu0 0
      %7147 = vmatpush1.bf16.msra.mxu0 0
      %7148 = vmatprep.subr.bf16.mxu0 0
      %7149 = vmatpush1.bf16.msra.mxu0 0
      %7150 = vmatprep.subr.bf16.mxu0 0
      %7151 = vmatpush1.bf16.msra.mxu0 0
      %7152 = vmatprep.subr.bf16.mxu0 %v7128
      %7153 = vmatpush1.bf16.msra.mxu0 %v7127
      %7154 = vmatprep.subr.bf16.mxu0 0
      %7155 = vmatpush2.bf16.msra.mxu0 0
      %7156 = vmatprep.subr.bf16.mxu0 0
      %7157 = vmatpush2.bf16.msra.mxu0 0
      %7158 = vmatprep.subr.bf16.mxu0 0
      %7159 = vmatpush2.bf16.msra.mxu0 0
      %7160 = vmatprep.subr.bf16.mxu0 0
      %7161 = vmatpush2.bf16.msra.mxu0 0
      %7162 = vmatprep.subr.bf16.mxu0 0
      %7163 = vmatpush2.bf16.msra.mxu0 0
      %7164 = vmatprep.subr.bf16.mxu0 0
      %7165 = vmatpush2.bf16.msra.mxu0 0
      %7166 = vmatprep.subr.bf16.mxu0 0
      %7167 = vmatpush2.bf16.msra.mxu0 0
      %7168 = vmatprep.subr.bf16.mxu0 0
      %7169 = vmatpush2.bf16.msra.mxu0 0
      %7170 = vmatprep.mubr.bf16.mxu0 0
      %7171 = vmatmul.mubr.bf16.gmra.mxu0 %v7136
      %v7172 = vpop.f32.mrf.mxu0
      %v7173 = vadd.f32 0.0, %v7172
      %v7174 = vpop.f32.mrf.mxu0
      %v7175 = vadd.f32 0.0, %v7174
      %v7176 = vpop.f32.mrf.mxu0
      %v7177 = vadd.f32 0.0, %v7176
      %v7178 = vpop.f32.mrf.mxu0
      %v7179 = vadd.f32 0.0, %v7178
      %7180 = vdwg.mxu0
      %7181 = vmatprep.subr.bf16.mxu0 0
      %7182 = vmatpush1.bf16.msra.mxu0 0
      %7183 = vmatprep.subr.bf16.mxu0 0
      %7184 = vmatpush1.bf16.msra.mxu0 0
      %7185 = vmatprep.subr.bf16.mxu0 0
      %7186 = vmatpush1.bf16.msra.mxu0 0
      %7187 = vmatprep.subr.bf16.mxu0 0
      %7188 = vmatpush1.bf16.msra.mxu0 0
      %7189 = vmatprep.subr.bf16.mxu0 0
      %7190 = vmatpush1.bf16.msra.mxu0 0
      %7191 = vmatprep.subr.bf16.mxu0 0
      %7192 = vmatpush1.bf16.msra.mxu0 0
      %7193 = vmatprep.subr.bf16.mxu0 0
      %7194 = vmatpush1.bf16.msra.mxu0 0
      %7195 = vmatprep.subr.bf16.mxu0 %v7130
      %7196 = vmatpush1.bf16.msra.mxu0 %v7129
      %7197 = vmatprep.subr.bf16.mxu0 0
      %7198 = vmatpush2.bf16.msra.mxu0 0
      %7199 = vmatprep.subr.bf16.mxu0 0
      %7200 = vmatpush2.bf16.msra.mxu0 0
      %7201 = vmatprep.subr.bf16.mxu0 0
      %7202 = vmatpush2.bf16.msra.mxu0 0
      %7203 = vmatprep.subr.bf16.mxu0 0
      %7204 = vmatpush2.bf16.msra.mxu0 0
      %7205 = vmatprep.subr.bf16.mxu0 0
      %7206 = vmatpush2.bf16.msra.mxu0 0
      %7207 = vmatprep.subr.bf16.mxu0 0
      %7208 = vmatpush2.bf16.msra.mxu0 0
      %7209 = vmatprep.subr.bf16.mxu0 0
      %7210 = vmatpush2.bf16.msra.mxu0 0
      %7211 = vmatprep.subr.bf16.mxu0 0
      %7212 = vmatpush2.bf16.msra.mxu0 0
      %7213 = vmatprep.mubr.bf16.mxu0 0
      %7214 = vmatmul.mubr.bf16.gmra.mxu0 %v7136
      %v7215 = vpop.f32.mrf.mxu0
      %v7216 = vadd.f32 0.0, %v7215
      %v7217 = vpop.f32.mrf.mxu0
      %v7218 = vadd.f32 0.0, %v7217
      %v7219 = vpop.f32.mrf.mxu0
      %v7220 = vadd.f32 0.0, %v7219
      %v7221 = vpop.f32.mrf.mxu0
      %v7222 = vadd.f32 0.0, %v7221
      %7223 = vdwg.mxu0
      %v7224 = vadd.f32 %v7106, %v7173
      %v7225 = vadd.f32 %v7107, %v7175
      %v7226 = vadd.f32 %v7108, %v7216
      %v7227 = vadd.f32 %v7109, %v7218
      %v7228 = vadd.f32 %v7110, %v7177
      %v7229 = vadd.f32 %v7111, %v7179
      %v7230 = vadd.f32 %v7112, %v7220
      %v7231 = vadd.f32 %v7113, %v7222
      %7232 = vrot.lane.b32.xlu0 %v6378, 16
      %v7233 = vpop.permute.xlu0 %7232
      %7234 = vrot.lane.b32.xlu0 %v6994, 92
      %v7235 = vpop.permute.xlu0 %7234
      %7236 = vrot.lane.b32.xlu0 %v6995, 92
      %v7237 = vpop.permute.xlu0 %7236
      %7238 = vrot.lane.b32.xlu0 %v6996, 92
      %v7239 = vpop.permute.xlu0 %7238
      %7240 = vrot.lane.b32.xlu0 %v6997, 92
      %v7241 = vpop.permute.xlu0 %7240
      %7242 = vrot.lane.b32.xlu0 %v6998, 92
      %v7243 = vpop.permute.xlu0 %7242
      %vm7244 = vcmask 752640
      %v7245 = vsel %vm7244, %v7235, %v7237
      %v7246 = vsel %vm7244, %v7237, %v7239
      %v7247 = vsel %vm7244, %v7239, %v7241
      %v7248 = vsel %vm7244, %v7241, %v7243
      %v7254 = vsel %vm416, %v7233, 0
      %7256 = vmatprep.subr.bf16.mxu0 0
      %7257 = vmatpush1.bf16.msra.mxu0 0
      %7258 = vmatprep.subr.bf16.mxu0 0
      %7259 = vmatpush1.bf16.msra.mxu0 0
      %7260 = vmatprep.subr.bf16.mxu0 0
      %7261 = vmatpush1.bf16.msra.mxu0 0
      %7262 = vmatprep.subr.bf16.mxu0 0
      %7263 = vmatpush1.bf16.msra.mxu0 0
      %7264 = vmatprep.subr.bf16.mxu0 0
      %7265 = vmatpush1.bf16.msra.mxu0 0
      %7266 = vmatprep.subr.bf16.mxu0 0
      %7267 = vmatpush1.bf16.msra.mxu0 0
      %7268 = vmatprep.subr.bf16.mxu0 0
      %7269 = vmatpush1.bf16.msra.mxu0 0
      %7270 = vmatprep.subr.bf16.mxu0 %v7246
      %7271 = vmatpush1.bf16.msra.mxu0 %v7245
      %7272 = vmatprep.subr.bf16.mxu0 0
      %7273 = vmatpush2.bf16.msra.mxu0 0
      %7274 = vmatprep.subr.bf16.mxu0 0
      %7275 = vmatpush2.bf16.msra.mxu0 0
      %7276 = vmatprep.subr.bf16.mxu0 0
      %7277 = vmatpush2.bf16.msra.mxu0 0
      %7278 = vmatprep.subr.bf16.mxu0 0
      %7279 = vmatpush2.bf16.msra.mxu0 0
      %7280 = vmatprep.subr.bf16.mxu0 0
      %7281 = vmatpush2.bf16.msra.mxu0 0
      %7282 = vmatprep.subr.bf16.mxu0 0
      %7283 = vmatpush2.bf16.msra.mxu0 0
      %7284 = vmatprep.subr.bf16.mxu0 0
      %7285 = vmatpush2.bf16.msra.mxu0 0
      %7286 = vmatprep.subr.bf16.mxu0 0
      %7287 = vmatpush2.bf16.msra.mxu0 0
      %7288 = vmatprep.mubr.bf16.mxu0 0
      %7289 = vmatmul.mubr.bf16.gmra.mxu0 %v7254
      %v7290 = vpop.f32.mrf.mxu0
      %v7291 = vadd.f32 0.0, %v7290
      %v7292 = vpop.f32.mrf.mxu0
      %v7293 = vadd.f32 0.0, %v7292
      %v7294 = vpop.f32.mrf.mxu0
      %v7295 = vadd.f32 0.0, %v7294
      %v7296 = vpop.f32.mrf.mxu0
      %v7297 = vadd.f32 0.0, %v7296
      %7298 = vdwg.mxu0
      %7299 = vmatprep.subr.bf16.mxu0 0
      %7300 = vmatpush1.bf16.msra.mxu0 0
      %7301 = vmatprep.subr.bf16.mxu0 0
      %7302 = vmatpush1.bf16.msra.mxu0 0
      %7303 = vmatprep.subr.bf16.mxu0 0
      %7304 = vmatpush1.bf16.msra.mxu0 0
      %7305 = vmatprep.subr.bf16.mxu0 0
      %7306 = vmatpush1.bf16.msra.mxu0 0
      %7307 = vmatprep.subr.bf16.mxu0 0
      %7308 = vmatpush1.bf16.msra.mxu0 0
      %7309 = vmatprep.subr.bf16.mxu0 0
      %7310 = vmatpush1.bf16.msra.mxu0 0
      %7311 = vmatprep.subr.bf16.mxu0 0
      %7312 = vmatpush1.bf16.msra.mxu0 0
      %7313 = vmatprep.subr.bf16.mxu0 %v7248
      %7314 = vmatpush1.bf16.msra.mxu0 %v7247
      %7315 = vmatprep.subr.bf16.mxu0 0
      %7316 = vmatpush2.bf16.msra.mxu0 0
      %7317 = vmatprep.subr.bf16.mxu0 0
      %7318 = vmatpush2.bf16.msra.mxu0 0
      %7319 = vmatprep.subr.bf16.mxu0 0
      %7320 = vmatpush2.bf16.msra.mxu0 0
      %7321 = vmatprep.subr.bf16.mxu0 0
      %7322 = vmatpush2.bf16.msra.mxu0 0
      %7323 = vmatprep.subr.bf16.mxu0 0
      %7324 = vmatpush2.bf16.msra.mxu0 0
      %7325 = vmatprep.subr.bf16.mxu0 0
      %7326 = vmatpush2.bf16.msra.mxu0 0
      %7327 = vmatprep.subr.bf16.mxu0 0
      %7328 = vmatpush2.bf16.msra.mxu0 0
      %7329 = vmatprep.subr.bf16.mxu0 0
      %7330 = vmatpush2.bf16.msra.mxu0 0
      %7331 = vmatprep.mubr.bf16.mxu0 0
      %7332 = vmatmul.mubr.bf16.gmra.mxu0 %v7254
      %v7333 = vpop.f32.mrf.mxu0
      %v7334 = vadd.f32 0.0, %v7333
      %v7335 = vpop.f32.mrf.mxu0
      %v7336 = vadd.f32 0.0, %v7335
      %v7337 = vpop.f32.mrf.mxu0
      %v7338 = vadd.f32 0.0, %v7337
      %v7339 = vpop.f32.mrf.mxu0
      %v7340 = vadd.f32 0.0, %v7339
      %7341 = vdwg.mxu0
      %v7342 = vadd.f32 %v7224, %v7291
      %v7343 = vadd.f32 %v7225, %v7293
      %v7344 = vadd.f32 %v7226, %v7334
      %v7345 = vadd.f32 %v7227, %v7336
      %v7346 = vadd.f32 %v7228, %v7295
      %v7347 = vadd.f32 %v7229, %v7297
      %v7348 = vadd.f32 %v7230, %v7338
      %v7349 = vadd.f32 %v7231, %v7340
      %v7352 = vunpack.c.l.b16 %v5417
      %v7353 = vunpack.c.l.b16 %v5419
      %v7354 = vpack.c.b16 %v7353, %v7352
      %7355 = vrot.lane.b32.xlu0 %v6994, 90
      %v7356 = vpop.permute.xlu0 %7355
      %7357 = vrot.lane.b32.xlu0 %v6995, 90
      %v7358 = vpop.permute.xlu0 %7357
      %7359 = vrot.lane.b32.xlu0 %v6996, 90
      %v7360 = vpop.permute.xlu0 %7359
      %7361 = vrot.lane.b32.xlu0 %v6997, 90
      %v7362 = vpop.permute.xlu0 %7361
      %7363 = vrot.lane.b32.xlu0 %v6998, 90
      %v7364 = vpop.permute.xlu0 %7363
      %v7365 = vsel %vm4730, %v7356, %v7358
      %v7366 = vsel %vm4730, %v7358, %v7360
      %v7367 = vsel %vm4730, %v7360, %v7362
      %v7368 = vsel %vm4730, %v7362, %v7364
      %v7374 = vsel %vm416, %v7354, 0
      %7376 = vmatprep.subr.bf16.mxu0 0
      %7377 = vmatpush1.bf16.msra.mxu0 0
      %7378 = vmatprep.subr.bf16.mxu0 0
      %7379 = vmatpush1.bf16.msra.mxu0 0
      %7380 = vmatprep.subr.bf16.mxu0 0
      %7381 = vmatpush1.bf16.msra.mxu0 0
      %7382 = vmatprep.subr.bf16.mxu0 0
      %7383 = vmatpush1.bf16.msra.mxu0 0
      %7384 = vmatprep.subr.bf16.mxu0 0
      %7385 = vmatpush1.bf16.msra.mxu0 0
      %7386 = vmatprep.subr.bf16.mxu0 0
      %7387 = vmatpush1.bf16.msra.mxu0 0
      %7388 = vmatprep.subr.bf16.mxu0 0
      %7389 = vmatpush1.bf16.msra.mxu0 0
      %7390 = vmatprep.subr.bf16.mxu0 %v7366
      %7391 = vmatpush1.bf16.msra.mxu0 %v7365
      %7392 = vmatprep.subr.bf16.mxu0 0
      %7393 = vmatpush2.bf16.msra.mxu0 0
      %7394 = vmatprep.subr.bf16.mxu0 0
      %7395 = vmatpush2.bf16.msra.mxu0 0
      %7396 = vmatprep.subr.bf16.mxu0 0
      %7397 = vmatpush2.bf16.msra.mxu0 0
      %7398 = vmatprep.subr.bf16.mxu0 0
      %7399 = vmatpush2.bf16.msra.mxu0 0
      %7400 = vmatprep.subr.bf16.mxu0 0
      %7401 = vmatpush2.bf16.msra.mxu0 0
      %7402 = vmatprep.subr.bf16.mxu0 0
      %7403 = vmatpush2.bf16.msra.mxu0 0
      %7404 = vmatprep.subr.bf16.mxu0 0
      %7405 = vmatpush2.bf16.msra.mxu0 0
      %7406 = vmatprep.subr.bf16.mxu0 0
      %7407 = vmatpush2.bf16.msra.mxu0 0
      %7408 = vmatprep.mubr.bf16.mxu0 0
      %7409 = vmatmul.mubr.bf16.gmra.mxu0 %v7374
      %v7410 = vpop.f32.mrf.mxu0
      %v7411 = vadd.f32 0.0, %v7410
      %v7412 = vpop.f32.mrf.mxu0
      %v7413 = vadd.f32 0.0, %v7412
      %v7414 = vpop.f32.mrf.mxu0
      %v7415 = vadd.f32 0.0, %v7414
      %v7416 = vpop.f32.mrf.mxu0
      %v7417 = vadd.f32 0.0, %v7416
      %7418 = vdwg.mxu0
      %7419 = vmatprep.subr.bf16.mxu0 0
      %7420 = vmatpush1.bf16.msra.mxu0 0
      %7421 = vmatprep.subr.bf16.mxu0 0
      %7422 = vmatpush1.bf16.msra.mxu0 0
      %7423 = vmatprep.subr.bf16.mxu0 0
      %7424 = vmatpush1.bf16.msra.mxu0 0
      %7425 = vmatprep.subr.bf16.mxu0 0
      %7426 = vmatpush1.bf16.msra.mxu0 0
      %7427 = vmatprep.subr.bf16.mxu0 0
      %7428 = vmatpush1.bf16.msra.mxu0 0
      %7429 = vmatprep.subr.bf16.mxu0 0
      %7430 = vmatpush1.bf16.msra.mxu0 0
      %7431 = vmatprep.subr.bf16.mxu0 0
      %7432 = vmatpush1.bf16.msra.mxu0 0
      %7433 = vmatprep.subr.bf16.mxu0 %v7368
      %7434 = vmatpush1.bf16.msra.mxu0 %v7367
      %7435 = vmatprep.subr.bf16.mxu0 0
      %7436 = vmatpush2.bf16.msra.mxu0 0
      %7437 = vmatprep.subr.bf16.mxu0 0
      %7438 = vmatpush2.bf16.msra.mxu0 0
      %7439 = vmatprep.subr.bf16.mxu0 0
      %7440 = vmatpush2.bf16.msra.mxu0 0
      %7441 = vmatprep.subr.bf16.mxu0 0
      %7442 = vmatpush2.bf16.msra.mxu0 0
      %7443 = vmatprep.subr.bf16.mxu0 0
      %7444 = vmatpush2.bf16.msra.mxu0 0
      %7445 = vmatprep.subr.bf16.mxu0 0
      %7446 = vmatpush2.bf16.msra.mxu0 0
      %7447 = vmatprep.subr.bf16.mxu0 0
      %7448 = vmatpush2.bf16.msra.mxu0 0
      %7449 = vmatprep.subr.bf16.mxu0 0
      %7450 = vmatpush2.bf16.msra.mxu0 0
      %7451 = vmatprep.mubr.bf16.mxu0 0
      %7452 = vmatmul.mubr.bf16.gmra.mxu0 %v7374
      %v7453 = vpop.f32.mrf.mxu0
      %v7454 = vadd.f32 0.0, %v7453
      %v7455 = vpop.f32.mrf.mxu0
      %v7456 = vadd.f32 0.0, %v7455
      %v7457 = vpop.f32.mrf.mxu0
      %v7458 = vadd.f32 0.0, %v7457
      %v7459 = vpop.f32.mrf.mxu0
      %v7460 = vadd.f32 0.0, %v7459
      %7461 = vdwg.mxu0
      %v7462 = vadd.f32 %v7342, %v7411
      %v7463 = vadd.f32 %v7343, %v7413
      %v7464 = vadd.f32 %v7344, %v7454
      %v7465 = vadd.f32 %v7345, %v7456
      %v7466 = vadd.f32 %v7346, %v7415
      %v7467 = vadd.f32 %v7347, %v7417
      %v7468 = vadd.f32 %v7348, %v7458
      %v7469 = vadd.f32 %v7349, %v7460
      %7470 = vrot.lane.b32.xlu0 %v7354, 112
      %v7471 = vpop.permute.xlu0 %7470
      %7472 = vrot.lane.b32.xlu0 %v6994, 88
      %v7473 = vpop.permute.xlu0 %7472
      %7474 = vrot.lane.b32.xlu0 %v6995, 88
      %v7475 = vpop.permute.xlu0 %7474
      %7476 = vrot.lane.b32.xlu0 %v6996, 88
      %v7477 = vpop.permute.xlu0 %7476
      %7478 = vrot.lane.b32.xlu0 %v6997, 88
      %v7479 = vpop.permute.xlu0 %7478
      %7480 = vrot.lane.b32.xlu0 %v6998, 88
      %v7481 = vpop.permute.xlu0 %7480
      %v7482 = vsel %vm1623, %v7473, %v7475
      %v7483 = vsel %vm1623, %v7475, %v7477
      %v7484 = vsel %vm1623, %v7477, %v7479
      %v7485 = vsel %vm1623, %v7479, %v7481
      %v7491 = vsel %vm416, %v7471, 0
      %7493 = vmatprep.subr.bf16.mxu0 0
      %7494 = vmatpush1.bf16.msra.mxu0 0
      %7495 = vmatprep.subr.bf16.mxu0 0
      %7496 = vmatpush1.bf16.msra.mxu0 0
      %7497 = vmatprep.subr.bf16.mxu0 0
      %7498 = vmatpush1.bf16.msra.mxu0 0
      %7499 = vmatprep.subr.bf16.mxu0 0
      %7500 = vmatpush1.bf16.msra.mxu0 0
      %7501 = vmatprep.subr.bf16.mxu0 0
      %7502 = vmatpush1.bf16.msra.mxu0 0
      %7503 = vmatprep.subr.bf16.mxu0 0
      %7504 = vmatpush1.bf16.msra.mxu0 0
      %7505 = vmatprep.subr.bf16.mxu0 0
      %7506 = vmatpush1.bf16.msra.mxu0 0
      %7507 = vmatprep.subr.bf16.mxu0 %v7483
      %7508 = vmatpush1.bf16.msra.mxu0 %v7482
      %7509 = vmatprep.subr.bf16.mxu0 0
      %7510 = vmatpush2.bf16.msra.mxu0 0
      %7511 = vmatprep.subr.bf16.mxu0 0
      %7512 = vmatpush2.bf16.msra.mxu0 0
      %7513 = vmatprep.subr.bf16.mxu0 0
      %7514 = vmatpush2.bf16.msra.mxu0 0
      %7515 = vmatprep.subr.bf16.mxu0 0
      %7516 = vmatpush2.bf16.msra.mxu0 0
      %7517 = vmatprep.subr.bf16.mxu0 0
      %7518 = vmatpush2.bf16.msra.mxu0 0
      %7519 = vmatprep.subr.bf16.mxu0 0
      %7520 = vmatpush2.bf16.msra.mxu0 0
      %7521 = vmatprep.subr.bf16.mxu0 0
      %7522 = vmatpush2.bf16.msra.mxu0 0
      %7523 = vmatprep.subr.bf16.mxu0 0
      %7524 = vmatpush2.bf16.msra.mxu0 0
      %7525 = vmatprep.mubr.bf16.mxu0 0
      %7526 = vmatmul.mubr.bf16.gmra.mxu0 %v7491
      %v7527 = vpop.f32.mrf.mxu0
      %v7528 = vadd.f32 0.0, %v7527
      %v7529 = vpop.f32.mrf.mxu0
      %v7530 = vadd.f32 0.0, %v7529
      %v7531 = vpop.f32.mrf.mxu0
      %v7532 = vadd.f32 0.0, %v7531
      %v7533 = vpop.f32.mrf.mxu0
      %v7534 = vadd.f32 0.0, %v7533
      %7535 = vdwg.mxu0
      %7536 = vmatprep.subr.bf16.mxu0 0
      %7537 = vmatpush1.bf16.msra.mxu0 0
      %7538 = vmatprep.subr.bf16.mxu0 0
      %7539 = vmatpush1.bf16.msra.mxu0 0
      %7540 = vmatprep.subr.bf16.mxu0 0
      %7541 = vmatpush1.bf16.msra.mxu0 0
      %7542 = vmatprep.subr.bf16.mxu0 0
      %7543 = vmatpush1.bf16.msra.mxu0 0
      %7544 = vmatprep.subr.bf16.mxu0 0
      %7545 = vmatpush1.bf16.msra.mxu0 0
      %7546 = vmatprep.subr.bf16.mxu0 0
      %7547 = vmatpush1.bf16.msra.mxu0 0
      %7548 = vmatprep.subr.bf16.mxu0 0
      %7549 = vmatpush1.bf16.msra.mxu0 0
      %7550 = vmatprep.subr.bf16.mxu0 %v7485
      %7551 = vmatpush1.bf16.msra.mxu0 %v7484
      %7552 = vmatprep.subr.bf16.mxu0 0
      %7553 = vmatpush2.bf16.msra.mxu0 0
      %7554 = vmatprep.subr.bf16.mxu0 0
      %7555 = vmatpush2.bf16.msra.mxu0 0
      %7556 = vmatprep.subr.bf16.mxu0 0
      %7557 = vmatpush2.bf16.msra.mxu0 0
      %7558 = vmatprep.subr.bf16.mxu0 0
      %7559 = vmatpush2.bf16.msra.mxu0 0
      %7560 = vmatprep.subr.bf16.mxu0 0
      %7561 = vmatpush2.bf16.msra.mxu0 0
      %7562 = vmatprep.subr.bf16.mxu0 0
      %7563 = vmatpush2.bf16.msra.mxu0 0
      %7564 = vmatprep.subr.bf16.mxu0 0
      %7565 = vmatpush2.bf16.msra.mxu0 0
      %7566 = vmatprep.subr.bf16.mxu0 0
      %7567 = vmatpush2.bf16.msra.mxu0 0
      %7568 = vmatprep.mubr.bf16.mxu0 0
      %7569 = vmatmul.mubr.bf16.gmra.mxu0 %v7491
      %v7570 = vpop.f32.mrf.mxu0
      %v7571 = vadd.f32 0.0, %v7570
      %v7572 = vpop.f32.mrf.mxu0
      %v7573 = vadd.f32 0.0, %v7572
      %v7574 = vpop.f32.mrf.mxu0
      %v7575 = vadd.f32 0.0, %v7574
      %v7576 = vpop.f32.mrf.mxu0
      %v7577 = vadd.f32 0.0, %v7576
      %7578 = vdwg.mxu0
      %v7579 = vadd.f32 %v7462, %v7528
      %v7580 = vadd.f32 %v7463, %v7530
      %v7581 = vadd.f32 %v7464, %v7571
      %v7582 = vadd.f32 %v7465, %v7573
      %v7583 = vadd.f32 %v7466, %v7532
      %v7584 = vadd.f32 %v7467, %v7534
      %v7585 = vadd.f32 %v7468, %v7575
      %v7586 = vadd.f32 %v7469, %v7577
      %7587 = vrot.lane.b32.xlu0 %v7354, 96
      %v7588 = vpop.permute.xlu0 %7587
      %7589 = vrot.lane.b32.xlu0 %v6994, 86
      %v7590 = vpop.permute.xlu0 %7589
      %7591 = vrot.lane.b32.xlu0 %v6995, 86
      %v7592 = vpop.permute.xlu0 %7591
      %7593 = vrot.lane.b32.xlu0 %v6996, 86
      %v7594 = vpop.permute.xlu0 %7593
      %7595 = vrot.lane.b32.xlu0 %v6997, 86
      %v7596 = vpop.permute.xlu0 %7595
      %7597 = vrot.lane.b32.xlu0 %v6998, 86
      %v7598 = vpop.permute.xlu0 %7597
      %v7599 = vsel %vm2093, %v7590, %v7592
      %v7600 = vsel %vm2093, %v7592, %v7594
      %v7601 = vsel %vm2093, %v7594, %v7596
      %v7602 = vsel %vm2093, %v7596, %v7598
      %v7608 = vsel %vm416, %v7588, 0
      %7610 = vmatprep.subr.bf16.mxu0 0
      %7611 = vmatpush1.bf16.msra.mxu0 0
      %7612 = vmatprep.subr.bf16.mxu0 0
      %7613 = vmatpush1.bf16.msra.mxu0 0
      %7614 = vmatprep.subr.bf16.mxu0 0
      %7615 = vmatpush1.bf16.msra.mxu0 0
      %7616 = vmatprep.subr.bf16.mxu0 0
      %7617 = vmatpush1.bf16.msra.mxu0 0
      %7618 = vmatprep.subr.bf16.mxu0 0
      %7619 = vmatpush1.bf16.msra.mxu0 0
      %7620 = vmatprep.subr.bf16.mxu0 0
      %7621 = vmatpush1.bf16.msra.mxu0 0
      %7622 = vmatprep.subr.bf16.mxu0 0
      %7623 = vmatpush1.bf16.msra.mxu0 0
      %7624 = vmatprep.subr.bf16.mxu0 %v7600
      %7625 = vmatpush1.bf16.msra.mxu0 %v7599
      %7626 = vmatprep.subr.bf16.mxu0 0
      %7627 = vmatpush2.bf16.msra.mxu0 0
      %7628 = vmatprep.subr.bf16.mxu0 0
      %7629 = vmatpush2.bf16.msra.mxu0 0
      %7630 = vmatprep.subr.bf16.mxu0 0
      %7631 = vmatpush2.bf16.msra.mxu0 0
      %7632 = vmatprep.subr.bf16.mxu0 0
      %7633 = vmatpush2.bf16.msra.mxu0 0
      %7634 = vmatprep.subr.bf16.mxu0 0
      %7635 = vmatpush2.bf16.msra.mxu0 0
      %7636 = vmatprep.subr.bf16.mxu0 0
      %7637 = vmatpush2.bf16.msra.mxu0 0
      %7638 = vmatprep.subr.bf16.mxu0 0
      %7639 = vmatpush2.bf16.msra.mxu0 0
      %7640 = vmatprep.subr.bf16.mxu0 0
      %7641 = vmatpush2.bf16.msra.mxu0 0
      %7642 = vmatprep.mubr.bf16.mxu0 0
      %7643 = vmatmul.mubr.bf16.gmra.mxu0 %v7608
      %v7644 = vpop.f32.mrf.mxu0
      %v7645 = vadd.f32 0.0, %v7644
      %v7646 = vpop.f32.mrf.mxu0
      %v7647 = vadd.f32 0.0, %v7646
      %v7648 = vpop.f32.mrf.mxu0
      %v7649 = vadd.f32 0.0, %v7648
      %v7650 = vpop.f32.mrf.mxu0
      %v7651 = vadd.f32 0.0, %v7650
      %7652 = vdwg.mxu0
      %7653 = vmatprep.subr.bf16.mxu0 0
      %7654 = vmatpush1.bf16.msra.mxu0 0
      %7655 = vmatprep.subr.bf16.mxu0 0
      %7656 = vmatpush1.bf16.msra.mxu0 0
      %7657 = vmatprep.subr.bf16.mxu0 0
      %7658 = vmatpush1.bf16.msra.mxu0 0
      %7659 = vmatprep.subr.bf16.mxu0 0
      %7660 = vmatpush1.bf16.msra.mxu0 0
      %7661 = vmatprep.subr.bf16.mxu0 0
      %7662 = vmatpush1.bf16.msra.mxu0 0
      %7663 = vmatprep.subr.bf16.mxu0 0
      %7664 = vmatpush1.bf16.msra.mxu0 0
      %7665 = vmatprep.subr.bf16.mxu0 0
      %7666 = vmatpush1.bf16.msra.mxu0 0
      %7667 = vmatprep.subr.bf16.mxu0 %v7602
      %7668 = vmatpush1.bf16.msra.mxu0 %v7601
      %7669 = vmatprep.subr.bf16.mxu0 0
      %7670 = vmatpush2.bf16.msra.mxu0 0
      %7671 = vmatprep.subr.bf16.mxu0 0
      %7672 = vmatpush2.bf16.msra.mxu0 0
      %7673 = vmatprep.subr.bf16.mxu0 0
      %7674 = vmatpush2.bf16.msra.mxu0 0
      %7675 = vmatprep.subr.bf16.mxu0 0
      %7676 = vmatpush2.bf16.msra.mxu0 0
      %7677 = vmatprep.subr.bf16.mxu0 0
      %7678 = vmatpush2.bf16.msra.mxu0 0
      %7679 = vmatprep.subr.bf16.mxu0 0
      %7680 = vmatpush2.bf16.msra.mxu0 0
      %7681 = vmatprep.subr.bf16.mxu0 0
      %7682 = vmatpush2.bf16.msra.mxu0 0
      %7683 = vmatprep.subr.bf16.mxu0 0
      %7684 = vmatpush2.bf16.msra.mxu0 0
      %7685 = vmatprep.mubr.bf16.mxu0 0
      %7686 = vmatmul.mubr.bf16.gmra.mxu0 %v7608
      %v7687 = vpop.f32.mrf.mxu0
      %v7688 = vadd.f32 0.0, %v7687
      %v7689 = vpop.f32.mrf.mxu0
      %v7690 = vadd.f32 0.0, %v7689
      %v7691 = vpop.f32.mrf.mxu0
      %v7692 = vadd.f32 0.0, %v7691
      %v7693 = vpop.f32.mrf.mxu0
      %v7694 = vadd.f32 0.0, %v7693
      %7695 = vdwg.mxu0
      %v7696 = vadd.f32 %v7579, %v7645
      %v7697 = vadd.f32 %v7580, %v7647
      %v7698 = vadd.f32 %v7581, %v7688
      %v7699 = vadd.f32 %v7582, %v7690
      %v7700 = vadd.f32 %v7583, %v7649
      %v7701 = vadd.f32 %v7584, %v7651
      %v7702 = vadd.f32 %v7585, %v7692
      %v7703 = vadd.f32 %v7586, %v7694
      %7704 = vrot.lane.b32.xlu0 %v7354, 80
      %v7705 = vpop.permute.xlu0 %7704
      %7706 = vrot.lane.b32.xlu0 %v6994, 84
      %v7707 = vpop.permute.xlu0 %7706
      %7708 = vrot.lane.b32.xlu0 %v6995, 84
      %v7709 = vpop.permute.xlu0 %7708
      %7710 = vrot.lane.b32.xlu0 %v6996, 84
      %v7711 = vpop.permute.xlu0 %7710
      %7712 = vrot.lane.b32.xlu0 %v6997, 84
      %v7713 = vpop.permute.xlu0 %7712
      %7714 = vrot.lane.b32.xlu0 %v6998, 84
      %v7715 = vpop.permute.xlu0 %7714
      %v7716 = vsel %vm5572, %v7707, %v7709
      %v7717 = vsel %vm5572, %v7709, %v7711
      %v7718 = vsel %vm5572, %v7711, %v7713
      %v7719 = vsel %vm5572, %v7713, %v7715
      %v7725 = vsel %vm416, %v7705, 0
      %7727 = vmatprep.subr.bf16.mxu0 0
      %7728 = vmatpush1.bf16.msra.mxu0 0
      %7729 = vmatprep.subr.bf16.mxu0 0
      %7730 = vmatpush1.bf16.msra.mxu0 0
      %7731 = vmatprep.subr.bf16.mxu0 0
      %7732 = vmatpush1.bf16.msra.mxu0 0
      %7733 = vmatprep.subr.bf16.mxu0 0
      %7734 = vmatpush1.bf16.msra.mxu0 0
      %7735 = vmatprep.subr.bf16.mxu0 0
      %7736 = vmatpush1.bf16.msra.mxu0 0
      %7737 = vmatprep.subr.bf16.mxu0 0
      %7738 = vmatpush1.bf16.msra.mxu0 0
      %7739 = vmatprep.subr.bf16.mxu0 0
      %7740 = vmatpush1.bf16.msra.mxu0 0
      %7741 = vmatprep.subr.bf16.mxu0 %v7717
      %7742 = vmatpush1.bf16.msra.mxu0 %v7716
      %7743 = vmatprep.subr.bf16.mxu0 0
      %7744 = vmatpush2.bf16.msra.mxu0 0
      %7745 = vmatprep.subr.bf16.mxu0 0
      %7746 = vmatpush2.bf16.msra.mxu0 0
      %7747 = vmatprep.subr.bf16.mxu0 0
      %7748 = vmatpush2.bf16.msra.mxu0 0
      %7749 = vmatprep.subr.bf16.mxu0 0
      %7750 = vmatpush2.bf16.msra.mxu0 0
      %7751 = vmatprep.subr.bf16.mxu0 0
      %7752 = vmatpush2.bf16.msra.mxu0 0
      %7753 = vmatprep.subr.bf16.mxu0 0
      %7754 = vmatpush2.bf16.msra.mxu0 0
      %7755 = vmatprep.subr.bf16.mxu0 0
      %7756 = vmatpush2.bf16.msra.mxu0 0
      %7757 = vmatprep.subr.bf16.mxu0 0
      %7758 = vmatpush2.bf16.msra.mxu0 0
      %7759 = vmatprep.mubr.bf16.mxu0 0
      %7760 = vmatmul.mubr.bf16.gmra.mxu0 %v7725
      %v7761 = vpop.f32.mrf.mxu0
      %v7762 = vadd.f32 0.0, %v7761
      %v7763 = vpop.f32.mrf.mxu0
      %v7764 = vadd.f32 0.0, %v7763
      %v7765 = vpop.f32.mrf.mxu0
      %v7766 = vadd.f32 0.0, %v7765
      %v7767 = vpop.f32.mrf.mxu0
      %v7768 = vadd.f32 0.0, %v7767
      %7769 = vdwg.mxu0
      %7770 = vmatprep.subr.bf16.mxu0 0
      %7771 = vmatpush1.bf16.msra.mxu0 0
      %7772 = vmatprep.subr.bf16.mxu0 0
      %7773 = vmatpush1.bf16.msra.mxu0 0
      %7774 = vmatprep.subr.bf16.mxu0 0
      %7775 = vmatpush1.bf16.msra.mxu0 0
      %7776 = vmatprep.subr.bf16.mxu0 0
      %7777 = vmatpush1.bf16.msra.mxu0 0
      %7778 = vmatprep.subr.bf16.mxu0 0
      %7779 = vmatpush1.bf16.msra.mxu0 0
      %7780 = vmatprep.subr.bf16.mxu0 0
      %7781 = vmatpush1.bf16.msra.mxu0 0
      %7782 = vmatprep.subr.bf16.mxu0 0
      %7783 = vmatpush1.bf16.msra.mxu0 0
      %7784 = vmatprep.subr.bf16.mxu0 %v7719
      %7785 = vmatpush1.bf16.msra.mxu0 %v7718
      %7786 = vmatprep.subr.bf16.mxu0 0
      %7787 = vmatpush2.bf16.msra.mxu0 0
      %7788 = vmatprep.subr.bf16.mxu0 0
      %7789 = vmatpush2.bf16.msra.mxu0 0
      %7790 = vmatprep.subr.bf16.mxu0 0
      %7791 = vmatpush2.bf16.msra.mxu0 0
      %7792 = vmatprep.subr.bf16.mxu0 0
      %7793 = vmatpush2.bf16.msra.mxu0 0
      %7794 = vmatprep.subr.bf16.mxu0 0
      %7795 = vmatpush2.bf16.msra.mxu0 0
      %7796 = vmatprep.subr.bf16.mxu0 0
      %7797 = vmatpush2.bf16.msra.mxu0 0
      %7798 = vmatprep.subr.bf16.mxu0 0
      %7799 = vmatpush2.bf16.msra.mxu0 0
      %7800 = vmatprep.subr.bf16.mxu0 0
      %7801 = vmatpush2.bf16.msra.mxu0 0
      %7802 = vmatprep.mubr.bf16.mxu0 0
      %7803 = vmatmul.mubr.bf16.gmra.mxu0 %v7725
      %v7804 = vpop.f32.mrf.mxu0
      %v7805 = vadd.f32 0.0, %v7804
      %v7806 = vpop.f32.mrf.mxu0
      %v7807 = vadd.f32 0.0, %v7806
      %v7808 = vpop.f32.mrf.mxu0
      %v7809 = vadd.f32 0.0, %v7808
      %v7810 = vpop.f32.mrf.mxu0
      %v7811 = vadd.f32 0.0, %v7810
      %7812 = vdwg.mxu0
      %v7813 = vadd.f32 %v7696, %v7762
      %v7814 = vadd.f32 %v7697, %v7764
      %v7815 = vadd.f32 %v7698, %v7805
      %v7816 = vadd.f32 %v7699, %v7807
      %v7817 = vadd.f32 %v7700, %v7766
      %v7818 = vadd.f32 %v7701, %v7768
      %v7819 = vadd.f32 %v7702, %v7809
      %v7820 = vadd.f32 %v7703, %v7811
      %7821 = vrot.lane.b32.xlu0 %v7354, 64
      %v7822 = vpop.permute.xlu0 %7821
      %7823 = vrot.lane.b32.xlu0 %v6994, 52
      %v7824 = vpop.permute.xlu0 %7823
      %7825 = vrot.lane.b32.xlu0 %v6995, 52
      %v7826 = vpop.permute.xlu0 %7825
      %7827 = vrot.lane.b32.xlu0 %v6996, 52
      %v7828 = vpop.permute.xlu0 %7827
      %7829 = vrot.lane.b32.xlu0 %v6997, 52
      %v7830 = vpop.permute.xlu0 %7829
      %7831 = vrot.lane.b32.xlu0 %v6998, 52
      %v7832 = vpop.permute.xlu0 %7831
      %vm7833 = vcmask 424960
      %v7834 = vsel %vm7833, %v7824, %v7826
      %v7835 = vsel %vm7833, %v7826, %v7828
      %v7836 = vsel %vm7833, %v7828, %v7830
      %v7837 = vsel %vm7833, %v7830, %v7832
      %v7843 = vsel %vm416, %v7822, 0
      %7845 = vmatprep.subr.bf16.mxu0 0
      %7846 = vmatpush1.bf16.msra.mxu0 0
      %7847 = vmatprep.subr.bf16.mxu0 0
      %7848 = vmatpush1.bf16.msra.mxu0 0
      %7849 = vmatprep.subr.bf16.mxu0 0
      %7850 = vmatpush1.bf16.msra.mxu0 0
      %7851 = vmatprep.subr.bf16.mxu0 0
      %7852 = vmatpush1.bf16.msra.mxu0 0
      %7853 = vmatprep.subr.bf16.mxu0 0
      %7854 = vmatpush1.bf16.msra.mxu0 0
      %7855 = vmatprep.subr.bf16.mxu0 0
      %7856 = vmatpush1.bf16.msra.mxu0 0
      %7857 = vmatprep.subr.bf16.mxu0 0
      %7858 = vmatpush1.bf16.msra.mxu0 0
      %7859 = vmatprep.subr.bf16.mxu0 %v7835
      %7860 = vmatpush1.bf16.msra.mxu0 %v7834
      %7861 = vmatprep.subr.bf16.mxu0 0
      %7862 = vmatpush2.bf16.msra.mxu0 0
      %7863 = vmatprep.subr.bf16.mxu0 0
      %7864 = vmatpush2.bf16.msra.mxu0 0
      %7865 = vmatprep.subr.bf16.mxu0 0
      %7866 = vmatpush2.bf16.msra.mxu0 0
      %7867 = vmatprep.subr.bf16.mxu0 0
      %7868 = vmatpush2.bf16.msra.mxu0 0
      %7869 = vmatprep.subr.bf16.mxu0 0
      %7870 = vmatpush2.bf16.msra.mxu0 0
      %7871 = vmatprep.subr.bf16.mxu0 0
      %7872 = vmatpush2.bf16.msra.mxu0 0
      %7873 = vmatprep.subr.bf16.mxu0 0
      %7874 = vmatpush2.bf16.msra.mxu0 0
      %7875 = vmatprep.subr.bf16.mxu0 0
      %7876 = vmatpush2.bf16.msra.mxu0 0
      %7877 = vmatprep.mubr.bf16.mxu0 0
      %7878 = vmatmul.mubr.bf16.gmra.mxu0 %v7843
      %v7879 = vpop.f32.mrf.mxu0
      %v7880 = vadd.f32 0.0, %v7879
      %v7881 = vpop.f32.mrf.mxu0
      %v7882 = vadd.f32 0.0, %v7881
      %v7883 = vpop.f32.mrf.mxu0
      %v7884 = vadd.f32 0.0, %v7883
      %v7885 = vpop.f32.mrf.mxu0
      %v7886 = vadd.f32 0.0, %v7885
      %7887 = vdwg.mxu0
      %7888 = vmatprep.subr.bf16.mxu0 0
      %7889 = vmatpush1.bf16.msra.mxu0 0
      %7890 = vmatprep.subr.bf16.mxu0 0
      %7891 = vmatpush1.bf16.msra.mxu0 0
      %7892 = vmatprep.subr.bf16.mxu0 0
      %7893 = vmatpush1.bf16.msra.mxu0 0
      %7894 = vmatprep.subr.bf16.mxu0 0
      %7895 = vmatpush1.bf16.msra.mxu0 0
      %7896 = vmatprep.subr.bf16.mxu0 0
      %7897 = vmatpush1.bf16.msra.mxu0 0
      %7898 = vmatprep.subr.bf16.mxu0 0
      %7899 = vmatpush1.bf16.msra.mxu0 0
      %7900 = vmatprep.subr.bf16.mxu0 0
      %7901 = vmatpush1.bf16.msra.mxu0 0
      %7902 = vmatprep.subr.bf16.mxu0 %v7837
      %7903 = vmatpush1.bf16.msra.mxu0 %v7836
      %7904 = vmatprep.subr.bf16.mxu0 0
      %7905 = vmatpush2.bf16.msra.mxu0 0
      %7906 = vmatprep.subr.bf16.mxu0 0
      %7907 = vmatpush2.bf16.msra.mxu0 0
      %7908 = vmatprep.subr.bf16.mxu0 0
      %7909 = vmatpush2.bf16.msra.mxu0 0
      %7910 = vmatprep.subr.bf16.mxu0 0
      %7911 = vmatpush2.bf16.msra.mxu0 0
      %7912 = vmatprep.subr.bf16.mxu0 0
      %7913 = vmatpush2.bf16.msra.mxu0 0
      %7914 = vmatprep.subr.bf16.mxu0 0
      %7915 = vmatpush2.bf16.msra.mxu0 0
      %7916 = vmatprep.subr.bf16.mxu0 0
      %7917 = vmatpush2.bf16.msra.mxu0 0
      %7918 = vmatprep.subr.bf16.mxu0 0
      %7919 = vmatpush2.bf16.msra.mxu0 0
      %7920 = vmatprep.mubr.bf16.mxu0 0
      %7921 = vmatmul.mubr.bf16.gmra.mxu0 %v7843
      %v7922 = vpop.f32.mrf.mxu0
      %v7923 = vadd.f32 0.0, %v7922
      %v7924 = vpop.f32.mrf.mxu0
      %v7925 = vadd.f32 0.0, %v7924
      %v7926 = vpop.f32.mrf.mxu0
      %v7927 = vadd.f32 0.0, %v7926
      %v7928 = vpop.f32.mrf.mxu0
      %v7929 = vadd.f32 0.0, %v7928
      %7930 = vdwg.mxu0
      %v7931 = vadd.f32 %v7813, %v7880
      %v7932 = vadd.f32 %v7814, %v7882
      %v7933 = vadd.f32 %v7815, %v7923
      %v7934 = vadd.f32 %v7816, %v7925
      %v7935 = vadd.f32 %v7817, %v7884
      %v7936 = vadd.f32 %v7818, %v7886
      %v7937 = vadd.f32 %v7819, %v7927
      %v7938 = vadd.f32 %v7820, %v7929
      %7939 = vrot.lane.b32.xlu0 %v7354, 48
      %v7940 = vpop.permute.xlu0 %7939
      %7941 = vrot.lane.b32.xlu0 %v6994, 50
      %v7942 = vpop.permute.xlu0 %7941
      %7943 = vrot.lane.b32.xlu0 %v6995, 50
      %v7944 = vpop.permute.xlu0 %7943
      %7945 = vrot.lane.b32.xlu0 %v6996, 50
      %v7946 = vpop.permute.xlu0 %7945
      %7947 = vrot.lane.b32.xlu0 %v6997, 50
      %v7948 = vpop.permute.xlu0 %7947
      %7949 = vrot.lane.b32.xlu0 %v6998, 50
      %v7950 = vpop.permute.xlu0 %7949
      %vm7951 = vcmask 408576
      %v7952 = vsel %vm7951, %v7942, %v7944
      %v7953 = vsel %vm7951, %v7944, %v7946
      %v7954 = vsel %vm7951, %v7946, %v7948
      %v7955 = vsel %vm7951, %v7948, %v7950
      %v7961 = vsel %vm416, %v7940, 0
      %7963 = vmatprep.subr.bf16.mxu0 0
      %7964 = vmatpush1.bf16.msra.mxu0 0
      %7965 = vmatprep.subr.bf16.mxu0 0
      %7966 = vmatpush1.bf16.msra.mxu0 0
      %7967 = vmatprep.subr.bf16.mxu0 0
      %7968 = vmatpush1.bf16.msra.mxu0 0
      %7969 = vmatprep.subr.bf16.mxu0 0
      %7970 = vmatpush1.bf16.msra.mxu0 0
      %7971 = vmatprep.subr.bf16.mxu0 0
      %7972 = vmatpush1.bf16.msra.mxu0 0
      %7973 = vmatprep.subr.bf16.mxu0 0
      %7974 = vmatpush1.bf16.msra.mxu0 0
      %7975 = vmatprep.subr.bf16.mxu0 0
      %7976 = vmatpush1.bf16.msra.mxu0 0
      %7977 = vmatprep.subr.bf16.mxu0 %v7953
      %7978 = vmatpush1.bf16.msra.mxu0 %v7952
      %7979 = vmatprep.subr.bf16.mxu0 0
      %7980 = vmatpush2.bf16.msra.mxu0 0
      %7981 = vmatprep.subr.bf16.mxu0 0
      %7982 = vmatpush2.bf16.msra.mxu0 0
      %7983 = vmatprep.subr.bf16.mxu0 0
      %7984 = vmatpush2.bf16.msra.mxu0 0
      %7985 = vmatprep.subr.bf16.mxu0 0
      %7986 = vmatpush2.bf16.msra.mxu0 0
      %7987 = vmatprep.subr.bf16.mxu0 0
      %7988 = vmatpush2.bf16.msra.mxu0 0
      %7989 = vmatprep.subr.bf16.mxu0 0
      %7990 = vmatpush2.bf16.msra.mxu0 0
      %7991 = vmatprep.subr.bf16.mxu0 0
      %7992 = vmatpush2.bf16.msra.mxu0 0
      %7993 = vmatprep.subr.bf16.mxu0 0
      %7994 = vmatpush2.bf16.msra.mxu0 0
      %7995 = vmatprep.mubr.bf16.mxu0 0
      %7996 = vmatmul.mubr.bf16.gmra.mxu0 %v7961
      %v7997 = vpop.f32.mrf.mxu0
      %v7998 = vadd.f32 0.0, %v7997
      %v7999 = vpop.f32.mrf.mxu0
      %v8000 = vadd.f32 0.0, %v7999
      %v8001 = vpop.f32.mrf.mxu0
      %v8002 = vadd.f32 0.0, %v8001
      %v8003 = vpop.f32.mrf.mxu0
      %v8004 = vadd.f32 0.0, %v8003
      %8005 = vdwg.mxu0
      %8006 = vmatprep.subr.bf16.mxu0 0
      %8007 = vmatpush1.bf16.msra.mxu0 0
      %8008 = vmatprep.subr.bf16.mxu0 0
      %8009 = vmatpush1.bf16.msra.mxu0 0
      %8010 = vmatprep.subr.bf16.mxu0 0
      %8011 = vmatpush1.bf16.msra.mxu0 0
      %8012 = vmatprep.subr.bf16.mxu0 0
      %8013 = vmatpush1.bf16.msra.mxu0 0
      %8014 = vmatprep.subr.bf16.mxu0 0
      %8015 = vmatpush1.bf16.msra.mxu0 0
      %8016 = vmatprep.subr.bf16.mxu0 0
      %8017 = vmatpush1.bf16.msra.mxu0 0
      %8018 = vmatprep.subr.bf16.mxu0 0
      %8019 = vmatpush1.bf16.msra.mxu0 0
      %8020 = vmatprep.subr.bf16.mxu0 %v7955
      %8021 = vmatpush1.bf16.msra.mxu0 %v7954
      %8022 = vmatprep.subr.bf16.mxu0 0
      %8023 = vmatpush2.bf16.msra.mxu0 0
      %8024 = vmatprep.subr.bf16.mxu0 0
      %8025 = vmatpush2.bf16.msra.mxu0 0
      %8026 = vmatprep.subr.bf16.mxu0 0
      %8027 = vmatpush2.bf16.msra.mxu0 0
      %8028 = vmatprep.subr.bf16.mxu0 0
      %8029 = vmatpush2.bf16.msra.mxu0 0
      %8030 = vmatprep.subr.bf16.mxu0 0
      %8031 = vmatpush2.bf16.msra.mxu0 0
      %8032 = vmatprep.subr.bf16.mxu0 0
      %8033 = vmatpush2.bf16.msra.mxu0 0
      %8034 = vmatprep.subr.bf16.mxu0 0
      %8035 = vmatpush2.bf16.msra.mxu0 0
      %8036 = vmatprep.subr.bf16.mxu0 0
      %8037 = vmatpush2.bf16.msra.mxu0 0
      %8038 = vmatprep.mubr.bf16.mxu0 0
      %8039 = vmatmul.mubr.bf16.gmra.mxu0 %v7961
      %v8040 = vpop.f32.mrf.mxu0
      %v8041 = vadd.f32 0.0, %v8040
      %v8042 = vpop.f32.mrf.mxu0
      %v8043 = vadd.f32 0.0, %v8042
      %v8044 = vpop.f32.mrf.mxu0
      %v8045 = vadd.f32 0.0, %v8044
      %v8046 = vpop.f32.mrf.mxu0
      %v8047 = vadd.f32 0.0, %v8046
      %8048 = vdwg.mxu0
      %v8049 = vadd.f32 %v7931, %v7998
      %v8050 = vadd.f32 %v7932, %v8000
      %v8051 = vadd.f32 %v7933, %v8041
      %v8052 = vadd.f32 %v7934, %v8043
      %v8053 = vadd.f32 %v7935, %v8002
      %v8054 = vadd.f32 %v7936, %v8004
      %v8055 = vadd.f32 %v7937, %v8045
      %v8056 = vadd.f32 %v7938, %v8047
      %8057 = vrot.lane.b32.xlu0 %v7354, 32
      %v8058 = vpop.permute.xlu0 %8057
      %8059 = vrot.lane.b32.xlu0 %v6994, 48
      %v8060 = vpop.permute.xlu0 %8059
      %8061 = vrot.lane.b32.xlu0 %v6995, 48
      %v8062 = vpop.permute.xlu0 %8061
      %8063 = vrot.lane.b32.xlu0 %v6996, 48
      %v8064 = vpop.permute.xlu0 %8063
      %8065 = vrot.lane.b32.xlu0 %v6997, 48
      %v8066 = vpop.permute.xlu0 %8065
      %8067 = vrot.lane.b32.xlu0 %v6998, 48
      %v8068 = vpop.permute.xlu0 %8067
      %vm8069 = vcmask 392192
      %v8070 = vsel %vm8069, %v8060, %v8062
      %v8071 = vsel %vm8069, %v8062, %v8064
      %v8072 = vsel %vm8069, %v8064, %v8066
      %v8073 = vsel %vm8069, %v8066, %v8068
      %v8079 = vsel %vm416, %v8058, 0
      %8081 = vmatprep.subr.bf16.mxu0 0
      %8082 = vmatpush1.bf16.msra.mxu0 0
      %8083 = vmatprep.subr.bf16.mxu0 0
      %8084 = vmatpush1.bf16.msra.mxu0 0
      %8085 = vmatprep.subr.bf16.mxu0 0
      %8086 = vmatpush1.bf16.msra.mxu0 0
      %8087 = vmatprep.subr.bf16.mxu0 0
      %8088 = vmatpush1.bf16.msra.mxu0 0
      %8089 = vmatprep.subr.bf16.mxu0 0
      %8090 = vmatpush1.bf16.msra.mxu0 0
      %8091 = vmatprep.subr.bf16.mxu0 0
      %8092 = vmatpush1.bf16.msra.mxu0 0
      %8093 = vmatprep.subr.bf16.mxu0 0
      %8094 = vmatpush1.bf16.msra.mxu0 0
      %8095 = vmatprep.subr.bf16.mxu0 %v8071
      %8096 = vmatpush1.bf16.msra.mxu0 %v8070
      %8097 = vmatprep.subr.bf16.mxu0 0
      %8098 = vmatpush2.bf16.msra.mxu0 0
      %8099 = vmatprep.subr.bf16.mxu0 0
      %8100 = vmatpush2.bf16.msra.mxu0 0
      %8101 = vmatprep.subr.bf16.mxu0 0
      %8102 = vmatpush2.bf16.msra.mxu0 0
      %8103 = vmatprep.subr.bf16.mxu0 0
      %8104 = vmatpush2.bf16.msra.mxu0 0
      %8105 = vmatprep.subr.bf16.mxu0 0
      %8106 = vmatpush2.bf16.msra.mxu0 0
      %8107 = vmatprep.subr.bf16.mxu0 0
      %8108 = vmatpush2.bf16.msra.mxu0 0
      %8109 = vmatprep.subr.bf16.mxu0 0
      %8110 = vmatpush2.bf16.msra.mxu0 0
      %8111 = vmatprep.subr.bf16.mxu0 0
      %8112 = vmatpush2.bf16.msra.mxu0 0
      %8113 = vmatprep.mubr.bf16.mxu0 0
      %8114 = vmatmul.mubr.bf16.gmra.mxu0 %v8079
      %v8115 = vpop.f32.mrf.mxu0
      %v8116 = vadd.f32 0.0, %v8115
      %v8117 = vpop.f32.mrf.mxu0
      %v8118 = vadd.f32 0.0, %v8117
      %v8119 = vpop.f32.mrf.mxu0
      %v8120 = vadd.f32 0.0, %v8119
      %v8121 = vpop.f32.mrf.mxu0
      %v8122 = vadd.f32 0.0, %v8121
      %8123 = vdwg.mxu0
      %8124 = vmatprep.subr.bf16.mxu0 0
      %8125 = vmatpush1.bf16.msra.mxu0 0
      %8126 = vmatprep.subr.bf16.mxu0 0
      %8127 = vmatpush1.bf16.msra.mxu0 0
      %8128 = vmatprep.subr.bf16.mxu0 0
      %8129 = vmatpush1.bf16.msra.mxu0 0
      %8130 = vmatprep.subr.bf16.mxu0 0
      %8131 = vmatpush1.bf16.msra.mxu0 0
      %8132 = vmatprep.subr.bf16.mxu0 0
      %8133 = vmatpush1.bf16.msra.mxu0 0
      %8134 = vmatprep.subr.bf16.mxu0 0
      %8135 = vmatpush1.bf16.msra.mxu0 0
      %8136 = vmatprep.subr.bf16.mxu0 0
      %8137 = vmatpush1.bf16.msra.mxu0 0
      %8138 = vmatprep.subr.bf16.mxu0 %v8073
      %8139 = vmatpush1.bf16.msra.mxu0 %v8072
      %8140 = vmatprep.subr.bf16.mxu0 0
      %8141 = vmatpush2.bf16.msra.mxu0 0
      %8142 = vmatprep.subr.bf16.mxu0 0
      %8143 = vmatpush2.bf16.msra.mxu0 0
      %8144 = vmatprep.subr.bf16.mxu0 0
      %8145 = vmatpush2.bf16.msra.mxu0 0
      %8146 = vmatprep.subr.bf16.mxu0 0
      %8147 = vmatpush2.bf16.msra.mxu0 0
      %8148 = vmatprep.subr.bf16.mxu0 0
      %8149 = vmatpush2.bf16.msra.mxu0 0
      %8150 = vmatprep.subr.bf16.mxu0 0
      %8151 = vmatpush2.bf16.msra.mxu0 0
      %8152 = vmatprep.subr.bf16.mxu0 0
      %8153 = vmatpush2.bf16.msra.mxu0 0
      %8154 = vmatprep.subr.bf16.mxu0 0
      %8155 = vmatpush2.bf16.msra.mxu0 0
      %8156 = vmatprep.mubr.bf16.mxu0 0
      %8157 = vmatmul.mubr.bf16.gmra.mxu0 %v8079
      %v8158 = vpop.f32.mrf.mxu0
      %v8159 = vadd.f32 0.0, %v8158
      %v8160 = vpop.f32.mrf.mxu0
      %v8161 = vadd.f32 0.0, %v8160
      %v8162 = vpop.f32.mrf.mxu0
      %v8163 = vadd.f32 0.0, %v8162
      %v8164 = vpop.f32.mrf.mxu0
      %v8165 = vadd.f32 0.0, %v8164
      %8166 = vdwg.mxu0
      %v8167 = vadd.f32 %v8049, %v8116
      %v8168 = vadd.f32 %v8050, %v8118
      %v8169 = vadd.f32 %v8051, %v8159
      %v8170 = vadd.f32 %v8052, %v8161
      %v8171 = vadd.f32 %v8053, %v8120
      %v8172 = vadd.f32 %v8054, %v8122
      %v8173 = vadd.f32 %v8055, %v8163
      %v8174 = vadd.f32 %v8056, %v8165
      %8175 = vrot.lane.b32.xlu0 %v7354, 16
      %v8176 = vpop.permute.xlu0 %8175
      %8177 = vrot.lane.b32.xlu0 %v6994, 46
      %v8178 = vpop.permute.xlu0 %8177
      %8179 = vrot.lane.b32.xlu0 %v6995, 46
      %v8180 = vpop.permute.xlu0 %8179
      %8181 = vrot.lane.b32.xlu0 %v6996, 46
      %v8182 = vpop.permute.xlu0 %8181
      %8183 = vrot.lane.b32.xlu0 %v6997, 46
      %v8184 = vpop.permute.xlu0 %8183
      %8185 = vrot.lane.b32.xlu0 %v6998, 46
      %v8186 = vpop.permute.xlu0 %8185
      %vm8187 = vcmask 375808
      %v8188 = vsel %vm8187, %v8178, %v8180
      %v8189 = vsel %vm8187, %v8180, %v8182
      %v8190 = vsel %vm8187, %v8182, %v8184
      %v8191 = vsel %vm8187, %v8184, %v8186
      %v8197 = vsel %vm416, %v8176, 0
      %8199 = vmatprep.subr.bf16.mxu0 0
      %8200 = vmatpush1.bf16.msra.mxu0 0
      %8201 = vmatprep.subr.bf16.mxu0 0
      %8202 = vmatpush1.bf16.msra.mxu0 0
      %8203 = vmatprep.subr.bf16.mxu0 0
      %8204 = vmatpush1.bf16.msra.mxu0 0
      %8205 = vmatprep.subr.bf16.mxu0 0
      %8206 = vmatpush1.bf16.msra.mxu0 0
      %8207 = vmatprep.subr.bf16.mxu0 0
      %8208 = vmatpush1.bf16.msra.mxu0 0
      %8209 = vmatprep.subr.bf16.mxu0 0
      %8210 = vmatpush1.bf16.msra.mxu0 0
      %8211 = vmatprep.subr.bf16.mxu0 0
      %8212 = vmatpush1.bf16.msra.mxu0 0
      %8213 = vmatprep.subr.bf16.mxu0 %v8189
      %8214 = vmatpush1.bf16.msra.mxu0 %v8188
      %8215 = vmatprep.subr.bf16.mxu0 0
      %8216 = vmatpush2.bf16.msra.mxu0 0
      %8217 = vmatprep.subr.bf16.mxu0 0
      %8218 = vmatpush2.bf16.msra.mxu0 0
      %8219 = vmatprep.subr.bf16.mxu0 0
      %8220 = vmatpush2.bf16.msra.mxu0 0
      %8221 = vmatprep.subr.bf16.mxu0 0
      %8222 = vmatpush2.bf16.msra.mxu0 0
      %8223 = vmatprep.subr.bf16.mxu0 0
      %8224 = vmatpush2.bf16.msra.mxu0 0
      %8225 = vmatprep.subr.bf16.mxu0 0
      %8226 = vmatpush2.bf16.msra.mxu0 0
      %8227 = vmatprep.subr.bf16.mxu0 0
      %8228 = vmatpush2.bf16.msra.mxu0 0
      %8229 = vmatprep.subr.bf16.mxu0 0
      %8230 = vmatpush2.bf16.msra.mxu0 0
      %8231 = vmatprep.mubr.bf16.mxu0 0
      %8232 = vmatmul.mubr.bf16.gmra.mxu0 %v8197
      %v8233 = vpop.f32.mrf.mxu0
      %v8234 = vadd.f32 0.0, %v8233
      %v8235 = vpop.f32.mrf.mxu0
      %v8236 = vadd.f32 0.0, %v8235
      %v8237 = vpop.f32.mrf.mxu0
      %v8238 = vadd.f32 0.0, %v8237
      %v8239 = vpop.f32.mrf.mxu0
      %v8240 = vadd.f32 0.0, %v8239
      %8241 = vdwg.mxu0
      %8242 = vmatprep.subr.bf16.mxu0 0
      %8243 = vmatpush1.bf16.msra.mxu0 0
      %8244 = vmatprep.subr.bf16.mxu0 0
      %8245 = vmatpush1.bf16.msra.mxu0 0
      %8246 = vmatprep.subr.bf16.mxu0 0
      %8247 = vmatpush1.bf16.msra.mxu0 0
      %8248 = vmatprep.subr.bf16.mxu0 0
      %8249 = vmatpush1.bf16.msra.mxu0 0
      %8250 = vmatprep.subr.bf16.mxu0 0
      %8251 = vmatpush1.bf16.msra.mxu0 0
      %8252 = vmatprep.subr.bf16.mxu0 0
      %8253 = vmatpush1.bf16.msra.mxu0 0
      %8254 = vmatprep.subr.bf16.mxu0 0
      %8255 = vmatpush1.bf16.msra.mxu0 0
      %8256 = vmatprep.subr.bf16.mxu0 %v8191
      %8257 = vmatpush1.bf16.msra.mxu0 %v8190
      %8258 = vmatprep.subr.bf16.mxu0 0
      %8259 = vmatpush2.bf16.msra.mxu0 0
      %8260 = vmatprep.subr.bf16.mxu0 0
      %8261 = vmatpush2.bf16.msra.mxu0 0
      %8262 = vmatprep.subr.bf16.mxu0 0
      %8263 = vmatpush2.bf16.msra.mxu0 0
      %8264 = vmatprep.subr.bf16.mxu0 0
      %8265 = vmatpush2.bf16.msra.mxu0 0
      %8266 = vmatprep.subr.bf16.mxu0 0
      %8267 = vmatpush2.bf16.msra.mxu0 0
      %8268 = vmatprep.subr.bf16.mxu0 0
      %8269 = vmatpush2.bf16.msra.mxu0 0
      %8270 = vmatprep.subr.bf16.mxu0 0
      %8271 = vmatpush2.bf16.msra.mxu0 0
      %8272 = vmatprep.subr.bf16.mxu0 0
      %8273 = vmatpush2.bf16.msra.mxu0 0
      %8274 = vmatprep.mubr.bf16.mxu0 0
      %8275 = vmatmul.mubr.bf16.gmra.mxu0 %v8197
      %v8276 = vpop.f32.mrf.mxu0
      %v8277 = vadd.f32 0.0, %v8276
      %v8278 = vpop.f32.mrf.mxu0
      %v8279 = vadd.f32 0.0, %v8278
      %v8280 = vpop.f32.mrf.mxu0
      %v8281 = vadd.f32 0.0, %v8280
      %v8282 = vpop.f32.mrf.mxu0
      %v8283 = vadd.f32 0.0, %v8282
      %8284 = vdwg.mxu0
      %v8285 = vadd.f32 %v8167, %v8234
      %v8286 = vadd.f32 %v8168, %v8236
      %v8287 = vadd.f32 %v8169, %v8277
      %v8288 = vadd.f32 %v8170, %v8279
      %v8289 = vadd.f32 %v8171, %v8238
      %v8290 = vadd.f32 %v8172, %v8240
      %v8291 = vadd.f32 %v8173, %v8281
      %v8292 = vadd.f32 %v8174, %v8283
      %v8293 = vunpack.c.h.b16 %v5417
      %v8294 = vunpack.c.h.b16 %v5419
      %v8295 = vpack.c.b16 %v8294, %v8293
      %8296 = vrot.lane.b32.xlu0 %v6994, 44
      %v8297 = vpop.permute.xlu0 %8296
      %8298 = vrot.lane.b32.xlu0 %v6995, 44
      %v8299 = vpop.permute.xlu0 %8298
      %8300 = vrot.lane.b32.xlu0 %v6996, 44
      %v8301 = vpop.permute.xlu0 %8300
      %8302 = vrot.lane.b32.xlu0 %v6997, 44
      %v8303 = vpop.permute.xlu0 %8302
      %8304 = vrot.lane.b32.xlu0 %v6998, 44
      %v8305 = vpop.permute.xlu0 %8304
      %v8306 = vsel %vm6036, %v8297, %v8299
      %v8307 = vsel %vm6036, %v8299, %v8301
      %v8308 = vsel %vm6036, %v8301, %v8303
      %v8309 = vsel %vm6036, %v8303, %v8305
      %v8315 = vsel %vm416, %v8295, 0
      %8317 = vmatprep.subr.bf16.mxu0 0
      %8318 = vmatpush1.bf16.msra.mxu0 0
      %8319 = vmatprep.subr.bf16.mxu0 0
      %8320 = vmatpush1.bf16.msra.mxu0 0
      %8321 = vmatprep.subr.bf16.mxu0 0
      %8322 = vmatpush1.bf16.msra.mxu0 0
      %8323 = vmatprep.subr.bf16.mxu0 0
      %8324 = vmatpush1.bf16.msra.mxu0 0
      %8325 = vmatprep.subr.bf16.mxu0 0
      %8326 = vmatpush1.bf16.msra.mxu0 0
      %8327 = vmatprep.subr.bf16.mxu0 0
      %8328 = vmatpush1.bf16.msra.mxu0 0
      %8329 = vmatprep.subr.bf16.mxu0 0
      %8330 = vmatpush1.bf16.msra.mxu0 0
      %8331 = vmatprep.subr.bf16.mxu0 %v8307
      %8332 = vmatpush1.bf16.msra.mxu0 %v8306
      %8333 = vmatprep.subr.bf16.mxu0 0
      %8334 = vmatpush2.bf16.msra.mxu0 0
      %8335 = vmatprep.subr.bf16.mxu0 0
      %8336 = vmatpush2.bf16.msra.mxu0 0
      %8337 = vmatprep.subr.bf16.mxu0 0
      %8338 = vmatpush2.bf16.msra.mxu0 0
      %8339 = vmatprep.subr.bf16.mxu0 0
      %8340 = vmatpush2.bf16.msra.mxu0 0
      %8341 = vmatprep.subr.bf16.mxu0 0
      %8342 = vmatpush2.bf16.msra.mxu0 0
      %8343 = vmatprep.subr.bf16.mxu0 0
      %8344 = vmatpush2.bf16.msra.mxu0 0
      %8345 = vmatprep.subr.bf16.mxu0 0
      %8346 = vmatpush2.bf16.msra.mxu0 0
      %8347 = vmatprep.subr.bf16.mxu0 0
      %8348 = vmatpush2.bf16.msra.mxu0 0
      %8349 = vmatprep.mubr.bf16.mxu0 0
      %8350 = vmatmul.mubr.bf16.gmra.mxu0 %v8315
      %v8351 = vpop.f32.mrf.mxu0
      %v8352 = vadd.f32 0.0, %v8351
      %v8353 = vpop.f32.mrf.mxu0
      %v8354 = vadd.f32 0.0, %v8353
      %v8355 = vpop.f32.mrf.mxu0
      %v8356 = vadd.f32 0.0, %v8355
      %v8357 = vpop.f32.mrf.mxu0
      %v8358 = vadd.f32 0.0, %v8357
      %8359 = vdwg.mxu0
      %8360 = vmatprep.subr.bf16.mxu0 0
      %8361 = vmatpush1.bf16.msra.mxu0 0
      %8362 = vmatprep.subr.bf16.mxu0 0
      %8363 = vmatpush1.bf16.msra.mxu0 0
      %8364 = vmatprep.subr.bf16.mxu0 0
      %8365 = vmatpush1.bf16.msra.mxu0 0
      %8366 = vmatprep.subr.bf16.mxu0 0
      %8367 = vmatpush1.bf16.msra.mxu0 0
      %8368 = vmatprep.subr.bf16.mxu0 0
      %8369 = vmatpush1.bf16.msra.mxu0 0
      %8370 = vmatprep.subr.bf16.mxu0 0
      %8371 = vmatpush1.bf16.msra.mxu0 0
      %8372 = vmatprep.subr.bf16.mxu0 0
      %8373 = vmatpush1.bf16.msra.mxu0 0
      %8374 = vmatprep.subr.bf16.mxu0 %v8309
      %8375 = vmatpush1.bf16.msra.mxu0 %v8308
      %8376 = vmatprep.subr.bf16.mxu0 0
      %8377 = vmatpush2.bf16.msra.mxu0 0
      %8378 = vmatprep.subr.bf16.mxu0 0
      %8379 = vmatpush2.bf16.msra.mxu0 0
      %8380 = vmatprep.subr.bf16.mxu0 0
      %8381 = vmatpush2.bf16.msra.mxu0 0
      %8382 = vmatprep.subr.bf16.mxu0 0
      %8383 = vmatpush2.bf16.msra.mxu0 0
      %8384 = vmatprep.subr.bf16.mxu0 0
      %8385 = vmatpush2.bf16.msra.mxu0 0
      %8386 = vmatprep.subr.bf16.mxu0 0
      %8387 = vmatpush2.bf16.msra.mxu0 0
      %8388 = vmatprep.subr.bf16.mxu0 0
      %8389 = vmatpush2.bf16.msra.mxu0 0
      %8390 = vmatprep.subr.bf16.mxu0 0
      %8391 = vmatpush2.bf16.msra.mxu0 0
      %8392 = vmatprep.mubr.bf16.mxu0 0
      %8393 = vmatmul.mubr.bf16.gmra.mxu0 %v8315
      %v8394 = vpop.f32.mrf.mxu0
      %v8395 = vadd.f32 0.0, %v8394
      %v8396 = vpop.f32.mrf.mxu0
      %v8397 = vadd.f32 0.0, %v8396
      %v8398 = vpop.f32.mrf.mxu0
      %v8399 = vadd.f32 0.0, %v8398
      %v8400 = vpop.f32.mrf.mxu0
      %v8401 = vadd.f32 0.0, %v8400
      %8402 = vdwg.mxu0
      %v8403 = vadd.f32 %v8285, %v8352
      %v8404 = vadd.f32 %v8286, %v8354
      %v8405 = vadd.f32 %v8287, %v8395
      %v8406 = vadd.f32 %v8288, %v8397
      %v8407 = vadd.f32 %v8289, %v8356
      %v8408 = vadd.f32 %v8290, %v8358
      %v8409 = vadd.f32 %v8291, %v8399
      %v8410 = vadd.f32 %v8292, %v8401
      %v8411 = vld [vmem:[%s8] sm:$0xff]
      %v8412 = vld [vmem:[%s8 + $0x8] sm:$0xf]
      %8414 = vset.pattern.permute.xlu0 0
      %8415 = vperm.xlu0 %8414, %v8411
      %v8416 = vpop.permute.xlu0 %8415
      %8419 = vset.pattern.permute.xlu0 0
      %8420 = vperm.xlu0 %8419, %v8412
      %v8421 = vpop.permute.xlu0 %8420
      %v8423 = vadd.f32 %v8403, %v8416
      %v8424 = vadd.f32 %v8404, %v8416
      %v8425 = vadd.f32 %v8405, %v8416
      %v8426 = vadd.f32 %v8406, %v8416
      %v8427 = vadd.f32 %v8407, %v8421
      %v8428 = vadd.f32 %v8408, %v8421
      %v8429 = vadd.f32 %v8409, %v8421
      %v8430 = vadd.f32 %v8410, %v8421
      %v8431 = vmul.f32 %v8423, 0.5
      %v8432 = vmul.f32 %v8424, 0.5
      %v8433 = vmul.f32 %v8425, 0.5
      %v8434 = vmul.f32 %v8426, 0.5
      %v8435 = vmul.f32 %v8427, 0.5
      %v8436 = vmul.f32 %v8428, 0.5
      %v8437 = vmul.f32 %v8429, 0.5
      %v8438 = vmul.f32 %v8430, 0.5
      %v8439 = vtanh.pop %v8431
      %v8440 = vtanh.pop %v8432
      %v8441 = vtanh.pop %v8433
      %v8442 = vtanh.pop %v8434
      %v8443 = vtanh.pop %v8435
      %v8444 = vtanh.pop %v8436
      %v8445 = vtanh.pop %v8437
      %v8446 = vtanh.pop %v8438
      %v8447 = vmul.f32 %v8439, 0.5
      %v8448 = vmul.f32 %v8440, 0.5
      %v8449 = vmul.f32 %v8441, 0.5
      %v8450 = vmul.f32 %v8442, 0.5
      %v8451 = vmul.f32 %v8443, 0.5
      %v8452 = vmul.f32 %v8444, 0.5
      %v8453 = vmul.f32 %v8445, 0.5
      %v8454 = vmul.f32 %v8446, 0.5
      %v8455 = vadd.f32 %v8447, 0.5
      %v8456 = vadd.f32 %v8448, 0.5
      %v8457 = vadd.f32 %v8449, 0.5
      %v8458 = vadd.f32 %v8450, 0.5
      %v8459 = vadd.f32 %v8451, 0.5
      %v8460 = vadd.f32 %v8452, 0.5
      %v8461 = vadd.f32 %v8453, 0.5
      %v8462 = vadd.f32 %v8454, 0.5
      %v8463 = vpack.c.bf16 %v8459, %v8455
      %v8464 = vpack.c.bf16 %v8460, %v8456
      %v8465 = vpack.c.bf16 %v8461, %v8457
      %v8466 = vpack.c.bf16 %v8462, %v8458
      %v8467 = vld [vmem:[%s9] sm:$0xf]
      %v8468 = vld [vmem:[%s9 + $0x4] sm:$0xf]
      %v8469 = vld [vmem:[%s9 + $0x8] sm:$0xf]
      %v8470 = vld [vmem:[%s9 + $0xc] sm:$0xf]
      %v8471 = vld [vmem:[%s9 + $0x10] sm:$0xf]
      %v8472 = vld [vmem:[%s9 + $0x14] sm:$0xf]
      %v8473 = vld [vmem:[%s9 + $0x18] sm:$0xf]
      %v8474 = vld [vmem:[%s9 + $0x1c] sm:$0xf]
      %v8475 = vld [vmem:[%s9 + $0x20] sm:$0xf]
      %v8476 = vld [vmem:[%s9 + $0x24] sm:$0xf]
      %v8477 = vld [vmem:[%s9 + $0x28] sm:$0xf]
      %v8478 = vld [vmem:[%s9 + $0x2c] sm:$0xf]
      %v8479 = vld [vmem:[%s9 + $0x30] sm:$0xf]
      %v8480 = vld [vmem:[%s9 + $0x34] sm:$0xf]
      %v8481 = vld [vmem:[%s9 + $0x38] sm:$0xf]
      %v8482 = vld [vmem:[%s9 + $0x3c] sm:$0xf]
      %v8483 = vld [vmem:[%s9 + $0x40] sm:$0xf]
      %v8484 = vld [vmem:[%s9 + $0x44] sm:$0xf]
      %v8485 = vld [vmem:[%s9 + $0x48] sm:$0xf]
      %v8486 = vld [vmem:[%s9 + $0x4c] sm:$0xf]
      %v8487 = vld [vmem:[%s9 + $0x50] sm:$0xf]
      %v8488 = vld [vmem:[%s9 + $0x54] sm:$0xf]
      %v8489 = vld [vmem:[%s9 + $0x58] sm:$0xf]
      %v8490 = vld [vmem:[%s9 + $0x5c] sm:$0xf]
      %v8491 = vld [vmem:[%s9 + $0x60] sm:$0xf]
      %v8492 = vld [vmem:[%s9 + $0x64] sm:$0xf]
      %v8493 = vld [vmem:[%s9 + $0x68] sm:$0xf]
      %v8494 = vld [vmem:[%s9 + $0x6c] sm:$0xf]
      %v8495 = vld [vmem:[%s9 + $0x70] sm:$0xf]
      %v8496 = vld [vmem:[%s9 + $0x74] sm:$0xf]
      %v8497 = vld [vmem:[%s9 + $0x78] sm:$0xf]
      %v8498 = vld [vmem:[%s9 + $0x7c] sm:$0xf]
      %v8499 = vld [vmem:[%s9 + $0x80] sm:$0xf]
      %v8500 = vld [vmem:[%s9 + $0x84] sm:$0xf]
      %v8501 = vld [vmem:[%s9 + $0x88] sm:$0xf]
      %v8502 = vld [vmem:[%s9 + $0x8c] sm:$0xf]
      %v8503 = vld [vmem:[%s9 + $0x90] sm:$0xf]
      %v8504 = vld [vmem:[%s9 + $0x94] sm:$0xf]
      %v8505 = vld [vmem:[%s9 + $0x98] sm:$0xf]
      %v8506 = vld [vmem:[%s9 + $0x9c] sm:$0xf]
      %v8507 = vld [vmem:[%s9 + $0xa0] sm:$0xf]
      %v8508 = vld [vmem:[%s9 + $0xa4] sm:$0xf]
      %v8509 = vld [vmem:[%s9 + $0xa8] sm:$0xf]
      %v8510 = vld [vmem:[%s9 + $0xac] sm:$0xf]
      %v8511 = vld [vmem:[%s9 + $0xb0] sm:$0xf]
      %v8512 = vld [vmem:[%s9 + $0xb4] sm:$0xf]
      %v8513 = vld [vmem:[%s9 + $0xb8] sm:$0xf]
      %v8514 = vld [vmem:[%s9 + $0xbc] sm:$0xf]
      %v8515 = vld [vmem:[%s9 + $0xc0] sm:$0xf]
      %v8516 = vld [vmem:[%s9 + $0xc4] sm:$0xf]
      %v8517 = vld [vmem:[%s9 + $0xc8] sm:$0xf]
      %v8518 = vld [vmem:[%s9 + $0xcc] sm:$0xf]
      %v8519 = vld [vmem:[%s9 + $0xd0] sm:$0xf]
      %v8520 = vld [vmem:[%s9 + $0xd4] sm:$0xf]
      %v8521 = vld [vmem:[%s9 + $0xd8] sm:$0xf]
      %v8522 = vld [vmem:[%s9 + $0xdc] sm:$0xf]
      %v8523 = vld [vmem:[%s9 + $0xe0] sm:$0xf]
      %v8524 = vld [vmem:[%s9 + $0xe4] sm:$0xf]
      %v8525 = vld [vmem:[%s9 + $0xe8] sm:$0xf]
      %v8526 = vld [vmem:[%s9 + $0xec] sm:$0xf]
      %v8527 = vld [vmem:[%s9 + $0xf0] sm:$0xf]
      %v8528 = vld [vmem:[%s9 + $0xf4] sm:$0xf]
      %v8529 = vld [vmem:[%s9 + $0xf8] sm:$0xf]
      %v8530 = vld [vmem:[%s9 + $0xfc] sm:$0xf]
      %v8595 = vunpack.c.l.b16 %v8467
      %v8596 = vunpack.c.l.b16 %v8468
      %v8597 = vunpack.c.l.b16 %v8469
      %v8598 = vunpack.c.l.b16 %v8470
      %v8599 = vunpack.c.l.b16 %v8471
      %v8600 = vunpack.c.l.b16 %v8472
      %v8601 = vunpack.c.l.b16 %v8473
      %v8602 = vunpack.c.l.b16 %v8474
      %v8603 = vunpack.c.l.b16 %v8475
      %v8604 = vunpack.c.l.b16 %v8476
      %v8605 = vunpack.c.l.b16 %v8477
      %v8606 = vunpack.c.l.b16 %v8478
      %v8607 = vunpack.c.l.b16 %v8479
      %v8608 = vunpack.c.l.b16 %v8480
      %v8609 = vunpack.c.l.b16 %v8481
      %v8610 = vunpack.c.l.b16 %v8482
      %v8611 = vunpack.c.l.b16 %v8483
      %v8612 = vunpack.c.l.b16 %v8484
      %v8613 = vunpack.c.l.b16 %v8485
      %v8614 = vunpack.c.l.b16 %v8486
      %v8615 = vunpack.c.l.b16 %v8487
      %v8616 = vunpack.c.l.b16 %v8488
      %v8617 = vunpack.c.l.b16 %v8489
      %v8618 = vunpack.c.l.b16 %v8490
      %v8619 = vunpack.c.l.b16 %v8491
      %v8620 = vunpack.c.l.b16 %v8492
      %v8621 = vunpack.c.l.b16 %v8493
      %v8622 = vunpack.c.l.b16 %v8494
      %v8623 = vunpack.c.l.b16 %v8495
      %v8624 = vunpack.c.l.b16 %v8496
      %v8625 = vunpack.c.l.b16 %v8497
      %v8626 = vunpack.c.l.b16 %v8498
      %v8627 = vunpack.c.l.b16 %v8499
      %v8628 = vunpack.c.l.b16 %v8500
      %v8629 = vunpack.c.l.b16 %v8501
      %v8630 = vunpack.c.l.b16 %v8502
      %v8631 = vunpack.c.l.b16 %v8503
      %v8632 = vunpack.c.l.b16 %v8504
      %v8633 = vunpack.c.l.b16 %v8505
      %v8634 = vunpack.c.l.b16 %v8506
      %v8635 = vunpack.c.l.b16 %v8507
      %v8636 = vunpack.c.l.b16 %v8508
      %v8637 = vunpack.c.l.b16 %v8509
      %v8638 = vunpack.c.l.b16 %v8510
      %v8639 = vunpack.c.l.b16 %v8511
      %v8640 = vunpack.c.l.b16 %v8512
      %v8641 = vunpack.c.l.b16 %v8513
      %v8642 = vunpack.c.l.b16 %v8514
      %v8643 = vunpack.c.l.b16 %v8515
      %v8644 = vunpack.c.l.b16 %v8516
      %v8645 = vunpack.c.l.b16 %v8517
      %v8646 = vunpack.c.l.b16 %v8518
      %v8647 = vunpack.c.l.b16 %v8519
      %v8648 = vunpack.c.l.b16 %v8520
      %v8649 = vunpack.c.l.b16 %v8521
      %v8650 = vunpack.c.l.b16 %v8522
      %v8651 = vunpack.c.l.b16 %v8523
      %v8652 = vunpack.c.l.b16 %v8524
      %v8653 = vunpack.c.l.b16 %v8525
      %v8654 = vunpack.c.l.b16 %v8526
      %v8655 = vunpack.c.l.b16 %v8527
      %v8656 = vunpack.c.l.b16 %v8528
      %v8657 = vunpack.c.l.b16 %v8529
      %v8658 = vunpack.c.l.b16 %v8530
      %v8659 = vpack.c.b16 %v8596, %v8595
      %v8660 = vpack.c.b16 %v8598, %v8597
      %v8661 = vpack.c.b16 %v8600, %v8599
      %v8662 = vpack.c.b16 %v8602, %v8601
      %v8663 = vpack.c.b16 %v8604, %v8603
      %v8664 = vpack.c.b16 %v8606, %v8605
      %v8665 = vpack.c.b16 %v8608, %v8607
      %v8666 = vpack.c.b16 %v8610, %v8609
      %v8667 = vpack.c.b16 %v8612, %v8611
      %v8668 = vpack.c.b16 %v8614, %v8613
      %v8669 = vpack.c.b16 %v8616, %v8615
      %v8670 = vpack.c.b16 %v8618, %v8617
      %v8671 = vpack.c.b16 %v8620, %v8619
      %v8672 = vpack.c.b16 %v8622, %v8621
      %v8673 = vpack.c.b16 %v8624, %v8623
      %v8674 = vpack.c.b16 %v8626, %v8625
      %v8675 = vpack.c.b16 %v8628, %v8627
      %v8676 = vpack.c.b16 %v8630, %v8629
      %v8677 = vpack.c.b16 %v8632, %v8631
      %v8678 = vpack.c.b16 %v8634, %v8633
      %v8679 = vpack.c.b16 %v8636, %v8635
      %v8680 = vpack.c.b16 %v8638, %v8637
      %v8681 = vpack.c.b16 %v8640, %v8639
      %v8682 = vpack.c.b16 %v8642, %v8641
      %v8683 = vpack.c.b16 %v8644, %v8643
      %v8684 = vpack.c.b16 %v8646, %v8645
      %v8685 = vpack.c.b16 %v8648, %v8647
      %v8686 = vpack.c.b16 %v8650, %v8649
      %v8687 = vpack.c.b16 %v8652, %v8651
      %v8688 = vpack.c.b16 %v8654, %v8653
      %v8689 = vpack.c.b16 %v8656, %v8655
      %v8690 = vpack.c.b16 %v8658, %v8657
      %8723 = vmatprep.subr.bf16.mxu0 0
      %8724 = vmatpush1.bf16.msra.mxu0 %v8666
      %8725 = vmatprep.subr.bf16.mxu0 0
      %8726 = vmatpush1.bf16.msra.mxu0 %v8665
      %8727 = vmatprep.subr.bf16.mxu0 0
      %8728 = vmatpush1.bf16.msra.mxu0 %v8664
      %8729 = vmatprep.subr.bf16.mxu0 0
      %8730 = vmatpush1.bf16.msra.mxu0 %v8663
      %8731 = vmatprep.subr.bf16.mxu0 0
      %8732 = vmatpush1.bf16.msra.mxu0 %v8662
      %8733 = vmatprep.subr.bf16.mxu0 0
      %8734 = vmatpush1.bf16.msra.mxu0 %v8661
      %8735 = vmatprep.subr.bf16.mxu0 0
      %8736 = vmatpush1.bf16.msra.mxu0 %v8660
      %8737 = vmatprep.subr.bf16.mxu0 0
      %8738 = vmatpush1.bf16.msra.mxu0 %v8659
      %8739 = vmatprep.subr.bf16.mxu0 0
      %8740 = vmatpush2.bf16.msra.mxu0 %v8674
      %8741 = vmatprep.subr.bf16.mxu0 0
      %8742 = vmatpush2.bf16.msra.mxu0 %v8673
      %8743 = vmatprep.subr.bf16.mxu0 0
      %8744 = vmatpush2.bf16.msra.mxu0 %v8672
      %8745 = vmatprep.subr.bf16.mxu0 0
      %8746 = vmatpush2.bf16.msra.mxu0 %v8671
      %8747 = vmatprep.subr.bf16.mxu0 0
      %8748 = vmatpush2.bf16.msra.mxu0 %v8670
      %8749 = vmatprep.subr.bf16.mxu0 0
      %8750 = vmatpush2.bf16.msra.mxu0 %v8669
      %8751 = vmatprep.subr.bf16.mxu0 0
      %8752 = vmatpush2.bf16.msra.mxu0 %v8668
      %8753 = vmatprep.subr.bf16.mxu0 0
      %8754 = vmatpush2.bf16.msra.mxu0 %v8667
      %8755 = vmatprep.mubr.bf16.mxu0 %v8464
      %8756 = vmatmul.mubr.bf16.gmra.mxu0 %v8463
      %v8757 = vpop.f32.mrf.mxu0
      %v8758 = vadd.f32 0.0, %v8757
      %v8759 = vpop.f32.mrf.mxu0
      %v8760 = vpop.f32.mrf.mxu0
      %v8761 = vadd.f32 0.0, %v8760
      %v8762 = vpop.f32.mrf.mxu0
      %8763 = vdwg.mxu0
      %8764 = vmatprep.subr.bf16.mxu0 0
      %8765 = vmatpush1.bf16.msra.mxu0 %v8682
      %8766 = vmatprep.subr.bf16.mxu0 0
      %8767 = vmatpush1.bf16.msra.mxu0 %v8681
      %8768 = vmatprep.subr.bf16.mxu0 0
      %8769 = vmatpush1.bf16.msra.mxu0 %v8680
      %8770 = vmatprep.subr.bf16.mxu0 0
      %8771 = vmatpush1.bf16.msra.mxu0 %v8679
      %8772 = vmatprep.subr.bf16.mxu0 0
      %8773 = vmatpush1.bf16.msra.mxu0 %v8678
      %8774 = vmatprep.subr.bf16.mxu0 0
      %8775 = vmatpush1.bf16.msra.mxu0 %v8677
      %8776 = vmatprep.subr.bf16.mxu0 0
      %8777 = vmatpush1.bf16.msra.mxu0 %v8676
      %8778 = vmatprep.subr.bf16.mxu0 0
      %8779 = vmatpush1.bf16.msra.mxu0 %v8675
      %8780 = vmatprep.subr.bf16.mxu0 0
      %8781 = vmatpush2.bf16.msra.mxu0 %v8690
      %8782 = vmatprep.subr.bf16.mxu0 0
      %8783 = vmatpush2.bf16.msra.mxu0 %v8689
      %8784 = vmatprep.subr.bf16.mxu0 0
      %8785 = vmatpush2.bf16.msra.mxu0 %v8688
      %8786 = vmatprep.subr.bf16.mxu0 0
      %8787 = vmatpush2.bf16.msra.mxu0 %v8687
      %8788 = vmatprep.subr.bf16.mxu0 0
      %8789 = vmatpush2.bf16.msra.mxu0 %v8686
      %8790 = vmatprep.subr.bf16.mxu0 0
      %8791 = vmatpush2.bf16.msra.mxu0 %v8685
      %8792 = vmatprep.subr.bf16.mxu0 0
      %8793 = vmatpush2.bf16.msra.mxu0 %v8684
      %8794 = vmatprep.subr.bf16.mxu0 0
      %8795 = vmatpush2.bf16.msra.mxu0 %v8683
      %8796 = vmatprep.mubr.bf16.mxu0 %v8466
      %8797 = vmatmul.mubr.bf16.gmra.mxu0 %v8465
      %v8798 = vpop.f32.mrf.mxu0
      %v8799 = vadd.f32 %v8758, %v8798
      %v8800 = vpop.f32.mrf.mxu0
      %v8801 = vpop.f32.mrf.mxu0
      %v8802 = vadd.f32 %v8761, %v8801
      %v8803 = vpop.f32.mrf.mxu0
      %8804 = vdwg.mxu0
      %8805 = vst [vmem:[%s364] sm:$0xff] %v8799
      %8806 = vst [vmem:[%s364 + $0x8] sm:$0xf] %v8802
      %p8807 = scmp.lt.s32.totalorder %s21, 1
      %s8808 = scalar_select %p8807, %s21, 1
      %s8809 = smul.addr %s8808, 2
      %s8810 = smul.addr %s8809, 8
      %s8811 = scalar_lea.vmem %s10, %s8810
      // Predicated region
      $region61: #{lenet_forward.1} parent=59 // pred_check
        %p8812 = pneg %p254
      $region62: #{lenet_forward.1} parent=59 // pred_check_branch
        %8814 = sbr.rel (%p8812) target = $region64
      $region63: #{lenet_forward.1} parent=59 // pred_region
        _
      $region64: #{lenet_forward.1} parent=59 // pred_fallthru
        _
    $region60: #{lenet_forward.1} parent=5 // pred_fallthru
      _
    %p8815 = scmp.le.s32.totalorder 2, %s16
    // Predicated region
    $region65: #{lenet_forward.1} parent=5 // pred_check
      %p8816 = pneg %p8815
    $region66: #{lenet_forward.1} parent=5 // pred_check_branch
      %8818 = sbr.rel (%p8816) target = $region68
    $region67: #{lenet_forward.1} parent=5 // pred_region
      %s8819 = ssub.s32 %s16, 2
      // Predicated region
      $region69: #{lenet_forward.1} parent=67 // pred_check
        %p8820 = pneg %p260
      $region70: #{lenet_forward.1} parent=67 // pred_check_branch
        %8822 = sbr.rel (%p8820) target = $region72
      $region71: #{lenet_forward.1} parent=67 // pred_region
        %p8823 = scmp.lt.s32.totalorder %s22, 1
        %s8824 = scalar_select %p8823, %s22, 1
        %s8825 = smul.addr %s8824, 2
        %s8826 = smul.addr %s8825, 8
        %s8827 = scalar_lea.vmem %s10, %s8826
      $region72: #{lenet_forward.1} parent=67 // pred_fallthru
        _
    $region68: #{lenet_forward.1} parent=5 // pred_fallthru
      _
  $region6: #{lenet_forward.1} parent=0 // loop_footer
    %s20 = sadd.s32 1, %s16
  $region7: #{lenet_forward.1} parent=0 // loop_footer_branch
    %15 = sbr.rel target = $region3
  $region8: #{lenet_forward.1} parent=0 // loop_exit
    _

</llo_original>
